<compile_context>
chip_gen: v6e
topology: v6e:2x2x1
jax: 0.10.0
libtpu: 0.0.40
codegen_flags: <defaults>
</compile_context>

<pallas_src>
import numpy as np
import jax
import jax.numpy as jnp
from jax.experimental import pallas as pl
from jax.experimental.pallas import tpu as pltpu

# ----------------------- module hyper-parameters (defaults) ------------------
HIDDEN = 16
OUT_CHANNELS = 16
NUM_BLOCKS = 2
INT_EMB = 32
BASIS_EMB = 4
OUT_EMB = 32
NUM_SPHERICAL = 5
NUM_RADIAL = 4
CUTOFF = 5.0
ENVELOPE_EXPONENT = 5
NUM_BEFORE_SKIP = 1
NUM_AFTER_SKIP = 1
NUM_OUTPUT_LAYERS = 2
NUM_CLASSES = 3

assert ENVELOPE_EXPONENT == 5 and NUM_SPHERICAL == 5  # closed forms below

_P = ENVELOPE_EXPONENT + 1                      # p = exponent + 1 = 6
_ENV_A = -(_P + 1) * (_P + 2) / 2.0             # -28
_ENV_B = _P * (_P + 2.0)                        # 48
_ENV_C = -_P * (_P + 1) / 2.0                   # -21
_SPH_PREF = [float(np.sqrt((2 * l + 1) / (4.0 * np.pi))) for l in range(NUM_SPHERICAL)]

_VMEM = pl.BlockSpec(memory_space=pltpu.MemorySpace.VMEM)
_LANE = 128


def _round_up(n, m=_LANE):
    return ((n + m - 1) // m) * m


# ------------------------- in-kernel helpers ---------------------------------

def _mxu(w_bf16, a):
    """bf16 MXU matmul  W @ A  with f32 accumulation (weights pre-cast bf16)."""
    return jnp.dot(w_bf16, a.astype(jnp.bfloat16), preferred_element_type=jnp.float32)


def _f32mm(a, b):
    """Exact f32 contraction — used for the one-hot gather/scatter/pool matmuls."""
    return jnp.dot(a, b, preferred_element_type=jnp.float32)


def _swish(y):
    # exp on the EUP; the divide becomes an EUP reciprocal (free slot vs VALU).
    return y * pl.reciprocal(1.0 + jnp.exp(-y), approx=True)


# ============================ fused forward kernel ===========================
#
# Everything is feature-major: activations are (features, rows) with the
# graph dimension (edges/triplets/nodes, padded to 128) on the lane axis.

def _fused_forward_kernel(d_ref, a_ref, gkj_ref, sji_ref, si_ref, sb_ref,
                          hcat_ref, f_ref, z_ref, n_ref, m_ref, *rest):
    out_ref = rest[-1]
    wit = iter(rest[:-1])

    def W():
        return next(wit)[...]

    H, L, R = HIDDEN, NUM_SPHERICAL, NUM_RADIAL

    # ----------------------------- basis -------------------------------------
    x = d_ref[...] * (1.0 / CUTOFF)                          # (1, Ep)
    inv_x = 1.0 / jnp.maximum(x, 1e-9)                       # guard d -> 0
    x2 = x * x
    x4 = x2 * x2
    x5 = x4 * x
    x6 = x5 * x
    x7 = x6 * x
    env = (inv_x + _ENV_A * x5 + _ENV_B * x6 + _ENV_C * x7) * (x < 1.0).astype(jnp.float32)

    # radial Bessel basis  (R, Ep)
    rbf = env * jnp.sin(f_ref[...] * x)

    # spherical-Bessel radial part: env * norm_{l,n} * j_l(z_{l,n} * x)
    t = z_ref[...] * x                                       # (L*R, Ep)
    inv_t = 1.0 / jnp.maximum(t, 1e-9)                       # exact recip (stability)
    st = jnp.sin(t)
    ct = jnp.cos(t)
    j_prev = st * inv_t                                      # j0
    j_cur = (st * inv_t - ct) * inv_t                        # j1
    acc = m_ref[0] * j_prev + m_ref[1] * j_cur
    for l in range(2, L):                                    # upward recurrence
        j_prev, j_cur = j_cur, (2.0 * l - 1.0) * inv_t * j_cur - j_prev
        acc = acc + m_ref[l] * j_cur
    sbf_rad = env * n_ref[...] * acc                         # (L*R, Ep)

    # gather radial part to triplets: exact f32 one-hot contraction
    gkj = gkj_ref[...]                                       # (Ep, Tp)
    rad_t = _f32mm(sbf_rad, gkj)                             # (L*R, Tp)

    # zonal spherical harmonics
    cth = jnp.cos(a_ref[...])                                # (1, Tp)
    c2 = cth * cth
    c3 = c2 * cth
    c4 = c2 * c2
    leg = (jnp.ones_like(cth), cth, 0.5 * (3.0 * c2 - 1.0),
           0.5 * (5.0 * c3 - 3.0 * cth), 0.125 * (35.0 * c4 - 30.0 * c2 + 3.0))
    cbf = m_ref[0] * (_SPH_PREF[0] * leg[0])
    for l in range(1, L):
        cbf = cbf + m_ref[l] * (_SPH_PREF[l] * leg[l])
    sbf = rad_t * cbf                                        # (L*R, Tp)

    # hoisted bf16 casts of reused activations
    rbf_bf = rbf.astype(jnp.bfloat16)
    sbf_bf = sbf.astype(jnp.bfloat16)
    sji = sji_ref[...]                                       # (Tp, Ep)
    si = si_ref[...]                                         # (Ep, Np)

    # --------------------------- embedding block -----------------------------
    w_rbf, b_rbf, w_ij, w_r, b_emb = W(), W(), W(), W(), W()
    rbf_h = _swish(_mxu(w_rbf, rbf_bf) + b_rbf)              # (H, Ep)
    xcur = _swish(_mxu(w_ij, hcat_ref[...]) + _mxu(w_r, rbf_h) + b_emb)   # (H, Ep)

    # --------------------------- block helpers -------------------------------
    def output_block(xb):
        w_orbf, w_oup = W(), W()
        g = _mxu(w_orbf, rbf_bf)                             # (H, Ep)
        h = _f32mm(g * xb, si)                               # exact segment-sum -> (H, Np)
        h = _mxu(w_oup, h)                                   # (OUT_EMB, Np)
        for _ in range(NUM_OUTPUT_LAYERS):
            w, b = W(), W()
            h = _swish(_mxu(w, h) + b)
        return _mxu(W(), h)                                  # (OUT_CHANNELS, Np)

    def interaction_block(xb):
        w_jikj, b_jikj, w_rbf_f, w_sbf_f, w_down, w_up = W(), W(), W(), W(), W(), W()
        y = _mxu(w_jikj, xb) + b_jikj                        # fused ji|kj matmul (2H, Ep)
        x_ji = _swish(y[:H, :])
        x_kj = _swish(y[H:, :])
        x_kj = x_kj * _mxu(w_rbf_f, rbf_bf)                  # folded rbf1@rbf2 projection
        x_kj = _swish(_mxu(w_down, x_kj))                    # (INT_EMB, Ep)
        s_b = _mxu(w_sbf_f, sbf_bf)                          # folded sbf1@sbf2 -> (INT_EMB, Tp)
        x_t = _f32mm(x_kj, gkj) * s_b                        # exact gather -> (INT_EMB, Tp)
        x_agg = _f32mm(x_t, sji)                             # exact scatter-sum -> (INT_EMB, Ep)
        x_kj = _swish(_mxu(w_up, x_agg))                     # (H, Ep)
        h = x_ji + x_kj
        for _ in range(NUM_BEFORE_SKIP):
            w1, b1, w2, b2 = W(), W(), W(), W()
            u = _swish(_mxu(w1, h) + b1)
            h = h + _swish(_mxu(w2, u) + b2)
        wl, bl = W(), W()
        h = _swish(_mxu(wl, h) + bl) + xb
        for _ in range(NUM_AFTER_SKIP):
            w1, b1, w2, b2 = W(), W(), W(), W()
            u = _swish(_mxu(w1, h) + b1)
            h = h + _swish(_mxu(w2, u) + b2)
        return h

    # ------------------ interaction / output blocks + readout ----------------
    P = output_block(xcur)
    for _ in range(NUM_BLOCKS):
        xcur = interaction_block(xcur)
        P = P + output_block(xcur)

    wc, bc = W(), W()
    pooled = _f32mm(P, sb_ref[...])                          # per-graph sum pool (OUT_CH, G)
    out_ref[...] = _mxu(wc, pooled) + bc                     # (NUM_CLASSES, G)


# ====================== host-side numeric constants ==========================

def _sph_jn_np(x, n):
    x = np.asarray(x, dtype=np.float64)
    j0 = np.sin(x) / x
    if n == 0:
        return j0
    j1 = np.sin(x) / x ** 2 - np.cos(x) / x
    jm1, jc = j0, j1
    for l in range(1, n):
        jm1, jc = jc, (2 * l + 1) / x * jc - jm1
    return jc


def _bessel_zeros(n, k):
    """First k zeros of spherical Bessel j_0..j_{n-1} (bisection, zeros interlace)."""
    zerosj = np.zeros((n, k))
    zerosj[0] = np.arange(1, k + 1) * np.pi
    points = np.arange(1, k + n) * np.pi
    racines = np.zeros(k + n - 1)
    for order in range(1, n):
        for j in range(k + n - 1 - order):
            a, b = float(points[j]), float(points[j + 1])
            fa = _sph_jn_np(a, order)
            for _ in range(200):
                m = 0.5 * (a + b)
                fm = _sph_jn_np(m, order)
                if fa * fm <= 0:
                    b = m
                else:
                    a, fa = m, fm
            racines[j] = 0.5 * (a + b)
        points = racines.copy()
        zerosj[order, :k] = racines[:k]
    return zerosj


def _bessel_basis_consts(n, k):
    z = _bessel_zeros(n, k)
    norms = np.zeros((n, k))
    for order in range(n):
        for i in range(k):
            norms[order, i] = 1.0 / np.sqrt(0.5 * _sph_jn_np(z[order, i], order + 1) ** 2)
    return z.astype(np.float32), norms.astype(np.float32)


# TODO(synk): radius_graph + triplet enumeration are data-dependent Python
# loops (no clean Pallas equivalent); done host-side in numpy like the
# reference code.
def radius_graph_np(pos, batch, cutoff):
    n = pos.shape[0]
    row, col = [], []
    for a in range(n):
        for b in range(n):
            if a == b or batch[a] != batch[b]:
                continue
            if np.linalg.norm(pos[a] - pos[b]) < cutoff:
                row.append(a)
                col.append(b)
    return np.asarray(row, np.int32), np.asarray(col, np.int32)


def triplets_np(row, col, num_nodes):
    adj = [[] for _ in range(num_nodes)]
    for e, (j, k) in enumerate(zip(row, col)):
        adj[int(j)].append((int(k), e))
    idx_i, idx_j, idx_k, idx_kj, idx_ji = [], [], [], [], []
    for j in range(num_nodes):
        for k, e_kj in adj[j]:
            for i, e_ji in adj[j]:
                if i != k:
                    idx_i.append(i)
                    idx_j.append(j)
                    idx_k.append(k)
                    idx_kj.append(e_kj)
                    idx_ji.append(e_ji)
    return (col, row,
            np.asarray(idx_i, np.int32), np.asarray(idx_j, np.int32),
            np.asarray(idx_k, np.int32), np.asarray(idx_kj, np.int32),
            np.asarray(idx_ji, np.int32))


# ============================ parameters =====================================

def _init_params(key):
    keys = iter(jax.random.split(key, 256))

    def lin(in_d, out_d, bias=True):
        w = jax.random.normal(next(keys), (in_d, out_d), jnp.float32) * (1.0 / np.sqrt(in_d))
        b = (jax.random.normal(next(keys), (1, out_d), jnp.float32) * 0.01) if bias else None
        return {"w": w, "b": b}

    p = {}
    p["emb"] = jax.random.uniform(next(keys), (95, HIDDEN), jnp.float32,
                                  -float(np.sqrt(3.0)), float(np.sqrt(3.0)))
    p["rbf_freq"] = jnp.arange(1, NUM_RADIAL + 1, dtype=jnp.float32) * np.pi
    p["emb_lin_rbf"] = lin(NUM_RADIAL, HIDDEN)
    p["emb_lin"] = lin(3 * HIDDEN, HIDDEN)

    p["interaction"] = []
    for _ in range(NUM_BLOCKS):
        blk = {
            "lin_rbf1": lin(NUM_RADIAL, BASIS_EMB, bias=False),
            "lin_rbf2": lin(BASIS_EMB, HIDDEN, bias=False),
            "lin_sbf1": lin(NUM_SPHERICAL * NUM_RADIAL, BASIS_EMB, bias=False),
            "lin_sbf2": lin(BASIS_EMB, INT_EMB, bias=False),
            "lin_kj": lin(HIDDEN, HIDDEN),
            "lin_ji": lin(HIDDEN, HIDDEN),
            "lin_down": lin(HIDDEN, INT_EMB, bias=False),
            "lin_up": lin(INT_EMB, HIDDEN, bias=False),
            "res_before": [(lin(HIDDEN, HIDDEN), lin(HIDDEN, HIDDEN)) for _ in range(NUM_BEFORE_SKIP)],
            "lin": lin(HIDDEN, HIDDEN),
            "res_after": [(lin(HIDDEN, HIDDEN), lin(HIDDEN, HIDDEN)) for _ in range(NUM_AFTER_SKIP)],
        }
        p["interaction"].append(blk)

    p["output"] = []
    for _ in range(NUM_BLOCKS + 1):
        blk = {
            "lin_rbf": lin(NUM_RADIAL, HIDDEN, bias=False),
            "lin_up": lin(HIDDEN, OUT_EMB, bias=False),
            "lins": [lin(OUT_EMB, OUT_EMB) for _ in range(NUM_OUTPUT_LAYERS)],
            "lin": lin(OUT_EMB, OUT_CHANNELS, bias=False),
        }
        p["output"].append(blk)

    p["classifier"] = lin(HIDDEN, NUM_CLASSES)
    return p


def _prepare_weight_args(params):
    """Flat, kernel-consumption-ordered weight list.

    Weights are transposed to feature-major (out_features, in_features) and
    cast bf16; biases become (out_features, 1) f32 columns.  Bias-free
    back-to-back basis projections are folded on the host (f32 -> bf16).
    """
    def wt(lp):
        return jnp.asarray(lp["w"], jnp.float32).T.astype(jnp.bfloat16)

    def bt(lp):
        return jnp.asarray(lp["b"], jnp.float32).reshape(-1, 1)

    args = []

    # embedding block: split the concat weight into [h_i|h_j] and rbf parts
    w_emb = jnp.asarray(params["emb_lin"]["w"], jnp.float32)            # (3H, H)
    args += [wt(params["emb_lin_rbf"]), bt(params["emb_lin_rbf"]),
             w_emb[:2 * HIDDEN, :].T.astype(jnp.bfloat16),              # (H, 2H)
             w_emb[2 * HIDDEN:, :].T.astype(jnp.bfloat16),              # (H, H)
             bt(params["emb_lin"])]

    def out_block_args(blk):
        a = [wt(blk["lin_rbf"]), wt(blk["lin_up"])]
        for l in blk["lins"]:
            a += [wt(l), bt(l)]
        a += [wt(blk["lin"])]
        return a

    def int_block_args(blk):
        w_jikj = jnp.concatenate([blk["lin_ji"]["w"], blk["lin_kj"]["w"]], axis=1)   # (H, 2H)
        b_jikj = jnp.concatenate([blk["lin_ji"]["b"], blk["lin_kj"]["b"]], axis=1)   # (1, 2H)
        w_rbf_fused = blk["lin_rbf1"]["w"] @ blk["lin_rbf2"]["w"]        # (R, H)  folded
        w_sbf_fused = blk["lin_sbf1"]["w"] @ blk["lin_sbf2"]["w"]        # (L*R, INT) folded
        a = [w_jikj.T.astype(jnp.bfloat16),
             jnp.reshape(b_jikj, (-1, 1)).astype(jnp.float32),
             w_rbf_fused.T.astype(jnp.bfloat16),
             w_sbf_fused.T.astype(jnp.bfloat16),
             wt(blk["lin_down"]), wt(blk["lin_up"])]
        for l1, l2 in blk["res_before"]:
            a += [wt(l1), bt(l1), wt(l2), bt(l2)]
        a += [wt(blk["lin"]), bt(blk["lin"])]
        for l1, l2 in blk["res_after"]:
            a += [wt(l1), bt(l1), wt(l2), bt(l2)]
        return a

    args += out_block_args(params["output"][0])
    for b in range(NUM_BLOCKS):
        args += int_block_args(params["interaction"][b])
        args += out_block_args(params["output"][b + 1])
    args += [wt(params["classifier"]), bt(params["classifier"])]
    return args


# ============================ forward pass ===================================

def dimenet_classifier_forward(params, z, pos, batch, bessel_zeros, bessel_norms):
    pos_np = np.asarray(pos, np.float32)
    batch_np = np.asarray(batch, np.int32)
    z_np = np.asarray(z, np.int32)
    num_nodes = int(pos_np.shape[0])
    num_graphs = int(batch_np.max()) + 1
    L, R, H = NUM_SPHERICAL, NUM_RADIAL, HIDDEN

    # ------------- graph construction + geometry (host-side glue) ------------
    row, col = radius_graph_np(pos_np, batch_np, CUTOFF)
    i_idx, j_idx, t_i, t_j, t_k, idx_kj, idx_ji = triplets_np(row, col, num_nodes)
    E = int(i_idx.shape[0])
    T = int(idx_kj.shape[0])

    dist = np.sqrt(((pos_np[i_idx] - pos_np[j_idx]) ** 2).sum(-1))
    pos_ij = pos_np[t_i] - pos_np[t_j]
    pos_jk = pos_np[t_j] - pos_np[t_k]
    a = (pos_ij * pos_jk).sum(-1)
    b = np.linalg.norm(np.cross(pos_ij, pos_jk), axis=-1)
    angle = np.arctan2(b, a)    # TODO(synk): atan2 kept as host-side glue

    # ------------- lane-dense padding (rows -> multiples of 128 lanes) -------
    Ep = _round_up(max(E, 1))
    Tp = _round_up(max(T, 1))
    Np = _round_up(num_nodes)

    dist_p = np.full((1, Ep), 1.0, np.float32)     # pad dist = 1.0 (safe, finite)
    dist_p[0, :E] = dist
    angle_p = np.zeros((1, Tp), np.float32)
    angle_p[0, :T] = angle

    # one-hot gather/scatter matrices (f32, exact), built once and reused
    gkj = np.zeros((Ep, Tp), np.float32)           # gather edges -> triplets
    gkj[idx_kj, np.arange(T)] = 1.0
    sji = np.zeros((Tp, Ep), np.float32)           # scatter-sum triplets -> edges
    sji[np.arange(T), idx_ji] = 1.0
    si = np.zeros((Ep, Np), np.float32)            # segment-sum edges -> nodes
    si[np.arange(E), i_idx] = 1.0
    sb = np.zeros((Np, num_graphs), np.float32)    # sum-pool nodes -> graphs
    sb[np.arange(num_nodes), batch_np] = 1.0

    # atom embedding lookup + [h_i | h_j] pre-concat, feature-major
    h_atom = np.asarray(params["emb"], np.float32)[z_np]      # (N, H)
    hcat = np.zeros((2 * H, Ep), np.float32)
    hcat[:H, :E] = h_atom[i_idx].T
    hcat[H:, :E] = h_atom[j_idx].T

    # per-degree selection masks for the Bessel recurrence / zonal harmonics
    lmask3 = np.repeat(np.eye(L, dtype=np.float32), R, axis=1).reshape(L, L * R, 1)

    const_args = [
        jnp.asarray(dist_p), jnp.asarray(angle_p), jnp.asarray(gkj),
        jnp.asarray(sji), jnp.asarray(si), jnp.asarray(sb), jnp.asarray(hcat),
        jnp.asarray(params["rbf_freq"], jnp.float32).reshape(R, 1),
        jnp.asarray(bessel_zeros.reshape(L * R, 1), jnp.float32),
        jnp.asarray(bessel_norms.reshape(L * R, 1), jnp.float32),
        jnp.asarray(lmask3),
    ]
    args = const_args + _prepare_weight_args(params)

    # ---------------- single fused pallas_call for the whole forward ---------
    out_fm = pl.pallas_call(
        _fused_forward_kernel,
        out_shape=jax.ShapeDtypeStruct((NUM_CLASSES, num_graphs), jnp.float32),
        in_specs=[_VMEM] * len(args),
        out_specs=_VMEM,
        compiler_params=pltpu.CompilerParams(vmem_limit_bytes=32 * 1024 * 1024),
    )(*args)

    return out_fm.T                                            # (num_graphs, NUM_CLASSES)


# ================================ main =======================================

if __name__ == "__main__":
    key = jax.random.PRNGKey(0)
    params = _init_params(key)
    bessel_zeros, bessel_norms = _bessel_basis_consts(NUM_SPHERICAL, NUM_RADIAL)

    # two small "molecules" (batch of 2 graphs, 5 + 4 atoms)
    pos0 = np.array([[0.0, 0.0, 0.0],
                     [1.2, 0.0, 0.0],
                     [0.0, 1.3, 0.0],
                     [0.0, 0.0, 1.4],
                     [1.1, 1.1, 0.2]], np.float32)
    pos1 = np.array([[10.0, 10.0, 10.0],
                     [11.3, 10.0, 10.0],
                     [10.0, 11.2, 10.0],
                     [10.2, 10.1, 11.3]], np.float32)
    pos = np.concatenate([pos0, pos1], axis=0)                  # (9, 3)
    z = np.array([6, 1, 1, 8, 1, 6, 1, 8, 1], np.int32)         # atomic numbers < 95
    batch = np.array([0, 0, 0, 0, 0, 1, 1, 1, 1], np.int32)

    logits = dimenet_classifier_forward(params, z, pos, batch, bessel_zeros, bessel_norms)
    logits = jax.block_until_ready(logits)

    assert logits.shape == (2, NUM_CLASSES)
    assert np.all(np.isfinite(np.asarray(logits)))
    print("KERNEL_OK")
</pallas_src>

<mosaic_0001>
module attributes {stable_mosaic.version = 11 : i64} {
  func.func @_fused_forward_kernel(%arg0: memref<1x128xf32, #tpu.memory_space<vmem>>, %arg1: memref<1x128xf32, #tpu.memory_space<vmem>>, %arg2: memref<128x128xf32, #tpu.memory_space<vmem>>, %arg3: memref<128x128xf32, #tpu.memory_space<vmem>>, %arg4: memref<128x128xf32, #tpu.memory_space<vmem>>, %arg5: memref<128x2xf32, #tpu.memory_space<vmem>>, %arg6: memref<32x128xf32, #tpu.memory_space<vmem>>, %arg7: memref<4x1xf32, #tpu.memory_space<vmem>>, %arg8: memref<20x1xf32, #tpu.memory_space<vmem>>, %arg9: memref<20x1xf32, #tpu.memory_space<vmem>>, %arg10: memref<5x20x1xf32, #tpu.memory_space<vmem>>, %arg11: memref<16x4xbf16, #tpu.memory_space<vmem>>, %arg12: memref<16x1xf32, #tpu.memory_space<vmem>>, %arg13: memref<16x32xbf16, #tpu.memory_space<vmem>>, %arg14: memref<16x16xbf16, #tpu.memory_space<vmem>>, %arg15: memref<16x1xf32, #tpu.memory_space<vmem>>, %arg16: memref<16x4xbf16, #tpu.memory_space<vmem>>, %arg17: memref<32x16xbf16, #tpu.memory_space<vmem>>, %arg18: memref<32x32xbf16, #tpu.memory_space<vmem>>, %arg19: memref<32x1xf32, #tpu.memory_space<vmem>>, %arg20: memref<32x32xbf16, #tpu.memory_space<vmem>>, %arg21: memref<32x1xf32, #tpu.memory_space<vmem>>, %arg22: memref<16x32xbf16, #tpu.memory_space<vmem>>, %arg23: memref<32x16xbf16, #tpu.memory_space<vmem>>, %arg24: memref<32x1xf32, #tpu.memory_space<vmem>>, %arg25: memref<16x4xbf16, #tpu.memory_space<vmem>>, %arg26: memref<32x20xbf16, #tpu.memory_space<vmem>>, %arg27: memref<32x16xbf16, #tpu.memory_space<vmem>>, %arg28: memref<16x32xbf16, #tpu.memory_space<vmem>>, %arg29: memref<16x16xbf16, #tpu.memory_space<vmem>>, %arg30: memref<16x1xf32, #tpu.memory_space<vmem>>, %arg31: memref<16x16xbf16, #tpu.memory_space<vmem>>, %arg32: memref<16x1xf32, #tpu.memory_space<vmem>>, %arg33: memref<16x16xbf16, #tpu.memory_space<vmem>>, %arg34: memref<16x1xf32, #tpu.memory_space<vmem>>, %arg35: memref<16x16xbf16, #tpu.memory_space<vmem>>, %arg36: memref<16x1xf32, #tpu.memory_space<vmem>>, %arg37: memref<16x16xbf16, #tpu.memory_space<vmem>>, %arg38: memref<16x1xf32, #tpu.memory_space<vmem>>, %arg39: memref<16x4xbf16, #tpu.memory_space<vmem>>, %arg40: memref<32x16xbf16, #tpu.memory_space<vmem>>, %arg41: memref<32x32xbf16, #tpu.memory_space<vmem>>, %arg42: memref<32x1xf32, #tpu.memory_space<vmem>>, %arg43: memref<32x32xbf16, #tpu.memory_space<vmem>>, %arg44: memref<32x1xf32, #tpu.memory_space<vmem>>, %arg45: memref<16x32xbf16, #tpu.memory_space<vmem>>, %arg46: memref<32x16xbf16, #tpu.memory_space<vmem>>, %arg47: memref<32x1xf32, #tpu.memory_space<vmem>>, %arg48: memref<16x4xbf16, #tpu.memory_space<vmem>>, %arg49: memref<32x20xbf16, #tpu.memory_space<vmem>>, %arg50: memref<32x16xbf16, #tpu.memory_space<vmem>>, %arg51: memref<16x32xbf16, #tpu.memory_space<vmem>>, %arg52: memref<16x16xbf16, #tpu.memory_space<vmem>>, %arg53: memref<16x1xf32, #tpu.memory_space<vmem>>, %arg54: memref<16x16xbf16, #tpu.memory_space<vmem>>, %arg55: memref<16x1xf32, #tpu.memory_space<vmem>>, %arg56: memref<16x16xbf16, #tpu.memory_space<vmem>>, %arg57: memref<16x1xf32, #tpu.memory_space<vmem>>, %arg58: memref<16x16xbf16, #tpu.memory_space<vmem>>, %arg59: memref<16x1xf32, #tpu.memory_space<vmem>>, %arg60: memref<16x16xbf16, #tpu.memory_space<vmem>>, %arg61: memref<16x1xf32, #tpu.memory_space<vmem>>, %arg62: memref<16x4xbf16, #tpu.memory_space<vmem>>, %arg63: memref<32x16xbf16, #tpu.memory_space<vmem>>, %arg64: memref<32x32xbf16, #tpu.memory_space<vmem>>, %arg65: memref<32x1xf32, #tpu.memory_space<vmem>>, %arg66: memref<32x32xbf16, #tpu.memory_space<vmem>>, %arg67: memref<32x1xf32, #tpu.memory_space<vmem>>, %arg68: memref<16x32xbf16, #tpu.memory_space<vmem>>, %arg69: memref<3x16xbf16, #tpu.memory_space<vmem>>, %arg70: memref<3x1xf32, #tpu.memory_space<vmem>>, %arg71: memref<3x2xf32, #tpu.memory_space<vmem>>) attributes {dimension_semantics = [], scalar_prefetch = 0 : i64, scratch_operands = 0 : i64, tpu.core_type = #tpu.core_type<tc>} {
    %c0 = arith.constant 0 : index
    %c0_0 = arith.constant 0 : index
    %0 = vector.load %arg0[%c0, %c0_0] : memref<1x128xf32, #tpu.memory_space<vmem>>, vector<1x128xf32>
    %cst = arith.constant 2.000000e-01 : f32
    %1 = vector.broadcast %cst : f32 to vector<1x128xf32>
    %2 = arith.mulf %0, %1 : vector<1x128xf32>
    %cst_1 = arith.constant 9.99999971E-10 : f32
    %3 = vector.broadcast %cst_1 : f32 to vector<1x128xf32>
    %4 = arith.maximumf %2, %3 : vector<1x128xf32>
    %cst_2 = arith.constant 1.000000e+00 : f32
    %5 = vector.broadcast %cst_2 : f32 to vector<1x128xf32>
    %6 = arith.divf %5, %4 : vector<1x128xf32>
    %7 = arith.mulf %2, %2 : vector<1x128xf32>
    %8 = arith.mulf %7, %7 : vector<1x128xf32>
    %9 = arith.mulf %8, %2 : vector<1x128xf32>
    %10 = arith.mulf %9, %2 : vector<1x128xf32>
    %11 = arith.mulf %10, %2 : vector<1x128xf32>
    %cst_3 = arith.constant -2.800000e+01 : f32
    %12 = vector.broadcast %cst_3 : f32 to vector<1x128xf32>
    %13 = arith.mulf %12, %9 : vector<1x128xf32>
    %14 = arith.addf %6, %13 : vector<1x128xf32>
    %cst_4 = arith.constant 4.800000e+01 : f32
    %15 = vector.broadcast %cst_4 : f32 to vector<1x128xf32>
    %16 = arith.mulf %15, %10 : vector<1x128xf32>
    %17 = arith.addf %14, %16 : vector<1x128xf32>
    %cst_5 = arith.constant -2.100000e+01 : f32
    %18 = vector.broadcast %cst_5 : f32 to vector<1x128xf32>
    %19 = arith.mulf %18, %11 : vector<1x128xf32>
    %20 = arith.addf %17, %19 : vector<1x128xf32>
    %cst_6 = arith.constant 1.000000e+00 : f32
    %21 = vector.broadcast %cst_6 : f32 to vector<1x128xf32>
    %22 = arith.cmpf olt, %2, %21 : vector<1x128xf32>
    %23 = arith.extui %22 : vector<1x128xi1> to vector<1x128xi32>
    %24 = arith.sitofp %23 : vector<1x128xi32> to vector<1x128xf32>
    %25 = arith.mulf %20, %24 : vector<1x128xf32>
    %c0_7 = arith.constant 0 : index
    %c0_8 = arith.constant 0 : index
    %26 = vector.load %arg7[%c0_7, %c0_8] : memref<4x1xf32, #tpu.memory_space<vmem>>, vector<4x1xf32>
    %27 = vector.broadcast %26 : vector<4x1xf32> to vector<4x128xf32>
    %28 = vector.broadcast %2 : vector<1x128xf32> to vector<4x128xf32>
    %29 = arith.mulf %27, %28 : vector<4x128xf32>
    %30 = math.sin %29 : vector<4x128xf32>
    %31 = vector.broadcast %25 : vector<1x128xf32> to vector<4x128xf32>
    %32 = arith.mulf %31, %30 : vector<4x128xf32>
    %c0_9 = arith.constant 0 : index
    %c0_10 = arith.constant 0 : index
    %33 = vector.load %arg8[%c0_9, %c0_10] : memref<20x1xf32, #tpu.memory_space<vmem>>, vector<20x1xf32>
    %34 = vector.broadcast %33 : vector<20x1xf32> to vector<20x128xf32>
    %35 = vector.broadcast %2 : vector<1x128xf32> to vector<20x128xf32>
    %36 = arith.mulf %34, %35 : vector<20x128xf32>
    %cst_11 = arith.constant 9.99999971E-10 : f32
    %37 = vector.broadcast %cst_11 : f32 to vector<20x128xf32>
    %38 = arith.maximumf %36, %37 : vector<20x128xf32>
    %cst_12 = arith.constant 1.000000e+00 : f32
    %39 = vector.broadcast %cst_12 : f32 to vector<20x128xf32>
    %40 = arith.divf %39, %38 : vector<20x128xf32>
    %41 = math.sin %36 : vector<20x128xf32>
    %42 = math.cos %36 : vector<20x128xf32>
    %43 = arith.mulf %41, %40 : vector<20x128xf32>
    %44 = arith.mulf %41, %40 : vector<20x128xf32>
    %45 = arith.subf %44, %42 : vector<20x128xf32>
    %46 = arith.mulf %45, %40 : vector<20x128xf32>
    %c0_13 = arith.constant 0 : index
    %c0_14 = arith.constant 0 : index
    %c0_15 = arith.constant 0 : index
    %47 = vector.load %arg10[%c0_13, %c0_14, %c0_15] : memref<5x20x1xf32, #tpu.memory_space<vmem>>, vector<1x20x1xf32>
    %48 = vector.shape_cast %47 : vector<1x20x1xf32> to vector<20x1xf32>
    %49 = vector.broadcast %48 : vector<20x1xf32> to vector<20x128xf32>
    %50 = arith.mulf %49, %43 : vector<20x128xf32>
    %c1 = arith.constant 1 : index
    %c0_16 = arith.constant 0 : index
    %c0_17 = arith.constant 0 : index
    %51 = vector.load %arg10[%c1, %c0_16, %c0_17] : memref<5x20x1xf32, #tpu.memory_space<vmem>>, vector<1x20x1xf32>
    %52 = vector.shape_cast %51 : vector<1x20x1xf32> to vector<20x1xf32>
    %53 = vector.broadcast %52 : vector<20x1xf32> to vector<20x128xf32>
    %54 = arith.mulf %53, %46 : vector<20x128xf32>
    %55 = arith.addf %50, %54 : vector<20x128xf32>
    %cst_18 = arith.constant 3.000000e+00 : f32
    %56 = vector.broadcast %cst_18 : f32 to vector<20x128xf32>
    %57 = arith.mulf %56, %40 : vector<20x128xf32>
    %58 = arith.mulf %57, %46 : vector<20x128xf32>
    %59 = arith.subf %58, %43 : vector<20x128xf32>
    %c2 = arith.constant 2 : index
    %c0_19 = arith.constant 0 : index
    %c0_20 = arith.constant 0 : index
    %60 = vector.load %arg10[%c2, %c0_19, %c0_20] : memref<5x20x1xf32, #tpu.memory_space<vmem>>, vector<1x20x1xf32>
    %61 = vector.shape_cast %60 : vector<1x20x1xf32> to vector<20x1xf32>
    %62 = vector.broadcast %61 : vector<20x1xf32> to vector<20x128xf32>
    %63 = arith.mulf %62, %59 : vector<20x128xf32>
    %64 = arith.addf %55, %63 : vector<20x128xf32>
    %cst_21 = arith.constant 5.000000e+00 : f32
    %65 = vector.broadcast %cst_21 : f32 to vector<20x128xf32>
    %66 = arith.mulf %65, %40 : vector<20x128xf32>
    %67 = arith.mulf %66, %59 : vector<20x128xf32>
    %68 = arith.subf %67, %46 : vector<20x128xf32>
    %c3 = arith.constant 3 : index
    %c0_22 = arith.constant 0 : index
    %c0_23 = arith.constant 0 : index
    %69 = vector.load %arg10[%c3, %c0_22, %c0_23] : memref<5x20x1xf32, #tpu.memory_space<vmem>>, vector<1x20x1xf32>
    %70 = vector.shape_cast %69 : vector<1x20x1xf32> to vector<20x1xf32>
    %71 = vector.broadcast %70 : vector<20x1xf32> to vector<20x128xf32>
    %72 = arith.mulf %71, %68 : vector<20x128xf32>
    %73 = arith.addf %64, %72 : vector<20x128xf32>
    %cst_24 = arith.constant 7.000000e+00 : f32
    %74 = vector.broadcast %cst_24 : f32 to vector<20x128xf32>
    %75 = arith.mulf %74, %40 : vector<20x128xf32>
    %76 = arith.mulf %75, %68 : vector<20x128xf32>
    %77 = arith.subf %76, %59 : vector<20x128xf32>
    %c4 = arith.constant 4 : index
    %c0_25 = arith.constant 0 : index
    %c0_26 = arith.constant 0 : index
    %78 = vector.load %arg10[%c4, %c0_25, %c0_26] : memref<5x20x1xf32, #tpu.memory_space<vmem>>, vector<1x20x1xf32>
    %79 = vector.shape_cast %78 : vector<1x20x1xf32> to vector<20x1xf32>
    %80 = vector.broadcast %79 : vector<20x1xf32> to vector<20x128xf32>
    %81 = arith.mulf %80, %77 : vector<20x128xf32>
    %82 = arith.addf %73, %81 : vector<20x128xf32>
    %c0_27 = arith.constant 0 : index
    %c0_28 = arith.constant 0 : index
    %83 = vector.load %arg9[%c0_27, %c0_28] : memref<20x1xf32, #tpu.memory_space<vmem>>, vector<20x1xf32>
    %84 = vector.broadcast %25 : vector<1x128xf32> to vector<20x128xf32>
    %85 = vector.broadcast %83 : vector<20x1xf32> to vector<20x128xf32>
    %86 = arith.mulf %84, %85 : vector<20x128xf32>
    %87 = arith.mulf %86, %82 : vector<20x128xf32>
    %c0_29 = arith.constant 0 : index
    %c0_30 = arith.constant 0 : index
    %88 = vector.load %arg2[%c0_29, %c0_30] : memref<128x128xf32, #tpu.memory_space<vmem>>, vector<128x128xf32>
    %cst_31 = arith.constant dense<0.000000e+00> : vector<20x128xf32>
    %89 = tpu.matmul %87, %88, %cst_31 {dimension_numbers = #tpu.dot_dimension_numbers<[1], [0], [0], [1], [0, 0, 1, 1], [], []>} : vector<20x128xf32>, vector<128x128xf32>, vector<20x128xf32> -> vector<20x128xf32>
    %c0_32 = arith.constant 0 : index
    %c0_33 = arith.constant 0 : index
    %90 = vector.load %arg1[%c0_32, %c0_33] : memref<1x128xf32, #tpu.memory_space<vmem>>, vector<1x128xf32>
    %91 = math.cos %90 : vector<1x128xf32>
    %92 = arith.mulf %91, %91 : vector<1x128xf32>
    %93 = arith.mulf %92, %91 : vector<1x128xf32>
    %94 = arith.mulf %92, %92 : vector<1x128xf32>
    %cst_34 = arith.constant 1.000000e+00 : f32
    %95 = vector.broadcast %cst_34 : f32 to vector<1x128xf32>
    %cst_35 = arith.constant 3.000000e+00 : f32
    %96 = vector.broadcast %cst_35 : f32 to vector<1x128xf32>
    %97 = arith.mulf %96, %92 : vector<1x128xf32>
    %cst_36 = arith.constant 1.000000e+00 : f32
    %98 = vector.broadcast %cst_36 : f32 to vector<1x128xf32>
    %99 = arith.subf %97, %98 : vector<1x128xf32>
    %cst_37 = arith.constant 5.000000e-01 : f32
    %100 = vector.broadcast %cst_37 : f32 to vector<1x128xf32>
    %101 = arith.mulf %100, %99 : vector<1x128xf32>
    %cst_38 = arith.constant 5.000000e+00 : f32
    %102 = vector.broadcast %cst_38 : f32 to vector<1x128xf32>
    %103 = arith.mulf %102, %93 : vector<1x128xf32>
    %cst_39 = arith.constant 3.000000e+00 : f32
    %104 = vector.broadcast %cst_39 : f32 to vector<1x128xf32>
    %105 = arith.mulf %104, %91 : vector<1x128xf32>
    %106 = arith.subf %103, %105 : vector<1x128xf32>
    %cst_40 = arith.constant 5.000000e-01 : f32
    %107 = vector.broadcast %cst_40 : f32 to vector<1x128xf32>
    %108 = arith.mulf %107, %106 : vector<1x128xf32>
    %cst_41 = arith.constant 3.500000e+01 : f32
    %109 = vector.broadcast %cst_41 : f32 to vector<1x128xf32>
    %110 = arith.mulf %109, %94 : vector<1x128xf32>
    %cst_42 = arith.constant 3.000000e+01 : f32
    %111 = vector.broadcast %cst_42 : f32 to vector<1x128xf32>
    %112 = arith.mulf %111, %92 : vector<1x128xf32>
    %113 = arith.subf %110, %112 : vector<1x128xf32>
    %cst_43 = arith.constant 3.000000e+00 : f32
    %114 = vector.broadcast %cst_43 : f32 to vector<1x128xf32>
    %115 = arith.addf %113, %114 : vector<1x128xf32>
    %cst_44 = arith.constant 1.250000e-01 : f32
    %116 = vector.broadcast %cst_44 : f32 to vector<1x128xf32>
    %117 = arith.mulf %116, %115 : vector<1x128xf32>
    %c0_45 = arith.constant 0 : index
    %c0_46 = arith.constant 0 : index
    %c0_47 = arith.constant 0 : index
    %118 = vector.load %arg10[%c0_45, %c0_46, %c0_47] : memref<5x20x1xf32, #tpu.memory_space<vmem>>, vector<1x20x1xf32>
    %119 = vector.shape_cast %118 : vector<1x20x1xf32> to vector<20x1xf32>
    %cst_48 = arith.constant 0.282094806 : f32
    %120 = vector.broadcast %cst_48 : f32 to vector<1x128xf32>
    %121 = arith.mulf %120, %95 : vector<1x128xf32>
    %122 = vector.broadcast %119 : vector<20x1xf32> to vector<20x128xf32>
    %123 = vector.broadcast %121 : vector<1x128xf32> to vector<20x128xf32>
    %124 = arith.mulf %122, %123 : vector<20x128xf32>
    %c1_49 = arith.constant 1 : index
    %c0_50 = arith.constant 0 : index
    %c0_51 = arith.constant 0 : index
    %125 = vector.load %arg10[%c1_49, %c0_50, %c0_51] : memref<5x20x1xf32, #tpu.memory_space<vmem>>, vector<1x20x1xf32>
    %126 = vector.shape_cast %125 : vector<1x20x1xf32> to vector<20x1xf32>
    %cst_52 = arith.constant 0.488602519 : f32
    %127 = vector.broadcast %cst_52 : f32 to vector<1x128xf32>
    %128 = arith.mulf %127, %91 : vector<1x128xf32>
    %129 = vector.broadcast %126 : vector<20x1xf32> to vector<20x128xf32>
    %130 = vector.broadcast %128 : vector<1x128xf32> to vector<20x128xf32>
    %131 = arith.mulf %129, %130 : vector<20x128xf32>
    %132 = arith.addf %124, %131 : vector<20x128xf32>
    %c2_53 = arith.constant 2 : index
    %c0_54 = arith.constant 0 : index
    %c0_55 = arith.constant 0 : index
    %133 = vector.load %arg10[%c2_53, %c0_54, %c0_55] : memref<5x20x1xf32, #tpu.memory_space<vmem>>, vector<1x20x1xf32>
    %134 = vector.shape_cast %133 : vector<1x20x1xf32> to vector<20x1xf32>
    %cst_56 = arith.constant 0.63078314 : f32
    %135 = vector.broadcast %cst_56 : f32 to vector<1x128xf32>
    %136 = arith.mulf %135, %101 : vector<1x128xf32>
    %137 = vector.broadcast %134 : vector<20x1xf32> to vector<20x128xf32>
    %138 = vector.broadcast %136 : vector<1x128xf32> to vector<20x128xf32>
    %139 = arith.mulf %137, %138 : vector<20x128xf32>
    %140 = arith.addf %132, %139 : vector<20x128xf32>
    %c3_57 = arith.constant 3 : index
    %c0_58 = arith.constant 0 : index
    %c0_59 = arith.constant 0 : index
    %141 = vector.load %arg10[%c3_57, %c0_58, %c0_59] : memref<5x20x1xf32, #tpu.memory_space<vmem>>, vector<1x20x1xf32>
    %142 = vector.shape_cast %141 : vector<1x20x1xf32> to vector<20x1xf32>
    %cst_60 = arith.constant 0.746352672 : f32
    %143 = vector.broadcast %cst_60 : f32 to vector<1x128xf32>
    %144 = arith.mulf %143, %108 : vector<1x128xf32>
    %145 = vector.broadcast %142 : vector<20x1xf32> to vector<20x128xf32>
    %146 = vector.broadcast %144 : vector<1x128xf32> to vector<20x128xf32>
    %147 = arith.mulf %145, %146 : vector<20x128xf32>
    %148 = arith.addf %140, %147 : vector<20x128xf32>
    %c4_61 = arith.constant 4 : index
    %c0_62 = arith.constant 0 : index
    %c0_63 = arith.constant 0 : index
    %149 = vector.load %arg10[%c4_61, %c0_62, %c0_63] : memref<5x20x1xf32, #tpu.memory_space<vmem>>, vector<1x20x1xf32>
    %150 = vector.shape_cast %149 : vector<1x20x1xf32> to vector<20x1xf32>
    %cst_64 = arith.constant 0.846284389 : f32
    %151 = vector.broadcast %cst_64 : f32 to vector<1x128xf32>
    %152 = arith.mulf %151, %117 : vector<1x128xf32>
    %153 = vector.broadcast %150 : vector<20x1xf32> to vector<20x128xf32>
    %154 = vector.broadcast %152 : vector<1x128xf32> to vector<20x128xf32>
    %155 = arith.mulf %153, %154 : vector<20x128xf32>
    %156 = arith.addf %148, %155 : vector<20x128xf32>
    %157 = arith.mulf %89, %156 : vector<20x128xf32>
    %158 = arith.truncf %32 : vector<4x128xf32> to vector<4x128xbf16>
    %159 = arith.truncf %157 : vector<20x128xf32> to vector<20x128xbf16>
    %c0_65 = arith.constant 0 : index
    %c0_66 = arith.constant 0 : index
    %160 = vector.load %arg3[%c0_65, %c0_66] : memref<128x128xf32, #tpu.memory_space<vmem>>, vector<128x128xf32>
    %c0_67 = arith.constant 0 : index
    %c0_68 = arith.constant 0 : index
    %161 = vector.load %arg4[%c0_67, %c0_68] : memref<128x128xf32, #tpu.memory_space<vmem>>, vector<128x128xf32>
    %c0_69 = arith.constant 0 : index
    %c0_70 = arith.constant 0 : index
    %162 = vector.load %arg11[%c0_69, %c0_70] : memref<16x4xbf16, #tpu.memory_space<vmem>>, vector<16x4xbf16>
    %c0_71 = arith.constant 0 : index
    %c0_72 = arith.constant 0 : index
    %163 = vector.load %arg12[%c0_71, %c0_72] : memref<16x1xf32, #tpu.memory_space<vmem>>, vector<16x1xf32>
    %c0_73 = arith.constant 0 : index
    %c0_74 = arith.constant 0 : index
    %164 = vector.load %arg13[%c0_73, %c0_74] : memref<16x32xbf16, #tpu.memory_space<vmem>>, vector<16x32xbf16>
    %c0_75 = arith.constant 0 : index
    %c0_76 = arith.constant 0 : index
    %165 = vector.load %arg14[%c0_75, %c0_76] : memref<16x16xbf16, #tpu.memory_space<vmem>>, vector<16x16xbf16>
    %c0_77 = arith.constant 0 : index
    %c0_78 = arith.constant 0 : index
    %166 = vector.load %arg15[%c0_77, %c0_78] : memref<16x1xf32, #tpu.memory_space<vmem>>, vector<16x1xf32>
    %cst_79 = arith.constant dense<0.000000e+00> : vector<16x128xf32>
    %167 = tpu.matmul %162, %158, %cst_79 {dimension_numbers = #tpu.dot_dimension_numbers<[1], [0], [0], [1], [0, 0, 1, 1], [], []>} : vector<16x4xbf16>, vector<4x128xbf16>, vector<16x128xf32> -> vector<16x128xf32>
    %168 = vector.broadcast %163 : vector<16x1xf32> to vector<16x128xf32>
    %169 = arith.addf %167, %168 : vector<16x128xf32>
    %cst_80 = arith.constant 0.000000e+00 : f32
    %170 = vector.broadcast %cst_80 : f32 to vector<16x128xf32>
    %171 = arith.subf %170, %169 : vector<16x128xf32>
    %172 = math.exp %171 : vector<16x128xf32>
    %cst_81 = arith.constant 1.000000e+00 : f32
    %173 = vector.broadcast %cst_81 : f32 to vector<16x128xf32>
    %174 = arith.addf %173, %172 : vector<16x128xf32>
    %175 = tpu.reciprocal %174 {approx = true} : vector<16x128xf32> -> vector<16x128xf32>
    %176 = arith.mulf %169, %175 : vector<16x128xf32>
    %c0_82 = arith.constant 0 : index
    %c0_83 = arith.constant 0 : index
    %177 = vector.load %arg6[%c0_82, %c0_83] : memref<32x128xf32, #tpu.memory_space<vmem>>, vector<32x128xf32>
    %178 = arith.truncf %177 : vector<32x128xf32> to vector<32x128xbf16>
    %cst_84 = arith.constant dense<0.000000e+00> : vector<16x128xf32>
    %179 = tpu.matmul %164, %178, %cst_84 {dimension_numbers = #tpu.dot_dimension_numbers<[1], [0], [0], [1], [0, 0, 1, 1], [], []>} : vector<16x32xbf16>, vector<32x128xbf16>, vector<16x128xf32> -> vector<16x128xf32>
    %180 = arith.truncf %176 : vector<16x128xf32> to vector<16x128xbf16>
    %cst_85 = arith.constant dense<0.000000e+00> : vector<16x128xf32>
    %181 = tpu.matmul %165, %180, %cst_85 {dimension_numbers = #tpu.dot_dimension_numbers<[1], [0], [0], [1], [0, 0, 1, 1], [], []>} : vector<16x16xbf16>, vector<16x128xbf16>, vector<16x128xf32> -> vector<16x128xf32>
    %182 = arith.addf %179, %181 : vector<16x128xf32>
    %183 = vector.broadcast %166 : vector<16x1xf32> to vector<16x128xf32>
    %184 = arith.addf %182, %183 : vector<16x128xf32>
    %cst_86 = arith.constant 0.000000e+00 : f32
    %185 = vector.broadcast %cst_86 : f32 to vector<16x128xf32>
    %186 = arith.subf %185, %184 : vector<16x128xf32>
    %187 = math.exp %186 : vector<16x128xf32>
    %cst_87 = arith.constant 1.000000e+00 : f32
    %188 = vector.broadcast %cst_87 : f32 to vector<16x128xf32>
    %189 = arith.addf %188, %187 : vector<16x128xf32>
    %190 = tpu.reciprocal %189 {approx = true} : vector<16x128xf32> -> vector<16x128xf32>
    %191 = arith.mulf %184, %190 : vector<16x128xf32>
    %c0_88 = arith.constant 0 : index
    %c0_89 = arith.constant 0 : index
    %192 = vector.load %arg16[%c0_88, %c0_89] : memref<16x4xbf16, #tpu.memory_space<vmem>>, vector<16x4xbf16>
    %c0_90 = arith.constant 0 : index
    %c0_91 = arith.constant 0 : index
    %193 = vector.load %arg17[%c0_90, %c0_91] : memref<32x16xbf16, #tpu.memory_space<vmem>>, vector<32x16xbf16>
    %cst_92 = arith.constant dense<0.000000e+00> : vector<16x128xf32>
    %194 = tpu.matmul %192, %158, %cst_92 {dimension_numbers = #tpu.dot_dimension_numbers<[1], [0], [0], [1], [0, 0, 1, 1], [], []>} : vector<16x4xbf16>, vector<4x128xbf16>, vector<16x128xf32> -> vector<16x128xf32>
    %195 = arith.mulf %194, %191 : vector<16x128xf32>
    %cst_93 = arith.constant dense<0.000000e+00> : vector<16x128xf32>
    %196 = tpu.matmul %195, %161, %cst_93 {dimension_numbers = #tpu.dot_dimension_numbers<[1], [0], [0], [1], [0, 0, 1, 1], [], []>} : vector<16x128xf32>, vector<128x128xf32>, vector<16x128xf32> -> vector<16x128xf32>
    %197 = arith.truncf %196 : vector<16x128xf32> to vector<16x128xbf16>
    %cst_94 = arith.constant dense<0.000000e+00> : vector<32x128xf32>
    %198 = tpu.matmul %193, %197, %cst_94 {dimension_numbers = #tpu.dot_dimension_numbers<[1], [0], [0], [1], [0, 0, 1, 1], [], []>} : vector<32x16xbf16>, vector<16x128xbf16>, vector<32x128xf32> -> vector<32x128xf32>
    %c0_95 = arith.constant 0 : index
    %c0_96 = arith.constant 0 : index
    %199 = vector.load %arg18[%c0_95, %c0_96] : memref<32x32xbf16, #tpu.memory_space<vmem>>, vector<32x32xbf16>
    %c0_97 = arith.constant 0 : index
    %c0_98 = arith.constant 0 : index
    %200 = vector.load %arg19[%c0_97, %c0_98] : memref<32x1xf32, #tpu.memory_space<vmem>>, vector<32x1xf32>
    %201 = arith.truncf %198 : vector<32x128xf32> to vector<32x128xbf16>
    %cst_99 = arith.constant dense<0.000000e+00> : vector<32x128xf32>
    %202 = tpu.matmul %199, %201, %cst_99 {dimension_numbers = #tpu.dot_dimension_numbers<[1], [0], [0], [1], [0, 0, 1, 1], [], []>} : vector<32x32xbf16>, vector<32x128xbf16>, vector<32x128xf32> -> vector<32x128xf32>
    %203 = vector.broadcast %200 : vector<32x1xf32> to vector<32x128xf32>
    %204 = arith.addf %202, %203 : vector<32x128xf32>
    %cst_100 = arith.constant 0.000000e+00 : f32
    %205 = vector.broadcast %cst_100 : f32 to vector<32x128xf32>
    %206 = arith.subf %205, %204 : vector<32x128xf32>
    %207 = math.exp %206 : vector<32x128xf32>
    %cst_101 = arith.constant 1.000000e+00 : f32
    %208 = vector.broadcast %cst_101 : f32 to vector<32x128xf32>
    %209 = arith.addf %208, %207 : vector<32x128xf32>
    %210 = tpu.reciprocal %209 {approx = true} : vector<32x128xf32> -> vector<32x128xf32>
    %211 = arith.mulf %204, %210 : vector<32x128xf32>
    %c0_102 = arith.constant 0 : index
    %c0_103 = arith.constant 0 : index
    %212 = vector.load %arg20[%c0_102, %c0_103] : memref<32x32xbf16, #tpu.memory_space<vmem>>, vector<32x32xbf16>
    %c0_104 = arith.constant 0 : index
    %c0_105 = arith.constant 0 : index
    %213 = vector.load %arg21[%c0_104, %c0_105] : memref<32x1xf32, #tpu.memory_space<vmem>>, vector<32x1xf32>
    %214 = arith.truncf %211 : vector<32x128xf32> to vector<32x128xbf16>
    %cst_106 = arith.constant dense<0.000000e+00> : vector<32x128xf32>
    %215 = tpu.matmul %212, %214, %cst_106 {dimension_numbers = #tpu.dot_dimension_numbers<[1], [0], [0], [1], [0, 0, 1, 1], [], []>} : vector<32x32xbf16>, vector<32x128xbf16>, vector<32x128xf32> -> vector<32x128xf32>
    %216 = vector.broadcast %213 : vector<32x1xf32> to vector<32x128xf32>
    %217 = arith.addf %215, %216 : vector<32x128xf32>
    %cst_107 = arith.constant 0.000000e+00 : f32
    %218 = vector.broadcast %cst_107 : f32 to vector<32x128xf32>
    %219 = arith.subf %218, %217 : vector<32x128xf32>
    %220 = math.exp %219 : vector<32x128xf32>
    %cst_108 = arith.constant 1.000000e+00 : f32
    %221 = vector.broadcast %cst_108 : f32 to vector<32x128xf32>
    %222 = arith.addf %221, %220 : vector<32x128xf32>
    %223 = tpu.reciprocal %222 {approx = true} : vector<32x128xf32> -> vector<32x128xf32>
    %224 = arith.mulf %217, %223 : vector<32x128xf32>
    %c0_109 = arith.constant 0 : index
    %c0_110 = arith.constant 0 : index
    %225 = vector.load %arg22[%c0_109, %c0_110] : memref<16x32xbf16, #tpu.memory_space<vmem>>, vector<16x32xbf16>
    %226 = arith.truncf %224 : vector<32x128xf32> to vector<32x128xbf16>
    %cst_111 = arith.constant dense<0.000000e+00> : vector<16x128xf32>
    %227 = tpu.matmul %225, %226, %cst_111 {dimension_numbers = #tpu.dot_dimension_numbers<[1], [0], [0], [1], [0, 0, 1, 1], [], []>} : vector<16x32xbf16>, vector<32x128xbf16>, vector<16x128xf32> -> vector<16x128xf32>
    %c0_112 = arith.constant 0 : index
    %c0_113 = arith.constant 0 : index
    %228 = vector.load %arg23[%c0_112, %c0_113] : memref<32x16xbf16, #tpu.memory_space<vmem>>, vector<32x16xbf16>
    %c0_114 = arith.constant 0 : index
    %c0_115 = arith.constant 0 : index
    %229 = vector.load %arg24[%c0_114, %c0_115] : memref<32x1xf32, #tpu.memory_space<vmem>>, vector<32x1xf32>
    %c0_116 = arith.constant 0 : index
    %c0_117 = arith.constant 0 : index
    %230 = vector.load %arg25[%c0_116, %c0_117] : memref<16x4xbf16, #tpu.memory_space<vmem>>, vector<16x4xbf16>
    %c0_118 = arith.constant 0 : index
    %c0_119 = arith.constant 0 : index
    %231 = vector.load %arg26[%c0_118, %c0_119] : memref<32x20xbf16, #tpu.memory_space<vmem>>, vector<32x20xbf16>
    %c0_120 = arith.constant 0 : index
    %c0_121 = arith.constant 0 : index
    %232 = vector.load %arg27[%c0_120, %c0_121] : memref<32x16xbf16, #tpu.memory_space<vmem>>, vector<32x16xbf16>
    %c0_122 = arith.constant 0 : index
    %c0_123 = arith.constant 0 : index
    %233 = vector.load %arg28[%c0_122, %c0_123] : memref<16x32xbf16, #tpu.memory_space<vmem>>, vector<16x32xbf16>
    %234 = arith.truncf %191 : vector<16x128xf32> to vector<16x128xbf16>
    %cst_124 = arith.constant dense<0.000000e+00> : vector<32x128xf32>
    %235 = tpu.matmul %228, %234, %cst_124 {dimension_numbers = #tpu.dot_dimension_numbers<[1], [0], [0], [1], [0, 0, 1, 1], [], []>} : vector<32x16xbf16>, vector<16x128xbf16>, vector<32x128xf32> -> vector<32x128xf32>
    %236 = vector.broadcast %229 : vector<32x1xf32> to vector<32x128xf32>
    %237 = arith.addf %235, %236 : vector<32x128xf32>
    %238 = vector.extract_strided_slice %237 {offsets = [0, 0], sizes = [16, 128], strides = [1, 1]} : vector<32x128xf32> to vector<16x128xf32>
    %cst_125 = arith.constant 0.000000e+00 : f32
    %239 = vector.broadcast %cst_125 : f32 to vector<16x128xf32>
    %240 = arith.subf %239, %238 : vector<16x128xf32>
    %241 = math.exp %240 : vector<16x128xf32>
    %cst_126 = arith.constant 1.000000e+00 : f32
    %242 = vector.broadcast %cst_126 : f32 to vector<16x128xf32>
    %243 = arith.addf %242, %241 : vector<16x128xf32>
    %244 = tpu.reciprocal %243 {approx = true} : vector<16x128xf32> -> vector<16x128xf32>
    %245 = arith.mulf %238, %244 : vector<16x128xf32>
    %246 = vector.extract_strided_slice %237 {offsets = [16, 0], sizes = [16, 128], strides = [1, 1]} : vector<32x128xf32> to vector<16x128xf32>
    %cst_127 = arith.constant 0.000000e+00 : f32
    %247 = vector.broadcast %cst_127 : f32 to vector<16x128xf32>
    %248 = arith.subf %247, %246 : vector<16x128xf32>
    %249 = math.exp %248 : vector<16x128xf32>
    %cst_128 = arith.constant 1.000000e+00 : f32
    %250 = vector.broadcast %cst_128 : f32 to vector<16x128xf32>
    %251 = arith.addf %250, %249 : vector<16x128xf32>
    %252 = tpu.reciprocal %251 {approx = true} : vector<16x128xf32> -> vector<16x128xf32>
    %253 = arith.mulf %246, %252 : vector<16x128xf32>
    %cst_129 = arith.constant dense<0.000000e+00> : vector<16x128xf32>
    %254 = tpu.matmul %230, %158, %cst_129 {dimension_numbers = #tpu.dot_dimension_numbers<[1], [0], [0], [1], [0, 0, 1, 1], [], []>} : vector<16x4xbf16>, vector<4x128xbf16>, vector<16x128xf32> -> vector<16x128xf32>
    %255 = arith.mulf %253, %254 : vector<16x128xf32>
    %256 = arith.truncf %255 : vector<16x128xf32> to vector<16x128xbf16>
    %cst_130 = arith.constant dense<0.000000e+00> : vector<32x128xf32>
    %257 = tpu.matmul %232, %256, %cst_130 {dimension_numbers = #tpu.dot_dimension_numbers<[1], [0], [0], [1], [0, 0, 1, 1], [], []>} : vector<32x16xbf16>, vector<16x128xbf16>, vector<32x128xf32> -> vector<32x128xf32>
    %cst_131 = arith.constant 0.000000e+00 : f32
    %258 = vector.broadcast %cst_131 : f32 to vector<32x128xf32>
    %259 = arith.subf %258, %257 : vector<32x128xf32>
    %260 = math.exp %259 : vector<32x128xf32>
    %cst_132 = arith.constant 1.000000e+00 : f32
    %261 = vector.broadcast %cst_132 : f32 to vector<32x128xf32>
    %262 = arith.addf %261, %260 : vector<32x128xf32>
    %263 = tpu.reciprocal %262 {approx = true} : vector<32x128xf32> -> vector<32x128xf32>
    %264 = arith.mulf %257, %263 : vector<32x128xf32>
    %cst_133 = arith.constant dense<0.000000e+00> : vector<32x128xf32>
    %265 = tpu.matmul %231, %159, %cst_133 {dimension_numbers = #tpu.dot_dimension_numbers<[1], [0], [0], [1], [0, 0, 1, 1], [], []>} : vector<32x20xbf16>, vector<20x128xbf16>, vector<32x128xf32> -> vector<32x128xf32>
    %cst_134 = arith.constant dense<0.000000e+00> : vector<32x128xf32>
    %266 = tpu.matmul %264, %88, %cst_134 {dimension_numbers = #tpu.dot_dimension_numbers<[1], [0], [0], [1], [0, 0, 1, 1], [], []>} : vector<32x128xf32>, vector<128x128xf32>, vector<32x128xf32> -> vector<32x128xf32>
    %267 = arith.mulf %266, %265 : vector<32x128xf32>
    %cst_135 = arith.constant dense<0.000000e+00> : vector<32x128xf32>
    %268 = tpu.matmul %267, %160, %cst_135 {dimension_numbers = #tpu.dot_dimension_numbers<[1], [0], [0], [1], [0, 0, 1, 1], [], []>} : vector<32x128xf32>, vector<128x128xf32>, vector<32x128xf32> -> vector<32x128xf32>
    %269 = arith.truncf %268 : vector<32x128xf32> to vector<32x128xbf16>
    %cst_136 = arith.constant dense<0.000000e+00> : vector<16x128xf32>
    %270 = tpu.matmul %233, %269, %cst_136 {dimension_numbers = #tpu.dot_dimension_numbers<[1], [0], [0], [1], [0, 0, 1, 1], [], []>} : vector<16x32xbf16>, vector<32x128xbf16>, vector<16x128xf32> -> vector<16x128xf32>
    %cst_137 = arith.constant 0.000000e+00 : f32
    %271 = vector.broadcast %cst_137 : f32 to vector<16x128xf32>
    %272 = arith.subf %271, %270 : vector<16x128xf32>
    %273 = math.exp %272 : vector<16x128xf32>
    %cst_138 = arith.constant 1.000000e+00 : f32
    %274 = vector.broadcast %cst_138 : f32 to vector<16x128xf32>
    %275 = arith.addf %274, %273 : vector<16x128xf32>
    %276 = tpu.reciprocal %275 {approx = true} : vector<16x128xf32> -> vector<16x128xf32>
    %277 = arith.mulf %270, %276 : vector<16x128xf32>
    %278 = arith.addf %245, %277 : vector<16x128xf32>
    %c0_139 = arith.constant 0 : index
    %c0_140 = arith.constant 0 : index
    %279 = vector.load %arg29[%c0_139, %c0_140] : memref<16x16xbf16, #tpu.memory_space<vmem>>, vector<16x16xbf16>
    %c0_141 = arith.constant 0 : index
    %c0_142 = arith.constant 0 : index
    %280 = vector.load %arg30[%c0_141, %c0_142] : memref<16x1xf32, #tpu.memory_space<vmem>>, vector<16x1xf32>
    %c0_143 = arith.constant 0 : index
    %c0_144 = arith.constant 0 : index
    %281 = vector.load %arg31[%c0_143, %c0_144] : memref<16x16xbf16, #tpu.memory_space<vmem>>, vector<16x16xbf16>
    %c0_145 = arith.constant 0 : index
    %c0_146 = arith.constant 0 : index
    %282 = vector.load %arg32[%c0_145, %c0_146] : memref<16x1xf32, #tpu.memory_space<vmem>>, vector<16x1xf32>
    %283 = arith.truncf %278 : vector<16x128xf32> to vector<16x128xbf16>
    %cst_147 = arith.constant dense<0.000000e+00> : vector<16x128xf32>
    %284 = tpu.matmul %279, %283, %cst_147 {dimension_numbers = #tpu.dot_dimension_numbers<[1], [0], [0], [1], [0, 0, 1, 1], [], []>} : vector<16x16xbf16>, vector<16x128xbf16>, vector<16x128xf32> -> vector<16x128xf32>
    %285 = vector.broadcast %280 : vector<16x1xf32> to vector<16x128xf32>
    %286 = arith.addf %284, %285 : vector<16x128xf32>
    %cst_148 = arith.constant 0.000000e+00 : f32
    %287 = vector.broadcast %cst_148 : f32 to vector<16x128xf32>
    %288 = arith.subf %287, %286 : vector<16x128xf32>
    %289 = math.exp %288 : vector<16x128xf32>
    %cst_149 = arith.constant 1.000000e+00 : f32
    %290 = vector.broadcast %cst_149 : f32 to vector<16x128xf32>
    %291 = arith.addf %290, %289 : vector<16x128xf32>
    %292 = tpu.reciprocal %291 {approx = true} : vector<16x128xf32> -> vector<16x128xf32>
    %293 = arith.mulf %286, %292 : vector<16x128xf32>
    %294 = arith.truncf %293 : vector<16x128xf32> to vector<16x128xbf16>
    %cst_150 = arith.constant dense<0.000000e+00> : vector<16x128xf32>
    %295 = tpu.matmul %281, %294, %cst_150 {dimension_numbers = #tpu.dot_dimension_numbers<[1], [0], [0], [1], [0, 0, 1, 1], [], []>} : vector<16x16xbf16>, vector<16x128xbf16>, vector<16x128xf32> -> vector<16x128xf32>
    %296 = vector.broadcast %282 : vector<16x1xf32> to vector<16x128xf32>
    %297 = arith.addf %295, %296 : vector<16x128xf32>
    %cst_151 = arith.constant 0.000000e+00 : f32
    %298 = vector.broadcast %cst_151 : f32 to vector<16x128xf32>
    %299 = arith.subf %298, %297 : vector<16x128xf32>
    %300 = math.exp %299 : vector<16x128xf32>
    %cst_152 = arith.constant 1.000000e+00 : f32
    %301 = vector.broadcast %cst_152 : f32 to vector<16x128xf32>
    %302 = arith.addf %301, %300 : vector<16x128xf32>
    %303 = tpu.reciprocal %302 {approx = true} : vector<16x128xf32> -> vector<16x128xf32>
    %304 = arith.mulf %297, %303 : vector<16x128xf32>
    %305 = arith.addf %278, %304 : vector<16x128xf32>
    %c0_153 = arith.constant 0 : index
    %c0_154 = arith.constant 0 : index
    %306 = vector.load %arg33[%c0_153, %c0_154] : memref<16x16xbf16, #tpu.memory_space<vmem>>, vector<16x16xbf16>
    %c0_155 = arith.constant 0 : index
    %c0_156 = arith.constant 0 : index
    %307 = vector.load %arg34[%c0_155, %c0_156] : memref<16x1xf32, #tpu.memory_space<vmem>>, vector<16x1xf32>
    %308 = arith.truncf %305 : vector<16x128xf32> to vector<16x128xbf16>
    %cst_157 = arith.constant dense<0.000000e+00> : vector<16x128xf32>
    %309 = tpu.matmul %306, %308, %cst_157 {dimension_numbers = #tpu.dot_dimension_numbers<[1], [0], [0], [1], [0, 0, 1, 1], [], []>} : vector<16x16xbf16>, vector<16x128xbf16>, vector<16x128xf32> -> vector<16x128xf32>
    %310 = vector.broadcast %307 : vector<16x1xf32> to vector<16x128xf32>
    %311 = arith.addf %309, %310 : vector<16x128xf32>
    %cst_158 = arith.constant 0.000000e+00 : f32
    %312 = vector.broadcast %cst_158 : f32 to vector<16x128xf32>
    %313 = arith.subf %312, %311 : vector<16x128xf32>
    %314 = math.exp %313 : vector<16x128xf32>
    %cst_159 = arith.constant 1.000000e+00 : f32
    %315 = vector.broadcast %cst_159 : f32 to vector<16x128xf32>
    %316 = arith.addf %315, %314 : vector<16x128xf32>
    %317 = tpu.reciprocal %316 {approx = true} : vector<16x128xf32> -> vector<16x128xf32>
    %318 = arith.mulf %311, %317 : vector<16x128xf32>
    %319 = arith.addf %318, %191 : vector<16x128xf32>
    %c0_160 = arith.constant 0 : index
    %c0_161 = arith.constant 0 : index
    %320 = vector.load %arg35[%c0_160, %c0_161] : memref<16x16xbf16, #tpu.memory_space<vmem>>, vector<16x16xbf16>
    %c0_162 = arith.constant 0 : index
    %c0_163 = arith.constant 0 : index
    %321 = vector.load %arg36[%c0_162, %c0_163] : memref<16x1xf32, #tpu.memory_space<vmem>>, vector<16x1xf32>
    %c0_164 = arith.constant 0 : index
    %c0_165 = arith.constant 0 : index
    %322 = vector.load %arg37[%c0_164, %c0_165] : memref<16x16xbf16, #tpu.memory_space<vmem>>, vector<16x16xbf16>
    %c0_166 = arith.constant 0 : index
    %c0_167 = arith.constant 0 : index
    %323 = vector.load %arg38[%c0_166, %c0_167] : memref<16x1xf32, #tpu.memory_space<vmem>>, vector<16x1xf32>
    %324 = arith.truncf %319 : vector<16x128xf32> to vector<16x128xbf16>
    %cst_168 = arith.constant dense<0.000000e+00> : vector<16x128xf32>
    %325 = tpu.matmul %320, %324, %cst_168 {dimension_numbers = #tpu.dot_dimension_numbers<[1], [0], [0], [1], [0, 0, 1, 1], [], []>} : vector<16x16xbf16>, vector<16x128xbf16>, vector<16x128xf32> -> vector<16x128xf32>
    %326 = vector.broadcast %321 : vector<16x1xf32> to vector<16x128xf32>
    %327 = arith.addf %325, %326 : vector<16x128xf32>
    %cst_169 = arith.constant 0.000000e+00 : f32
    %328 = vector.broadcast %cst_169 : f32 to vector<16x128xf32>
    %329 = arith.subf %328, %327 : vector<16x128xf32>
    %330 = math.exp %329 : vector<16x128xf32>
    %cst_170 = arith.constant 1.000000e+00 : f32
    %331 = vector.broadcast %cst_170 : f32 to vector<16x128xf32>
    %332 = arith.addf %331, %330 : vector<16x128xf32>
    %333 = tpu.reciprocal %332 {approx = true} : vector<16x128xf32> -> vector<16x128xf32>
    %334 = arith.mulf %327, %333 : vector<16x128xf32>
    %335 = arith.truncf %334 : vector<16x128xf32> to vector<16x128xbf16>
    %cst_171 = arith.constant dense<0.000000e+00> : vector<16x128xf32>
    %336 = tpu.matmul %322, %335, %cst_171 {dimension_numbers = #tpu.dot_dimension_numbers<[1], [0], [0], [1], [0, 0, 1, 1], [], []>} : vector<16x16xbf16>, vector<16x128xbf16>, vector<16x128xf32> -> vector<16x128xf32>
    %337 = vector.broadcast %323 : vector<16x1xf32> to vector<16x128xf32>
    %338 = arith.addf %336, %337 : vector<16x128xf32>
    %cst_172 = arith.constant 0.000000e+00 : f32
    %339 = vector.broadcast %cst_172 : f32 to vector<16x128xf32>
    %340 = arith.subf %339, %338 : vector<16x128xf32>
    %341 = math.exp %340 : vector<16x128xf32>
    %cst_173 = arith.constant 1.000000e+00 : f32
    %342 = vector.broadcast %cst_173 : f32 to vector<16x128xf32>
    %343 = arith.addf %342, %341 : vector<16x128xf32>
    %344 = tpu.reciprocal %343 {approx = true} : vector<16x128xf32> -> vector<16x128xf32>
    %345 = arith.mulf %338, %344 : vector<16x128xf32>
    %346 = arith.addf %319, %345 : vector<16x128xf32>
    %c0_174 = arith.constant 0 : index
    %c0_175 = arith.constant 0 : index
    %347 = vector.load %arg39[%c0_174, %c0_175] : memref<16x4xbf16, #tpu.memory_space<vmem>>, vector<16x4xbf16>
    %c0_176 = arith.constant 0 : index
    %c0_177 = arith.constant 0 : index
    %348 = vector.load %arg40[%c0_176, %c0_177] : memref<32x16xbf16, #tpu.memory_space<vmem>>, vector<32x16xbf16>
    %cst_178 = arith.constant dense<0.000000e+00> : vector<16x128xf32>
    %349 = tpu.matmul %347, %158, %cst_178 {dimension_numbers = #tpu.dot_dimension_numbers<[1], [0], [0], [1], [0, 0, 1, 1], [], []>} : vector<16x4xbf16>, vector<4x128xbf16>, vector<16x128xf32> -> vector<16x128xf32>
    %350 = arith.mulf %349, %346 : vector<16x128xf32>
    %cst_179 = arith.constant dense<0.000000e+00> : vector<16x128xf32>
    %351 = tpu.matmul %350, %161, %cst_179 {dimension_numbers = #tpu.dot_dimension_numbers<[1], [0], [0], [1], [0, 0, 1, 1], [], []>} : vector<16x128xf32>, vector<128x128xf32>, vector<16x128xf32> -> vector<16x128xf32>
    %352 = arith.truncf %351 : vector<16x128xf32> to vector<16x128xbf16>
    %cst_180 = arith.constant dense<0.000000e+00> : vector<32x128xf32>
    %353 = tpu.matmul %348, %352, %cst_180 {dimension_numbers = #tpu.dot_dimension_numbers<[1], [0], [0], [1], [0, 0, 1, 1], [], []>} : vector<32x16xbf16>, vector<16x128xbf16>, vector<32x128xf32> -> vector<32x128xf32>
    %c0_181 = arith.constant 0 : index
    %c0_182 = arith.constant 0 : index
    %354 = vector.load %arg41[%c0_181, %c0_182] : memref<32x32xbf16, #tpu.memory_space<vmem>>, vector<32x32xbf16>
    %c0_183 = arith.constant 0 : index
    %c0_184 = arith.constant 0 : index
    %355 = vector.load %arg42[%c0_183, %c0_184] : memref<32x1xf32, #tpu.memory_space<vmem>>, vector<32x1xf32>
    %356 = arith.truncf %353 : vector<32x128xf32> to vector<32x128xbf16>
    %cst_185 = arith.constant dense<0.000000e+00> : vector<32x128xf32>
    %357 = tpu.matmul %354, %356, %cst_185 {dimension_numbers = #tpu.dot_dimension_numbers<[1], [0], [0], [1], [0, 0, 1, 1], [], []>} : vector<32x32xbf16>, vector<32x128xbf16>, vector<32x128xf32> -> vector<32x128xf32>
    %358 = vector.broadcast %355 : vector<32x1xf32> to vector<32x128xf32>
    %359 = arith.addf %357, %358 : vector<32x128xf32>
    %cst_186 = arith.constant 0.000000e+00 : f32
    %360 = vector.broadcast %cst_186 : f32 to vector<32x128xf32>
    %361 = arith.subf %360, %359 : vector<32x128xf32>
    %362 = math.exp %361 : vector<32x128xf32>
    %cst_187 = arith.constant 1.000000e+00 : f32
    %363 = vector.broadcast %cst_187 : f32 to vector<32x128xf32>
    %364 = arith.addf %363, %362 : vector<32x128xf32>
    %365 = tpu.reciprocal %364 {approx = true} : vector<32x128xf32> -> vector<32x128xf32>
    %366 = arith.mulf %359, %365 : vector<32x128xf32>
    %c0_188 = arith.constant 0 : index
    %c0_189 = arith.constant 0 : index
    %367 = vector.load %arg43[%c0_188, %c0_189] : memref<32x32xbf16, #tpu.memory_space<vmem>>, vector<32x32xbf16>
    %c0_190 = arith.constant 0 : index
    %c0_191 = arith.constant 0 : index
    %368 = vector.load %arg44[%c0_190, %c0_191] : memref<32x1xf32, #tpu.memory_space<vmem>>, vector<32x1xf32>
    %369 = arith.truncf %366 : vector<32x128xf32> to vector<32x128xbf16>
    %cst_192 = arith.constant dense<0.000000e+00> : vector<32x128xf32>
    %370 = tpu.matmul %367, %369, %cst_192 {dimension_numbers = #tpu.dot_dimension_numbers<[1], [0], [0], [1], [0, 0, 1, 1], [], []>} : vector<32x32xbf16>, vector<32x128xbf16>, vector<32x128xf32> -> vector<32x128xf32>
    %371 = vector.broadcast %368 : vector<32x1xf32> to vector<32x128xf32>
    %372 = arith.addf %370, %371 : vector<32x128xf32>
    %cst_193 = arith.constant 0.000000e+00 : f32
    %373 = vector.broadcast %cst_193 : f32 to vector<32x128xf32>
    %374 = arith.subf %373, %372 : vector<32x128xf32>
    %375 = math.exp %374 : vector<32x128xf32>
    %cst_194 = arith.constant 1.000000e+00 : f32
    %376 = vector.broadcast %cst_194 : f32 to vector<32x128xf32>
    %377 = arith.addf %376, %375 : vector<32x128xf32>
    %378 = tpu.reciprocal %377 {approx = true} : vector<32x128xf32> -> vector<32x128xf32>
    %379 = arith.mulf %372, %378 : vector<32x128xf32>
    %c0_195 = arith.constant 0 : index
    %c0_196 = arith.constant 0 : index
    %380 = vector.load %arg45[%c0_195, %c0_196] : memref<16x32xbf16, #tpu.memory_space<vmem>>, vector<16x32xbf16>
    %381 = arith.truncf %379 : vector<32x128xf32> to vector<32x128xbf16>
    %cst_197 = arith.constant dense<0.000000e+00> : vector<16x128xf32>
    %382 = tpu.matmul %380, %381, %cst_197 {dimension_numbers = #tpu.dot_dimension_numbers<[1], [0], [0], [1], [0, 0, 1, 1], [], []>} : vector<16x32xbf16>, vector<32x128xbf16>, vector<16x128xf32> -> vector<16x128xf32>
    %383 = arith.addf %227, %382 : vector<16x128xf32>
    %c0_198 = arith.constant 0 : index
    %c0_199 = arith.constant 0 : index
    %384 = vector.load %arg46[%c0_198, %c0_199] : memref<32x16xbf16, #tpu.memory_space<vmem>>, vector<32x16xbf16>
    %c0_200 = arith.constant 0 : index
    %c0_201 = arith.constant 0 : index
    %385 = vector.load %arg47[%c0_200, %c0_201] : memref<32x1xf32, #tpu.memory_space<vmem>>, vector<32x1xf32>
    %c0_202 = arith.constant 0 : index
    %c0_203 = arith.constant 0 : index
    %386 = vector.load %arg48[%c0_202, %c0_203] : memref<16x4xbf16, #tpu.memory_space<vmem>>, vector<16x4xbf16>
    %c0_204 = arith.constant 0 : index
    %c0_205 = arith.constant 0 : index
    %387 = vector.load %arg49[%c0_204, %c0_205] : memref<32x20xbf16, #tpu.memory_space<vmem>>, vector<32x20xbf16>
    %c0_206 = arith.constant 0 : index
    %c0_207 = arith.constant 0 : index
    %388 = vector.load %arg50[%c0_206, %c0_207] : memref<32x16xbf16, #tpu.memory_space<vmem>>, vector<32x16xbf16>
    %c0_208 = arith.constant 0 : index
    %c0_209 = arith.constant 0 : index
    %389 = vector.load %arg51[%c0_208, %c0_209] : memref<16x32xbf16, #tpu.memory_space<vmem>>, vector<16x32xbf16>
    %390 = arith.truncf %346 : vector<16x128xf32> to vector<16x128xbf16>
    %cst_210 = arith.constant dense<0.000000e+00> : vector<32x128xf32>
    %391 = tpu.matmul %384, %390, %cst_210 {dimension_numbers = #tpu.dot_dimension_numbers<[1], [0], [0], [1], [0, 0, 1, 1], [], []>} : vector<32x16xbf16>, vector<16x128xbf16>, vector<32x128xf32> -> vector<32x128xf32>
    %392 = vector.broadcast %385 : vector<32x1xf32> to vector<32x128xf32>
    %393 = arith.addf %391, %392 : vector<32x128xf32>
    %394 = vector.extract_strided_slice %393 {offsets = [0, 0], sizes = [16, 128], strides = [1, 1]} : vector<32x128xf32> to vector<16x128xf32>
    %cst_211 = arith.constant 0.000000e+00 : f32
    %395 = vector.broadcast %cst_211 : f32 to vector<16x128xf32>
    %396 = arith.subf %395, %394 : vector<16x128xf32>
    %397 = math.exp %396 : vector<16x128xf32>
    %cst_212 = arith.constant 1.000000e+00 : f32
    %398 = vector.broadcast %cst_212 : f32 to vector<16x128xf32>
    %399 = arith.addf %398, %397 : vector<16x128xf32>
    %400 = tpu.reciprocal %399 {approx = true} : vector<16x128xf32> -> vector<16x128xf32>
    %401 = arith.mulf %394, %400 : vector<16x128xf32>
    %402 = vector.extract_strided_slice %393 {offsets = [16, 0], sizes = [16, 128], strides = [1, 1]} : vector<32x128xf32> to vector<16x128xf32>
    %cst_213 = arith.constant 0.000000e+00 : f32
    %403 = vector.broadcast %cst_213 : f32 to vector<16x128xf32>
    %404 = arith.subf %403, %402 : vector<16x128xf32>
    %405 = math.exp %404 : vector<16x128xf32>
    %cst_214 = arith.constant 1.000000e+00 : f32
    %406 = vector.broadcast %cst_214 : f32 to vector<16x128xf32>
    %407 = arith.addf %406, %405 : vector<16x128xf32>
    %408 = tpu.reciprocal %407 {approx = true} : vector<16x128xf32> -> vector<16x128xf32>
    %409 = arith.mulf %402, %408 : vector<16x128xf32>
    %cst_215 = arith.constant dense<0.000000e+00> : vector<16x128xf32>
    %410 = tpu.matmul %386, %158, %cst_215 {dimension_numbers = #tpu.dot_dimension_numbers<[1], [0], [0], [1], [0, 0, 1, 1], [], []>} : vector<16x4xbf16>, vector<4x128xbf16>, vector<16x128xf32> -> vector<16x128xf32>
    %411 = arith.mulf %409, %410 : vector<16x128xf32>
    %412 = arith.truncf %411 : vector<16x128xf32> to vector<16x128xbf16>
    %cst_216 = arith.constant dense<0.000000e+00> : vector<32x128xf32>
    %413 = tpu.matmul %388, %412, %cst_216 {dimension_numbers = #tpu.dot_dimension_numbers<[1], [0], [0], [1], [0, 0, 1, 1], [], []>} : vector<32x16xbf16>, vector<16x128xbf16>, vector<32x128xf32> -> vector<32x128xf32>
    %cst_217 = arith.constant 0.000000e+00 : f32
    %414 = vector.broadcast %cst_217 : f32 to vector<32x128xf32>
    %415 = arith.subf %414, %413 : vector<32x128xf32>
    %416 = math.exp %415 : vector<32x128xf32>
    %cst_218 = arith.constant 1.000000e+00 : f32
    %417 = vector.broadcast %cst_218 : f32 to vector<32x128xf32>
    %418 = arith.addf %417, %416 : vector<32x128xf32>
    %419 = tpu.reciprocal %418 {approx = true} : vector<32x128xf32> -> vector<32x128xf32>
    %420 = arith.mulf %413, %419 : vector<32x128xf32>
    %cst_219 = arith.constant dense<0.000000e+00> : vector<32x128xf32>
    %421 = tpu.matmul %387, %159, %cst_219 {dimension_numbers = #tpu.dot_dimension_numbers<[1], [0], [0], [1], [0, 0, 1, 1], [], []>} : vector<32x20xbf16>, vector<20x128xbf16>, vector<32x128xf32> -> vector<32x128xf32>
    %cst_220 = arith.constant dense<0.000000e+00> : vector<32x128xf32>
    %422 = tpu.matmul %420, %88, %cst_220 {dimension_numbers = #tpu.dot_dimension_numbers<[1], [0], [0], [1], [0, 0, 1, 1], [], []>} : vector<32x128xf32>, vector<128x128xf32>, vector<32x128xf32> -> vector<32x128xf32>
    %423 = arith.mulf %422, %421 : vector<32x128xf32>
    %cst_221 = arith.constant dense<0.000000e+00> : vector<32x128xf32>
    %424 = tpu.matmul %423, %160, %cst_221 {dimension_numbers = #tpu.dot_dimension_numbers<[1], [0], [0], [1], [0, 0, 1, 1], [], []>} : vector<32x128xf32>, vector<128x128xf32>, vector<32x128xf32> -> vector<32x128xf32>
    %425 = arith.truncf %424 : vector<32x128xf32> to vector<32x128xbf16>
    %cst_222 = arith.constant dense<0.000000e+00> : vector<16x128xf32>
    %426 = tpu.matmul %389, %425, %cst_222 {dimension_numbers = #tpu.dot_dimension_numbers<[1], [0], [0], [1], [0, 0, 1, 1], [], []>} : vector<16x32xbf16>, vector<32x128xbf16>, vector<16x128xf32> -> vector<16x128xf32>
    %cst_223 = arith.constant 0.000000e+00 : f32
    %427 = vector.broadcast %cst_223 : f32 to vector<16x128xf32>
    %428 = arith.subf %427, %426 : vector<16x128xf32>
    %429 = math.exp %428 : vector<16x128xf32>
    %cst_224 = arith.constant 1.000000e+00 : f32
    %430 = vector.broadcast %cst_224 : f32 to vector<16x128xf32>
    %431 = arith.addf %430, %429 : vector<16x128xf32>
    %432 = tpu.reciprocal %431 {approx = true} : vector<16x128xf32> -> vector<16x128xf32>
    %433 = arith.mulf %426, %432 : vector<16x128xf32>
    %434 = arith.addf %401, %433 : vector<16x128xf32>
    %c0_225 = arith.constant 0 : index
    %c0_226 = arith.constant 0 : index
    %435 = vector.load %arg52[%c0_225, %c0_226] : memref<16x16xbf16, #tpu.memory_space<vmem>>, vector<16x16xbf16>
    %c0_227 = arith.constant 0 : index
    %c0_228 = arith.constant 0 : index
    %436 = vector.load %arg53[%c0_227, %c0_228] : memref<16x1xf32, #tpu.memory_space<vmem>>, vector<16x1xf32>
    %c0_229 = arith.constant 0 : index
    %c0_230 = arith.constant 0 : index
    %437 = vector.load %arg54[%c0_229, %c0_230] : memref<16x16xbf16, #tpu.memory_space<vmem>>, vector<16x16xbf16>
    %c0_231 = arith.constant 0 : index
    %c0_232 = arith.constant 0 : index
    %438 = vector.load %arg55[%c0_231, %c0_232] : memref<16x1xf32, #tpu.memory_space<vmem>>, vector<16x1xf32>
    %439 = arith.truncf %434 : vector<16x128xf32> to vector<16x128xbf16>
    %cst_233 = arith.constant dense<0.000000e+00> : vector<16x128xf32>
    %440 = tpu.matmul %435, %439, %cst_233 {dimension_numbers = #tpu.dot_dimension_numbers<[1], [0], [0], [1], [0, 0, 1, 1], [], []>} : vector<16x16xbf16>, vector<16x128xbf16>, vector<16x128xf32> -> vector<16x128xf32>
    %441 = vector.broadcast %436 : vector<16x1xf32> to vector<16x128xf32>
    %442 = arith.addf %440, %441 : vector<16x128xf32>
    %cst_234 = arith.constant 0.000000e+00 : f32
    %443 = vector.broadcast %cst_234 : f32 to vector<16x128xf32>
    %444 = arith.subf %443, %442 : vector<16x128xf32>
    %445 = math.exp %444 : vector<16x128xf32>
    %cst_235 = arith.constant 1.000000e+00 : f32
    %446 = vector.broadcast %cst_235 : f32 to vector<16x128xf32>
    %447 = arith.addf %446, %445 : vector<16x128xf32>
    %448 = tpu.reciprocal %447 {approx = true} : vector<16x128xf32> -> vector<16x128xf32>
    %449 = arith.mulf %442, %448 : vector<16x128xf32>
    %450 = arith.truncf %449 : vector<16x128xf32> to vector<16x128xbf16>
    %cst_236 = arith.constant dense<0.000000e+00> : vector<16x128xf32>
    %451 = tpu.matmul %437, %450, %cst_236 {dimension_numbers = #tpu.dot_dimension_numbers<[1], [0], [0], [1], [0, 0, 1, 1], [], []>} : vector<16x16xbf16>, vector<16x128xbf16>, vector<16x128xf32> -> vector<16x128xf32>
    %452 = vector.broadcast %438 : vector<16x1xf32> to vector<16x128xf32>
    %453 = arith.addf %451, %452 : vector<16x128xf32>
    %cst_237 = arith.constant 0.000000e+00 : f32
    %454 = vector.broadcast %cst_237 : f32 to vector<16x128xf32>
    %455 = arith.subf %454, %453 : vector<16x128xf32>
    %456 = math.exp %455 : vector<16x128xf32>
    %cst_238 = arith.constant 1.000000e+00 : f32
    %457 = vector.broadcast %cst_238 : f32 to vector<16x128xf32>
    %458 = arith.addf %457, %456 : vector<16x128xf32>
    %459 = tpu.reciprocal %458 {approx = true} : vector<16x128xf32> -> vector<16x128xf32>
    %460 = arith.mulf %453, %459 : vector<16x128xf32>
    %461 = arith.addf %434, %460 : vector<16x128xf32>
    %c0_239 = arith.constant 0 : index
    %c0_240 = arith.constant 0 : index
    %462 = vector.load %arg56[%c0_239, %c0_240] : memref<16x16xbf16, #tpu.memory_space<vmem>>, vector<16x16xbf16>
    %c0_241 = arith.constant 0 : index
    %c0_242 = arith.constant 0 : index
    %463 = vector.load %arg57[%c0_241, %c0_242] : memref<16x1xf32, #tpu.memory_space<vmem>>, vector<16x1xf32>
    %464 = arith.truncf %461 : vector<16x128xf32> to vector<16x128xbf16>
    %cst_243 = arith.constant dense<0.000000e+00> : vector<16x128xf32>
    %465 = tpu.matmul %462, %464, %cst_243 {dimension_numbers = #tpu.dot_dimension_numbers<[1], [0], [0], [1], [0, 0, 1, 1], [], []>} : vector<16x16xbf16>, vector<16x128xbf16>, vector<16x128xf32> -> vector<16x128xf32>
    %466 = vector.broadcast %463 : vector<16x1xf32> to vector<16x128xf32>
    %467 = arith.addf %465, %466 : vector<16x128xf32>
    %cst_244 = arith.constant 0.000000e+00 : f32
    %468 = vector.broadcast %cst_244 : f32 to vector<16x128xf32>
    %469 = arith.subf %468, %467 : vector<16x128xf32>
    %470 = math.exp %469 : vector<16x128xf32>
    %cst_245 = arith.constant 1.000000e+00 : f32
    %471 = vector.broadcast %cst_245 : f32 to vector<16x128xf32>
    %472 = arith.addf %471, %470 : vector<16x128xf32>
    %473 = tpu.reciprocal %472 {approx = true} : vector<16x128xf32> -> vector<16x128xf32>
    %474 = arith.mulf %467, %473 : vector<16x128xf32>
    %475 = arith.addf %474, %346 : vector<16x128xf32>
    %c0_246 = arith.constant 0 : index
    %c0_247 = arith.constant 0 : index
    %476 = vector.load %arg58[%c0_246, %c0_247] : memref<16x16xbf16, #tpu.memory_space<vmem>>, vector<16x16xbf16>
    %c0_248 = arith.constant 0 : index
    %c0_249 = arith.constant 0 : index
    %477 = vector.load %arg59[%c0_248, %c0_249] : memref<16x1xf32, #tpu.memory_space<vmem>>, vector<16x1xf32>
    %c0_250 = arith.constant 0 : index
    %c0_251 = arith.constant 0 : index
    %478 = vector.load %arg60[%c0_250, %c0_251] : memref<16x16xbf16, #tpu.memory_space<vmem>>, vector<16x16xbf16>
    %c0_252 = arith.constant 0 : index
    %c0_253 = arith.constant 0 : index
    %479 = vector.load %arg61[%c0_252, %c0_253] : memref<16x1xf32, #tpu.memory_space<vmem>>, vector<16x1xf32>
    %480 = arith.truncf %475 : vector<16x128xf32> to vector<16x128xbf16>
    %cst_254 = arith.constant dense<0.000000e+00> : vector<16x128xf32>
    %481 = tpu.matmul %476, %480, %cst_254 {dimension_numbers = #tpu.dot_dimension_numbers<[1], [0], [0], [1], [0, 0, 1, 1], [], []>} : vector<16x16xbf16>, vector<16x128xbf16>, vector<16x128xf32> -> vector<16x128xf32>
    %482 = vector.broadcast %477 : vector<16x1xf32> to vector<16x128xf32>
    %483 = arith.addf %481, %482 : vector<16x128xf32>
    %cst_255 = arith.constant 0.000000e+00 : f32
    %484 = vector.broadcast %cst_255 : f32 to vector<16x128xf32>
    %485 = arith.subf %484, %483 : vector<16x128xf32>
    %486 = math.exp %485 : vector<16x128xf32>
    %cst_256 = arith.constant 1.000000e+00 : f32
    %487 = vector.broadcast %cst_256 : f32 to vector<16x128xf32>
    %488 = arith.addf %487, %486 : vector<16x128xf32>
    %489 = tpu.reciprocal %488 {approx = true} : vector<16x128xf32> -> vector<16x128xf32>
    %490 = arith.mulf %483, %489 : vector<16x128xf32>
    %491 = arith.truncf %490 : vector<16x128xf32> to vector<16x128xbf16>
    %cst_257 = arith.constant dense<0.000000e+00> : vector<16x128xf32>
    %492 = tpu.matmul %478, %491, %cst_257 {dimension_numbers = #tpu.dot_dimension_numbers<[1], [0], [0], [1], [0, 0, 1, 1], [], []>} : vector<16x16xbf16>, vector<16x128xbf16>, vector<16x128xf32> -> vector<16x128xf32>
    %493 = vector.broadcast %479 : vector<16x1xf32> to vector<16x128xf32>
    %494 = arith.addf %492, %493 : vector<16x128xf32>
    %cst_258 = arith.constant 0.000000e+00 : f32
    %495 = vector.broadcast %cst_258 : f32 to vector<16x128xf32>
    %496 = arith.subf %495, %494 : vector<16x128xf32>
    %497 = math.exp %496 : vector<16x128xf32>
    %cst_259 = arith.constant 1.000000e+00 : f32
    %498 = vector.broadcast %cst_259 : f32 to vector<16x128xf32>
    %499 = arith.addf %498, %497 : vector<16x128xf32>
    %500 = tpu.reciprocal %499 {approx = true} : vector<16x128xf32> -> vector<16x128xf32>
    %501 = arith.mulf %494, %500 : vector<16x128xf32>
    %502 = arith.addf %475, %501 : vector<16x128xf32>
    %c0_260 = arith.constant 0 : index
    %c0_261 = arith.constant 0 : index
    %503 = vector.load %arg62[%c0_260, %c0_261] : memref<16x4xbf16, #tpu.memory_space<vmem>>, vector<16x4xbf16>
    %c0_262 = arith.constant 0 : index
    %c0_263 = arith.constant 0 : index
    %504 = vector.load %arg63[%c0_262, %c0_263] : memref<32x16xbf16, #tpu.memory_space<vmem>>, vector<32x16xbf16>
    %cst_264 = arith.constant dense<0.000000e+00> : vector<16x128xf32>
    %505 = tpu.matmul %503, %158, %cst_264 {dimension_numbers = #tpu.dot_dimension_numbers<[1], [0], [0], [1], [0, 0, 1, 1], [], []>} : vector<16x4xbf16>, vector<4x128xbf16>, vector<16x128xf32> -> vector<16x128xf32>
    %506 = arith.mulf %505, %502 : vector<16x128xf32>
    %cst_265 = arith.constant dense<0.000000e+00> : vector<16x128xf32>
    %507 = tpu.matmul %506, %161, %cst_265 {dimension_numbers = #tpu.dot_dimension_numbers<[1], [0], [0], [1], [0, 0, 1, 1], [], []>} : vector<16x128xf32>, vector<128x128xf32>, vector<16x128xf32> -> vector<16x128xf32>
    %508 = arith.truncf %507 : vector<16x128xf32> to vector<16x128xbf16>
    %cst_266 = arith.constant dense<0.000000e+00> : vector<32x128xf32>
    %509 = tpu.matmul %504, %508, %cst_266 {dimension_numbers = #tpu.dot_dimension_numbers<[1], [0], [0], [1], [0, 0, 1, 1], [], []>} : vector<32x16xbf16>, vector<16x128xbf16>, vector<32x128xf32> -> vector<32x128xf32>
    %c0_267 = arith.constant 0 : index
    %c0_268 = arith.constant 0 : index
    %510 = vector.load %arg64[%c0_267, %c0_268] : memref<32x32xbf16, #tpu.memory_space<vmem>>, vector<32x32xbf16>
    %c0_269 = arith.constant 0 : index
    %c0_270 = arith.constant 0 : index
    %511 = vector.load %arg65[%c0_269, %c0_270] : memref<32x1xf32, #tpu.memory_space<vmem>>, vector<32x1xf32>
    %512 = arith.truncf %509 : vector<32x128xf32> to vector<32x128xbf16>
    %cst_271 = arith.constant dense<0.000000e+00> : vector<32x128xf32>
    %513 = tpu.matmul %510, %512, %cst_271 {dimension_numbers = #tpu.dot_dimension_numbers<[1], [0], [0], [1], [0, 0, 1, 1], [], []>} : vector<32x32xbf16>, vector<32x128xbf16>, vector<32x128xf32> -> vector<32x128xf32>
    %514 = vector.broadcast %511 : vector<32x1xf32> to vector<32x128xf32>
    %515 = arith.addf %513, %514 : vector<32x128xf32>
    %cst_272 = arith.constant 0.000000e+00 : f32
    %516 = vector.broadcast %cst_272 : f32 to vector<32x128xf32>
    %517 = arith.subf %516, %515 : vector<32x128xf32>
    %518 = math.exp %517 : vector<32x128xf32>
    %cst_273 = arith.constant 1.000000e+00 : f32
    %519 = vector.broadcast %cst_273 : f32 to vector<32x128xf32>
    %520 = arith.addf %519, %518 : vector<32x128xf32>
    %521 = tpu.reciprocal %520 {approx = true} : vector<32x128xf32> -> vector<32x128xf32>
    %522 = arith.mulf %515, %521 : vector<32x128xf32>
    %c0_274 = arith.constant 0 : index
    %c0_275 = arith.constant 0 : index
    %523 = vector.load %arg66[%c0_274, %c0_275] : memref<32x32xbf16, #tpu.memory_space<vmem>>, vector<32x32xbf16>
    %c0_276 = arith.constant 0 : index
    %c0_277 = arith.constant 0 : index
    %524 = vector.load %arg67[%c0_276, %c0_277] : memref<32x1xf32, #tpu.memory_space<vmem>>, vector<32x1xf32>
    %525 = arith.truncf %522 : vector<32x128xf32> to vector<32x128xbf16>
    %cst_278 = arith.constant dense<0.000000e+00> : vector<32x128xf32>
    %526 = tpu.matmul %523, %525, %cst_278 {dimension_numbers = #tpu.dot_dimension_numbers<[1], [0], [0], [1], [0, 0, 1, 1], [], []>} : vector<32x32xbf16>, vector<32x128xbf16>, vector<32x128xf32> -> vector<32x128xf32>
    %527 = vector.broadcast %524 : vector<32x1xf32> to vector<32x128xf32>
    %528 = arith.addf %526, %527 : vector<32x128xf32>
    %cst_279 = arith.constant 0.000000e+00 : f32
    %529 = vector.broadcast %cst_279 : f32 to vector<32x128xf32>
    %530 = arith.subf %529, %528 : vector<32x128xf32>
    %531 = math.exp %530 : vector<32x128xf32>
    %cst_280 = arith.constant 1.000000e+00 : f32
    %532 = vector.broadcast %cst_280 : f32 to vector<32x128xf32>
    %533 = arith.addf %532, %531 : vector<32x128xf32>
    %534 = tpu.reciprocal %533 {approx = true} : vector<32x128xf32> -> vector<32x128xf32>
    %535 = arith.mulf %528, %534 : vector<32x128xf32>
    %c0_281 = arith.constant 0 : index
    %c0_282 = arith.constant 0 : index
    %536 = vector.load %arg68[%c0_281, %c0_282] : memref<16x32xbf16, #tpu.memory_space<vmem>>, vector<16x32xbf16>
    %537 = arith.truncf %535 : vector<32x128xf32> to vector<32x128xbf16>
    %cst_283 = arith.constant dense<0.000000e+00> : vector<16x128xf32>
    %538 = tpu.matmul %536, %537, %cst_283 {dimension_numbers = #tpu.dot_dimension_numbers<[1], [0], [0], [1], [0, 0, 1, 1], [], []>} : vector<16x32xbf16>, vector<32x128xbf16>, vector<16x128xf32> -> vector<16x128xf32>
    %539 = arith.addf %383, %538 : vector<16x128xf32>
    %c0_284 = arith.constant 0 : index
    %c0_285 = arith.constant 0 : index
    %540 = vector.load %arg69[%c0_284, %c0_285] : memref<3x16xbf16, #tpu.memory_space<vmem>>, vector<3x16xbf16>
    %c0_286 = arith.constant 0 : index
    %c0_287 = arith.constant 0 : index
    %541 = vector.load %arg70[%c0_286, %c0_287] : memref<3x1xf32, #tpu.memory_space<vmem>>, vector<3x1xf32>
    %c0_288 = arith.constant 0 : index
    %c0_289 = arith.constant 0 : index
    %542 = vector.load %arg5[%c0_288, %c0_289] : memref<128x2xf32, #tpu.memory_space<vmem>>, vector<128x2xf32>
    %cst_290 = arith.constant dense<0.000000e+00> : vector<16x2xf32>
    %543 = tpu.matmul %539, %542, %cst_290 {dimension_numbers = #tpu.dot_dimension_numbers<[1], [0], [0], [1], [0, 0, 1, 1], [], []>} : vector<16x128xf32>, vector<128x2xf32>, vector<16x2xf32> -> vector<16x2xf32>
    %544 = arith.truncf %543 : vector<16x2xf32> to vector<16x2xbf16>
    %cst_291 = arith.constant dense<0.000000e+00> : vector<3x2xf32>
    %545 = tpu.matmul %540, %544, %cst_291 {dimension_numbers = #tpu.dot_dimension_numbers<[1], [0], [0], [1], [0, 0, 1, 1], [], []>} : vector<3x16xbf16>, vector<16x2xbf16>, vector<3x2xf32> -> vector<3x2xf32>
    %546 = vector.broadcast %541 : vector<3x1xf32> to vector<3x2xf32>
    %547 = arith.addf %545, %546 : vector<3x2xf32>
    %c0_292 = arith.constant 0 : index
    %c0_293 = arith.constant 0 : index
    %548 = vector.load %arg71[%c0_292, %c0_293] : memref<3x2xf32, #tpu.memory_space<vmem>>, vector<3x2xf32>
    tpu.vector_store %arg71[%c0_292, %c0_293], %547 {strides = array<i32>} : memref<3x2xf32, #tpu.memory_space<vmem>>, vector<3x2xf32>,
    return
  }
}

</mosaic_0001>

<llo_original>
// kernel: tpu_custom_call.1
$region0: #{tpu_custom_call.1}
  #allocation0 [shape = 'u32[]', space=smem, size = 0x4, offset = 0x4, fixed_abs, tag = 'smem constant byte address 0x4 - core index']
  #allocation1 [shape = 'u32[144,128]{1,0:T(1,128)}', space=vmem, size = 0x12000, scoped, tag = 'internal scratch']
  %s0 = inlined_call_operand.smem [shape: u32[72], index: -1, kind: input, shape index: {}]
  %s1 = sld [smem:[%s0]]
  %s2 = scalar_lea.smem %s0, 1
  %s3 = sld [smem:[%s2]]
  %s4 = scalar_lea.smem %s0, 2
  %s5 = sld [smem:[%s4]]
  %s6 = scalar_lea.smem %s0, 3
  %s7 = sld [smem:[%s6]]
  %s8 = scalar_lea.smem %s0, 4
  %s9 = sld [smem:[%s8]]
  %s10 = scalar_lea.smem %s0, 5
  %s11 = sld [smem:[%s10]]
  %s12 = scalar_lea.smem %s0, 6
  %s13 = sld [smem:[%s12]]
  %s14 = scalar_lea.smem %s0, 7
  %s15 = sld [smem:[%s14]]
  %s16 = scalar_lea.smem %s0, 8
  %s17 = sld [smem:[%s16]]
  %s18 = scalar_lea.smem %s0, 9
  %s19 = sld [smem:[%s18]]
  %s20 = scalar_lea.smem %s0, 10
  %s21 = sld [smem:[%s20]]
  %s22 = scalar_lea.smem %s0, 11
  %s23 = sld [smem:[%s22]]
  %s24 = scalar_lea.smem %s0, 12
  %s25 = sld [smem:[%s24]]
  %s26 = scalar_lea.smem %s0, 13
  %s27 = sld [smem:[%s26]]
  %s28 = scalar_lea.smem %s0, 14
  %s29 = sld [smem:[%s28]]
  %s30 = scalar_lea.smem %s0, 15
  %s31 = sld [smem:[%s30]]
  %s32 = scalar_lea.smem %s0, 16
  %s33 = sld [smem:[%s32]]
  %s34 = scalar_lea.smem %s0, 17
  %s35 = sld [smem:[%s34]]
  %s36 = scalar_lea.smem %s0, 18
  %s37 = sld [smem:[%s36]]
  %s38 = scalar_lea.smem %s0, 19
  %s39 = sld [smem:[%s38]]
  %s40 = scalar_lea.smem %s0, 20
  %s41 = sld [smem:[%s40]]
  %s42 = scalar_lea.smem %s0, 21
  %s43 = sld [smem:[%s42]]
  %s44 = scalar_lea.smem %s0, 22
  %s45 = sld [smem:[%s44]]
  %s46 = scalar_lea.smem %s0, 23
  %s47 = sld [smem:[%s46]]
  %s48 = scalar_lea.smem %s0, 24
  %s49 = sld [smem:[%s48]]
  %s50 = scalar_lea.smem %s0, 25
  %s51 = sld [smem:[%s50]]
  %s52 = scalar_lea.smem %s0, 26
  %s53 = sld [smem:[%s52]]
  %s54 = scalar_lea.smem %s0, 27
  %s55 = sld [smem:[%s54]]
  %s56 = scalar_lea.smem %s0, 28
  %s57 = sld [smem:[%s56]]
  %s58 = scalar_lea.smem %s0, 29
  %s59 = sld [smem:[%s58]]
  %s60 = scalar_lea.smem %s0, 30
  %s61 = sld [smem:[%s60]]
  %s62 = scalar_lea.smem %s0, 31
  %s63 = sld [smem:[%s62]]
  %s64 = scalar_lea.smem %s0, 32
  %s65 = sld [smem:[%s64]]
  %s66 = scalar_lea.smem %s0, 33
  %s67 = sld [smem:[%s66]]
  %s68 = scalar_lea.smem %s0, 34
  %s69 = sld [smem:[%s68]]
  %s70 = scalar_lea.smem %s0, 35
  %s71 = sld [smem:[%s70]]
  %s72 = scalar_lea.smem %s0, 36
  %s73 = sld [smem:[%s72]]
  %s74 = scalar_lea.smem %s0, 37
  %s75 = sld [smem:[%s74]]
  %s76 = scalar_lea.smem %s0, 38
  %s77 = sld [smem:[%s76]]
  %s78 = scalar_lea.smem %s0, 39
  %s79 = sld [smem:[%s78]]
  %s80 = scalar_lea.smem %s0, 40
  %s81 = sld [smem:[%s80]]
  %s82 = scalar_lea.smem %s0, 41
  %s83 = sld [smem:[%s82]]
  %s84 = scalar_lea.smem %s0, 42
  %s85 = sld [smem:[%s84]]
  %s86 = scalar_lea.smem %s0, 43
  %s87 = sld [smem:[%s86]]
  %s88 = scalar_lea.smem %s0, 44
  %s89 = sld [smem:[%s88]]
  %s90 = scalar_lea.smem %s0, 45
  %s91 = sld [smem:[%s90]]
  %s92 = scalar_lea.smem %s0, 46
  %s93 = sld [smem:[%s92]]
  %s94 = scalar_lea.smem %s0, 47
  %s95 = sld [smem:[%s94]]
  %s96 = scalar_lea.smem %s0, 48
  %s97 = sld [smem:[%s96]]
  %s98 = scalar_lea.smem %s0, 49
  %s99 = sld [smem:[%s98]]
  %s100 = scalar_lea.smem %s0, 50
  %s101 = sld [smem:[%s100]]
  %s102 = scalar_lea.smem %s0, 51
  %s103 = sld [smem:[%s102]]
  %s104 = scalar_lea.smem %s0, 52
  %s105 = sld [smem:[%s104]]
  %s106 = scalar_lea.smem %s0, 53
  %s107 = sld [smem:[%s106]]
  %s108 = scalar_lea.smem %s0, 54
  %s109 = sld [smem:[%s108]]
  %s110 = scalar_lea.smem %s0, 55
  %s111 = sld [smem:[%s110]]
  %s112 = scalar_lea.smem %s0, 56
  %s113 = sld [smem:[%s112]]
  %s114 = scalar_lea.smem %s0, 57
  %s115 = sld [smem:[%s114]]
  %s116 = scalar_lea.smem %s0, 58
  %s117 = sld [smem:[%s116]]
  %s118 = scalar_lea.smem %s0, 59
  %s119 = sld [smem:[%s118]]
  %s120 = scalar_lea.smem %s0, 60
  %s121 = sld [smem:[%s120]]
  %s122 = scalar_lea.smem %s0, 61
  %s123 = sld [smem:[%s122]]
  %s124 = scalar_lea.smem %s0, 62
  %s125 = sld [smem:[%s124]]
  %s126 = scalar_lea.smem %s0, 63
  %s127 = sld [smem:[%s126]]
  %s128 = scalar_lea.smem %s0, 64
  %s129 = sld [smem:[%s128]]
  %s130 = scalar_lea.smem %s0, 65
  %s131 = sld [smem:[%s130]]
  %s132 = scalar_lea.smem %s0, 66
  %s133 = sld [smem:[%s132]]
  %s134 = scalar_lea.smem %s0, 67
  %s135 = sld [smem:[%s134]]
  %s136 = scalar_lea.smem %s0, 68
  %s137 = sld [smem:[%s136]]
  %s138 = scalar_lea.smem %s0, 69
  %s139 = sld [smem:[%s138]]
  %s140 = scalar_lea.smem %s0, 70
  %s141 = sld [smem:[%s140]]
  %s142 = scalar_lea.smem %s0, 71
  %s143 = sld [smem:[%s142]]
  %s144 = sld [smem:[#allocation0]]
  $region294: #{tpu_custom_call.1} parent=0
    _
  %s146 = ssub.s32 1, %s144
  %s147 = scalar_select 0, %s146, %s144
  // Predicated region
  $region2: #{tpu_custom_call.1} parent=0 // pred_check
    _
  $region3: #{tpu_custom_call.1} parent=0 // pred_check_branch
    %149 = sbr.rel (0) target = $region5
  $region4: #{tpu_custom_call.1} parent=0 // pred_region
    _
  $region5: #{tpu_custom_call.1} parent=0 // pred_fallthru
    _
  // Predicated region
  $region6: #{tpu_custom_call.1} parent=0 // pred_check
    _
  $region7: #{tpu_custom_call.1} parent=0 // pred_check_branch
    %151 = sbr.rel (0) target = $region9
  $region8: #{tpu_custom_call.1} parent=0 // pred_region
    _
  $region9: #{tpu_custom_call.1} parent=0 // pred_fallthru
    _
  // Predicated region
  $region10: #{tpu_custom_call.1} parent=0 // pred_check
    _
  $region11: #{tpu_custom_call.1} parent=0 // pred_check_branch
    %153 = sbr.rel (0) target = $region13
  $region12: #{tpu_custom_call.1} parent=0 // pred_region
    _
  $region13: #{tpu_custom_call.1} parent=0 // pred_fallthru
    _
  // Predicated region
  $region14: #{tpu_custom_call.1} parent=0 // pred_check
    _
  $region15: #{tpu_custom_call.1} parent=0 // pred_check_branch
    %155 = sbr.rel (0) target = $region17
  $region16: #{tpu_custom_call.1} parent=0 // pred_region
    _
  $region17: #{tpu_custom_call.1} parent=0 // pred_fallthru
    _
  // Predicated region
  $region18: #{tpu_custom_call.1} parent=0 // pred_check
    _
  $region19: #{tpu_custom_call.1} parent=0 // pred_check_branch
    %157 = sbr.rel (0) target = $region21
  $region20: #{tpu_custom_call.1} parent=0 // pred_region
    _
  $region21: #{tpu_custom_call.1} parent=0 // pred_fallthru
    _
  // Predicated region
  $region22: #{tpu_custom_call.1} parent=0 // pred_check
    _
  $region23: #{tpu_custom_call.1} parent=0 // pred_check_branch
    %159 = sbr.rel (0) target = $region25
  $region24: #{tpu_custom_call.1} parent=0 // pred_region
    _
  $region25: #{tpu_custom_call.1} parent=0 // pred_fallthru
    _
  // Predicated region
  $region26: #{tpu_custom_call.1} parent=0 // pred_check
    _
  $region27: #{tpu_custom_call.1} parent=0 // pred_check_branch
    %161 = sbr.rel (0) target = $region29
  $region28: #{tpu_custom_call.1} parent=0 // pred_region
    _
  $region29: #{tpu_custom_call.1} parent=0 // pred_fallthru
    _
  // Predicated region
  $region30: #{tpu_custom_call.1} parent=0 // pred_check
    _
  $region31: #{tpu_custom_call.1} parent=0 // pred_check_branch
    %163 = sbr.rel (0) target = $region33
  $region32: #{tpu_custom_call.1} parent=0 // pred_region
    _
  $region33: #{tpu_custom_call.1} parent=0 // pred_fallthru
    _
  // Predicated region
  $region34: #{tpu_custom_call.1} parent=0 // pred_check
    _
  $region35: #{tpu_custom_call.1} parent=0 // pred_check_branch
    %165 = sbr.rel (0) target = $region37
  $region36: #{tpu_custom_call.1} parent=0 // pred_region
    _
  $region37: #{tpu_custom_call.1} parent=0 // pred_fallthru
    _
  // Predicated region
  $region38: #{tpu_custom_call.1} parent=0 // pred_check
    _
  $region39: #{tpu_custom_call.1} parent=0 // pred_check_branch
    %167 = sbr.rel (0) target = $region41
  $region40: #{tpu_custom_call.1} parent=0 // pred_region
    _
  $region41: #{tpu_custom_call.1} parent=0 // pred_fallthru
    _
  // Predicated region
  $region42: #{tpu_custom_call.1} parent=0 // pred_check
    _
  $region43: #{tpu_custom_call.1} parent=0 // pred_check_branch
    %169 = sbr.rel (0) target = $region45
  $region44: #{tpu_custom_call.1} parent=0 // pred_region
    _
  $region45: #{tpu_custom_call.1} parent=0 // pred_fallthru
    _
  // Predicated region
  $region46: #{tpu_custom_call.1} parent=0 // pred_check
    _
  $region47: #{tpu_custom_call.1} parent=0 // pred_check_branch
    %171 = sbr.rel (0) target = $region49
  $region48: #{tpu_custom_call.1} parent=0 // pred_region
    _
  $region49: #{tpu_custom_call.1} parent=0 // pred_fallthru
    _
  // Predicated region
  $region50: #{tpu_custom_call.1} parent=0 // pred_check
    _
  $region51: #{tpu_custom_call.1} parent=0 // pred_check_branch
    %173 = sbr.rel (0) target = $region53
  $region52: #{tpu_custom_call.1} parent=0 // pred_region
    _
  $region53: #{tpu_custom_call.1} parent=0 // pred_fallthru
    _
  // Predicated region
  $region54: #{tpu_custom_call.1} parent=0 // pred_check
    _
  $region55: #{tpu_custom_call.1} parent=0 // pred_check_branch
    %175 = sbr.rel (0) target = $region57
  $region56: #{tpu_custom_call.1} parent=0 // pred_region
    _
  $region57: #{tpu_custom_call.1} parent=0 // pred_fallthru
    _
  // Predicated region
  $region58: #{tpu_custom_call.1} parent=0 // pred_check
    _
  $region59: #{tpu_custom_call.1} parent=0 // pred_check_branch
    %177 = sbr.rel (0) target = $region61
  $region60: #{tpu_custom_call.1} parent=0 // pred_region
    _
  $region61: #{tpu_custom_call.1} parent=0 // pred_fallthru
    _
  // Predicated region
  $region62: #{tpu_custom_call.1} parent=0 // pred_check
    _
  $region63: #{tpu_custom_call.1} parent=0 // pred_check_branch
    %179 = sbr.rel (0) target = $region65
  $region64: #{tpu_custom_call.1} parent=0 // pred_region
    _
  $region65: #{tpu_custom_call.1} parent=0 // pred_fallthru
    _
  // Predicated region
  $region66: #{tpu_custom_call.1} parent=0 // pred_check
    _
  $region67: #{tpu_custom_call.1} parent=0 // pred_check_branch
    %181 = sbr.rel (0) target = $region69
  $region68: #{tpu_custom_call.1} parent=0 // pred_region
    _
  $region69: #{tpu_custom_call.1} parent=0 // pred_fallthru
    _
  // Predicated region
  $region70: #{tpu_custom_call.1} parent=0 // pred_check
    _
  $region71: #{tpu_custom_call.1} parent=0 // pred_check_branch
    %183 = sbr.rel (0) target = $region73
  $region72: #{tpu_custom_call.1} parent=0 // pred_region
    _
  $region73: #{tpu_custom_call.1} parent=0 // pred_fallthru
    _
  // Predicated region
  $region74: #{tpu_custom_call.1} parent=0 // pred_check
    _
  $region75: #{tpu_custom_call.1} parent=0 // pred_check_branch
    %185 = sbr.rel (0) target = $region77
  $region76: #{tpu_custom_call.1} parent=0 // pred_region
    _
  $region77: #{tpu_custom_call.1} parent=0 // pred_fallthru
    _
  // Predicated region
  $region78: #{tpu_custom_call.1} parent=0 // pred_check
    _
  $region79: #{tpu_custom_call.1} parent=0 // pred_check_branch
    %187 = sbr.rel (0) target = $region81
  $region80: #{tpu_custom_call.1} parent=0 // pred_region
    _
  $region81: #{tpu_custom_call.1} parent=0 // pred_fallthru
    _
  // Predicated region
  $region82: #{tpu_custom_call.1} parent=0 // pred_check
    _
  $region83: #{tpu_custom_call.1} parent=0 // pred_check_branch
    %189 = sbr.rel (0) target = $region85
  $region84: #{tpu_custom_call.1} parent=0 // pred_region
    _
  $region85: #{tpu_custom_call.1} parent=0 // pred_fallthru
    _
  // Predicated region
  $region86: #{tpu_custom_call.1} parent=0 // pred_check
    _
  $region87: #{tpu_custom_call.1} parent=0 // pred_check_branch
    %191 = sbr.rel (0) target = $region89
  $region88: #{tpu_custom_call.1} parent=0 // pred_region
    _
  $region89: #{tpu_custom_call.1} parent=0 // pred_fallthru
    _
  // Predicated region
  $region90: #{tpu_custom_call.1} parent=0 // pred_check
    _
  $region91: #{tpu_custom_call.1} parent=0 // pred_check_branch
    %193 = sbr.rel (0) target = $region93
  $region92: #{tpu_custom_call.1} parent=0 // pred_region
    _
  $region93: #{tpu_custom_call.1} parent=0 // pred_fallthru
    _
  // Predicated region
  $region94: #{tpu_custom_call.1} parent=0 // pred_check
    _
  $region95: #{tpu_custom_call.1} parent=0 // pred_check_branch
    %195 = sbr.rel (0) target = $region97
  $region96: #{tpu_custom_call.1} parent=0 // pred_region
    _
  $region97: #{tpu_custom_call.1} parent=0 // pred_fallthru
    _
  // Predicated region
  $region98: #{tpu_custom_call.1} parent=0 // pred_check
    _
  $region99: #{tpu_custom_call.1} parent=0 // pred_check_branch
    %197 = sbr.rel (0) target = $region101
  $region100: #{tpu_custom_call.1} parent=0 // pred_region
    _
  $region101: #{tpu_custom_call.1} parent=0 // pred_fallthru
    _
  // Predicated region
  $region102: #{tpu_custom_call.1} parent=0 // pred_check
    _
  $region103: #{tpu_custom_call.1} parent=0 // pred_check_branch
    %199 = sbr.rel (0) target = $region105
  $region104: #{tpu_custom_call.1} parent=0 // pred_region
    _
  $region105: #{tpu_custom_call.1} parent=0 // pred_fallthru
    _
  // Predicated region
  $region106: #{tpu_custom_call.1} parent=0 // pred_check
    _
  $region107: #{tpu_custom_call.1} parent=0 // pred_check_branch
    %201 = sbr.rel (0) target = $region109
  $region108: #{tpu_custom_call.1} parent=0 // pred_region
    _
  $region109: #{tpu_custom_call.1} parent=0 // pred_fallthru
    _
  // Predicated region
  $region110: #{tpu_custom_call.1} parent=0 // pred_check
    _
  $region111: #{tpu_custom_call.1} parent=0 // pred_check_branch
    %203 = sbr.rel (0) target = $region113
  $region112: #{tpu_custom_call.1} parent=0 // pred_region
    _
  $region113: #{tpu_custom_call.1} parent=0 // pred_fallthru
    _
  // Predicated region
  $region114: #{tpu_custom_call.1} parent=0 // pred_check
    _
  $region115: #{tpu_custom_call.1} parent=0 // pred_check_branch
    %205 = sbr.rel (0) target = $region117
  $region116: #{tpu_custom_call.1} parent=0 // pred_region
    _
  $region117: #{tpu_custom_call.1} parent=0 // pred_fallthru
    _
  // Predicated region
  $region118: #{tpu_custom_call.1} parent=0 // pred_check
    _
  $region119: #{tpu_custom_call.1} parent=0 // pred_check_branch
    %207 = sbr.rel (0) target = $region121
  $region120: #{tpu_custom_call.1} parent=0 // pred_region
    _
  $region121: #{tpu_custom_call.1} parent=0 // pred_fallthru
    _
  // Predicated region
  $region122: #{tpu_custom_call.1} parent=0 // pred_check
    _
  $region123: #{tpu_custom_call.1} parent=0 // pred_check_branch
    %209 = sbr.rel (0) target = $region125
  $region124: #{tpu_custom_call.1} parent=0 // pred_region
    _
  $region125: #{tpu_custom_call.1} parent=0 // pred_fallthru
    _
  // Predicated region
  $region126: #{tpu_custom_call.1} parent=0 // pred_check
    _
  $region127: #{tpu_custom_call.1} parent=0 // pred_check_branch
    %211 = sbr.rel (0) target = $region129
  $region128: #{tpu_custom_call.1} parent=0 // pred_region
    _
  $region129: #{tpu_custom_call.1} parent=0 // pred_fallthru
    _
  // Predicated region
  $region130: #{tpu_custom_call.1} parent=0 // pred_check
    _
  $region131: #{tpu_custom_call.1} parent=0 // pred_check_branch
    %213 = sbr.rel (0) target = $region133
  $region132: #{tpu_custom_call.1} parent=0 // pred_region
    _
  $region133: #{tpu_custom_call.1} parent=0 // pred_fallthru
    _
  // Predicated region
  $region134: #{tpu_custom_call.1} parent=0 // pred_check
    _
  $region135: #{tpu_custom_call.1} parent=0 // pred_check_branch
    %215 = sbr.rel (0) target = $region137
  $region136: #{tpu_custom_call.1} parent=0 // pred_region
    _
  $region137: #{tpu_custom_call.1} parent=0 // pred_fallthru
    _
  // Predicated region
  $region138: #{tpu_custom_call.1} parent=0 // pred_check
    _
  $region139: #{tpu_custom_call.1} parent=0 // pred_check_branch
    %217 = sbr.rel (0) target = $region141
  $region140: #{tpu_custom_call.1} parent=0 // pred_region
    _
  $region141: #{tpu_custom_call.1} parent=0 // pred_fallthru
    _
  // Predicated region
  $region142: #{tpu_custom_call.1} parent=0 // pred_check
    _
  $region143: #{tpu_custom_call.1} parent=0 // pred_check_branch
    %219 = sbr.rel (0) target = $region145
  $region144: #{tpu_custom_call.1} parent=0 // pred_region
    _
  $region145: #{tpu_custom_call.1} parent=0 // pred_fallthru
    _
  // Predicated region
  $region146: #{tpu_custom_call.1} parent=0 // pred_check
    _
  $region147: #{tpu_custom_call.1} parent=0 // pred_check_branch
    %221 = sbr.rel (0) target = $region149
  $region148: #{tpu_custom_call.1} parent=0 // pred_region
    _
  $region149: #{tpu_custom_call.1} parent=0 // pred_fallthru
    _
  // Predicated region
  $region150: #{tpu_custom_call.1} parent=0 // pred_check
    _
  $region151: #{tpu_custom_call.1} parent=0 // pred_check_branch
    %223 = sbr.rel (0) target = $region153
  $region152: #{tpu_custom_call.1} parent=0 // pred_region
    _
  $region153: #{tpu_custom_call.1} parent=0 // pred_fallthru
    _
  // Predicated region
  $region154: #{tpu_custom_call.1} parent=0 // pred_check
    _
  $region155: #{tpu_custom_call.1} parent=0 // pred_check_branch
    %225 = sbr.rel (0) target = $region157
  $region156: #{tpu_custom_call.1} parent=0 // pred_region
    _
  $region157: #{tpu_custom_call.1} parent=0 // pred_fallthru
    _
  // Predicated region
  $region158: #{tpu_custom_call.1} parent=0 // pred_check
    _
  $region159: #{tpu_custom_call.1} parent=0 // pred_check_branch
    %227 = sbr.rel (0) target = $region161
  $region160: #{tpu_custom_call.1} parent=0 // pred_region
    _
  $region161: #{tpu_custom_call.1} parent=0 // pred_fallthru
    _
  // Predicated region
  $region162: #{tpu_custom_call.1} parent=0 // pred_check
    _
  $region163: #{tpu_custom_call.1} parent=0 // pred_check_branch
    %229 = sbr.rel (0) target = $region165
  $region164: #{tpu_custom_call.1} parent=0 // pred_region
    _
  $region165: #{tpu_custom_call.1} parent=0 // pred_fallthru
    _
  // Predicated region
  $region166: #{tpu_custom_call.1} parent=0 // pred_check
    _
  $region167: #{tpu_custom_call.1} parent=0 // pred_check_branch
    %231 = sbr.rel (0) target = $region169
  $region168: #{tpu_custom_call.1} parent=0 // pred_region
    _
  $region169: #{tpu_custom_call.1} parent=0 // pred_fallthru
    _
  // Predicated region
  $region170: #{tpu_custom_call.1} parent=0 // pred_check
    _
  $region171: #{tpu_custom_call.1} parent=0 // pred_check_branch
    %233 = sbr.rel (0) target = $region173
  $region172: #{tpu_custom_call.1} parent=0 // pred_region
    _
  $region173: #{tpu_custom_call.1} parent=0 // pred_fallthru
    _
  // Predicated region
  $region174: #{tpu_custom_call.1} parent=0 // pred_check
    _
  $region175: #{tpu_custom_call.1} parent=0 // pred_check_branch
    %235 = sbr.rel (0) target = $region177
  $region176: #{tpu_custom_call.1} parent=0 // pred_region
    _
  $region177: #{tpu_custom_call.1} parent=0 // pred_fallthru
    _
  // Predicated region
  $region178: #{tpu_custom_call.1} parent=0 // pred_check
    _
  $region179: #{tpu_custom_call.1} parent=0 // pred_check_branch
    %237 = sbr.rel (0) target = $region181
  $region180: #{tpu_custom_call.1} parent=0 // pred_region
    _
  $region181: #{tpu_custom_call.1} parent=0 // pred_fallthru
    _
  // Predicated region
  $region182: #{tpu_custom_call.1} parent=0 // pred_check
    _
  $region183: #{tpu_custom_call.1} parent=0 // pred_check_branch
    %239 = sbr.rel (0) target = $region185
  $region184: #{tpu_custom_call.1} parent=0 // pred_region
    _
  $region185: #{tpu_custom_call.1} parent=0 // pred_fallthru
    _
  // Predicated region
  $region186: #{tpu_custom_call.1} parent=0 // pred_check
    _
  $region187: #{tpu_custom_call.1} parent=0 // pred_check_branch
    %241 = sbr.rel (0) target = $region189
  $region188: #{tpu_custom_call.1} parent=0 // pred_region
    _
  $region189: #{tpu_custom_call.1} parent=0 // pred_fallthru
    _
  // Predicated region
  $region190: #{tpu_custom_call.1} parent=0 // pred_check
    _
  $region191: #{tpu_custom_call.1} parent=0 // pred_check_branch
    %243 = sbr.rel (0) target = $region193
  $region192: #{tpu_custom_call.1} parent=0 // pred_region
    _
  $region193: #{tpu_custom_call.1} parent=0 // pred_fallthru
    _
  // Predicated region
  $region194: #{tpu_custom_call.1} parent=0 // pred_check
    _
  $region195: #{tpu_custom_call.1} parent=0 // pred_check_branch
    %245 = sbr.rel (0) target = $region197
  $region196: #{tpu_custom_call.1} parent=0 // pred_region
    _
  $region197: #{tpu_custom_call.1} parent=0 // pred_fallthru
    _
  // Predicated region
  $region198: #{tpu_custom_call.1} parent=0 // pred_check
    _
  $region199: #{tpu_custom_call.1} parent=0 // pred_check_branch
    %247 = sbr.rel (0) target = $region201
  $region200: #{tpu_custom_call.1} parent=0 // pred_region
    _
  $region201: #{tpu_custom_call.1} parent=0 // pred_fallthru
    _
  // Predicated region
  $region202: #{tpu_custom_call.1} parent=0 // pred_check
    _
  $region203: #{tpu_custom_call.1} parent=0 // pred_check_branch
    %249 = sbr.rel (0) target = $region205
  $region204: #{tpu_custom_call.1} parent=0 // pred_region
    _
  $region205: #{tpu_custom_call.1} parent=0 // pred_fallthru
    _
  // Predicated region
  $region206: #{tpu_custom_call.1} parent=0 // pred_check
    _
  $region207: #{tpu_custom_call.1} parent=0 // pred_check_branch
    %251 = sbr.rel (0) target = $region209
  $region208: #{tpu_custom_call.1} parent=0 // pred_region
    _
  $region209: #{tpu_custom_call.1} parent=0 // pred_fallthru
    _
  // Predicated region
  $region210: #{tpu_custom_call.1} parent=0 // pred_check
    _
  $region211: #{tpu_custom_call.1} parent=0 // pred_check_branch
    %253 = sbr.rel (0) target = $region213
  $region212: #{tpu_custom_call.1} parent=0 // pred_region
    _
  $region213: #{tpu_custom_call.1} parent=0 // pred_fallthru
    _
  // Predicated region
  $region214: #{tpu_custom_call.1} parent=0 // pred_check
    _
  $region215: #{tpu_custom_call.1} parent=0 // pred_check_branch
    %255 = sbr.rel (0) target = $region217
  $region216: #{tpu_custom_call.1} parent=0 // pred_region
    _
  $region217: #{tpu_custom_call.1} parent=0 // pred_fallthru
    _
  // Predicated region
  $region218: #{tpu_custom_call.1} parent=0 // pred_check
    _
  $region219: #{tpu_custom_call.1} parent=0 // pred_check_branch
    %257 = sbr.rel (0) target = $region221
  $region220: #{tpu_custom_call.1} parent=0 // pred_region
    _
  $region221: #{tpu_custom_call.1} parent=0 // pred_fallthru
    _
  // Predicated region
  $region222: #{tpu_custom_call.1} parent=0 // pred_check
    _
  $region223: #{tpu_custom_call.1} parent=0 // pred_check_branch
    %259 = sbr.rel (0) target = $region225
  $region224: #{tpu_custom_call.1} parent=0 // pred_region
    _
  $region225: #{tpu_custom_call.1} parent=0 // pred_fallthru
    _
  // Predicated region
  $region226: #{tpu_custom_call.1} parent=0 // pred_check
    _
  $region227: #{tpu_custom_call.1} parent=0 // pred_check_branch
    %261 = sbr.rel (0) target = $region229
  $region228: #{tpu_custom_call.1} parent=0 // pred_region
    _
  $region229: #{tpu_custom_call.1} parent=0 // pred_fallthru
    _
  // Predicated region
  $region230: #{tpu_custom_call.1} parent=0 // pred_check
    _
  $region231: #{tpu_custom_call.1} parent=0 // pred_check_branch
    %263 = sbr.rel (0) target = $region233
  $region232: #{tpu_custom_call.1} parent=0 // pred_region
    _
  $region233: #{tpu_custom_call.1} parent=0 // pred_fallthru
    _
  // Predicated region
  $region234: #{tpu_custom_call.1} parent=0 // pred_check
    _
  $region235: #{tpu_custom_call.1} parent=0 // pred_check_branch
    %265 = sbr.rel (0) target = $region237
  $region236: #{tpu_custom_call.1} parent=0 // pred_region
    _
  $region237: #{tpu_custom_call.1} parent=0 // pred_fallthru
    _
  // Predicated region
  $region238: #{tpu_custom_call.1} parent=0 // pred_check
    _
  $region239: #{tpu_custom_call.1} parent=0 // pred_check_branch
    %267 = sbr.rel (0) target = $region241
  $region240: #{tpu_custom_call.1} parent=0 // pred_region
    _
  $region241: #{tpu_custom_call.1} parent=0 // pred_fallthru
    _
  // Predicated region
  $region242: #{tpu_custom_call.1} parent=0 // pred_check
    _
  $region243: #{tpu_custom_call.1} parent=0 // pred_check_branch
    %269 = sbr.rel (0) target = $region245
  $region244: #{tpu_custom_call.1} parent=0 // pred_region
    _
  $region245: #{tpu_custom_call.1} parent=0 // pred_fallthru
    _
  // Predicated region
  $region246: #{tpu_custom_call.1} parent=0 // pred_check
    _
  $region247: #{tpu_custom_call.1} parent=0 // pred_check_branch
    %271 = sbr.rel (0) target = $region249
  $region248: #{tpu_custom_call.1} parent=0 // pred_region
    _
  $region249: #{tpu_custom_call.1} parent=0 // pred_fallthru
    _
  // Predicated region
  $region250: #{tpu_custom_call.1} parent=0 // pred_check
    _
  $region251: #{tpu_custom_call.1} parent=0 // pred_check_branch
    %273 = sbr.rel (0) target = $region253
  $region252: #{tpu_custom_call.1} parent=0 // pred_region
    _
  $region253: #{tpu_custom_call.1} parent=0 // pred_fallthru
    _
  // Predicated region
  $region254: #{tpu_custom_call.1} parent=0 // pred_check
    _
  $region255: #{tpu_custom_call.1} parent=0 // pred_check_branch
    %275 = sbr.rel (0) target = $region257
  $region256: #{tpu_custom_call.1} parent=0 // pred_region
    _
  $region257: #{tpu_custom_call.1} parent=0 // pred_fallthru
    _
  // Predicated region
  $region258: #{tpu_custom_call.1} parent=0 // pred_check
    _
  $region259: #{tpu_custom_call.1} parent=0 // pred_check_branch
    %277 = sbr.rel (0) target = $region261
  $region260: #{tpu_custom_call.1} parent=0 // pred_region
    _
  $region261: #{tpu_custom_call.1} parent=0 // pred_fallthru
    _
  // Predicated region
  $region262: #{tpu_custom_call.1} parent=0 // pred_check
    _
  $region263: #{tpu_custom_call.1} parent=0 // pred_check_branch
    %279 = sbr.rel (0) target = $region265
  $region264: #{tpu_custom_call.1} parent=0 // pred_region
    _
  $region265: #{tpu_custom_call.1} parent=0 // pred_fallthru
    _
  // Predicated region
  $region266: #{tpu_custom_call.1} parent=0 // pred_check
    _
  $region267: #{tpu_custom_call.1} parent=0 // pred_check_branch
    %281 = sbr.rel (0) target = $region269
  $region268: #{tpu_custom_call.1} parent=0 // pred_region
    _
  $region269: #{tpu_custom_call.1} parent=0 // pred_fallthru
    _
  // Predicated region
  $region270: #{tpu_custom_call.1} parent=0 // pred_check
    _
  $region271: #{tpu_custom_call.1} parent=0 // pred_check_branch
    %283 = sbr.rel (0) target = $region273
  $region272: #{tpu_custom_call.1} parent=0 // pred_region
    _
  $region273: #{tpu_custom_call.1} parent=0 // pred_fallthru
    _
  // Predicated region
  $region274: #{tpu_custom_call.1} parent=0 // pred_check
    _
  $region275: #{tpu_custom_call.1} parent=0 // pred_check_branch
    %285 = sbr.rel (0) target = $region277
  $region276: #{tpu_custom_call.1} parent=0 // pred_region
    _
  $region277: #{tpu_custom_call.1} parent=0 // pred_fallthru
    _
  // Predicated region
  $region278: #{tpu_custom_call.1} parent=0 // pred_check
    _
  $region279: #{tpu_custom_call.1} parent=0 // pred_check_branch
    %287 = sbr.rel (0) target = $region281
  $region280: #{tpu_custom_call.1} parent=0 // pred_region
    _
  $region281: #{tpu_custom_call.1} parent=0 // pred_fallthru
    _
  // Predicated region
  $region282: #{tpu_custom_call.1} parent=0 // pred_check
    _
  $region283: #{tpu_custom_call.1} parent=0 // pred_check_branch
    %289 = sbr.rel (0) target = $region285
  $region284: #{tpu_custom_call.1} parent=0 // pred_region
    _
  $region285: #{tpu_custom_call.1} parent=0 // pred_fallthru
    _
  %v291 = vld [vmem:[%s1] sm:$0x1]
  %v292 = vmul.f32 %v291, 0.2
  %v293 = vmax.f32 %v292, 1e-09
  %v294 = vrcp.pop %v293
  %v295 = vmul.f32 1.0, %v294
  %v296 = vmul.f32 %v292, %v292
  %v297 = vmul.f32 %v296, %v296
  %v298 = vmul.f32 %v297, %v292
  %v299 = vmul.f32 %v298, %v292
  %v300 = vmul.f32 %v299, %v292
  %v301 = vmul.f32 %v298, -28.0
  %v302 = vadd.f32 %v295, %v301
  %v303 = vmul.f32 %v299, 48.0
  %v304 = vadd.f32 %v302, %v303
  %v305 = vmul.f32 %v300, -21.0
  %v306 = vadd.f32 %v304, %v305
  %vm307 = vcmp.lt.f32.partialorder %v292, 1.0
  %v308 = vsel %vm307, 1, 0
  %v309 = vcvt.s32.f32 %v308
  %v310 = vmul.f32 %v306, %v309
  %v311 = vld [vmem:[%s15] sm:$0xf]
  %313 = vset.pattern.permute.xlu0 0
  %314 = vperm.xlu0 %313, %v311
  %v315 = vpop.permute.xlu0 %314
  %v318 = vlaneseq
  %v319 = vshrl.u32 %v318, 7
  %v320 = vsub.s32 0, %v319
  %v321 = vrot.slane %v292, %v320
  %v323 = vmul.f32 %v315, %v321
  %v324 = vand.u32 2147483647, %v323
  %vm325 = vcmp.le.f32.partialorder %v324, 0.7853982
  %vm326 = vcmp.lt.s32.totalorder %v323, 0
  %v327 = vand.u32 %v323, 2139095040
  %v328 = vshrl.u32 %v327, 23
  %v329 = vsub.s32 %v328, 127
  %v330 = vand.u32 2147483647, %v323
  %v331 = vand.u32 %v330, 8388607
  %v332 = vor.u32 %v331, 8388608
  %v333 = vsub.s32 0, %v332
  %v334 = vadd.s32 %v329, 1
  %vm335 = vcmp.gt.s32.totalorder %v334, 0
  %v336 = vsel %vm335, %v334, 0
  %v337 = vshrl.u32 %v336, 5
  %v338 = vand.u32 %v336, 31
  %v339 = vsub.s32 32, %v338
  %v340 = vshrl.u32 683565275, %v339
  %v341 = vshll.u32 683565275, %v338
  %v342 = vshrl.u32 2475754826, %v339
  %v343 = vor.u32 %v341, %v342
  %v344 = vshll.u32 2475754826, %v338
  %v345 = vshrl.u32 2131351028, %v339
  %v346 = vor.u32 %v344, %v345
  %v347 = vshll.u32 2131351028, %v338
  %v348 = vshrl.u32 2102212464, %v339
  %v349 = vor.u32 %v347, %v348
  %v350 = vshll.u32 2102212464, %v338
  %v351 = vshrl.u32 920167782, %v339
  %v352 = vor.u32 %v350, %v351
  %v353 = vshll.u32 920167782, %v338
  %v354 = vshrl.u32 1326507024, %v339
  %v355 = vor.u32 %v353, %v354
  %vm356 = vcmp.lt.s32.totalorder %v337, 1
  %vm357 = vcmp.lt.s32.totalorder %v337, 2
  %vm358 = vcmp.lt.s32.totalorder %v337, 3
  %vm359 = vcmp.lt.s32.totalorder %v337, 4
  %v360 = vsel %vm356, %v340, %v343
  %v361 = vsel %vm359, %v349, 2102212464
  %v362 = vsel %vm358, %v346, %v361
  %v363 = vsel %vm357, %v360, %v362
  %v364 = vsel %vm356, %v343, %v346
  %v365 = vsel %vm359, %v352, 920167782
  %v366 = vsel %vm358, %v349, %v365
  %v367 = vsel %vm357, %v364, %v366
  %v368 = vsel %vm356, %v346, %v349
  %v369 = vsel %vm359, %v355, 1326507024
  %v370 = vsel %vm358, %v352, %v369
  %v371 = vsel %vm357, %v368, %v370
  %v372 = vshll.u32 %v332, 8
  %v373 = vmul.u32.u64.compose %v372, %v371
  %v374 = vextract.low.u32 %v373
  %v375 = vextract.high.u32 %v373
  %v376 = vmul.u32.u64.compose %v372, %v367
  %v377 = vextract.low.u32 %v376
  %v378 = vextract.high.u32 %v376
  %v379 = vmul.u32 %v372, %v363
  %v380 = vadd.s32 %v375, %v377
  %vm381 = vc.u32 %v375, %v377
  %v382 = vadd.s32 %v378, 1
  %v383 = vsel %vm381, %v382, %v378
  %v384 = vadd.s32 %v379, %v383
  %v385 = vadd.s32 %v384, 536870912
  %v386 = vshrl.u32 %v385, 30
  %v387 = vshll.u32 %v386, 30
  %v388 = vsub.s32 %v384, %v387
  %vm389 = vcmp.lt.s32.totalorder %v388, 0
  %v390 = vsub.s32 0, %v388
  %v391 = vsel %vm389, %v390, %v388
  %v392 = vclz %v391
  %v393 = vsub.s32 %v392, 2
  %vm394 = vcmp.gt.s32.totalorder 0, %v393
  %v395 = vsel %vm394, 0, %v393
  %v396 = vsub.s32 32, %v395
  %v397 = vshll.u32 %v388, %v395
  %v398 = vshrl.u32 %v380, %v396
  %v399 = vor.u32 %v397, %v398
  %v400 = vsub.s32 4294967266, %v395
  %v401 = vadd.s32 %v400, 127
  %v402 = vshll.u32 %v401, 23
  %v403 = vor.u32 4788187, %v402
  %v404 = vand.u32 2147483647, %v403
  %v406 = vcvt.s32.f32 %v399
  %v407 = vmul.f32 %v406, %v404
  %v408 = vxor.u32 %v407, 2147483648
  %v409 = vsel %vm326, %v408, %v407
  %v410 = vsub.s32 4, %v386
  %v411 = vsel %vm326, %v410, %v386
  %v412 = vsel %vm325, %v323, %v409
  %v413 = vsel %vm325, 0, %v411
  %v414 = vcosq.f32.pop %v412
  %v415 = vsinq.f32.pop %v412
  %vm416 = vweird.f32 %v323
  %v417 = vadd.s32 %v413, 3
  %v418 = vand.u32 %v417, 3
  %vm419 = vcmp.lt.s32.totalorder %v418, 2
  %vm420 = vcmp.eq.s32.totalorder %v418, 0
  %v421 = vxor.u32 %v415, 2147483648
  %v422 = vsel %vm420, %v414, %v421
  %vm423 = vcmp.eq.s32.totalorder %v418, 2
  %v424 = vxor.u32 %v414, 2147483648
  %v425 = vsel %vm423, %v424, %v415
  %v426 = vsel %vm419, %v422, %v425
  %v427 = vsel %vm416, nan, %v426
  %v429 = vlaneseq
  %v430 = vshrl.u32 %v429, 7
  %v431 = vsub.s32 0, %v430
  %v432 = vrot.slane %v310, %v431
  %v434 = vmul.f32 %v432, %v427
  %v435 = vld [vmem:[%s17] sm:$0xff]
  %v436 = vld [vmem:[%s17 + $0x8] sm:$0xff]
  %v437 = vld [vmem:[%s17 + $0x10] sm:$0xf]
  %439 = vset.pattern.permute.xlu0 0
  %440 = vperm.xlu0 %439, %v435
  %v441 = vpop.permute.xlu0 %440
  %444 = vset.pattern.permute.xlu0 0
  %445 = vperm.xlu0 %444, %v436
  %v446 = vpop.permute.xlu0 %445
  %449 = vset.pattern.permute.xlu0 0
  %450 = vperm.xlu0 %449, %v437
  %v451 = vpop.permute.xlu0 %450
  %v453 = vmul.f32 %v441, %v321
  %v454 = vmul.f32 %v446, %v321
  %v455 = vmul.f32 %v451, %v321
  %v456 = vmax.f32 %v453, 1e-09
  %v457 = vmax.f32 %v454, 1e-09
  %v458 = vmax.f32 %v455, 1e-09
  %v459 = vrcp.pop %v456
  %v460 = vmul.f32 1.0, %v459
  %v461 = vrcp.pop %v457
  %v462 = vmul.f32 1.0, %v461
  %v463 = vrcp.pop %v458
  %v464 = vmul.f32 1.0, %v463
  %v465 = vand.u32 2147483647, %v453
  %vm466 = vcmp.le.f32.partialorder %v465, 0.7853982
  %vm467 = vcmp.lt.s32.totalorder %v453, 0
  %v468 = vand.u32 %v453, 2139095040
  %v469 = vshrl.u32 %v468, 23
  %v470 = vsub.s32 %v469, 127
  %v471 = vand.u32 2147483647, %v453
  %v472 = vand.u32 %v471, 8388607
  %v473 = vor.u32 %v472, 8388608
  %v474 = vsub.s32 0, %v473
  %v475 = vadd.s32 %v470, 1
  %vm476 = vcmp.gt.s32.totalorder %v475, 0
  %v477 = vsel %vm476, %v475, 0
  %v478 = vshrl.u32 %v477, 5
  %v479 = vand.u32 %v477, 31
  %v480 = vsub.s32 32, %v479
  %v481 = vshrl.u32 683565275, %v480
  %v482 = vshll.u32 683565275, %v479
  %v483 = vshrl.u32 2475754826, %v480
  %v484 = vor.u32 %v482, %v483
  %v485 = vshll.u32 2475754826, %v479
  %v486 = vshrl.u32 2131351028, %v480
  %v487 = vor.u32 %v485, %v486
  %v488 = vshll.u32 2131351028, %v479
  %v489 = vshrl.u32 2102212464, %v480
  %v490 = vor.u32 %v488, %v489
  %v491 = vshll.u32 2102212464, %v479
  %v492 = vshrl.u32 920167782, %v480
  %v493 = vor.u32 %v491, %v492
  %v494 = vshll.u32 920167782, %v479
  %v495 = vshrl.u32 1326507024, %v480
  %v496 = vor.u32 %v494, %v495
  %vm497 = vcmp.lt.s32.totalorder %v478, 1
  %vm498 = vcmp.lt.s32.totalorder %v478, 2
  %vm499 = vcmp.lt.s32.totalorder %v478, 3
  %vm500 = vcmp.lt.s32.totalorder %v478, 4
  %v501 = vsel %vm497, %v481, %v484
  %v502 = vsel %vm500, %v490, 2102212464
  %v503 = vsel %vm499, %v487, %v502
  %v504 = vsel %vm498, %v501, %v503
  %v505 = vsel %vm497, %v484, %v487
  %v506 = vsel %vm500, %v493, 920167782
  %v507 = vsel %vm499, %v490, %v506
  %v508 = vsel %vm498, %v505, %v507
  %v509 = vsel %vm497, %v487, %v490
  %v510 = vsel %vm500, %v496, 1326507024
  %v511 = vsel %vm499, %v493, %v510
  %v512 = vsel %vm498, %v509, %v511
  %v513 = vshll.u32 %v473, 8
  %v514 = vmul.u32.u64.compose %v513, %v512
  %v515 = vextract.low.u32 %v514
  %v516 = vextract.high.u32 %v514
  %v517 = vmul.u32.u64.compose %v513, %v508
  %v518 = vextract.low.u32 %v517
  %v519 = vextract.high.u32 %v517
  %v520 = vmul.u32 %v513, %v504
  %v521 = vadd.s32 %v516, %v518
  %vm522 = vc.u32 %v516, %v518
  %v523 = vadd.s32 %v519, 1
  %v524 = vsel %vm522, %v523, %v519
  %v525 = vadd.s32 %v520, %v524
  %v526 = vadd.s32 %v525, 536870912
  %v527 = vshrl.u32 %v526, 30
  %v528 = vshll.u32 %v527, 30
  %v529 = vsub.s32 %v525, %v528
  %vm530 = vcmp.lt.s32.totalorder %v529, 0
  %v531 = vsub.s32 0, %v529
  %v532 = vsel %vm530, %v531, %v529
  %v533 = vclz %v532
  %v534 = vsub.s32 %v533, 2
  %vm535 = vcmp.gt.s32.totalorder 0, %v534
  %v536 = vsel %vm535, 0, %v534
  %v537 = vsub.s32 32, %v536
  %v538 = vshll.u32 %v529, %v536
  %v539 = vshrl.u32 %v521, %v537
  %v540 = vor.u32 %v538, %v539
  %v541 = vsub.s32 4294967266, %v536
  %v542 = vadd.s32 %v541, 127
  %v543 = vshll.u32 %v542, 23
  %v544 = vor.u32 4788187, %v543
  %v545 = vand.u32 2147483647, %v544
  %v547 = vcvt.s32.f32 %v540
  %v548 = vmul.f32 %v547, %v545
  %v549 = vxor.u32 %v548, 2147483648
  %v550 = vsel %vm467, %v549, %v548
  %v551 = vsub.s32 4, %v527
  %v552 = vsel %vm467, %v551, %v527
  %v553 = vsel %vm466, %v453, %v550
  %v554 = vsel %vm466, 0, %v552
  %v555 = vcosq.f32.pop %v553
  %v556 = vsinq.f32.pop %v553
  %vm557 = vweird.f32 %v453
  %v558 = vadd.s32 %v554, 3
  %v559 = vand.u32 %v558, 3
  %vm560 = vcmp.lt.s32.totalorder %v559, 2
  %vm561 = vcmp.eq.s32.totalorder %v559, 0
  %v562 = vxor.u32 %v556, 2147483648
  %v563 = vsel %vm561, %v555, %v562
  %vm564 = vcmp.eq.s32.totalorder %v559, 2
  %v565 = vxor.u32 %v555, 2147483648
  %v566 = vsel %vm564, %v565, %v556
  %v567 = vsel %vm560, %v563, %v566
  %v568 = vsel %vm557, nan, %v567
  %v569 = vand.u32 2147483647, %v454
  %vm570 = vcmp.le.f32.partialorder %v569, 0.7853982
  %vm571 = vcmp.lt.s32.totalorder %v454, 0
  %v572 = vand.u32 %v454, 2139095040
  %v573 = vshrl.u32 %v572, 23
  %v574 = vsub.s32 %v573, 127
  %v575 = vand.u32 2147483647, %v454
  %v576 = vand.u32 %v575, 8388607
  %v577 = vor.u32 %v576, 8388608
  %v578 = vsub.s32 0, %v577
  %v579 = vadd.s32 %v574, 1
  %vm580 = vcmp.gt.s32.totalorder %v579, 0
  %v581 = vsel %vm580, %v579, 0
  %v582 = vshrl.u32 %v581, 5
  %v583 = vand.u32 %v581, 31
  %v584 = vsub.s32 32, %v583
  %v585 = vshrl.u32 683565275, %v584
  %v586 = vshll.u32 683565275, %v583
  %v587 = vshrl.u32 2475754826, %v584
  %v588 = vor.u32 %v586, %v587
  %v589 = vshll.u32 2475754826, %v583
  %v590 = vshrl.u32 2131351028, %v584
  %v591 = vor.u32 %v589, %v590
  %v592 = vshll.u32 2131351028, %v583
  %v593 = vshrl.u32 2102212464, %v584
  %v594 = vor.u32 %v592, %v593
  %v595 = vshll.u32 2102212464, %v583
  %v596 = vshrl.u32 920167782, %v584
  %v597 = vor.u32 %v595, %v596
  %v598 = vshll.u32 920167782, %v583
  %v599 = vshrl.u32 1326507024, %v584
  %v600 = vor.u32 %v598, %v599
  %vm601 = vcmp.lt.s32.totalorder %v582, 1
  %vm602 = vcmp.lt.s32.totalorder %v582, 2
  %vm603 = vcmp.lt.s32.totalorder %v582, 3
  %vm604 = vcmp.lt.s32.totalorder %v582, 4
  %v605 = vsel %vm601, %v585, %v588
  %v606 = vsel %vm604, %v594, 2102212464
  %v607 = vsel %vm603, %v591, %v606
  %v608 = vsel %vm602, %v605, %v607
  %v609 = vsel %vm601, %v588, %v591
  %v610 = vsel %vm604, %v597, 920167782
  %v611 = vsel %vm603, %v594, %v610
  %v612 = vsel %vm602, %v609, %v611
  %v613 = vsel %vm601, %v591, %v594
  %v614 = vsel %vm604, %v600, 1326507024
  %v615 = vsel %vm603, %v597, %v614
  %v616 = vsel %vm602, %v613, %v615
  %v617 = vshll.u32 %v577, 8
  %v618 = vmul.u32.u64.compose %v617, %v616
  %v619 = vextract.low.u32 %v618
  %v620 = vextract.high.u32 %v618
  %v621 = vmul.u32.u64.compose %v617, %v612
  %v622 = vextract.low.u32 %v621
  %v623 = vextract.high.u32 %v621
  %v624 = vmul.u32 %v617, %v608
  %v625 = vadd.s32 %v620, %v622
  %vm626 = vc.u32 %v620, %v622
  %v627 = vadd.s32 %v623, 1
  %v628 = vsel %vm626, %v627, %v623
  %v629 = vadd.s32 %v624, %v628
  %v630 = vadd.s32 %v629, 536870912
  %v631 = vshrl.u32 %v630, 30
  %v632 = vshll.u32 %v631, 30
  %v633 = vsub.s32 %v629, %v632
  %vm634 = vcmp.lt.s32.totalorder %v633, 0
  %v635 = vsub.s32 0, %v633
  %v636 = vsel %vm634, %v635, %v633
  %v637 = vclz %v636
  %v638 = vsub.s32 %v637, 2
  %vm639 = vcmp.gt.s32.totalorder 0, %v638
  %v640 = vsel %vm639, 0, %v638
  %v641 = vsub.s32 32, %v640
  %v642 = vshll.u32 %v633, %v640
  %v643 = vshrl.u32 %v625, %v641
  %v644 = vor.u32 %v642, %v643
  %v645 = vsub.s32 4294967266, %v640
  %v646 = vadd.s32 %v645, 127
  %v647 = vshll.u32 %v646, 23
  %v648 = vor.u32 4788187, %v647
  %v649 = vand.u32 2147483647, %v648
  %v651 = vcvt.s32.f32 %v644
  %v652 = vmul.f32 %v651, %v649
  %v653 = vxor.u32 %v652, 2147483648
  %v654 = vsel %vm571, %v653, %v652
  %v655 = vsub.s32 4, %v631
  %v656 = vsel %vm571, %v655, %v631
  %v657 = vsel %vm570, %v454, %v654
  %v658 = vsel %vm570, 0, %v656
  %v659 = vcosq.f32.pop %v657
  %v660 = vsinq.f32.pop %v657
  %vm661 = vweird.f32 %v454
  %v662 = vadd.s32 %v658, 3
  %v663 = vand.u32 %v662, 3
  %vm664 = vcmp.lt.s32.totalorder %v663, 2
  %vm665 = vcmp.eq.s32.totalorder %v663, 0
  %v666 = vxor.u32 %v660, 2147483648
  %v667 = vsel %vm665, %v659, %v666
  %vm668 = vcmp.eq.s32.totalorder %v663, 2
  %v669 = vxor.u32 %v659, 2147483648
  %v670 = vsel %vm668, %v669, %v660
  %v671 = vsel %vm664, %v667, %v670
  %v672 = vsel %vm661, nan, %v671
  %v673 = vand.u32 2147483647, %v455
  %vm674 = vcmp.le.f32.partialorder %v673, 0.7853982
  %vm675 = vcmp.lt.s32.totalorder %v455, 0
  %v676 = vand.u32 %v455, 2139095040
  %v677 = vshrl.u32 %v676, 23
  %v678 = vsub.s32 %v677, 127
  %v679 = vand.u32 2147483647, %v455
  %v680 = vand.u32 %v679, 8388607
  %v681 = vor.u32 %v680, 8388608
  %v682 = vsub.s32 0, %v681
  %v683 = vadd.s32 %v678, 1
  %vm684 = vcmp.gt.s32.totalorder %v683, 0
  %v685 = vsel %vm684, %v683, 0
  %v686 = vshrl.u32 %v685, 5
  %v687 = vand.u32 %v685, 31
  %v688 = vsub.s32 32, %v687
  %v689 = vshrl.u32 683565275, %v688
  %v690 = vshll.u32 683565275, %v687
  %v691 = vshrl.u32 2475754826, %v688
  %v692 = vor.u32 %v690, %v691
  %v693 = vshll.u32 2475754826, %v687
  %v694 = vshrl.u32 2131351028, %v688
  %v695 = vor.u32 %v693, %v694
  %v696 = vshll.u32 2131351028, %v687
  %v697 = vshrl.u32 2102212464, %v688
  %v698 = vor.u32 %v696, %v697
  %v699 = vshll.u32 2102212464, %v687
  %v700 = vshrl.u32 920167782, %v688
  %v701 = vor.u32 %v699, %v700
  %v702 = vshll.u32 920167782, %v687
  %v703 = vshrl.u32 1326507024, %v688
  %v704 = vor.u32 %v702, %v703
  %vm705 = vcmp.lt.s32.totalorder %v686, 1
  %vm706 = vcmp.lt.s32.totalorder %v686, 2
  %vm707 = vcmp.lt.s32.totalorder %v686, 3
  %vm708 = vcmp.lt.s32.totalorder %v686, 4
  %v709 = vsel %vm705, %v689, %v692
  %v710 = vsel %vm708, %v698, 2102212464
  %v711 = vsel %vm707, %v695, %v710
  %v712 = vsel %vm706, %v709, %v711
  %v713 = vsel %vm705, %v692, %v695
  %v714 = vsel %vm708, %v701, 920167782
  %v715 = vsel %vm707, %v698, %v714
  %v716 = vsel %vm706, %v713, %v715
  %v717 = vsel %vm705, %v695, %v698
  %v718 = vsel %vm708, %v704, 1326507024
  %v719 = vsel %vm707, %v701, %v718
  %v720 = vsel %vm706, %v717, %v719
  %v721 = vshll.u32 %v681, 8
  %v722 = vmul.u32.u64.compose %v721, %v720
  %v723 = vextract.low.u32 %v722
  %v724 = vextract.high.u32 %v722
  %v725 = vmul.u32.u64.compose %v721, %v716
  %v726 = vextract.low.u32 %v725
  %v727 = vextract.high.u32 %v725
  %v728 = vmul.u32 %v721, %v712
  %v729 = vadd.s32 %v724, %v726
  %vm730 = vc.u32 %v724, %v726
  %v731 = vadd.s32 %v727, 1
  %v732 = vsel %vm730, %v731, %v727
  %v733 = vadd.s32 %v728, %v732
  %v734 = vadd.s32 %v733, 536870912
  %v735 = vshrl.u32 %v734, 30
  %v736 = vshll.u32 %v735, 30
  %v737 = vsub.s32 %v733, %v736
  %vm738 = vcmp.lt.s32.totalorder %v737, 0
  %v739 = vsub.s32 0, %v737
  %v740 = vsel %vm738, %v739, %v737
  %v741 = vclz %v740
  %v742 = vsub.s32 %v741, 2
  %vm743 = vcmp.gt.s32.totalorder 0, %v742
  %v744 = vsel %vm743, 0, %v742
  %v745 = vsub.s32 32, %v744
  %v746 = vshll.u32 %v737, %v744
  %v747 = vshrl.u32 %v729, %v745
  %v748 = vor.u32 %v746, %v747
  %v749 = vsub.s32 4294967266, %v744
  %v750 = vadd.s32 %v749, 127
  %v751 = vshll.u32 %v750, 23
  %v752 = vor.u32 4788187, %v751
  %v753 = vand.u32 2147483647, %v752
  %v755 = vcvt.s32.f32 %v748
  %v756 = vmul.f32 %v755, %v753
  %v757 = vxor.u32 %v756, 2147483648
  %v758 = vsel %vm675, %v757, %v756
  %v759 = vsub.s32 4, %v735
  %v760 = vsel %vm675, %v759, %v735
  %v761 = vsel %vm674, %v455, %v758
  %v762 = vsel %vm674, 0, %v760
  %v763 = vcosq.f32.pop %v761
  %v764 = vsinq.f32.pop %v761
  %vm765 = vweird.f32 %v455
  %v766 = vadd.s32 %v762, 3
  %v767 = vand.u32 %v766, 3
  %vm768 = vcmp.lt.s32.totalorder %v767, 2
  %vm769 = vcmp.eq.s32.totalorder %v767, 0
  %v770 = vxor.u32 %v764, 2147483648
  %v771 = vsel %vm769, %v763, %v770
  %vm772 = vcmp.eq.s32.totalorder %v767, 2
  %v773 = vxor.u32 %v763, 2147483648
  %v774 = vsel %vm772, %v773, %v764
  %v775 = vsel %vm768, %v771, %v774
  %v776 = vsel %vm765, nan, %v775
  %v777 = vand.u32 2147483647, %v453
  %vm778 = vcmp.le.f32.partialorder %v777, 0.7853982
  %vm779 = vcmp.lt.s32.totalorder %v453, 0
  %v780 = vand.u32 %v453, 2139095040
  %v781 = vshrl.u32 %v780, 23
  %v782 = vsub.s32 %v781, 127
  %v783 = vand.u32 2147483647, %v453
  %v784 = vand.u32 %v783, 8388607
  %v785 = vor.u32 %v784, 8388608
  %v786 = vsub.s32 0, %v785
  %v787 = vadd.s32 %v782, 1
  %vm788 = vcmp.gt.s32.totalorder %v787, 0
  %v789 = vsel %vm788, %v787, 0
  %v790 = vshrl.u32 %v789, 5
  %v791 = vand.u32 %v789, 31
  %v792 = vsub.s32 32, %v791
  %v793 = vshrl.u32 683565275, %v792
  %v794 = vshll.u32 683565275, %v791
  %v795 = vshrl.u32 2475754826, %v792
  %v796 = vor.u32 %v794, %v795
  %v797 = vshll.u32 2475754826, %v791
  %v798 = vshrl.u32 2131351028, %v792
  %v799 = vor.u32 %v797, %v798
  %v800 = vshll.u32 2131351028, %v791
  %v801 = vshrl.u32 2102212464, %v792
  %v802 = vor.u32 %v800, %v801
  %v803 = vshll.u32 2102212464, %v791
  %v804 = vshrl.u32 920167782, %v792
  %v805 = vor.u32 %v803, %v804
  %v806 = vshll.u32 920167782, %v791
  %v807 = vshrl.u32 1326507024, %v792
  %v808 = vor.u32 %v806, %v807
  %vm809 = vcmp.lt.s32.totalorder %v790, 1
  %vm810 = vcmp.lt.s32.totalorder %v790, 2
  %vm811 = vcmp.lt.s32.totalorder %v790, 3
  %vm812 = vcmp.lt.s32.totalorder %v790, 4
  %v813 = vsel %vm809, %v793, %v796
  %v814 = vsel %vm812, %v802, 2102212464
  %v815 = vsel %vm811, %v799, %v814
  %v816 = vsel %vm810, %v813, %v815
  %v817 = vsel %vm809, %v796, %v799
  %v818 = vsel %vm812, %v805, 920167782
  %v819 = vsel %vm811, %v802, %v818
  %v820 = vsel %vm810, %v817, %v819
  %v821 = vsel %vm809, %v799, %v802
  %v822 = vsel %vm812, %v808, 1326507024
  %v823 = vsel %vm811, %v805, %v822
  %v824 = vsel %vm810, %v821, %v823
  %v825 = vshll.u32 %v785, 8
  %v826 = vmul.u32.u64.compose %v825, %v824
  %v827 = vextract.low.u32 %v826
  %v828 = vextract.high.u32 %v826
  %v829 = vmul.u32.u64.compose %v825, %v820
  %v830 = vextract.low.u32 %v829
  %v831 = vextract.high.u32 %v829
  %v832 = vmul.u32 %v825, %v816
  %v833 = vadd.s32 %v828, %v830
  %vm834 = vc.u32 %v828, %v830
  %v835 = vadd.s32 %v831, 1
  %v836 = vsel %vm834, %v835, %v831
  %v837 = vadd.s32 %v832, %v836
  %v838 = vadd.s32 %v837, 536870912
  %v839 = vshrl.u32 %v838, 30
  %v840 = vshll.u32 %v839, 30
  %v841 = vsub.s32 %v837, %v840
  %vm842 = vcmp.lt.s32.totalorder %v841, 0
  %v843 = vsub.s32 0, %v841
  %v844 = vsel %vm842, %v843, %v841
  %v845 = vclz %v844
  %v846 = vsub.s32 %v845, 2
  %vm847 = vcmp.gt.s32.totalorder 0, %v846
  %v848 = vsel %vm847, 0, %v846
  %v849 = vsub.s32 32, %v848
  %v850 = vshll.u32 %v841, %v848
  %v851 = vshrl.u32 %v833, %v849
  %v852 = vor.u32 %v850, %v851
  %v853 = vsub.s32 4294967266, %v848
  %v854 = vadd.s32 %v853, 127
  %v855 = vshll.u32 %v854, 23
  %v856 = vor.u32 4788187, %v855
  %v857 = vand.u32 2147483647, %v856
  %v859 = vcvt.s32.f32 %v852
  %v860 = vmul.f32 %v859, %v857
  %v861 = vxor.u32 %v860, 2147483648
  %v862 = vsel %vm779, %v861, %v860
  %v863 = vsub.s32 4, %v839
  %v864 = vsel %vm779, %v863, %v839
  %v865 = vsel %vm778, %v453, %v862
  %v866 = vsel %vm778, 0, %v864
  %v867 = vcosq.f32.pop %v865
  %v868 = vsinq.f32.pop %v865
  %vm869 = vweird.f32 %v453
  %v870 = vand.u32 %v866, 3
  %vm871 = vcmp.lt.s32.totalorder %v870, 2
  %vm872 = vcmp.eq.s32.totalorder %v870, 0
  %v873 = vxor.u32 %v868, 2147483648
  %v874 = vsel %vm872, %v867, %v873
  %vm875 = vcmp.eq.s32.totalorder %v870, 2
  %v876 = vxor.u32 %v867, 2147483648
  %v877 = vsel %vm875, %v876, %v868
  %v878 = vsel %vm871, %v874, %v877
  %v879 = vsel %vm869, nan, %v878
  %v880 = vand.u32 2147483647, %v454
  %vm881 = vcmp.le.f32.partialorder %v880, 0.7853982
  %vm882 = vcmp.lt.s32.totalorder %v454, 0
  %v883 = vand.u32 %v454, 2139095040
  %v884 = vshrl.u32 %v883, 23
  %v885 = vsub.s32 %v884, 127
  %v886 = vand.u32 2147483647, %v454
  %v887 = vand.u32 %v886, 8388607
  %v888 = vor.u32 %v887, 8388608
  %v889 = vsub.s32 0, %v888
  %v890 = vadd.s32 %v885, 1
  %vm891 = vcmp.gt.s32.totalorder %v890, 0
  %v892 = vsel %vm891, %v890, 0
  %v893 = vshrl.u32 %v892, 5
  %v894 = vand.u32 %v892, 31
  %v895 = vsub.s32 32, %v894
  %v896 = vshrl.u32 683565275, %v895
  %v897 = vshll.u32 683565275, %v894
  %v898 = vshrl.u32 2475754826, %v895
  %v899 = vor.u32 %v897, %v898
  %v900 = vshll.u32 2475754826, %v894
  %v901 = vshrl.u32 2131351028, %v895
  %v902 = vor.u32 %v900, %v901
  %v903 = vshll.u32 2131351028, %v894
  %v904 = vshrl.u32 2102212464, %v895
  %v905 = vor.u32 %v903, %v904
  %v906 = vshll.u32 2102212464, %v894
  %v907 = vshrl.u32 920167782, %v895
  %v908 = vor.u32 %v906, %v907
  %v909 = vshll.u32 920167782, %v894
  %v910 = vshrl.u32 1326507024, %v895
  %v911 = vor.u32 %v909, %v910
  %vm912 = vcmp.lt.s32.totalorder %v893, 1
  %vm913 = vcmp.lt.s32.totalorder %v893, 2
  %vm914 = vcmp.lt.s32.totalorder %v893, 3
  %vm915 = vcmp.lt.s32.totalorder %v893, 4
  %v916 = vsel %vm912, %v896, %v899
  %v917 = vsel %vm915, %v905, 2102212464
  %v918 = vsel %vm914, %v902, %v917
  %v919 = vsel %vm913, %v916, %v918
  %v920 = vsel %vm912, %v899, %v902
  %v921 = vsel %vm915, %v908, 920167782
  %v922 = vsel %vm914, %v905, %v921
  %v923 = vsel %vm913, %v920, %v922
  %v924 = vsel %vm912, %v902, %v905
  %v925 = vsel %vm915, %v911, 1326507024
  %v926 = vsel %vm914, %v908, %v925
  %v927 = vsel %vm913, %v924, %v926
  %v928 = vshll.u32 %v888, 8
  %v929 = vmul.u32.u64.compose %v928, %v927
  %v930 = vextract.low.u32 %v929
  %v931 = vextract.high.u32 %v929
  %v932 = vmul.u32.u64.compose %v928, %v923
  %v933 = vextract.low.u32 %v932
  %v934 = vextract.high.u32 %v932
  %v935 = vmul.u32 %v928, %v919
  %v936 = vadd.s32 %v931, %v933
  %vm937 = vc.u32 %v931, %v933
  %v938 = vadd.s32 %v934, 1
  %v939 = vsel %vm937, %v938, %v934
  %v940 = vadd.s32 %v935, %v939
  %v941 = vadd.s32 %v940, 536870912
  %v942 = vshrl.u32 %v941, 30
  %v943 = vshll.u32 %v942, 30
  %v944 = vsub.s32 %v940, %v943
  %vm945 = vcmp.lt.s32.totalorder %v944, 0
  %v946 = vsub.s32 0, %v944
  %v947 = vsel %vm945, %v946, %v944
  %v948 = vclz %v947
  %v949 = vsub.s32 %v948, 2
  %vm950 = vcmp.gt.s32.totalorder 0, %v949
  %v951 = vsel %vm950, 0, %v949
  %v952 = vsub.s32 32, %v951
  %v953 = vshll.u32 %v944, %v951
  %v954 = vshrl.u32 %v936, %v952
  %v955 = vor.u32 %v953, %v954
  %v956 = vsub.s32 4294967266, %v951
  %v957 = vadd.s32 %v956, 127
  %v958 = vshll.u32 %v957, 23
  %v959 = vor.u32 4788187, %v958
  %v960 = vand.u32 2147483647, %v959
  %v962 = vcvt.s32.f32 %v955
  %v963 = vmul.f32 %v962, %v960
  %v964 = vxor.u32 %v963, 2147483648
  %v965 = vsel %vm882, %v964, %v963
  %v966 = vsub.s32 4, %v942
  %v967 = vsel %vm882, %v966, %v942
  %v968 = vsel %vm881, %v454, %v965
  %v969 = vsel %vm881, 0, %v967
  %v970 = vcosq.f32.pop %v968
  %v971 = vsinq.f32.pop %v968
  %vm972 = vweird.f32 %v454
  %v973 = vand.u32 %v969, 3
  %vm974 = vcmp.lt.s32.totalorder %v973, 2
  %vm975 = vcmp.eq.s32.totalorder %v973, 0
  %v976 = vxor.u32 %v971, 2147483648
  %v977 = vsel %vm975, %v970, %v976
  %vm978 = vcmp.eq.s32.totalorder %v973, 2
  %v979 = vxor.u32 %v970, 2147483648
  %v980 = vsel %vm978, %v979, %v971
  %v981 = vsel %vm974, %v977, %v980
  %v982 = vsel %vm972, nan, %v981
  %v983 = vand.u32 2147483647, %v455
  %vm984 = vcmp.le.f32.partialorder %v983, 0.7853982
  %vm985 = vcmp.lt.s32.totalorder %v455, 0
  %v986 = vand.u32 %v455, 2139095040
  %v987 = vshrl.u32 %v986, 23
  %v988 = vsub.s32 %v987, 127
  %v989 = vand.u32 2147483647, %v455
  %v990 = vand.u32 %v989, 8388607
  %v991 = vor.u32 %v990, 8388608
  %v992 = vsub.s32 0, %v991
  %v993 = vadd.s32 %v988, 1
  %vm994 = vcmp.gt.s32.totalorder %v993, 0
  %v995 = vsel %vm994, %v993, 0
  %v996 = vshrl.u32 %v995, 5
  %v997 = vand.u32 %v995, 31
  %v998 = vsub.s32 32, %v997
  %v999 = vshrl.u32 683565275, %v998
  %v1000 = vshll.u32 683565275, %v997
  %v1001 = vshrl.u32 2475754826, %v998
  %v1002 = vor.u32 %v1000, %v1001
  %v1003 = vshll.u32 2475754826, %v997
  %v1004 = vshrl.u32 2131351028, %v998
  %v1005 = vor.u32 %v1003, %v1004
  %v1006 = vshll.u32 2131351028, %v997
  %v1007 = vshrl.u32 2102212464, %v998
  %v1008 = vor.u32 %v1006, %v1007
  %v1009 = vshll.u32 2102212464, %v997
  %v1010 = vshrl.u32 920167782, %v998
  %v1011 = vor.u32 %v1009, %v1010
  %v1012 = vshll.u32 920167782, %v997
  %v1013 = vshrl.u32 1326507024, %v998
  %v1014 = vor.u32 %v1012, %v1013
  %vm1015 = vcmp.lt.s32.totalorder %v996, 1
  %vm1016 = vcmp.lt.s32.totalorder %v996, 2
  %vm1017 = vcmp.lt.s32.totalorder %v996, 3
  %vm1018 = vcmp.lt.s32.totalorder %v996, 4
  %v1019 = vsel %vm1015, %v999, %v1002
  %v1020 = vsel %vm1018, %v1008, 2102212464
  %v1021 = vsel %vm1017, %v1005, %v1020
  %v1022 = vsel %vm1016, %v1019, %v1021
  %v1023 = vsel %vm1015, %v1002, %v1005
  %v1024 = vsel %vm1018, %v1011, 920167782
  %v1025 = vsel %vm1017, %v1008, %v1024
  %v1026 = vsel %vm1016, %v1023, %v1025
  %v1027 = vsel %vm1015, %v1005, %v1008
  %v1028 = vsel %vm1018, %v1014, 1326507024
  %v1029 = vsel %vm1017, %v1011, %v1028
  %v1030 = vsel %vm1016, %v1027, %v1029
  %v1031 = vshll.u32 %v991, 8
  %v1032 = vmul.u32.u64.compose %v1031, %v1030
  %v1033 = vextract.low.u32 %v1032
  %v1034 = vextract.high.u32 %v1032
  %v1035 = vmul.u32.u64.compose %v1031, %v1026
  %v1036 = vextract.low.u32 %v1035
  %v1037 = vextract.high.u32 %v1035
  %v1038 = vmul.u32 %v1031, %v1022
  %v1039 = vadd.s32 %v1034, %v1036
  %vm1040 = vc.u32 %v1034, %v1036
  %v1041 = vadd.s32 %v1037, 1
  %v1042 = vsel %vm1040, %v1041, %v1037
  %v1043 = vadd.s32 %v1038, %v1042
  %v1044 = vadd.s32 %v1043, 536870912
  %v1045 = vshrl.u32 %v1044, 30
  %v1046 = vshll.u32 %v1045, 30
  %v1047 = vsub.s32 %v1043, %v1046
  %vm1048 = vcmp.lt.s32.totalorder %v1047, 0
  %v1049 = vsub.s32 0, %v1047
  %v1050 = vsel %vm1048, %v1049, %v1047
  %v1051 = vclz %v1050
  %v1052 = vsub.s32 %v1051, 2
  %vm1053 = vcmp.gt.s32.totalorder 0, %v1052
  %v1054 = vsel %vm1053, 0, %v1052
  %v1055 = vsub.s32 32, %v1054
  %v1056 = vshll.u32 %v1047, %v1054
  %v1057 = vshrl.u32 %v1039, %v1055
  %v1058 = vor.u32 %v1056, %v1057
  %v1059 = vsub.s32 4294967266, %v1054
  %v1060 = vadd.s32 %v1059, 127
  %v1061 = vshll.u32 %v1060, 23
  %v1062 = vor.u32 4788187, %v1061
  %v1063 = vand.u32 2147483647, %v1062
  %v1065 = vcvt.s32.f32 %v1058
  %v1066 = vmul.f32 %v1065, %v1063
  %v1067 = vxor.u32 %v1066, 2147483648
  %v1068 = vsel %vm985, %v1067, %v1066
  %v1069 = vsub.s32 4, %v1045
  %v1070 = vsel %vm985, %v1069, %v1045
  %v1071 = vsel %vm984, %v455, %v1068
  %v1072 = vsel %vm984, 0, %v1070
  %v1073 = vcosq.f32.pop %v1071
  %v1074 = vsinq.f32.pop %v1071
  %vm1075 = vweird.f32 %v455
  %v1076 = vand.u32 %v1072, 3
  %vm1077 = vcmp.lt.s32.totalorder %v1076, 2
  %vm1078 = vcmp.eq.s32.totalorder %v1076, 0
  %v1079 = vxor.u32 %v1074, 2147483648
  %v1080 = vsel %vm1078, %v1073, %v1079
  %vm1081 = vcmp.eq.s32.totalorder %v1076, 2
  %v1082 = vxor.u32 %v1073, 2147483648
  %v1083 = vsel %vm1081, %v1082, %v1074
  %v1084 = vsel %vm1077, %v1080, %v1083
  %v1085 = vsel %vm1075, nan, %v1084
  %v1086 = vmul.f32 %v568, %v460
  %v1087 = vmul.f32 %v672, %v462
  %v1088 = vmul.f32 %v776, %v464
  %v1089 = vsub.f32 %v1086, %v879
  %v1090 = vsub.f32 %v1087, %v982
  %v1091 = vsub.f32 %v1088, %v1085
  %v1092 = vmul.f32 %v1089, %v460
  %v1093 = vmul.f32 %v1090, %v462
  %v1094 = vmul.f32 %v1091, %v464
  %v1095 = vld [vmem:[%s21] sm:$0xff]
  %v1096 = vld [vmem:[%s21 + $0x8] sm:$0xff]
  %v1097 = vld [vmem:[%s21 + $0x10] sm:$0xf]
  %1099 = vset.pattern.permute.xlu0 0
  %1100 = vperm.xlu0 %1099, %v1095
  %v1101 = vpop.permute.xlu0 %1100
  %1104 = vset.pattern.permute.xlu0 0
  %1105 = vperm.xlu0 %1104, %v1096
  %v1106 = vpop.permute.xlu0 %1105
  %1109 = vset.pattern.permute.xlu0 0
  %1110 = vperm.xlu0 %1109, %v1097
  %v1111 = vpop.permute.xlu0 %1110
  %v1113 = vmul.f32 %v1101, %v1086
  %v1114 = vmul.f32 %v1106, %v1087
  %v1115 = vmul.f32 %v1111, %v1088
  %s1116 = scalar_lea.vmem %s21, 24
  %v1117 = vld [vmem:[%s1116] sm:$0xff]
  %v1118 = vld [vmem:[%s1116 + $0x8] sm:$0xff]
  %v1119 = vld [vmem:[%s1116 + $0x10] sm:$0xf]
  %1121 = vset.pattern.permute.xlu0 0
  %1122 = vperm.xlu0 %1121, %v1117
  %v1123 = vpop.permute.xlu0 %1122
  %1126 = vset.pattern.permute.xlu0 0
  %1127 = vperm.xlu0 %1126, %v1118
  %v1128 = vpop.permute.xlu0 %1127
  %1131 = vset.pattern.permute.xlu0 0
  %1132 = vperm.xlu0 %1131, %v1119
  %v1133 = vpop.permute.xlu0 %1132
  %v1135 = vmul.f32 %v1123, %v1092
  %v1136 = vmul.f32 %v1128, %v1093
  %v1137 = vmul.f32 %v1133, %v1094
  %v1138 = vadd.f32 %v1113, %v1135
  %v1139 = vadd.f32 %v1114, %v1136
  %v1140 = vadd.f32 %v1115, %v1137
  %v1141 = vmul.f32 %v460, 3.0
  %v1142 = vmul.f32 %v462, 3.0
  %v1143 = vmul.f32 %v464, 3.0
  %v1144 = vmul.f32 %v1141, %v1092
  %v1145 = vmul.f32 %v1142, %v1093
  %v1146 = vmul.f32 %v1143, %v1094
  %v1147 = vsub.f32 %v1144, %v1086
  %v1148 = vsub.f32 %v1145, %v1087
  %v1149 = vsub.f32 %v1146, %v1088
  %s1150 = scalar_lea.vmem %s21, 48
  %v1151 = vld [vmem:[%s1150] sm:$0xff]
  %v1152 = vld [vmem:[%s1150 + $0x8] sm:$0xff]
  %v1153 = vld [vmem:[%s1150 + $0x10] sm:$0xf]
  %1155 = vset.pattern.permute.xlu0 0
  %1156 = vperm.xlu0 %1155, %v1151
  %v1157 = vpop.permute.xlu0 %1156
  %1160 = vset.pattern.permute.xlu0 0
  %1161 = vperm.xlu0 %1160, %v1152
  %v1162 = vpop.permute.xlu0 %1161
  %1165 = vset.pattern.permute.xlu0 0
  %1166 = vperm.xlu0 %1165, %v1153
  %v1167 = vpop.permute.xlu0 %1166
  %v1169 = vmul.f32 %v1157, %v1147
  %v1170 = vmul.f32 %v1162, %v1148
  %v1171 = vmul.f32 %v1167, %v1149
  %v1172 = vadd.f32 %v1138, %v1169
  %v1173 = vadd.f32 %v1139, %v1170
  %v1174 = vadd.f32 %v1140, %v1171
  %v1175 = vmul.f32 %v460, 5.0
  %v1176 = vmul.f32 %v462, 5.0
  %v1177 = vmul.f32 %v464, 5.0
  %v1178 = vmul.f32 %v1175, %v1147
  %v1179 = vmul.f32 %v1176, %v1148
  %v1180 = vmul.f32 %v1177, %v1149
  %v1181 = vsub.f32 %v1178, %v1092
  %v1182 = vsub.f32 %v1179, %v1093
  %v1183 = vsub.f32 %v1180, %v1094
  %s1184 = scalar_lea.vmem %s21, 72
  %v1185 = vld [vmem:[%s1184] sm:$0xff]
  %v1186 = vld [vmem:[%s1184 + $0x8] sm:$0xff]
  %v1187 = vld [vmem:[%s1184 + $0x10] sm:$0xf]
  %1189 = vset.pattern.permute.xlu0 0
  %1190 = vperm.xlu0 %1189, %v1185
  %v1191 = vpop.permute.xlu0 %1190
  %1194 = vset.pattern.permute.xlu0 0
  %1195 = vperm.xlu0 %1194, %v1186
  %v1196 = vpop.permute.xlu0 %1195
  %1199 = vset.pattern.permute.xlu0 0
  %1200 = vperm.xlu0 %1199, %v1187
  %v1201 = vpop.permute.xlu0 %1200
  %v1203 = vmul.f32 %v1191, %v1181
  %v1204 = vmul.f32 %v1196, %v1182
  %v1205 = vmul.f32 %v1201, %v1183
  %v1206 = vadd.f32 %v1172, %v1203
  %v1207 = vadd.f32 %v1173, %v1204
  %v1208 = vadd.f32 %v1174, %v1205
  %v1209 = vmul.f32 %v460, 7.0
  %v1210 = vmul.f32 %v462, 7.0
  %v1211 = vmul.f32 %v464, 7.0
  %v1212 = vmul.f32 %v1209, %v1181
  %v1213 = vmul.f32 %v1210, %v1182
  %v1214 = vmul.f32 %v1211, %v1183
  %v1215 = vsub.f32 %v1212, %v1147
  %v1216 = vsub.f32 %v1213, %v1148
  %v1217 = vsub.f32 %v1214, %v1149
  %s1218 = scalar_lea.vmem %s21, 96
  %v1219 = vld [vmem:[%s1218] sm:$0xff]
  %v1220 = vld [vmem:[%s1218 + $0x8] sm:$0xff]
  %v1221 = vld [vmem:[%s1218 + $0x10] sm:$0xf]
  %1223 = vset.pattern.permute.xlu0 0
  %1224 = vperm.xlu0 %1223, %v1219
  %v1225 = vpop.permute.xlu0 %1224
  %1228 = vset.pattern.permute.xlu0 0
  %1229 = vperm.xlu0 %1228, %v1220
  %v1230 = vpop.permute.xlu0 %1229
  %1233 = vset.pattern.permute.xlu0 0
  %1234 = vperm.xlu0 %1233, %v1221
  %v1235 = vpop.permute.xlu0 %1234
  %v1237 = vmul.f32 %v1225, %v1215
  %v1238 = vmul.f32 %v1230, %v1216
  %v1239 = vmul.f32 %v1235, %v1217
  %v1240 = vadd.f32 %v1206, %v1237
  %v1241 = vadd.f32 %v1207, %v1238
  %v1242 = vadd.f32 %v1208, %v1239
  %v1243 = vld [vmem:[%s19] sm:$0xff]
  %v1244 = vld [vmem:[%s19 + $0x8] sm:$0xff]
  %v1245 = vld [vmem:[%s19 + $0x10] sm:$0xf]
  %1247 = vset.pattern.permute.xlu0 0
  %1248 = vperm.xlu0 %1247, %v1243
  %v1249 = vpop.permute.xlu0 %1248
  %1252 = vset.pattern.permute.xlu0 0
  %1253 = vperm.xlu0 %1252, %v1244
  %v1254 = vpop.permute.xlu0 %1253
  %1257 = vset.pattern.permute.xlu0 0
  %1258 = vperm.xlu0 %1257, %v1245
  %v1259 = vpop.permute.xlu0 %1258
  %v1261 = vmul.f32 %v432, %v1249
  %v1262 = vmul.f32 %v432, %v1254
  %v1263 = vmul.f32 %v432, %v1259
  %v1264 = vmul.f32 %v1261, %v1240
  %v1265 = vmul.f32 %v1262, %v1241
  %v1266 = vmul.f32 %v1263, %v1242
  %v1267 = vld [vmem:[%s5] sm:$0xff]
  %v1268 = vld [vmem:[%s5 + $0x8] sm:$0xff]
  %v1269 = vld [vmem:[%s5 + $0x10] sm:$0xff]
  %v1270 = vld [vmem:[%s5 + $0x18] sm:$0xff]
  %v1271 = vld [vmem:[%s5 + $0x20] sm:$0xff]
  %v1272 = vld [vmem:[%s5 + $0x28] sm:$0xff]
  %v1273 = vld [vmem:[%s5 + $0x30] sm:$0xff]
  %v1274 = vld [vmem:[%s5 + $0x38] sm:$0xff]
  %v1275 = vld [vmem:[%s5 + $0x40] sm:$0xff]
  %v1276 = vld [vmem:[%s5 + $0x48] sm:$0xff]
  %v1277 = vld [vmem:[%s5 + $0x50] sm:$0xff]
  %v1278 = vld [vmem:[%s5 + $0x58] sm:$0xff]
  %v1279 = vld [vmem:[%s5 + $0x60] sm:$0xff]
  %v1280 = vld [vmem:[%s5 + $0x68] sm:$0xff]
  %v1281 = vld [vmem:[%s5 + $0x70] sm:$0xff]
  %v1282 = vld [vmem:[%s5 + $0x78] sm:$0xff]
  %1283 = vmatprep.subr.mxu0 0.0
  %1284 = vmatpush1.msra.mxu0 %v1282
  %1285 = vmatprep.subr.mxu0 0.0
  %1286 = vmatpush1.msra.mxu0 %v1281
  %1287 = vmatprep.subr.mxu0 0.0
  %1288 = vmatpush1.msra.mxu0 %v1280
  %1289 = vmatprep.subr.mxu0 0.0
  %1290 = vmatpush1.msra.mxu0 %v1279
  %1291 = vmatprep.subr.mxu0 0.0
  %1292 = vmatpush1.msra.mxu0 %v1278
  %1293 = vmatprep.subr.mxu0 0.0
  %1294 = vmatpush1.msra.mxu0 %v1277
  %1295 = vmatprep.subr.mxu0 0.0
  %1296 = vmatpush1.msra.mxu0 %v1276
  %1297 = vmatprep.subr.mxu0 0.0
  %1298 = vmatpush1.msra.mxu0 %v1275
  %1299 = vmatprep.subr.mxu0 0.0
  %1300 = vmatpush1.msra.mxu0 %v1274
  %1301 = vmatprep.subr.mxu0 0.0
  %1302 = vmatpush1.msra.mxu0 %v1273
  %1303 = vmatprep.subr.mxu0 0.0
  %1304 = vmatpush1.msra.mxu0 %v1272
  %1305 = vmatprep.subr.mxu0 0.0
  %1306 = vmatpush1.msra.mxu0 %v1271
  %1307 = vmatprep.subr.mxu0 0.0
  %1308 = vmatpush1.msra.mxu0 %v1270
  %1309 = vmatprep.subr.mxu0 0.0
  %1310 = vmatpush1.msra.mxu0 %v1269
  %1311 = vmatprep.subr.mxu0 0.0
  %1312 = vmatpush1.msra.mxu0 %v1268
  %1313 = vmatprep.subr.mxu0 0.0
  %1314 = vmatpush1.msra.mxu0 %v1267
  %1315 = vmatprep.subr.mxu0 0.0
  %1316 = vmatpush2.msra.mxu0 0.0
  %1317 = vmatprep.subr.mxu0 0.0
  %1318 = vmatpush2.msra.mxu0 0.0
  %1319 = vmatprep.subr.mxu0 0.0
  %1320 = vmatpush2.msra.mxu0 0.0
  %1321 = vmatprep.subr.mxu0 0.0
  %1322 = vmatpush2.msra.mxu0 0.0
  %1323 = vmatprep.subr.mxu0 0.0
  %1324 = vmatpush2.msra.mxu0 0.0
  %1325 = vmatprep.subr.mxu0 0.0
  %1326 = vmatpush2.msra.mxu0 0.0
  %1327 = vmatprep.subr.mxu0 0.0
  %1328 = vmatpush2.msra.mxu0 0.0
  %1329 = vmatprep.subr.mxu0 0.0
  %1330 = vmatpush2.msra.mxu0 0.0
  %1331 = vmatprep.subr.mxu0 0.0
  %1332 = vmatpush2.msra.mxu0 0.0
  %1333 = vmatprep.subr.mxu0 0.0
  %1334 = vmatpush2.msra.mxu0 0.0
  %1335 = vmatprep.subr.mxu0 0.0
  %1336 = vmatpush2.msra.mxu0 0.0
  %1337 = vmatprep.subr.mxu0 0.0
  %1338 = vmatpush2.msra.mxu0 0.0
  %1339 = vmatprep.subr.mxu0 0.0
  %1340 = vmatpush2.msra.mxu0 0.0
  %1341 = vmatprep.subr.mxu0 0.0
  %1342 = vmatpush2.msra.mxu0 0.0
  %1343 = vmatprep.subr.mxu0 0.0
  %1344 = vmatpush2.msra.mxu0 0.0
  %1345 = vmatprep.subr.mxu0 0.0
  %1346 = vmatpush2.msra.mxu0 0.0
  %1347 = vmatprep.mubr.f32.mxu0 0.0
  %1348 = vmatmul.mubr.f32.gmra.mxu0 %v1264
  %v1349 = vpop.f32.mrf.mxu0
  %v1350 = vadd.f32 0.0, %v1349
  %v1351 = vpop.f32.mrf.mxu0
  %1352 = vmatprep.mubr.f32.mxu0 0.0
  %1353 = vmatmul.mubr.f32.gmra.mxu0 %v1265
  %v1354 = vpop.f32.mrf.mxu0
  %v1355 = vadd.f32 0.0, %v1354
  %v1356 = vpop.f32.mrf.mxu0
  %1357 = vmatprep.mubr.f32.mxu0 0.0
  %1358 = vmatmul.mubr.f32.gmra.mxu0 %v1266
  %v1359 = vpop.f32.mrf.mxu0
  %v1360 = vadd.f32 0.0, %v1359
  %v1361 = vpop.f32.mrf.mxu0
  %1362 = vdwg.mxu0
  %v1363 = vld [vmem:[%s3] sm:$0x1]
  %v1364 = vand.u32 2147483647, %v1363
  %vm1365 = vcmp.le.f32.partialorder %v1364, 0.7853982
  %vm1366 = vcmp.lt.s32.totalorder %v1363, 0
  %v1367 = vand.u32 %v1363, 2139095040
  %v1368 = vshrl.u32 %v1367, 23
  %v1369 = vsub.s32 %v1368, 127
  %v1370 = vand.u32 2147483647, %v1363
  %v1371 = vand.u32 %v1370, 8388607
  %v1372 = vor.u32 %v1371, 8388608
  %v1373 = vsub.s32 0, %v1372
  %v1374 = vadd.s32 %v1369, 1
  %vm1375 = vcmp.gt.s32.totalorder %v1374, 0
  %v1376 = vsel %vm1375, %v1374, 0
  %v1377 = vshrl.u32 %v1376, 5
  %v1378 = vand.u32 %v1376, 31
  %v1379 = vsub.s32 32, %v1378
  %v1380 = vshrl.u32 683565275, %v1379
  %v1381 = vshll.u32 683565275, %v1378
  %v1382 = vshrl.u32 2475754826, %v1379
  %v1383 = vor.u32 %v1381, %v1382
  %v1384 = vshll.u32 2475754826, %v1378
  %v1385 = vshrl.u32 2131351028, %v1379
  %v1386 = vor.u32 %v1384, %v1385
  %v1387 = vshll.u32 2131351028, %v1378
  %v1388 = vshrl.u32 2102212464, %v1379
  %v1389 = vor.u32 %v1387, %v1388
  %v1390 = vshll.u32 2102212464, %v1378
  %v1391 = vshrl.u32 920167782, %v1379
  %v1392 = vor.u32 %v1390, %v1391
  %v1393 = vshll.u32 920167782, %v1378
  %v1394 = vshrl.u32 1326507024, %v1379
  %v1395 = vor.u32 %v1393, %v1394
  %vm1396 = vcmp.lt.s32.totalorder %v1377, 1
  %vm1397 = vcmp.lt.s32.totalorder %v1377, 2
  %vm1398 = vcmp.lt.s32.totalorder %v1377, 3
  %vm1399 = vcmp.lt.s32.totalorder %v1377, 4
  %v1400 = vsel %vm1396, %v1380, %v1383
  %v1401 = vsel %vm1399, %v1389, 2102212464
  %v1402 = vsel %vm1398, %v1386, %v1401
  %v1403 = vsel %vm1397, %v1400, %v1402
  %v1404 = vsel %vm1396, %v1383, %v1386
  %v1405 = vsel %vm1399, %v1392, 920167782
  %v1406 = vsel %vm1398, %v1389, %v1405
  %v1407 = vsel %vm1397, %v1404, %v1406
  %v1408 = vsel %vm1396, %v1386, %v1389
  %v1409 = vsel %vm1399, %v1395, 1326507024
  %v1410 = vsel %vm1398, %v1392, %v1409
  %v1411 = vsel %vm1397, %v1408, %v1410
  %v1412 = vshll.u32 %v1372, 8
  %v1413 = vmul.u32.u64.compose %v1412, %v1411
  %v1414 = vextract.low.u32 %v1413
  %v1415 = vextract.high.u32 %v1413
  %v1416 = vmul.u32.u64.compose %v1412, %v1407
  %v1417 = vextract.low.u32 %v1416
  %v1418 = vextract.high.u32 %v1416
  %v1419 = vmul.u32 %v1412, %v1403
  %v1420 = vadd.s32 %v1415, %v1417
  %vm1421 = vc.u32 %v1415, %v1417
  %v1422 = vadd.s32 %v1418, 1
  %v1423 = vsel %vm1421, %v1422, %v1418
  %v1424 = vadd.s32 %v1419, %v1423
  %v1425 = vadd.s32 %v1424, 536870912
  %v1426 = vshrl.u32 %v1425, 30
  %v1427 = vshll.u32 %v1426, 30
  %v1428 = vsub.s32 %v1424, %v1427
  %vm1429 = vcmp.lt.s32.totalorder %v1428, 0
  %v1430 = vsub.s32 0, %v1428
  %v1431 = vsel %vm1429, %v1430, %v1428
  %v1432 = vclz %v1431
  %v1433 = vsub.s32 %v1432, 2
  %vm1434 = vcmp.gt.s32.totalorder 0, %v1433
  %v1435 = vsel %vm1434, 0, %v1433
  %v1436 = vsub.s32 32, %v1435
  %v1437 = vshll.u32 %v1428, %v1435
  %v1438 = vshrl.u32 %v1420, %v1436
  %v1439 = vor.u32 %v1437, %v1438
  %v1440 = vsub.s32 4294967266, %v1435
  %v1441 = vadd.s32 %v1440, 127
  %v1442 = vshll.u32 %v1441, 23
  %v1443 = vor.u32 4788187, %v1442
  %v1444 = vand.u32 2147483647, %v1443
  %v1446 = vcvt.s32.f32 %v1439
  %v1447 = vmul.f32 %v1446, %v1444
  %v1448 = vxor.u32 %v1447, 2147483648
  %v1449 = vsel %vm1366, %v1448, %v1447
  %v1450 = vsub.s32 4, %v1426
  %v1451 = vsel %vm1366, %v1450, %v1426
  %v1452 = vsel %vm1365, %v1363, %v1449
  %v1453 = vsel %vm1365, 0, %v1451
  %v1454 = vcosq.f32.pop %v1452
  %v1455 = vsinq.f32.pop %v1452
  %vm1456 = vweird.f32 %v1363
  %v1457 = vand.u32 %v1453, 3
  %vm1458 = vcmp.lt.s32.totalorder %v1457, 2
  %vm1459 = vcmp.eq.s32.totalorder %v1457, 0
  %v1460 = vxor.u32 %v1455, 2147483648
  %v1461 = vsel %vm1459, %v1454, %v1460
  %vm1462 = vcmp.eq.s32.totalorder %v1457, 2
  %v1463 = vxor.u32 %v1454, 2147483648
  %v1464 = vsel %vm1462, %v1463, %v1455
  %v1465 = vsel %vm1458, %v1461, %v1464
  %v1466 = vsel %vm1456, nan, %v1465
  %v1467 = vmul.f32 %v1466, %v1466
  %v1468 = vmul.f32 %v1467, %v1466
  %v1469 = vmul.f32 %v1467, %v1467
  %v1470 = vmul.f32 %v1467, 3.0
  %v1471 = vsub.f32 %v1470, 1.0
  %v1472 = vmul.f32 %v1471, 0.5
  %v1473 = vmul.f32 %v1468, 5.0
  %v1474 = vmul.f32 %v1466, 3.0
  %v1475 = vsub.f32 %v1473, %v1474
  %v1476 = vmul.f32 %v1475, 0.5
  %v1477 = vmul.f32 %v1469, 35.0
  %v1478 = vmul.f32 %v1467, 30.0
  %v1479 = vsub.f32 %v1477, %v1478
  %v1480 = vadd.f32 %v1479, 3.0
  %v1481 = vmul.f32 %v1480, 0.125
  %v1482 = vmul.f32 %v1101, 0.2820948
  %v1483 = vmul.f32 %v1106, 0.2820948
  %v1484 = vmul.f32 %v1111, 0.2820948
  %v1485 = vmul.f32 %v1466, 0.48860252
  %v1487 = vlaneseq
  %v1488 = vshrl.u32 %v1487, 7
  %v1489 = vsub.s32 0, %v1488
  %v1490 = vrot.slane %v1485, %v1489
  %v1492 = vmul.f32 %v1123, %v1490
  %v1493 = vmul.f32 %v1128, %v1490
  %v1494 = vmul.f32 %v1133, %v1490
  %v1495 = vadd.f32 %v1482, %v1492
  %v1496 = vadd.f32 %v1483, %v1493
  %v1497 = vadd.f32 %v1484, %v1494
  %v1498 = vmul.f32 %v1472, 0.63078314
  %v1500 = vlaneseq
  %v1501 = vshrl.u32 %v1500, 7
  %v1502 = vsub.s32 0, %v1501
  %v1503 = vrot.slane %v1498, %v1502
  %v1505 = vmul.f32 %v1157, %v1503
  %v1506 = vmul.f32 %v1162, %v1503
  %v1507 = vmul.f32 %v1167, %v1503
  %v1508 = vadd.f32 %v1495, %v1505
  %v1509 = vadd.f32 %v1496, %v1506
  %v1510 = vadd.f32 %v1497, %v1507
  %v1511 = vmul.f32 %v1476, 0.7463527
  %v1513 = vlaneseq
  %v1514 = vshrl.u32 %v1513, 7
  %v1515 = vsub.s32 0, %v1514
  %v1516 = vrot.slane %v1511, %v1515
  %v1518 = vmul.f32 %v1191, %v1516
  %v1519 = vmul.f32 %v1196, %v1516
  %v1520 = vmul.f32 %v1201, %v1516
  %v1521 = vadd.f32 %v1508, %v1518
  %v1522 = vadd.f32 %v1509, %v1519
  %v1523 = vadd.f32 %v1510, %v1520
  %v1524 = vmul.f32 %v1481, 0.8462844
  %v1526 = vlaneseq
  %v1527 = vshrl.u32 %v1526, 7
  %v1528 = vsub.s32 0, %v1527
  %v1529 = vrot.slane %v1524, %v1528
  %v1531 = vmul.f32 %v1225, %v1529
  %v1532 = vmul.f32 %v1230, %v1529
  %v1533 = vmul.f32 %v1235, %v1529
  %v1534 = vadd.f32 %v1521, %v1531
  %v1535 = vadd.f32 %v1522, %v1532
  %v1536 = vadd.f32 %v1523, %v1533
  %v1537 = vmul.f32 %v1350, %v1534
  %v1538 = vmul.f32 %v1355, %v1535
  %v1539 = vmul.f32 %v1360, %v1536
  %v1540 = vpack.c.bf16 %v434, %v434
  %v1541 = vpack.c.bf16 %v1538, %v1537
  %v1542 = vpack.c.bf16 %v1539, %v1539
  %v1543 = vld [vmem:[%s7] sm:$0xff]
  %v1544 = vld [vmem:[%s7 + $0x8] sm:$0xff]
  %v1545 = vld [vmem:[%s7 + $0x10] sm:$0xff]
  %v1546 = vld [vmem:[%s7 + $0x18] sm:$0xff]
  %v1547 = vld [vmem:[%s7 + $0x20] sm:$0xff]
  %v1548 = vld [vmem:[%s7 + $0x28] sm:$0xff]
  %v1549 = vld [vmem:[%s7 + $0x30] sm:$0xff]
  %v1550 = vld [vmem:[%s7 + $0x38] sm:$0xff]
  %v1551 = vld [vmem:[%s7 + $0x40] sm:$0xff]
  %v1552 = vld [vmem:[%s7 + $0x48] sm:$0xff]
  %v1553 = vld [vmem:[%s7 + $0x50] sm:$0xff]
  %v1554 = vld [vmem:[%s7 + $0x58] sm:$0xff]
  %v1555 = vld [vmem:[%s7 + $0x60] sm:$0xff]
  %v1556 = vld [vmem:[%s7 + $0x68] sm:$0xff]
  %v1557 = vld [vmem:[%s7 + $0x70] sm:$0xff]
  %v1558 = vld [vmem:[%s7 + $0x78] sm:$0xff]
  %v1559 = vld [vmem:[%s9] sm:$0xff]
  %v1560 = vld [vmem:[%s9 + $0x8] sm:$0xff]
  %v1561 = vld [vmem:[%s9 + $0x10] sm:$0xff]
  %v1562 = vld [vmem:[%s9 + $0x18] sm:$0xff]
  %v1563 = vld [vmem:[%s9 + $0x20] sm:$0xff]
  %v1564 = vld [vmem:[%s9 + $0x28] sm:$0xff]
  %v1565 = vld [vmem:[%s9 + $0x30] sm:$0xff]
  %v1566 = vld [vmem:[%s9 + $0x38] sm:$0xff]
  %v1567 = vld [vmem:[%s9 + $0x40] sm:$0xff]
  %v1568 = vld [vmem:[%s9 + $0x48] sm:$0xff]
  %v1569 = vld [vmem:[%s9 + $0x50] sm:$0xff]
  %v1570 = vld [vmem:[%s9 + $0x58] sm:$0xff]
  %v1571 = vld [vmem:[%s9 + $0x60] sm:$0xff]
  %v1572 = vld [vmem:[%s9 + $0x68] sm:$0xff]
  %v1573 = vld [vmem:[%s9 + $0x70] sm:$0xff]
  %v1574 = vld [vmem:[%s9 + $0x78] sm:$0xff]
  %v1575 = vld [vmem:[%s23] sm:$0xf]
  %v1576 = vld [vmem:[%s23 + $0x4] sm:$0xf]
  %v1577 = vld [vmem:[%s25] sm:$0xff]
  %v1578 = vld [vmem:[%s25 + $0x8] sm:$0xff]
  %v1579 = vld [vmem:[%s27] sm:$0xf]
  %v1580 = vld [vmem:[%s27 + $0x4] sm:$0xf]
  %v1581 = vld [vmem:[%s29] sm:$0xf]
  %v1582 = vld [vmem:[%s29 + $0x4] sm:$0xf]
  %v1583 = vld [vmem:[%s31] sm:$0xff]
  %v1584 = vld [vmem:[%s31 + $0x8] sm:$0xff]
  %1586 = vset.pattern.permute.xlu0 0
  %1587 = vperm.xlu0 %1586, %v1577
  %v1588 = vpop.permute.xlu0 %1587
  %1591 = vset.pattern.permute.xlu0 0
  %1592 = vperm.xlu0 %1591, %v1578
  %v1593 = vpop.permute.xlu0 %1592
  %v1597 = vunpack.c.l.b16 %v1575
  %v1598 = vunpack.c.l.b16 %v1576
  %v1599 = vpack.c.b16 %v1598, %v1597
  %vm1600 = vcmask 31744
  %v1602 = vsel %vm1600, %v1599, 0
  %vm1604 = vcmask 1041408
  %v1606 = vsel %vm1604, %v1540, 0
  %1608 = vmatprep.subr.bf16.mxu0 0
  %1609 = vmatpush1.bf16.msra.mxu0 0
  %1610 = vmatprep.subr.bf16.mxu0 0
  %1611 = vmatpush1.bf16.msra.mxu0 0
  %1612 = vmatprep.subr.bf16.mxu0 0
  %1613 = vmatpush1.bf16.msra.mxu0 0
  %1614 = vmatprep.subr.bf16.mxu0 0
  %1615 = vmatpush1.bf16.msra.mxu0 0
  %1616 = vmatprep.subr.bf16.mxu0 0
  %1617 = vmatpush1.bf16.msra.mxu0 0
  %1618 = vmatprep.subr.bf16.mxu0 0
  %1619 = vmatpush1.bf16.msra.mxu0 0
  %1620 = vmatprep.subr.bf16.mxu0 0
  %1621 = vmatpush1.bf16.msra.mxu0 0
  %1622 = vmatprep.subr.bf16.mxu0 0
  %1623 = vmatpush1.bf16.msra.mxu0 %v1606
  %1624 = vmatprep.subr.bf16.mxu0 0
  %1625 = vmatpush2.bf16.msra.mxu0 0
  %1626 = vmatprep.subr.bf16.mxu0 0
  %1627 = vmatpush2.bf16.msra.mxu0 0
  %1628 = vmatprep.subr.bf16.mxu0 0
  %1629 = vmatpush2.bf16.msra.mxu0 0
  %1630 = vmatprep.subr.bf16.mxu0 0
  %1631 = vmatpush2.bf16.msra.mxu0 0
  %1632 = vmatprep.subr.bf16.mxu0 0
  %1633 = vmatpush2.bf16.msra.mxu0 0
  %1634 = vmatprep.subr.bf16.mxu0 0
  %1635 = vmatpush2.bf16.msra.mxu0 0
  %1636 = vmatprep.subr.bf16.mxu0 0
  %1637 = vmatpush2.bf16.msra.mxu0 0
  %1638 = vmatprep.subr.bf16.mxu0 0
  %1639 = vmatpush2.bf16.msra.mxu0 0
  %1640 = vmatprep.mubr.bf16.mxu0 0
  %1641 = vmatmul.mubr.bf16.gmra.mxu0 %v1602
  %v1642 = vpop.f32.mrf.mxu0
  %v1643 = vadd.f32 %v1588, %v1642
  %v1644 = vpop.f32.mrf.mxu0
  %v1645 = vpop.f32.mrf.mxu0
  %v1646 = vadd.f32 %v1593, %v1645
  %v1647 = vpop.f32.mrf.mxu0
  %1648 = vdwg.mxu0
  %v1649 = vsub.f32 0.0, %v1643
  %v1650 = vsub.f32 0.0, %v1646
  %v1651 = vmul.f32 %v1649, 1.442695
  %v1652 = vpow.pop %v1651
  %v1653 = vmul.f32 %v1650, 1.442695
  %v1654 = vpow.pop %v1653
  %v1655 = vadd.f32 %v1652, 1.0
  %v1656 = vadd.f32 %v1654, 1.0
  %v1657 = vrcp.pop %v1655
  %v1658 = vrcp.pop %v1656
  %v1659 = vmul.f32 %v1643, %v1657
  %v1660 = vmul.f32 %v1646, %v1658
  %v1661 = vld [vmem:[%s13] sm:$0xff]
  %v1662 = vld [vmem:[%s13 + $0x8] sm:$0xff]
  %v1663 = vld [vmem:[%s13 + $0x10] sm:$0xff]
  %v1664 = vld [vmem:[%s13 + $0x18] sm:$0xff]
  %v1665 = vpack.c.bf16 %v1662, %v1661
  %v1666 = vpack.c.bf16 %v1664, %v1663
  %v1667 = vpack.c.bf16 %v1660, %v1659
  %v1670 = vunpack.c.l.b16 %v1581
  %v1671 = vunpack.c.l.b16 %v1582
  %v1672 = vpack.c.b16 %v1671, %v1670
  %vm1673 = vcmask 130048
  %v1675 = vsel %vm1673, %v1672, 0
  %1677 = vmatprep.subr.bf16.mxu0 0
  %1678 = vmatpush1.bf16.msra.mxu0 0
  %1679 = vmatprep.subr.bf16.mxu0 0
  %1680 = vmatpush1.bf16.msra.mxu0 0
  %1681 = vmatprep.subr.bf16.mxu0 0
  %1682 = vmatpush1.bf16.msra.mxu0 0
  %1683 = vmatprep.subr.bf16.mxu0 0
  %1684 = vmatpush1.bf16.msra.mxu0 0
  %1685 = vmatprep.subr.bf16.mxu0 0
  %1686 = vmatpush1.bf16.msra.mxu0 0
  %1687 = vmatprep.subr.bf16.mxu0 0
  %1688 = vmatpush1.bf16.msra.mxu0 0
  %1689 = vmatprep.subr.bf16.mxu0 0
  %1690 = vmatpush1.bf16.msra.mxu0 0
  %1691 = vmatprep.subr.bf16.mxu0 0
  %1692 = vmatpush1.bf16.msra.mxu0 %v1667
  %1693 = vmatprep.subr.bf16.mxu0 0
  %1694 = vmatpush2.bf16.msra.mxu0 0
  %1695 = vmatprep.subr.bf16.mxu0 0
  %1696 = vmatpush2.bf16.msra.mxu0 0
  %1697 = vmatprep.subr.bf16.mxu0 0
  %1698 = vmatpush2.bf16.msra.mxu0 0
  %1699 = vmatprep.subr.bf16.mxu0 0
  %1700 = vmatpush2.bf16.msra.mxu0 0
  %1701 = vmatprep.subr.bf16.mxu0 0
  %1702 = vmatpush2.bf16.msra.mxu0 0
  %1703 = vmatprep.subr.bf16.mxu0 0
  %1704 = vmatpush2.bf16.msra.mxu0 0
  %1705 = vmatprep.subr.bf16.mxu0 0
  %1706 = vmatpush2.bf16.msra.mxu0 0
  %1707 = vmatprep.subr.bf16.mxu0 0
  %1708 = vmatpush2.bf16.msra.mxu0 0
  %1709 = vmatprep.mubr.bf16.mxu0 0
  %1710 = vmatmul.mubr.bf16.gmra.mxu0 %v1675
  %v1711 = vpop.f32.mrf.mxu0
  %v1712 = vadd.f32 0.0, %v1711
  %v1713 = vpop.f32.mrf.mxu0
  %v1714 = vpop.f32.mrf.mxu0
  %v1715 = vadd.f32 0.0, %v1714
  %v1716 = vpop.f32.mrf.mxu0
  %1717 = vdwg.mxu0
  %v1720 = vunpack.c.l.b16 %v1579
  %v1721 = vunpack.c.l.b16 %v1580
  %v1722 = vpack.c.b16 %v1721, %v1720
  %vm1723 = vcmask 261120
  %v1725 = vsel %vm1723, %v1722, 0
  %1727 = vmatprep.subr.bf16.mxu0 0
  %1728 = vmatpush1.bf16.msra.mxu0 0
  %1729 = vmatprep.subr.bf16.mxu0 0
  %1730 = vmatpush1.bf16.msra.mxu0 0
  %1731 = vmatprep.subr.bf16.mxu0 0
  %1732 = vmatpush1.bf16.msra.mxu0 0
  %1733 = vmatprep.subr.bf16.mxu0 0
  %1734 = vmatpush1.bf16.msra.mxu0 0
  %1735 = vmatprep.subr.bf16.mxu0 0
  %1736 = vmatpush1.bf16.msra.mxu0 0
  %1737 = vmatprep.subr.bf16.mxu0 0
  %1738 = vmatpush1.bf16.msra.mxu0 0
  %1739 = vmatprep.subr.bf16.mxu0 0
  %1740 = vmatpush1.bf16.msra.mxu0 %v1666
  %1741 = vmatprep.subr.bf16.mxu0 0
  %1742 = vmatpush1.bf16.msra.mxu0 %v1665
  %1743 = vmatprep.subr.bf16.mxu0 0
  %1744 = vmatpush2.bf16.msra.mxu0 0
  %1745 = vmatprep.subr.bf16.mxu0 0
  %1746 = vmatpush2.bf16.msra.mxu0 0
  %1747 = vmatprep.subr.bf16.mxu0 0
  %1748 = vmatpush2.bf16.msra.mxu0 0
  %1749 = vmatprep.subr.bf16.mxu0 0
  %1750 = vmatpush2.bf16.msra.mxu0 0
  %1751 = vmatprep.subr.bf16.mxu0 0
  %1752 = vmatpush2.bf16.msra.mxu0 0
  %1753 = vmatprep.subr.bf16.mxu0 0
  %1754 = vmatpush2.bf16.msra.mxu0 0
  %1755 = vmatprep.subr.bf16.mxu0 0
  %1756 = vmatpush2.bf16.msra.mxu0 0
  %1757 = vmatprep.subr.bf16.mxu0 0
  %1758 = vmatpush2.bf16.msra.mxu0 0
  %1759 = vmatprep.mubr.bf16.mxu0 0
  %1760 = vmatmul.mubr.bf16.gmra.mxu0 %v1725
  %v1761 = vpop.f32.mrf.mxu0
  %v1762 = vadd.f32 %v1712, %v1761
  %v1763 = vpop.f32.mrf.mxu0
  %v1764 = vpop.f32.mrf.mxu0
  %v1765 = vadd.f32 %v1715, %v1764
  %v1766 = vpop.f32.mrf.mxu0
  %1767 = vdwg.mxu0
  %1769 = vset.pattern.permute.xlu0 0
  %1770 = vperm.xlu0 %1769, %v1583
  %v1771 = vpop.permute.xlu0 %1770
  %1774 = vset.pattern.permute.xlu0 0
  %1775 = vperm.xlu0 %1774, %v1584
  %v1776 = vpop.permute.xlu0 %1775
  %v1778 = vadd.f32 %v1762, %v1771
  %v1779 = vadd.f32 %v1765, %v1776
  %v1780 = vsub.f32 0.0, %v1778
  %v1781 = vsub.f32 0.0, %v1779
  %v1782 = vmul.f32 %v1780, 1.442695
  %v1783 = vpow.pop %v1782
  %v1784 = vmul.f32 %v1781, 1.442695
  %v1785 = vpow.pop %v1784
  %v1786 = vadd.f32 %v1783, 1.0
  %v1787 = vadd.f32 %v1785, 1.0
  %v1788 = vrcp.pop %v1786
  %v1789 = vrcp.pop %v1787
  %v1790 = vmul.f32 %v1778, %v1788
  %v1791 = vmul.f32 %v1779, %v1789
  %v1792 = vld [vmem:[%s33] sm:$0xf]
  %v1793 = vld [vmem:[%s33 + $0x4] sm:$0xf]
  %v1794 = vld [vmem:[%s35] sm:$0xf]
  %v1795 = vld [vmem:[%s35 + $0x4] sm:$0xf]
  %v1796 = vld [vmem:[%s35 + $0x8] sm:$0xf]
  %v1797 = vld [vmem:[%s35 + $0xc] sm:$0xf]
  %v1800 = vunpack.c.l.b16 %v1792
  %v1801 = vunpack.c.l.b16 %v1793
  %v1802 = vpack.c.b16 %v1801, %v1800
  %v1804 = vsel %vm1600, %v1802, 0
  %1806 = vmatprep.subr.bf16.mxu0 0
  %1807 = vmatpush1.bf16.msra.mxu0 0
  %1808 = vmatprep.subr.bf16.mxu0 0
  %1809 = vmatpush1.bf16.msra.mxu0 0
  %1810 = vmatprep.subr.bf16.mxu0 0
  %1811 = vmatpush1.bf16.msra.mxu0 0
  %1812 = vmatprep.subr.bf16.mxu0 0
  %1813 = vmatpush1.bf16.msra.mxu0 0
  %1814 = vmatprep.subr.bf16.mxu0 0
  %1815 = vmatpush1.bf16.msra.mxu0 0
  %1816 = vmatprep.subr.bf16.mxu0 0
  %1817 = vmatpush1.bf16.msra.mxu0 0
  %1818 = vmatprep.subr.bf16.mxu0 0
  %1819 = vmatpush1.bf16.msra.mxu0 0
  %1820 = vmatprep.subr.bf16.mxu0 0
  %1821 = vmatpush1.bf16.msra.mxu0 %v1606
  %1822 = vmatprep.subr.bf16.mxu0 0
  %1823 = vmatpush2.bf16.msra.mxu0 0
  %1824 = vmatprep.subr.bf16.mxu0 0
  %1825 = vmatpush2.bf16.msra.mxu0 0
  %1826 = vmatprep.subr.bf16.mxu0 0
  %1827 = vmatpush2.bf16.msra.mxu0 0
  %1828 = vmatprep.subr.bf16.mxu0 0
  %1829 = vmatpush2.bf16.msra.mxu0 0
  %1830 = vmatprep.subr.bf16.mxu0 0
  %1831 = vmatpush2.bf16.msra.mxu0 0
  %1832 = vmatprep.subr.bf16.mxu0 0
  %1833 = vmatpush2.bf16.msra.mxu0 0
  %1834 = vmatprep.subr.bf16.mxu0 0
  %1835 = vmatpush2.bf16.msra.mxu0 0
  %1836 = vmatprep.subr.bf16.mxu0 0
  %1837 = vmatpush2.bf16.msra.mxu0 0
  %1838 = vmatprep.mubr.bf16.mxu0 0
  %1839 = vmatmul.mubr.bf16.gmra.mxu0 %v1804
  %v1840 = vpop.f32.mrf.mxu0
  %v1841 = vadd.f32 0.0, %v1840
  %v1842 = vpop.f32.mrf.mxu0
  %v1843 = vpop.f32.mrf.mxu0
  %v1844 = vadd.f32 0.0, %v1843
  %v1845 = vpop.f32.mrf.mxu0
  %1846 = vdwg.mxu0
  %v1847 = vmul.f32 %v1841, %v1790
  %v1848 = vmul.f32 %v1844, %v1791
  %1849 = vmatprep.subr.mxu0 0.0
  %1850 = vmatpush1.msra.mxu0 %v1574
  %1851 = vmatprep.subr.mxu0 0.0
  %1852 = vmatpush1.msra.mxu0 %v1573
  %1853 = vmatprep.subr.mxu0 0.0
  %1854 = vmatpush1.msra.mxu0 %v1572
  %1855 = vmatprep.subr.mxu0 0.0
  %1856 = vmatpush1.msra.mxu0 %v1571
  %1857 = vmatprep.subr.mxu0 0.0
  %1858 = vmatpush1.msra.mxu0 %v1570
  %1859 = vmatprep.subr.mxu0 0.0
  %1860 = vmatpush1.msra.mxu0 %v1569
  %1861 = vmatprep.subr.mxu0 0.0
  %1862 = vmatpush1.msra.mxu0 %v1568
  %1863 = vmatprep.subr.mxu0 0.0
  %1864 = vmatpush1.msra.mxu0 %v1567
  %1865 = vmatprep.subr.mxu0 0.0
  %1866 = vmatpush1.msra.mxu0 %v1566
  %1867 = vmatprep.subr.mxu0 0.0
  %1868 = vmatpush1.msra.mxu0 %v1565
  %1869 = vmatprep.subr.mxu0 0.0
  %1870 = vmatpush1.msra.mxu0 %v1564
  %1871 = vmatprep.subr.mxu0 0.0
  %1872 = vmatpush1.msra.mxu0 %v1563
  %1873 = vmatprep.subr.mxu0 0.0
  %1874 = vmatpush1.msra.mxu0 %v1562
  %1875 = vmatprep.subr.mxu0 0.0
  %1876 = vmatpush1.msra.mxu0 %v1561
  %1877 = vmatprep.subr.mxu0 0.0
  %1878 = vmatpush1.msra.mxu0 %v1560
  %1879 = vmatprep.subr.mxu0 0.0
  %1880 = vmatpush1.msra.mxu0 %v1559
  %1881 = vmatprep.subr.mxu0 0.0
  %1882 = vmatpush2.msra.mxu0 0.0
  %1883 = vmatprep.subr.mxu0 0.0
  %1884 = vmatpush2.msra.mxu0 0.0
  %1885 = vmatprep.subr.mxu0 0.0
  %1886 = vmatpush2.msra.mxu0 0.0
  %1887 = vmatprep.subr.mxu0 0.0
  %1888 = vmatpush2.msra.mxu0 0.0
  %1889 = vmatprep.subr.mxu0 0.0
  %1890 = vmatpush2.msra.mxu0 0.0
  %1891 = vmatprep.subr.mxu0 0.0
  %1892 = vmatpush2.msra.mxu0 0.0
  %1893 = vmatprep.subr.mxu0 0.0
  %1894 = vmatpush2.msra.mxu0 0.0
  %1895 = vmatprep.subr.mxu0 0.0
  %1896 = vmatpush2.msra.mxu0 0.0
  %1897 = vmatprep.subr.mxu0 0.0
  %1898 = vmatpush2.msra.mxu0 0.0
  %1899 = vmatprep.subr.mxu0 0.0
  %1900 = vmatpush2.msra.mxu0 0.0
  %1901 = vmatprep.subr.mxu0 0.0
  %1902 = vmatpush2.msra.mxu0 0.0
  %1903 = vmatprep.subr.mxu0 0.0
  %1904 = vmatpush2.msra.mxu0 0.0
  %1905 = vmatprep.subr.mxu0 0.0
  %1906 = vmatpush2.msra.mxu0 0.0
  %1907 = vmatprep.subr.mxu0 0.0
  %1908 = vmatpush2.msra.mxu0 0.0
  %1909 = vmatprep.subr.mxu0 0.0
  %1910 = vmatpush2.msra.mxu0 0.0
  %1911 = vmatprep.subr.mxu0 0.0
  %1912 = vmatpush2.msra.mxu0 0.0
  %1913 = vmatprep.mubr.f32.mxu0 0.0
  %1914 = vmatmul.mubr.f32.gmra.mxu0 %v1847
  %v1915 = vpop.f32.mrf.mxu0
  %v1916 = vadd.f32 0.0, %v1915
  %v1917 = vpop.f32.mrf.mxu0
  %1918 = vmatprep.mubr.f32.mxu0 0.0
  %1919 = vmatmul.mubr.f32.gmra.mxu0 %v1848
  %v1920 = vpop.f32.mrf.mxu0
  %v1921 = vadd.f32 0.0, %v1920
  %v1922 = vpop.f32.mrf.mxu0
  %1923 = vdwg.mxu0
  %v1924 = vpack.c.bf16 %v1921, %v1916
  %v1929 = vunpack.c.l.b16 %v1794
  %v1930 = vunpack.c.l.b16 %v1795
  %v1931 = vunpack.c.l.b16 %v1796
  %v1932 = vunpack.c.l.b16 %v1797
  %v1933 = vpack.c.b16 %v1930, %v1929
  %v1934 = vpack.c.b16 %v1932, %v1931
  %v1936 = vsel %vm1673, %v1933, 0
  %v1939 = vsel %vm1673, %v1934, 0
  %1941 = vmatprep.subr.bf16.mxu0 0
  %1942 = vmatpush1.bf16.msra.mxu0 0
  %1943 = vmatprep.subr.bf16.mxu0 0
  %1944 = vmatpush1.bf16.msra.mxu0 0
  %1945 = vmatprep.subr.bf16.mxu0 0
  %1946 = vmatpush1.bf16.msra.mxu0 0
  %1947 = vmatprep.subr.bf16.mxu0 0
  %1948 = vmatpush1.bf16.msra.mxu0 0
  %1949 = vmatprep.subr.bf16.mxu0 0
  %1950 = vmatpush1.bf16.msra.mxu0 0
  %1951 = vmatprep.subr.bf16.mxu0 0
  %1952 = vmatpush1.bf16.msra.mxu0 0
  %1953 = vmatprep.subr.bf16.mxu0 0
  %1954 = vmatpush1.bf16.msra.mxu0 0
  %1955 = vmatprep.subr.bf16.mxu0 0
  %1956 = vmatpush1.bf16.msra.mxu0 %v1924
  %1957 = vmatprep.subr.bf16.mxu0 0
  %1958 = vmatpush2.bf16.msra.mxu0 0
  %1959 = vmatprep.subr.bf16.mxu0 0
  %1960 = vmatpush2.bf16.msra.mxu0 0
  %1961 = vmatprep.subr.bf16.mxu0 0
  %1962 = vmatpush2.bf16.msra.mxu0 0
  %1963 = vmatprep.subr.bf16.mxu0 0
  %1964 = vmatpush2.bf16.msra.mxu0 0
  %1965 = vmatprep.subr.bf16.mxu0 0
  %1966 = vmatpush2.bf16.msra.mxu0 0
  %1967 = vmatprep.subr.bf16.mxu0 0
  %1968 = vmatpush2.bf16.msra.mxu0 0
  %1969 = vmatprep.subr.bf16.mxu0 0
  %1970 = vmatpush2.bf16.msra.mxu0 0
  %1971 = vmatprep.subr.bf16.mxu0 0
  %1972 = vmatpush2.bf16.msra.mxu0 0
  %1973 = vmatprep.mubr.bf16.mxu0 0
  %1974 = vmatmul.mubr.bf16.gmra.mxu0 %v1936
  %v1975 = vpop.f32.mrf.mxu0
  %v1976 = vadd.f32 0.0, %v1975
  %v1977 = vpop.f32.mrf.mxu0
  %v1978 = vpop.f32.mrf.mxu0
  %v1979 = vadd.f32 0.0, %v1978
  %v1980 = vpop.f32.mrf.mxu0
  %1981 = vmatprep.mubr.bf16.mxu0 0
  %1982 = vmatmul.mubr.bf16.gmra.mxu0 %v1939
  %v1983 = vpop.f32.mrf.mxu0
  %v1984 = vadd.f32 0.0, %v1983
  %v1985 = vpop.f32.mrf.mxu0
  %v1986 = vpop.f32.mrf.mxu0
  %v1987 = vadd.f32 0.0, %v1986
  %v1988 = vpop.f32.mrf.mxu0
  %1989 = vdwg.mxu0
  %v1990 = vld [vmem:[%s37] sm:$0xf]
  %v1991 = vld [vmem:[%s37 + $0x4] sm:$0xf]
  %v1992 = vld [vmem:[%s37 + $0x8] sm:$0xf]
  %v1993 = vld [vmem:[%s37 + $0xc] sm:$0xf]
  %v1994 = vld [vmem:[%s39] sm:$0xff]
  %v1995 = vld [vmem:[%s39 + $0x8] sm:$0xff]
  %v1996 = vld [vmem:[%s39 + $0x10] sm:$0xff]
  %v1997 = vld [vmem:[%s39 + $0x18] sm:$0xff]
  %v1998 = vpack.c.bf16 %v1979, %v1976
  %v1999 = vpack.c.bf16 %v1987, %v1984
  %2001 = vset.pattern.permute.xlu0 0
  %2002 = vperm.xlu0 %2001, %v1994
  %v2003 = vpop.permute.xlu0 %2002
  %2006 = vset.pattern.permute.xlu0 0
  %2007 = vperm.xlu0 %2006, %v1995
  %v2008 = vpop.permute.xlu0 %2007
  %2011 = vset.pattern.permute.xlu0 0
  %2012 = vperm.xlu0 %2011, %v1996
  %v2013 = vpop.permute.xlu0 %2012
  %2016 = vset.pattern.permute.xlu0 0
  %2017 = vperm.xlu0 %2016, %v1997
  %v2018 = vpop.permute.xlu0 %2017
  %v2024 = vunpack.c.l.b16 %v1990
  %v2025 = vunpack.c.l.b16 %v1991
  %v2026 = vunpack.c.l.b16 %v1992
  %v2027 = vunpack.c.l.b16 %v1993
  %v2028 = vpack.c.b16 %v2025, %v2024
  %v2029 = vpack.c.b16 %v2027, %v2026
  %v2031 = vsel %vm1723, %v2028, 0
  %v2034 = vsel %vm1723, %v2029, 0
  %2036 = vmatprep.subr.bf16.mxu0 0
  %2037 = vmatpush1.bf16.msra.mxu0 0
  %2038 = vmatprep.subr.bf16.mxu0 0
  %2039 = vmatpush1.bf16.msra.mxu0 0
  %2040 = vmatprep.subr.bf16.mxu0 0
  %2041 = vmatpush1.bf16.msra.mxu0 0
  %2042 = vmatprep.subr.bf16.mxu0 0
  %2043 = vmatpush1.bf16.msra.mxu0 0
  %2044 = vmatprep.subr.bf16.mxu0 0
  %2045 = vmatpush1.bf16.msra.mxu0 0
  %2046 = vmatprep.subr.bf16.mxu0 0
  %2047 = vmatpush1.bf16.msra.mxu0 0
  %2048 = vmatprep.subr.bf16.mxu0 0
  %2049 = vmatpush1.bf16.msra.mxu0 %v1999
  %2050 = vmatprep.subr.bf16.mxu0 0
  %2051 = vmatpush1.bf16.msra.mxu0 %v1998
  %2052 = vmatprep.subr.bf16.mxu0 0
  %2053 = vmatpush2.bf16.msra.mxu0 0
  %2054 = vmatprep.subr.bf16.mxu0 0
  %2055 = vmatpush2.bf16.msra.mxu0 0
  %2056 = vmatprep.subr.bf16.mxu0 0
  %2057 = vmatpush2.bf16.msra.mxu0 0
  %2058 = vmatprep.subr.bf16.mxu0 0
  %2059 = vmatpush2.bf16.msra.mxu0 0
  %2060 = vmatprep.subr.bf16.mxu0 0
  %2061 = vmatpush2.bf16.msra.mxu0 0
  %2062 = vmatprep.subr.bf16.mxu0 0
  %2063 = vmatpush2.bf16.msra.mxu0 0
  %2064 = vmatprep.subr.bf16.mxu0 0
  %2065 = vmatpush2.bf16.msra.mxu0 0
  %2066 = vmatprep.subr.bf16.mxu0 0
  %2067 = vmatpush2.bf16.msra.mxu0 0
  %2068 = vmatprep.mubr.bf16.mxu0 0
  %2069 = vmatmul.mubr.bf16.gmra.mxu0 %v2031
  %v2070 = vpop.f32.mrf.mxu0
  %v2071 = vadd.f32 %v2003, %v2070
  %v2072 = vpop.f32.mrf.mxu0
  %v2073 = vpop.f32.mrf.mxu0
  %v2074 = vadd.f32 %v2008, %v2073
  %v2075 = vpop.f32.mrf.mxu0
  %2076 = vmatprep.mubr.bf16.mxu0 0
  %2077 = vmatmul.mubr.bf16.gmra.mxu0 %v2034
  %v2078 = vpop.f32.mrf.mxu0
  %v2079 = vadd.f32 %v2013, %v2078
  %v2080 = vpop.f32.mrf.mxu0
  %v2081 = vpop.f32.mrf.mxu0
  %v2082 = vadd.f32 %v2018, %v2081
  %v2083 = vpop.f32.mrf.mxu0
  %2084 = vdwg.mxu0
  %v2085 = vsub.f32 0.0, %v2071
  %v2086 = vsub.f32 0.0, %v2074
  %v2087 = vsub.f32 0.0, %v2079
  %v2088 = vsub.f32 0.0, %v2082
  %v2089 = vmul.f32 %v2085, 1.442695
  %v2090 = vpow.pop %v2089
  %v2091 = vmul.f32 %v2086, 1.442695
  %v2092 = vpow.pop %v2091
  %v2093 = vmul.f32 %v2087, 1.442695
  %v2094 = vpow.pop %v2093
  %v2095 = vmul.f32 %v2088, 1.442695
  %v2096 = vpow.pop %v2095
  %v2097 = vadd.f32 %v2090, 1.0
  %v2098 = vadd.f32 %v2092, 1.0
  %v2099 = vadd.f32 %v2094, 1.0
  %v2100 = vadd.f32 %v2096, 1.0
  %v2101 = vrcp.pop %v2097
  %v2102 = vrcp.pop %v2098
  %v2103 = vrcp.pop %v2099
  %v2104 = vrcp.pop %v2100
  %v2105 = vmul.f32 %v2071, %v2101
  %v2106 = vmul.f32 %v2074, %v2102
  %v2107 = vmul.f32 %v2079, %v2103
  %v2108 = vmul.f32 %v2082, %v2104
  %v2109 = vld [vmem:[%s41] sm:$0xf]
  %v2110 = vld [vmem:[%s41 + $0x4] sm:$0xf]
  %v2111 = vld [vmem:[%s41 + $0x8] sm:$0xf]
  %v2112 = vld [vmem:[%s41 + $0xc] sm:$0xf]
  %v2113 = vld [vmem:[%s43] sm:$0xff]
  %v2114 = vld [vmem:[%s43 + $0x8] sm:$0xff]
  %v2115 = vld [vmem:[%s43 + $0x10] sm:$0xff]
  %v2116 = vld [vmem:[%s43 + $0x18] sm:$0xff]
  %v2117 = vpack.c.bf16 %v2106, %v2105
  %v2118 = vpack.c.bf16 %v2108, %v2107
  %2120 = vset.pattern.permute.xlu0 0
  %2121 = vperm.xlu0 %2120, %v2113
  %v2122 = vpop.permute.xlu0 %2121
  %2125 = vset.pattern.permute.xlu0 0
  %2126 = vperm.xlu0 %2125, %v2114
  %v2127 = vpop.permute.xlu0 %2126
  %2130 = vset.pattern.permute.xlu0 0
  %2131 = vperm.xlu0 %2130, %v2115
  %v2132 = vpop.permute.xlu0 %2131
  %2135 = vset.pattern.permute.xlu0 0
  %2136 = vperm.xlu0 %2135, %v2116
  %v2137 = vpop.permute.xlu0 %2136
  %v2143 = vunpack.c.l.b16 %v2109
  %v2144 = vunpack.c.l.b16 %v2110
  %v2145 = vunpack.c.l.b16 %v2111
  %v2146 = vunpack.c.l.b16 %v2112
  %v2147 = vpack.c.b16 %v2144, %v2143
  %v2148 = vpack.c.b16 %v2146, %v2145
  %v2150 = vsel %vm1723, %v2147, 0
  %v2153 = vsel %vm1723, %v2148, 0
  %2155 = vmatprep.subr.bf16.mxu0 0
  %2156 = vmatpush1.bf16.msra.mxu0 0
  %2157 = vmatprep.subr.bf16.mxu0 0
  %2158 = vmatpush1.bf16.msra.mxu0 0
  %2159 = vmatprep.subr.bf16.mxu0 0
  %2160 = vmatpush1.bf16.msra.mxu0 0
  %2161 = vmatprep.subr.bf16.mxu0 0
  %2162 = vmatpush1.bf16.msra.mxu0 0
  %2163 = vmatprep.subr.bf16.mxu0 0
  %2164 = vmatpush1.bf16.msra.mxu0 0
  %2165 = vmatprep.subr.bf16.mxu0 0
  %2166 = vmatpush1.bf16.msra.mxu0 0
  %2167 = vmatprep.subr.bf16.mxu0 0
  %2168 = vmatpush1.bf16.msra.mxu0 %v2118
  %2169 = vmatprep.subr.bf16.mxu0 0
  %2170 = vmatpush1.bf16.msra.mxu0 %v2117
  %2171 = vmatprep.subr.bf16.mxu0 0
  %2172 = vmatpush2.bf16.msra.mxu0 0
  %2173 = vmatprep.subr.bf16.mxu0 0
  %2174 = vmatpush2.bf16.msra.mxu0 0
  %2175 = vmatprep.subr.bf16.mxu0 0
  %2176 = vmatpush2.bf16.msra.mxu0 0
  %2177 = vmatprep.subr.bf16.mxu0 0
  %2178 = vmatpush2.bf16.msra.mxu0 0
  %2179 = vmatprep.subr.bf16.mxu0 0
  %2180 = vmatpush2.bf16.msra.mxu0 0
  %2181 = vmatprep.subr.bf16.mxu0 0
  %2182 = vmatpush2.bf16.msra.mxu0 0
  %2183 = vmatprep.subr.bf16.mxu0 0
  %2184 = vmatpush2.bf16.msra.mxu0 0
  %2185 = vmatprep.subr.bf16.mxu0 0
  %2186 = vmatpush2.bf16.msra.mxu0 0
  %2187 = vmatprep.mubr.bf16.mxu0 0
  %2188 = vmatmul.mubr.bf16.gmra.mxu0 %v2150
  %v2189 = vpop.f32.mrf.mxu0
  %v2190 = vadd.f32 %v2122, %v2189
  %v2191 = vpop.f32.mrf.mxu0
  %v2192 = vpop.f32.mrf.mxu0
  %v2193 = vadd.f32 %v2127, %v2192
  %v2194 = vpop.f32.mrf.mxu0
  %2195 = vmatprep.mubr.bf16.mxu0 0
  %2196 = vmatmul.mubr.bf16.gmra.mxu0 %v2153
  %v2197 = vpop.f32.mrf.mxu0
  %v2198 = vadd.f32 %v2132, %v2197
  %v2199 = vpop.f32.mrf.mxu0
  %v2200 = vpop.f32.mrf.mxu0
  %v2201 = vadd.f32 %v2137, %v2200
  %v2202 = vpop.f32.mrf.mxu0
  %2203 = vdwg.mxu0
  %v2204 = vsub.f32 0.0, %v2190
  %v2205 = vsub.f32 0.0, %v2193
  %v2206 = vsub.f32 0.0, %v2198
  %v2207 = vsub.f32 0.0, %v2201
  %v2208 = vmul.f32 %v2204, 1.442695
  %v2209 = vpow.pop %v2208
  %v2210 = vmul.f32 %v2205, 1.442695
  %v2211 = vpow.pop %v2210
  %v2212 = vmul.f32 %v2206, 1.442695
  %v2213 = vpow.pop %v2212
  %v2214 = vmul.f32 %v2207, 1.442695
  %v2215 = vpow.pop %v2214
  %v2216 = vadd.f32 %v2209, 1.0
  %v2217 = vadd.f32 %v2211, 1.0
  %v2218 = vadd.f32 %v2213, 1.0
  %v2219 = vadd.f32 %v2215, 1.0
  %v2220 = vrcp.pop %v2216
  %v2221 = vrcp.pop %v2217
  %v2222 = vrcp.pop %v2218
  %v2223 = vrcp.pop %v2219
  %v2224 = vmul.f32 %v2190, %v2220
  %v2225 = vmul.f32 %v2193, %v2221
  %v2226 = vmul.f32 %v2198, %v2222
  %v2227 = vmul.f32 %v2201, %v2223
  %v2228 = vld [vmem:[%s45] sm:$0xf]
  %v2229 = vld [vmem:[%s45 + $0x4] sm:$0xf]
  %v2230 = vpack.c.bf16 %v2225, %v2224
  %v2231 = vpack.c.bf16 %v2227, %v2226
  %v2232 = vld [vmem:[%s47] sm:$0xf]
  %v2233 = vld [vmem:[%s47 + $0x4] sm:$0xf]
  %v2234 = vld [vmem:[%s47 + $0x8] sm:$0xf]
  %v2235 = vld [vmem:[%s47 + $0xc] sm:$0xf]
  %v2236 = vld [vmem:[%s49] sm:$0xff]
  %v2237 = vld [vmem:[%s49 + $0x8] sm:$0xff]
  %v2238 = vld [vmem:[%s49 + $0x10] sm:$0xff]
  %v2239 = vld [vmem:[%s49 + $0x18] sm:$0xff]
  %v2240 = vld [vmem:[%s51] sm:$0xf]
  %v2241 = vld [vmem:[%s51 + $0x4] sm:$0xf]
  %v2242 = vld [vmem:[%s53] sm:$0xf]
  %v2243 = vld [vmem:[%s53 + $0x4] sm:$0xf]
  %v2244 = vld [vmem:[%s53 + $0x8] sm:$0xf]
  %v2245 = vld [vmem:[%s53 + $0xc] sm:$0xf]
  %v2246 = vld [vmem:[%s55] sm:$0xf]
  %v2247 = vld [vmem:[%s55 + $0x4] sm:$0xf]
  %v2248 = vld [vmem:[%s55 + $0x8] sm:$0xf]
  %v2249 = vld [vmem:[%s55 + $0xc] sm:$0xf]
  %v2250 = vld [vmem:[%s57] sm:$0xf]
  %v2251 = vld [vmem:[%s57 + $0x4] sm:$0xf]
  %v2252 = vpack.c.bf16 %v1791, %v1790
  %2254 = vset.pattern.permute.xlu0 0
  %2255 = vperm.xlu0 %2254, %v2236
  %v2256 = vpop.permute.xlu0 %2255
  %2259 = vset.pattern.permute.xlu0 0
  %2260 = vperm.xlu0 %2259, %v2237
  %v2261 = vpop.permute.xlu0 %2260
  %2264 = vset.pattern.permute.xlu0 0
  %2265 = vperm.xlu0 %2264, %v2238
  %v2266 = vpop.permute.xlu0 %2265
  %2269 = vset.pattern.permute.xlu0 0
  %2270 = vperm.xlu0 %2269, %v2239
  %v2271 = vpop.permute.xlu0 %2270
  %v2277 = vunpack.c.l.b16 %v2232
  %v2278 = vunpack.c.l.b16 %v2233
  %v2279 = vunpack.c.l.b16 %v2234
  %v2280 = vunpack.c.l.b16 %v2235
  %v2281 = vpack.c.b16 %v2278, %v2277
  %v2282 = vpack.c.b16 %v2280, %v2279
  %v2284 = vsel %vm1673, %v2281, 0
  %v2287 = vsel %vm1673, %v2282, 0
  %2289 = vmatprep.subr.bf16.mxu0 0
  %2290 = vmatpush1.bf16.msra.mxu0 0
  %2291 = vmatprep.subr.bf16.mxu0 0
  %2292 = vmatpush1.bf16.msra.mxu0 0
  %2293 = vmatprep.subr.bf16.mxu0 0
  %2294 = vmatpush1.bf16.msra.mxu0 0
  %2295 = vmatprep.subr.bf16.mxu0 0
  %2296 = vmatpush1.bf16.msra.mxu0 0
  %2297 = vmatprep.subr.bf16.mxu0 0
  %2298 = vmatpush1.bf16.msra.mxu0 0
  %2299 = vmatprep.subr.bf16.mxu0 0
  %2300 = vmatpush1.bf16.msra.mxu0 0
  %2301 = vmatprep.subr.bf16.mxu0 0
  %2302 = vmatpush1.bf16.msra.mxu0 0
  %2303 = vmatprep.subr.bf16.mxu0 0
  %2304 = vmatpush1.bf16.msra.mxu0 %v2252
  %2305 = vmatprep.subr.bf16.mxu0 0
  %2306 = vmatpush2.bf16.msra.mxu0 0
  %2307 = vmatprep.subr.bf16.mxu0 0
  %2308 = vmatpush2.bf16.msra.mxu0 0
  %2309 = vmatprep.subr.bf16.mxu0 0
  %2310 = vmatpush2.bf16.msra.mxu0 0
  %2311 = vmatprep.subr.bf16.mxu0 0
  %2312 = vmatpush2.bf16.msra.mxu0 0
  %2313 = vmatprep.subr.bf16.mxu0 0
  %2314 = vmatpush2.bf16.msra.mxu0 0
  %2315 = vmatprep.subr.bf16.mxu0 0
  %2316 = vmatpush2.bf16.msra.mxu0 0
  %2317 = vmatprep.subr.bf16.mxu0 0
  %2318 = vmatpush2.bf16.msra.mxu0 0
  %2319 = vmatprep.subr.bf16.mxu0 0
  %2320 = vmatpush2.bf16.msra.mxu0 0
  %2321 = vmatprep.mubr.bf16.mxu0 0
  %2322 = vmatmul.mubr.bf16.gmra.mxu0 %v2284
  %v2323 = vpop.f32.mrf.mxu0
  %v2324 = vadd.f32 %v2256, %v2323
  %v2325 = vpop.f32.mrf.mxu0
  %v2326 = vpop.f32.mrf.mxu0
  %v2327 = vadd.f32 %v2261, %v2326
  %v2328 = vpop.f32.mrf.mxu0
  %2329 = vmatprep.mubr.bf16.mxu0 0
  %2330 = vmatmul.mubr.bf16.gmra.mxu0 %v2287
  %v2331 = vpop.f32.mrf.mxu0
  %v2332 = vadd.f32 %v2266, %v2331
  %v2333 = vpop.f32.mrf.mxu0
  %v2334 = vpop.f32.mrf.mxu0
  %v2335 = vadd.f32 %v2271, %v2334
  %v2336 = vpop.f32.mrf.mxu0
  %2337 = vdwg.mxu0
  %v2338 = vsub.f32 0.0, %v2324
  %v2339 = vsub.f32 0.0, %v2327
  %v2340 = vmul.f32 %v2338, 1.442695
  %v2341 = vpow.pop %v2340
  %v2342 = vmul.f32 %v2339, 1.442695
  %v2343 = vpow.pop %v2342
  %v2344 = vadd.f32 %v2341, 1.0
  %v2345 = vadd.f32 %v2343, 1.0
  %v2346 = vrcp.pop %v2344
  %v2347 = vrcp.pop %v2345
  %v2348 = vmul.f32 %v2324, %v2346
  %v2349 = vmul.f32 %v2327, %v2347
  %v2350 = vsub.f32 0.0, %v2332
  %v2351 = vsub.f32 0.0, %v2335
  %v2352 = vmul.f32 %v2350, 1.442695
  %v2353 = vpow.pop %v2352
  %v2354 = vmul.f32 %v2351, 1.442695
  %v2355 = vpow.pop %v2354
  %v2356 = vadd.f32 %v2353, 1.0
  %v2357 = vadd.f32 %v2355, 1.0
  %v2358 = vrcp.pop %v2356
  %v2359 = vrcp.pop %v2357
  %v2360 = vmul.f32 %v2332, %v2358
  %v2361 = vmul.f32 %v2335, %v2359
  %v2364 = vunpack.c.l.b16 %v2240
  %v2365 = vunpack.c.l.b16 %v2241
  %v2366 = vpack.c.b16 %v2365, %v2364
  %v2368 = vsel %vm1600, %v2366, 0
  %2370 = vmatprep.subr.bf16.mxu0 0
  %2371 = vmatpush1.bf16.msra.mxu0 0
  %2372 = vmatprep.subr.bf16.mxu0 0
  %2373 = vmatpush1.bf16.msra.mxu0 0
  %2374 = vmatprep.subr.bf16.mxu0 0
  %2375 = vmatpush1.bf16.msra.mxu0 0
  %2376 = vmatprep.subr.bf16.mxu0 0
  %2377 = vmatpush1.bf16.msra.mxu0 0
  %2378 = vmatprep.subr.bf16.mxu0 0
  %2379 = vmatpush1.bf16.msra.mxu0 0
  %2380 = vmatprep.subr.bf16.mxu0 0
  %2381 = vmatpush1.bf16.msra.mxu0 0
  %2382 = vmatprep.subr.bf16.mxu0 0
  %2383 = vmatpush1.bf16.msra.mxu0 0
  %2384 = vmatprep.subr.bf16.mxu0 0
  %2385 = vmatpush1.bf16.msra.mxu0 %v1606
  %2386 = vmatprep.subr.bf16.mxu0 0
  %2387 = vmatpush2.bf16.msra.mxu0 0
  %2388 = vmatprep.subr.bf16.mxu0 0
  %2389 = vmatpush2.bf16.msra.mxu0 0
  %2390 = vmatprep.subr.bf16.mxu0 0
  %2391 = vmatpush2.bf16.msra.mxu0 0
  %2392 = vmatprep.subr.bf16.mxu0 0
  %2393 = vmatpush2.bf16.msra.mxu0 0
  %2394 = vmatprep.subr.bf16.mxu0 0
  %2395 = vmatpush2.bf16.msra.mxu0 0
  %2396 = vmatprep.subr.bf16.mxu0 0
  %2397 = vmatpush2.bf16.msra.mxu0 0
  %2398 = vmatprep.subr.bf16.mxu0 0
  %2399 = vmatpush2.bf16.msra.mxu0 0
  %2400 = vmatprep.subr.bf16.mxu0 0
  %2401 = vmatpush2.bf16.msra.mxu0 0
  %2402 = vmatprep.mubr.bf16.mxu0 0
  %2403 = vmatmul.mubr.bf16.gmra.mxu0 %v2368
  %v2404 = vpop.f32.mrf.mxu0
  %v2405 = vadd.f32 0.0, %v2404
  %v2406 = vpop.f32.mrf.mxu0
  %v2407 = vpop.f32.mrf.mxu0
  %v2408 = vadd.f32 0.0, %v2407
  %v2409 = vpop.f32.mrf.mxu0
  %2410 = vdwg.mxu0
  %v2411 = vmul.f32 %v2360, %v2405
  %v2412 = vmul.f32 %v2361, %v2408
  %v2413 = vpack.c.bf16 %v2412, %v2411
  %v2418 = vunpack.c.l.b16 %v2246
  %v2419 = vunpack.c.l.b16 %v2247
  %v2420 = vunpack.c.l.b16 %v2248
  %v2421 = vunpack.c.l.b16 %v2249
  %v2422 = vpack.c.b16 %v2419, %v2418
  %v2423 = vpack.c.b16 %v2421, %v2420
  %v2425 = vsel %vm1673, %v2422, 0
  %v2428 = vsel %vm1673, %v2423, 0
  %2430 = vmatprep.subr.bf16.mxu0 0
  %2431 = vmatpush1.bf16.msra.mxu0 0
  %2432 = vmatprep.subr.bf16.mxu0 0
  %2433 = vmatpush1.bf16.msra.mxu0 0
  %2434 = vmatprep.subr.bf16.mxu0 0
  %2435 = vmatpush1.bf16.msra.mxu0 0
  %2436 = vmatprep.subr.bf16.mxu0 0
  %2437 = vmatpush1.bf16.msra.mxu0 0
  %2438 = vmatprep.subr.bf16.mxu0 0
  %2439 = vmatpush1.bf16.msra.mxu0 0
  %2440 = vmatprep.subr.bf16.mxu0 0
  %2441 = vmatpush1.bf16.msra.mxu0 0
  %2442 = vmatprep.subr.bf16.mxu0 0
  %2443 = vmatpush1.bf16.msra.mxu0 0
  %2444 = vmatprep.subr.bf16.mxu0 0
  %2445 = vmatpush1.bf16.msra.mxu0 %v2413
  %2446 = vmatprep.subr.bf16.mxu0 0
  %2447 = vmatpush2.bf16.msra.mxu0 0
  %2448 = vmatprep.subr.bf16.mxu0 0
  %2449 = vmatpush2.bf16.msra.mxu0 0
  %2450 = vmatprep.subr.bf16.mxu0 0
  %2451 = vmatpush2.bf16.msra.mxu0 0
  %2452 = vmatprep.subr.bf16.mxu0 0
  %2453 = vmatpush2.bf16.msra.mxu0 0
  %2454 = vmatprep.subr.bf16.mxu0 0
  %2455 = vmatpush2.bf16.msra.mxu0 0
  %2456 = vmatprep.subr.bf16.mxu0 0
  %2457 = vmatpush2.bf16.msra.mxu0 0
  %2458 = vmatprep.subr.bf16.mxu0 0
  %2459 = vmatpush2.bf16.msra.mxu0 0
  %2460 = vmatprep.subr.bf16.mxu0 0
  %2461 = vmatpush2.bf16.msra.mxu0 0
  %2462 = vmatprep.mubr.bf16.mxu0 0
  %2463 = vmatmul.mubr.bf16.gmra.mxu0 %v2425
  %v2464 = vpop.f32.mrf.mxu0
  %v2465 = vadd.f32 0.0, %v2464
  %v2466 = vpop.f32.mrf.mxu0
  %v2467 = vpop.f32.mrf.mxu0
  %v2468 = vadd.f32 0.0, %v2467
  %v2469 = vpop.f32.mrf.mxu0
  %2470 = vmatprep.mubr.bf16.mxu0 0
  %2471 = vmatmul.mubr.bf16.gmra.mxu0 %v2428
  %v2472 = vpop.f32.mrf.mxu0
  %v2473 = vadd.f32 0.0, %v2472
  %v2474 = vpop.f32.mrf.mxu0
  %v2475 = vpop.f32.mrf.mxu0
  %v2476 = vadd.f32 0.0, %v2475
  %v2477 = vpop.f32.mrf.mxu0
  %2478 = vdwg.mxu0
  %v2479 = vsub.f32 0.0, %v2465
  %v2480 = vsub.f32 0.0, %v2468
  %v2481 = vsub.f32 0.0, %v2473
  %v2482 = vsub.f32 0.0, %v2476
  %v2483 = vmul.f32 %v2479, 1.442695
  %v2484 = vpow.pop %v2483
  %v2485 = vmul.f32 %v2480, 1.442695
  %v2486 = vpow.pop %v2485
  %v2487 = vmul.f32 %v2481, 1.442695
  %v2488 = vpow.pop %v2487
  %v2489 = vmul.f32 %v2482, 1.442695
  %v2490 = vpow.pop %v2489
  %v2491 = vadd.f32 %v2484, 1.0
  %v2492 = vadd.f32 %v2486, 1.0
  %v2493 = vadd.f32 %v2488, 1.0
  %v2494 = vadd.f32 %v2490, 1.0
  %v2495 = vrcp.pop %v2491
  %v2496 = vrcp.pop %v2492
  %v2497 = vrcp.pop %v2493
  %v2498 = vrcp.pop %v2494
  %v2499 = vmul.f32 %v2465, %v2495
  %v2500 = vmul.f32 %v2468, %v2496
  %v2501 = vmul.f32 %v2473, %v2497
  %v2502 = vmul.f32 %v2476, %v2498
  %v2507 = vunpack.c.l.b16 %v2242
  %v2508 = vunpack.c.l.b16 %v2243
  %v2509 = vunpack.c.l.b16 %v2244
  %v2510 = vunpack.c.l.b16 %v2245
  %v2511 = vpack.c.b16 %v2508, %v2507
  %v2512 = vpack.c.b16 %v2510, %v2509
  %vm2513 = vcmask 162816
  %v2515 = vsel %vm2513, %v2511, 0
  %v2518 = vsel %vm2513, %v2512, 0
  %v2521 = vsel %vm1604, %v1542, 0
  %2523 = vmatprep.subr.bf16.mxu0 0
  %2524 = vmatpush1.bf16.msra.mxu0 0
  %2525 = vmatprep.subr.bf16.mxu0 0
  %2526 = vmatpush1.bf16.msra.mxu0 0
  %2527 = vmatprep.subr.bf16.mxu0 0
  %2528 = vmatpush1.bf16.msra.mxu0 0
  %2529 = vmatprep.subr.bf16.mxu0 0
  %2530 = vmatpush1.bf16.msra.mxu0 0
  %2531 = vmatprep.subr.bf16.mxu0 0
  %2532 = vmatpush1.bf16.msra.mxu0 0
  %2533 = vmatprep.subr.bf16.mxu0 0
  %2534 = vmatpush1.bf16.msra.mxu0 0
  %2535 = vmatprep.subr.bf16.mxu0 0
  %2536 = vmatpush1.bf16.msra.mxu0 %v2521
  %2537 = vmatprep.subr.bf16.mxu0 0
  %2538 = vmatpush1.bf16.msra.mxu0 %v1541
  %2539 = vmatprep.subr.bf16.mxu0 0
  %2540 = vmatpush2.bf16.msra.mxu0 0
  %2541 = vmatprep.subr.bf16.mxu0 0
  %2542 = vmatpush2.bf16.msra.mxu0 0
  %2543 = vmatprep.subr.bf16.mxu0 0
  %2544 = vmatpush2.bf16.msra.mxu0 0
  %2545 = vmatprep.subr.bf16.mxu0 0
  %2546 = vmatpush2.bf16.msra.mxu0 0
  %2547 = vmatprep.subr.bf16.mxu0 0
  %2548 = vmatpush2.bf16.msra.mxu0 0
  %2549 = vmatprep.subr.bf16.mxu0 0
  %2550 = vmatpush2.bf16.msra.mxu0 0
  %2551 = vmatprep.subr.bf16.mxu0 0
  %2552 = vmatpush2.bf16.msra.mxu0 0
  %2553 = vmatprep.subr.bf16.mxu0 0
  %2554 = vmatpush2.bf16.msra.mxu0 0
  %2555 = vmatprep.mubr.bf16.mxu0 0
  %2556 = vmatmul.mubr.bf16.gmra.mxu0 %v2515
  %v2557 = vpop.f32.mrf.mxu0
  %v2558 = vadd.f32 0.0, %v2557
  %v2559 = vpop.f32.mrf.mxu0
  %v2560 = vpop.f32.mrf.mxu0
  %v2561 = vadd.f32 0.0, %v2560
  %v2562 = vpop.f32.mrf.mxu0
  %2563 = vmatprep.mubr.bf16.mxu0 0
  %2564 = vmatmul.mubr.bf16.gmra.mxu0 %v2518
  %v2565 = vpop.f32.mrf.mxu0
  %v2566 = vadd.f32 0.0, %v2565
  %v2567 = vpop.f32.mrf.mxu0
  %v2568 = vpop.f32.mrf.mxu0
  %v2569 = vadd.f32 0.0, %v2568
  %v2570 = vpop.f32.mrf.mxu0
  %2571 = vdwg.mxu0
  %2572 = vmatprep.subr.mxu0 0.0
  %2573 = vmatpush1.msra.mxu0 %v1282
  %2574 = vmatprep.subr.mxu0 0.0
  %2575 = vmatpush1.msra.mxu0 %v1281
  %2576 = vmatprep.subr.mxu0 0.0
  %2577 = vmatpush1.msra.mxu0 %v1280
  %2578 = vmatprep.subr.mxu0 0.0
  %2579 = vmatpush1.msra.mxu0 %v1279
  %2580 = vmatprep.subr.mxu0 0.0
  %2581 = vmatpush1.msra.mxu0 %v1278
  %2582 = vmatprep.subr.mxu0 0.0
  %2583 = vmatpush1.msra.mxu0 %v1277
  %2584 = vmatprep.subr.mxu0 0.0
  %2585 = vmatpush1.msra.mxu0 %v1276
  %2586 = vmatprep.subr.mxu0 0.0
  %2587 = vmatpush1.msra.mxu0 %v1275
  %2588 = vmatprep.subr.mxu0 0.0
  %2589 = vmatpush1.msra.mxu0 %v1274
  %2590 = vmatprep.subr.mxu0 0.0
  %2591 = vmatpush1.msra.mxu0 %v1273
  %2592 = vmatprep.subr.mxu0 0.0
  %2593 = vmatpush1.msra.mxu0 %v1272
  %2594 = vmatprep.subr.mxu0 0.0
  %2595 = vmatpush1.msra.mxu0 %v1271
  %2596 = vmatprep.subr.mxu0 0.0
  %2597 = vmatpush1.msra.mxu0 %v1270
  %2598 = vmatprep.subr.mxu0 0.0
  %2599 = vmatpush1.msra.mxu0 %v1269
  %2600 = vmatprep.subr.mxu0 0.0
  %2601 = vmatpush1.msra.mxu0 %v1268
  %2602 = vmatprep.subr.mxu0 0.0
  %2603 = vmatpush1.msra.mxu0 %v1267
  %2604 = vmatprep.subr.mxu0 0.0
  %2605 = vmatpush2.msra.mxu0 0.0
  %2606 = vmatprep.subr.mxu0 0.0
  %2607 = vmatpush2.msra.mxu0 0.0
  %2608 = vmatprep.subr.mxu0 0.0
  %2609 = vmatpush2.msra.mxu0 0.0
  %2610 = vmatprep.subr.mxu0 0.0
  %2611 = vmatpush2.msra.mxu0 0.0
  %2612 = vmatprep.subr.mxu0 0.0
  %2613 = vmatpush2.msra.mxu0 0.0
  %2614 = vmatprep.subr.mxu0 0.0
  %2615 = vmatpush2.msra.mxu0 0.0
  %2616 = vmatprep.subr.mxu0 0.0
  %2617 = vmatpush2.msra.mxu0 0.0
  %2618 = vmatprep.subr.mxu0 0.0
  %2619 = vmatpush2.msra.mxu0 0.0
  %2620 = vmatprep.subr.mxu0 0.0
  %2621 = vmatpush2.msra.mxu0 0.0
  %2622 = vmatprep.subr.mxu0 0.0
  %2623 = vmatpush2.msra.mxu0 0.0
  %2624 = vmatprep.subr.mxu0 0.0
  %2625 = vmatpush2.msra.mxu0 0.0
  %2626 = vmatprep.subr.mxu0 0.0
  %2627 = vmatpush2.msra.mxu0 0.0
  %2628 = vmatprep.subr.mxu0 0.0
  %2629 = vmatpush2.msra.mxu0 0.0
  %2630 = vmatprep.subr.mxu0 0.0
  %2631 = vmatpush2.msra.mxu0 0.0
  %2632 = vmatprep.subr.mxu0 0.0
  %2633 = vmatpush2.msra.mxu0 0.0
  %2634 = vmatprep.subr.mxu0 0.0
  %2635 = vmatpush2.msra.mxu0 0.0
  %2636 = vmatprep.mubr.f32.mxu0 0.0
  %2637 = vmatmul.mubr.f32.gmra.mxu0 %v2499
  %v2638 = vpop.f32.mrf.mxu0
  %v2639 = vadd.f32 0.0, %v2638
  %v2640 = vpop.f32.mrf.mxu0
  %2641 = vmatprep.mubr.f32.mxu0 0.0
  %2642 = vmatmul.mubr.f32.gmra.mxu0 %v2500
  %v2643 = vpop.f32.mrf.mxu0
  %v2644 = vadd.f32 0.0, %v2643
  %v2645 = vpop.f32.mrf.mxu0
  %2646 = vmatprep.mubr.f32.mxu0 0.0
  %2647 = vmatmul.mubr.f32.gmra.mxu0 %v2501
  %v2648 = vpop.f32.mrf.mxu0
  %v2649 = vadd.f32 0.0, %v2648
  %v2650 = vpop.f32.mrf.mxu0
  %2651 = vmatprep.mubr.f32.mxu0 0.0
  %2652 = vmatmul.mubr.f32.gmra.mxu0 %v2502
  %v2653 = vpop.f32.mrf.mxu0
  %v2654 = vadd.f32 0.0, %v2653
  %v2655 = vpop.f32.mrf.mxu0
  %2656 = vdwg.mxu0
  %v2657 = vmul.f32 %v2639, %v2558
  %v2658 = vmul.f32 %v2644, %v2561
  %v2659 = vmul.f32 %v2649, %v2566
  %v2660 = vmul.f32 %v2654, %v2569
  %2661 = vmatprep.subr.mxu0 0.0
  %2662 = vmatpush1.msra.mxu0 %v1558
  %2663 = vmatprep.subr.mxu0 0.0
  %2664 = vmatpush1.msra.mxu0 %v1557
  %2665 = vmatprep.subr.mxu0 0.0
  %2666 = vmatpush1.msra.mxu0 %v1556
  %2667 = vmatprep.subr.mxu0 0.0
  %2668 = vmatpush1.msra.mxu0 %v1555
  %2669 = vmatprep.subr.mxu0 0.0
  %2670 = vmatpush1.msra.mxu0 %v1554
  %2671 = vmatprep.subr.mxu0 0.0
  %2672 = vmatpush1.msra.mxu0 %v1553
  %2673 = vmatprep.subr.mxu0 0.0
  %2674 = vmatpush1.msra.mxu0 %v1552
  %2675 = vmatprep.subr.mxu0 0.0
  %2676 = vmatpush1.msra.mxu0 %v1551
  %2677 = vmatprep.subr.mxu0 0.0
  %2678 = vmatpush1.msra.mxu0 %v1550
  %2679 = vmatprep.subr.mxu0 0.0
  %2680 = vmatpush1.msra.mxu0 %v1549
  %2681 = vmatprep.subr.mxu0 0.0
  %2682 = vmatpush1.msra.mxu0 %v1548
  %2683 = vmatprep.subr.mxu0 0.0
  %2684 = vmatpush1.msra.mxu0 %v1547
  %2685 = vmatprep.subr.mxu0 0.0
  %2686 = vmatpush1.msra.mxu0 %v1546
  %2687 = vmatprep.subr.mxu0 0.0
  %2688 = vmatpush1.msra.mxu0 %v1545
  %2689 = vmatprep.subr.mxu0 0.0
  %2690 = vmatpush1.msra.mxu0 %v1544
  %2691 = vmatprep.subr.mxu0 0.0
  %2692 = vmatpush1.msra.mxu0 %v1543
  %2693 = vmatprep.subr.mxu0 0.0
  %2694 = vmatpush2.msra.mxu0 0.0
  %2695 = vmatprep.subr.mxu0 0.0
  %2696 = vmatpush2.msra.mxu0 0.0
  %2697 = vmatprep.subr.mxu0 0.0
  %2698 = vmatpush2.msra.mxu0 0.0
  %2699 = vmatprep.subr.mxu0 0.0
  %2700 = vmatpush2.msra.mxu0 0.0
  %2701 = vmatprep.subr.mxu0 0.0
  %2702 = vmatpush2.msra.mxu0 0.0
  %2703 = vmatprep.subr.mxu0 0.0
  %2704 = vmatpush2.msra.mxu0 0.0
  %2705 = vmatprep.subr.mxu0 0.0
  %2706 = vmatpush2.msra.mxu0 0.0
  %2707 = vmatprep.subr.mxu0 0.0
  %2708 = vmatpush2.msra.mxu0 0.0
  %2709 = vmatprep.subr.mxu0 0.0
  %2710 = vmatpush2.msra.mxu0 0.0
  %2711 = vmatprep.subr.mxu0 0.0
  %2712 = vmatpush2.msra.mxu0 0.0
  %2713 = vmatprep.subr.mxu0 0.0
  %2714 = vmatpush2.msra.mxu0 0.0
  %2715 = vmatprep.subr.mxu0 0.0
  %2716 = vmatpush2.msra.mxu0 0.0
  %2717 = vmatprep.subr.mxu0 0.0
  %2718 = vmatpush2.msra.mxu0 0.0
  %2719 = vmatprep.subr.mxu0 0.0
  %2720 = vmatpush2.msra.mxu0 0.0
  %2721 = vmatprep.subr.mxu0 0.0
  %2722 = vmatpush2.msra.mxu0 0.0
  %2723 = vmatprep.subr.mxu0 0.0
  %2724 = vmatpush2.msra.mxu0 0.0
  %2725 = vmatprep.mubr.f32.mxu0 0.0
  %2726 = vmatmul.mubr.f32.gmra.mxu0 %v2657
  %v2727 = vpop.f32.mrf.mxu0
  %v2728 = vadd.f32 0.0, %v2727
  %v2729 = vpop.f32.mrf.mxu0
  %2730 = vmatprep.mubr.f32.mxu0 0.0
  %2731 = vmatmul.mubr.f32.gmra.mxu0 %v2658
  %v2732 = vpop.f32.mrf.mxu0
  %v2733 = vadd.f32 0.0, %v2732
  %v2734 = vpop.f32.mrf.mxu0
  %2735 = vmatprep.mubr.f32.mxu0 0.0
  %2736 = vmatmul.mubr.f32.gmra.mxu0 %v2659
  %v2737 = vpop.f32.mrf.mxu0
  %v2738 = vadd.f32 0.0, %v2737
  %v2739 = vpop.f32.mrf.mxu0
  %2740 = vmatprep.mubr.f32.mxu0 0.0
  %2741 = vmatmul.mubr.f32.gmra.mxu0 %v2660
  %v2742 = vpop.f32.mrf.mxu0
  %v2743 = vadd.f32 0.0, %v2742
  %v2744 = vpop.f32.mrf.mxu0
  %2745 = vdwg.mxu0
  %v2746 = vpack.c.bf16 %v2733, %v2728
  %v2747 = vpack.c.bf16 %v2743, %v2738
  %v2750 = vunpack.c.l.b16 %v2250
  %v2751 = vunpack.c.l.b16 %v2251
  %v2752 = vpack.c.b16 %v2751, %v2750
  %v2754 = vsel %vm1723, %v2752, 0
  %2756 = vmatprep.subr.bf16.mxu0 0
  %2757 = vmatpush1.bf16.msra.mxu0 0
  %2758 = vmatprep.subr.bf16.mxu0 0
  %2759 = vmatpush1.bf16.msra.mxu0 0
  %2760 = vmatprep.subr.bf16.mxu0 0
  %2761 = vmatpush1.bf16.msra.mxu0 0
  %2762 = vmatprep.subr.bf16.mxu0 0
  %2763 = vmatpush1.bf16.msra.mxu0 0
  %2764 = vmatprep.subr.bf16.mxu0 0
  %2765 = vmatpush1.bf16.msra.mxu0 0
  %2766 = vmatprep.subr.bf16.mxu0 0
  %2767 = vmatpush1.bf16.msra.mxu0 0
  %2768 = vmatprep.subr.bf16.mxu0 0
  %2769 = vmatpush1.bf16.msra.mxu0 %v2747
  %2770 = vmatprep.subr.bf16.mxu0 0
  %2771 = vmatpush1.bf16.msra.mxu0 %v2746
  %2772 = vmatprep.subr.bf16.mxu0 0
  %2773 = vmatpush2.bf16.msra.mxu0 0
  %2774 = vmatprep.subr.bf16.mxu0 0
  %2775 = vmatpush2.bf16.msra.mxu0 0
  %2776 = vmatprep.subr.bf16.mxu0 0
  %2777 = vmatpush2.bf16.msra.mxu0 0
  %2778 = vmatprep.subr.bf16.mxu0 0
  %2779 = vmatpush2.bf16.msra.mxu0 0
  %2780 = vmatprep.subr.bf16.mxu0 0
  %2781 = vmatpush2.bf16.msra.mxu0 0
  %2782 = vmatprep.subr.bf16.mxu0 0
  %2783 = vmatpush2.bf16.msra.mxu0 0
  %2784 = vmatprep.subr.bf16.mxu0 0
  %2785 = vmatpush2.bf16.msra.mxu0 0
  %2786 = vmatprep.subr.bf16.mxu0 0
  %2787 = vmatpush2.bf16.msra.mxu0 0
  %2788 = vmatprep.mubr.bf16.mxu0 0
  %2789 = vmatmul.mubr.bf16.gmra.mxu0 %v2754
  %v2790 = vpop.f32.mrf.mxu0
  %v2791 = vadd.f32 0.0, %v2790
  %v2792 = vpop.f32.mrf.mxu0
  %v2793 = vpop.f32.mrf.mxu0
  %v2794 = vadd.f32 0.0, %v2793
  %v2795 = vpop.f32.mrf.mxu0
  %2796 = vdwg.mxu0
  %v2797 = vsub.f32 0.0, %v2791
  %v2798 = vsub.f32 0.0, %v2794
  %v2799 = vmul.f32 %v2797, 1.442695
  %v2800 = vpow.pop %v2799
  %v2801 = vmul.f32 %v2798, 1.442695
  %v2802 = vpow.pop %v2801
  %v2803 = vadd.f32 %v2800, 1.0
  %v2804 = vadd.f32 %v2802, 1.0
  %v2805 = vrcp.pop %v2803
  %v2806 = vrcp.pop %v2804
  %v2807 = vmul.f32 %v2791, %v2805
  %v2808 = vmul.f32 %v2794, %v2806
  %v2809 = vadd.f32 %v2348, %v2807
  %v2810 = vadd.f32 %v2349, %v2808
  %v2811 = vld [vmem:[%s59] sm:$0xf]
  %v2812 = vld [vmem:[%s59 + $0x4] sm:$0xf]
  %v2813 = vld [vmem:[%s61] sm:$0xff]
  %v2814 = vld [vmem:[%s61 + $0x8] sm:$0xff]
  %v2815 = vld [vmem:[%s63] sm:$0xf]
  %v2816 = vld [vmem:[%s63 + $0x4] sm:$0xf]
  %v2817 = vld [vmem:[%s65] sm:$0xff]
  %v2818 = vld [vmem:[%s65 + $0x8] sm:$0xff]
  %v2819 = vpack.c.bf16 %v2810, %v2809
  %2821 = vset.pattern.permute.xlu0 0
  %2822 = vperm.xlu0 %2821, %v2813
  %v2823 = vpop.permute.xlu0 %2822
  %2826 = vset.pattern.permute.xlu0 0
  %2827 = vperm.xlu0 %2826, %v2814
  %v2828 = vpop.permute.xlu0 %2827
  %v2832 = vunpack.c.l.b16 %v2811
  %v2833 = vunpack.c.l.b16 %v2812
  %v2834 = vpack.c.b16 %v2833, %v2832
  %v2836 = vsel %vm1673, %v2834, 0
  %2838 = vmatprep.subr.bf16.mxu0 0
  %2839 = vmatpush1.bf16.msra.mxu0 0
  %2840 = vmatprep.subr.bf16.mxu0 0
  %2841 = vmatpush1.bf16.msra.mxu0 0
  %2842 = vmatprep.subr.bf16.mxu0 0
  %2843 = vmatpush1.bf16.msra.mxu0 0
  %2844 = vmatprep.subr.bf16.mxu0 0
  %2845 = vmatpush1.bf16.msra.mxu0 0
  %2846 = vmatprep.subr.bf16.mxu0 0
  %2847 = vmatpush1.bf16.msra.mxu0 0
  %2848 = vmatprep.subr.bf16.mxu0 0
  %2849 = vmatpush1.bf16.msra.mxu0 0
  %2850 = vmatprep.subr.bf16.mxu0 0
  %2851 = vmatpush1.bf16.msra.mxu0 0
  %2852 = vmatprep.subr.bf16.mxu0 0
  %2853 = vmatpush1.bf16.msra.mxu0 %v2819
  %2854 = vmatprep.subr.bf16.mxu0 0
  %2855 = vmatpush2.bf16.msra.mxu0 0
  %2856 = vmatprep.subr.bf16.mxu0 0
  %2857 = vmatpush2.bf16.msra.mxu0 0
  %2858 = vmatprep.subr.bf16.mxu0 0
  %2859 = vmatpush2.bf16.msra.mxu0 0
  %2860 = vmatprep.subr.bf16.mxu0 0
  %2861 = vmatpush2.bf16.msra.mxu0 0
  %2862 = vmatprep.subr.bf16.mxu0 0
  %2863 = vmatpush2.bf16.msra.mxu0 0
  %2864 = vmatprep.subr.bf16.mxu0 0
  %2865 = vmatpush2.bf16.msra.mxu0 0
  %2866 = vmatprep.subr.bf16.mxu0 0
  %2867 = vmatpush2.bf16.msra.mxu0 0
  %2868 = vmatprep.subr.bf16.mxu0 0
  %2869 = vmatpush2.bf16.msra.mxu0 0
  %2870 = vmatprep.mubr.bf16.mxu0 0
  %2871 = vmatmul.mubr.bf16.gmra.mxu0 %v2836
  %v2872 = vpop.f32.mrf.mxu0
  %v2873 = vadd.f32 %v2823, %v2872
  %v2874 = vpop.f32.mrf.mxu0
  %v2875 = vpop.f32.mrf.mxu0
  %v2876 = vadd.f32 %v2828, %v2875
  %v2877 = vpop.f32.mrf.mxu0
  %2878 = vdwg.mxu0
  %v2879 = vsub.f32 0.0, %v2873
  %v2880 = vsub.f32 0.0, %v2876
  %v2881 = vmul.f32 %v2879, 1.442695
  %v2882 = vpow.pop %v2881
  %v2883 = vmul.f32 %v2880, 1.442695
  %v2884 = vpow.pop %v2883
  %v2885 = vadd.f32 %v2882, 1.0
  %v2886 = vadd.f32 %v2884, 1.0
  %v2887 = vrcp.pop %v2885
  %v2888 = vrcp.pop %v2886
  %v2889 = vmul.f32 %v2873, %v2887
  %v2890 = vmul.f32 %v2876, %v2888
  %v2891 = vpack.c.bf16 %v2890, %v2889
  %2893 = vset.pattern.permute.xlu0 0
  %2894 = vperm.xlu0 %2893, %v2817
  %v2895 = vpop.permute.xlu0 %2894
  %2898 = vset.pattern.permute.xlu0 0
  %2899 = vperm.xlu0 %2898, %v2818
  %v2900 = vpop.permute.xlu0 %2899
  %v2904 = vunpack.c.l.b16 %v2815
  %v2905 = vunpack.c.l.b16 %v2816
  %v2906 = vpack.c.b16 %v2905, %v2904
  %v2908 = vsel %vm1673, %v2906, 0
  %2910 = vmatprep.subr.bf16.mxu0 0
  %2911 = vmatpush1.bf16.msra.mxu0 0
  %2912 = vmatprep.subr.bf16.mxu0 0
  %2913 = vmatpush1.bf16.msra.mxu0 0
  %2914 = vmatprep.subr.bf16.mxu0 0
  %2915 = vmatpush1.bf16.msra.mxu0 0
  %2916 = vmatprep.subr.bf16.mxu0 0
  %2917 = vmatpush1.bf16.msra.mxu0 0
  %2918 = vmatprep.subr.bf16.mxu0 0
  %2919 = vmatpush1.bf16.msra.mxu0 0
  %2920 = vmatprep.subr.bf16.mxu0 0
  %2921 = vmatpush1.bf16.msra.mxu0 0
  %2922 = vmatprep.subr.bf16.mxu0 0
  %2923 = vmatpush1.bf16.msra.mxu0 0
  %2924 = vmatprep.subr.bf16.mxu0 0
  %2925 = vmatpush1.bf16.msra.mxu0 %v2891
  %2926 = vmatprep.subr.bf16.mxu0 0
  %2927 = vmatpush2.bf16.msra.mxu0 0
  %2928 = vmatprep.subr.bf16.mxu0 0
  %2929 = vmatpush2.bf16.msra.mxu0 0
  %2930 = vmatprep.subr.bf16.mxu0 0
  %2931 = vmatpush2.bf16.msra.mxu0 0
  %2932 = vmatprep.subr.bf16.mxu0 0
  %2933 = vmatpush2.bf16.msra.mxu0 0
  %2934 = vmatprep.subr.bf16.mxu0 0
  %2935 = vmatpush2.bf16.msra.mxu0 0
  %2936 = vmatprep.subr.bf16.mxu0 0
  %2937 = vmatpush2.bf16.msra.mxu0 0
  %2938 = vmatprep.subr.bf16.mxu0 0
  %2939 = vmatpush2.bf16.msra.mxu0 0
  %2940 = vmatprep.subr.bf16.mxu0 0
  %2941 = vmatpush2.bf16.msra.mxu0 0
  %2942 = vmatprep.mubr.bf16.mxu0 0
  %2943 = vmatmul.mubr.bf16.gmra.mxu0 %v2908
  %v2944 = vpop.f32.mrf.mxu0
  %v2945 = vadd.f32 %v2895, %v2944
  %v2946 = vpop.f32.mrf.mxu0
  %v2947 = vpop.f32.mrf.mxu0
  %v2948 = vadd.f32 %v2900, %v2947
  %v2949 = vpop.f32.mrf.mxu0
  %2950 = vdwg.mxu0
  %v2951 = vsub.f32 0.0, %v2945
  %v2952 = vsub.f32 0.0, %v2948
  %v2953 = vmul.f32 %v2951, 1.442695
  %v2954 = vpow.pop %v2953
  %v2955 = vmul.f32 %v2952, 1.442695
  %v2956 = vpow.pop %v2955
  %v2957 = vadd.f32 %v2954, 1.0
  %v2958 = vadd.f32 %v2956, 1.0
  %v2959 = vrcp.pop %v2957
  %v2960 = vrcp.pop %v2958
  %v2961 = vmul.f32 %v2945, %v2959
  %v2962 = vmul.f32 %v2948, %v2960
  %v2963 = vadd.f32 %v2809, %v2961
  %v2964 = vadd.f32 %v2810, %v2962
  %v2965 = vld [vmem:[%s67] sm:$0xf]
  %v2966 = vld [vmem:[%s67 + $0x4] sm:$0xf]
  %v2967 = vld [vmem:[%s69] sm:$0xff]
  %v2968 = vld [vmem:[%s69 + $0x8] sm:$0xff]
  %v2969 = vpack.c.bf16 %v2964, %v2963
  %2971 = vset.pattern.permute.xlu0 0
  %2972 = vperm.xlu0 %2971, %v2967
  %v2973 = vpop.permute.xlu0 %2972
  %2976 = vset.pattern.permute.xlu0 0
  %2977 = vperm.xlu0 %2976, %v2968
  %v2978 = vpop.permute.xlu0 %2977
  %v2982 = vunpack.c.l.b16 %v2965
  %v2983 = vunpack.c.l.b16 %v2966
  %v2984 = vpack.c.b16 %v2983, %v2982
  %v2986 = vsel %vm1673, %v2984, 0
  %2988 = vmatprep.subr.bf16.mxu0 0
  %2989 = vmatpush1.bf16.msra.mxu0 0
  %2990 = vmatprep.subr.bf16.mxu0 0
  %2991 = vmatpush1.bf16.msra.mxu0 0
  %2992 = vmatprep.subr.bf16.mxu0 0
  %2993 = vmatpush1.bf16.msra.mxu0 0
  %2994 = vmatprep.subr.bf16.mxu0 0
  %2995 = vmatpush1.bf16.msra.mxu0 0
  %2996 = vmatprep.subr.bf16.mxu0 0
  %2997 = vmatpush1.bf16.msra.mxu0 0
  %2998 = vmatprep.subr.bf16.mxu0 0
  %2999 = vmatpush1.bf16.msra.mxu0 0
  %3000 = vmatprep.subr.bf16.mxu0 0
  %3001 = vmatpush1.bf16.msra.mxu0 0
  %3002 = vmatprep.subr.bf16.mxu0 0
  %3003 = vmatpush1.bf16.msra.mxu0 %v2969
  %3004 = vmatprep.subr.bf16.mxu0 0
  %3005 = vmatpush2.bf16.msra.mxu0 0
  %3006 = vmatprep.subr.bf16.mxu0 0
  %3007 = vmatpush2.bf16.msra.mxu0 0
  %3008 = vmatprep.subr.bf16.mxu0 0
  %3009 = vmatpush2.bf16.msra.mxu0 0
  %3010 = vmatprep.subr.bf16.mxu0 0
  %3011 = vmatpush2.bf16.msra.mxu0 0
  %3012 = vmatprep.subr.bf16.mxu0 0
  %3013 = vmatpush2.bf16.msra.mxu0 0
  %3014 = vmatprep.subr.bf16.mxu0 0
  %3015 = vmatpush2.bf16.msra.mxu0 0
  %3016 = vmatprep.subr.bf16.mxu0 0
  %3017 = vmatpush2.bf16.msra.mxu0 0
  %3018 = vmatprep.subr.bf16.mxu0 0
  %3019 = vmatpush2.bf16.msra.mxu0 0
  %3020 = vmatprep.mubr.bf16.mxu0 0
  %3021 = vmatmul.mubr.bf16.gmra.mxu0 %v2986
  %v3022 = vpop.f32.mrf.mxu0
  %v3023 = vadd.f32 %v2973, %v3022
  %v3024 = vpop.f32.mrf.mxu0
  %v3025 = vpop.f32.mrf.mxu0
  %v3026 = vadd.f32 %v2978, %v3025
  %v3027 = vpop.f32.mrf.mxu0
  %3028 = vdwg.mxu0
  %v3029 = vsub.f32 0.0, %v3023
  %v3030 = vsub.f32 0.0, %v3026
  %v3031 = vmul.f32 %v3029, 1.442695
  %v3032 = vpow.pop %v3031
  %v3033 = vmul.f32 %v3030, 1.442695
  %v3034 = vpow.pop %v3033
  %v3035 = vadd.f32 %v3032, 1.0
  %v3036 = vadd.f32 %v3034, 1.0
  %v3037 = vrcp.pop %v3035
  %v3038 = vrcp.pop %v3036
  %v3039 = vmul.f32 %v3023, %v3037
  %v3040 = vmul.f32 %v3026, %v3038
  %v3041 = vadd.f32 %v3039, %v1790
  %v3042 = vadd.f32 %v3040, %v1791
  %v3043 = vld [vmem:[%s71] sm:$0xf]
  %v3044 = vld [vmem:[%s71 + $0x4] sm:$0xf]
  %v3045 = vld [vmem:[%s73] sm:$0xff]
  %v3046 = vld [vmem:[%s73 + $0x8] sm:$0xff]
  %v3047 = vld [vmem:[%s75] sm:$0xf]
  %v3048 = vld [vmem:[%s75 + $0x4] sm:$0xf]
  %v3049 = vld [vmem:[%s77] sm:$0xff]
  %v3050 = vld [vmem:[%s77 + $0x8] sm:$0xff]
  %v3051 = vpack.c.bf16 %v3042, %v3041
  %3053 = vset.pattern.permute.xlu0 0
  %3054 = vperm.xlu0 %3053, %v3045
  %v3055 = vpop.permute.xlu0 %3054
  %3058 = vset.pattern.permute.xlu0 0
  %3059 = vperm.xlu0 %3058, %v3046
  %v3060 = vpop.permute.xlu0 %3059
  %v3064 = vunpack.c.l.b16 %v3043
  %v3065 = vunpack.c.l.b16 %v3044
  %v3066 = vpack.c.b16 %v3065, %v3064
  %v3068 = vsel %vm1673, %v3066, 0
  %3070 = vmatprep.subr.bf16.mxu0 0
  %3071 = vmatpush1.bf16.msra.mxu0 0
  %3072 = vmatprep.subr.bf16.mxu0 0
  %3073 = vmatpush1.bf16.msra.mxu0 0
  %3074 = vmatprep.subr.bf16.mxu0 0
  %3075 = vmatpush1.bf16.msra.mxu0 0
  %3076 = vmatprep.subr.bf16.mxu0 0
  %3077 = vmatpush1.bf16.msra.mxu0 0
  %3078 = vmatprep.subr.bf16.mxu0 0
  %3079 = vmatpush1.bf16.msra.mxu0 0
  %3080 = vmatprep.subr.bf16.mxu0 0
  %3081 = vmatpush1.bf16.msra.mxu0 0
  %3082 = vmatprep.subr.bf16.mxu0 0
  %3083 = vmatpush1.bf16.msra.mxu0 0
  %3084 = vmatprep.subr.bf16.mxu0 0
  %3085 = vmatpush1.bf16.msra.mxu0 %v3051
  %3086 = vmatprep.subr.bf16.mxu0 0
  %3087 = vmatpush2.bf16.msra.mxu0 0
  %3088 = vmatprep.subr.bf16.mxu0 0
  %3089 = vmatpush2.bf16.msra.mxu0 0
  %3090 = vmatprep.subr.bf16.mxu0 0
  %3091 = vmatpush2.bf16.msra.mxu0 0
  %3092 = vmatprep.subr.bf16.mxu0 0
  %3093 = vmatpush2.bf16.msra.mxu0 0
  %3094 = vmatprep.subr.bf16.mxu0 0
  %3095 = vmatpush2.bf16.msra.mxu0 0
  %3096 = vmatprep.subr.bf16.mxu0 0
  %3097 = vmatpush2.bf16.msra.mxu0 0
  %3098 = vmatprep.subr.bf16.mxu0 0
  %3099 = vmatpush2.bf16.msra.mxu0 0
  %3100 = vmatprep.subr.bf16.mxu0 0
  %3101 = vmatpush2.bf16.msra.mxu0 0
  %3102 = vmatprep.mubr.bf16.mxu0 0
  %3103 = vmatmul.mubr.bf16.gmra.mxu0 %v3068
  %v3104 = vpop.f32.mrf.mxu0
  %v3105 = vadd.f32 %v3055, %v3104
  %v3106 = vpop.f32.mrf.mxu0
  %v3107 = vpop.f32.mrf.mxu0
  %v3108 = vadd.f32 %v3060, %v3107
  %v3109 = vpop.f32.mrf.mxu0
  %3110 = vdwg.mxu0
  %v3111 = vsub.f32 0.0, %v3105
  %v3112 = vsub.f32 0.0, %v3108
  %v3113 = vmul.f32 %v3111, 1.442695
  %v3114 = vpow.pop %v3113
  %v3115 = vmul.f32 %v3112, 1.442695
  %v3116 = vpow.pop %v3115
  %v3117 = vadd.f32 %v3114, 1.0
  %v3118 = vadd.f32 %v3116, 1.0
  %v3119 = vrcp.pop %v3117
  %v3120 = vrcp.pop %v3118
  %v3121 = vmul.f32 %v3105, %v3119
  %v3122 = vmul.f32 %v3108, %v3120
  %v3123 = vpack.c.bf16 %v3122, %v3121
  %3125 = vset.pattern.permute.xlu0 0
  %3126 = vperm.xlu0 %3125, %v3049
  %v3127 = vpop.permute.xlu0 %3126
  %3130 = vset.pattern.permute.xlu0 0
  %3131 = vperm.xlu0 %3130, %v3050
  %v3132 = vpop.permute.xlu0 %3131
  %v3136 = vunpack.c.l.b16 %v3047
  %v3137 = vunpack.c.l.b16 %v3048
  %v3138 = vpack.c.b16 %v3137, %v3136
  %v3140 = vsel %vm1673, %v3138, 0
  %3142 = vmatprep.subr.bf16.mxu0 0
  %3143 = vmatpush1.bf16.msra.mxu0 0
  %3144 = vmatprep.subr.bf16.mxu0 0
  %3145 = vmatpush1.bf16.msra.mxu0 0
  %3146 = vmatprep.subr.bf16.mxu0 0
  %3147 = vmatpush1.bf16.msra.mxu0 0
  %3148 = vmatprep.subr.bf16.mxu0 0
  %3149 = vmatpush1.bf16.msra.mxu0 0
  %3150 = vmatprep.subr.bf16.mxu0 0
  %3151 = vmatpush1.bf16.msra.mxu0 0
  %3152 = vmatprep.subr.bf16.mxu0 0
  %3153 = vmatpush1.bf16.msra.mxu0 0
  %3154 = vmatprep.subr.bf16.mxu0 0
  %3155 = vmatpush1.bf16.msra.mxu0 0
  %3156 = vmatprep.subr.bf16.mxu0 0
  %3157 = vmatpush1.bf16.msra.mxu0 %v3123
  %3158 = vmatprep.subr.bf16.mxu0 0
  %3159 = vmatpush2.bf16.msra.mxu0 0
  %3160 = vmatprep.subr.bf16.mxu0 0
  %3161 = vmatpush2.bf16.msra.mxu0 0
  %3162 = vmatprep.subr.bf16.mxu0 0
  %3163 = vmatpush2.bf16.msra.mxu0 0
  %3164 = vmatprep.subr.bf16.mxu0 0
  %3165 = vmatpush2.bf16.msra.mxu0 0
  %3166 = vmatprep.subr.bf16.mxu0 0
  %3167 = vmatpush2.bf16.msra.mxu0 0
  %3168 = vmatprep.subr.bf16.mxu0 0
  %3169 = vmatpush2.bf16.msra.mxu0 0
  %3170 = vmatprep.subr.bf16.mxu0 0
  %3171 = vmatpush2.bf16.msra.mxu0 0
  %3172 = vmatprep.subr.bf16.mxu0 0
  %3173 = vmatpush2.bf16.msra.mxu0 0
  %3174 = vmatprep.mubr.bf16.mxu0 0
  %3175 = vmatmul.mubr.bf16.gmra.mxu0 %v3140
  %v3176 = vpop.f32.mrf.mxu0
  %v3177 = vadd.f32 %v3127, %v3176
  %v3178 = vpop.f32.mrf.mxu0
  %v3179 = vpop.f32.mrf.mxu0
  %v3180 = vadd.f32 %v3132, %v3179
  %v3181 = vpop.f32.mrf.mxu0
  %3182 = vdwg.mxu0
  %v3183 = vsub.f32 0.0, %v3177
  %v3184 = vsub.f32 0.0, %v3180
  %v3185 = vmul.f32 %v3183, 1.442695
  %v3186 = vpow.pop %v3185
  %v3187 = vmul.f32 %v3184, 1.442695
  %v3188 = vpow.pop %v3187
  %v3189 = vadd.f32 %v3186, 1.0
  %v3190 = vadd.f32 %v3188, 1.0
  %v3191 = vrcp.pop %v3189
  %v3192 = vrcp.pop %v3190
  %v3193 = vmul.f32 %v3177, %v3191
  %v3194 = vmul.f32 %v3180, %v3192
  %v3195 = vadd.f32 %v3041, %v3193
  %v3196 = vadd.f32 %v3042, %v3194
  %v3197 = vld [vmem:[%s79] sm:$0xf]
  %v3198 = vld [vmem:[%s79 + $0x4] sm:$0xf]
  %v3199 = vld [vmem:[%s81] sm:$0xf]
  %v3200 = vld [vmem:[%s81 + $0x4] sm:$0xf]
  %v3201 = vld [vmem:[%s81 + $0x8] sm:$0xf]
  %v3202 = vld [vmem:[%s81 + $0xc] sm:$0xf]
  %v3205 = vunpack.c.l.b16 %v3197
  %v3206 = vunpack.c.l.b16 %v3198
  %v3207 = vpack.c.b16 %v3206, %v3205
  %v3209 = vsel %vm1600, %v3207, 0
  %3211 = vmatprep.subr.bf16.mxu0 0
  %3212 = vmatpush1.bf16.msra.mxu0 0
  %3213 = vmatprep.subr.bf16.mxu0 0
  %3214 = vmatpush1.bf16.msra.mxu0 0
  %3215 = vmatprep.subr.bf16.mxu0 0
  %3216 = vmatpush1.bf16.msra.mxu0 0
  %3217 = vmatprep.subr.bf16.mxu0 0
  %3218 = vmatpush1.bf16.msra.mxu0 0
  %3219 = vmatprep.subr.bf16.mxu0 0
  %3220 = vmatpush1.bf16.msra.mxu0 0
  %3221 = vmatprep.subr.bf16.mxu0 0
  %3222 = vmatpush1.bf16.msra.mxu0 0
  %3223 = vmatprep.subr.bf16.mxu0 0
  %3224 = vmatpush1.bf16.msra.mxu0 0
  %3225 = vmatprep.subr.bf16.mxu0 0
  %3226 = vmatpush1.bf16.msra.mxu0 %v1606
  %3227 = vmatprep.subr.bf16.mxu0 0
  %3228 = vmatpush2.bf16.msra.mxu0 0
  %3229 = vmatprep.subr.bf16.mxu0 0
  %3230 = vmatpush2.bf16.msra.mxu0 0
  %3231 = vmatprep.subr.bf16.mxu0 0
  %3232 = vmatpush2.bf16.msra.mxu0 0
  %3233 = vmatprep.subr.bf16.mxu0 0
  %3234 = vmatpush2.bf16.msra.mxu0 0
  %3235 = vmatprep.subr.bf16.mxu0 0
  %3236 = vmatpush2.bf16.msra.mxu0 0
  %3237 = vmatprep.subr.bf16.mxu0 0
  %3238 = vmatpush2.bf16.msra.mxu0 0
  %3239 = vmatprep.subr.bf16.mxu0 0
  %3240 = vmatpush2.bf16.msra.mxu0 0
  %3241 = vmatprep.subr.bf16.mxu0 0
  %3242 = vmatpush2.bf16.msra.mxu0 0
  %3243 = vmatprep.mubr.bf16.mxu0 0
  %3244 = vmatmul.mubr.bf16.gmra.mxu0 %v3209
  %v3245 = vpop.f32.mrf.mxu0
  %v3246 = vadd.f32 0.0, %v3245
  %v3247 = vpop.f32.mrf.mxu0
  %v3248 = vpop.f32.mrf.mxu0
  %v3249 = vadd.f32 0.0, %v3248
  %v3250 = vpop.f32.mrf.mxu0
  %3251 = vdwg.mxu0
  %v3252 = vmul.f32 %v3246, %v3195
  %v3253 = vmul.f32 %v3249, %v3196
  %3254 = vmatprep.subr.mxu0 0.0
  %3255 = vmatpush1.msra.mxu0 %v1574
  %3256 = vmatprep.subr.mxu0 0.0
  %3257 = vmatpush1.msra.mxu0 %v1573
  %3258 = vmatprep.subr.mxu0 0.0
  %3259 = vmatpush1.msra.mxu0 %v1572
  %3260 = vmatprep.subr.mxu0 0.0
  %3261 = vmatpush1.msra.mxu0 %v1571
  %3262 = vmatprep.subr.mxu0 0.0
  %3263 = vmatpush1.msra.mxu0 %v1570
  %3264 = vmatprep.subr.mxu0 0.0
  %3265 = vmatpush1.msra.mxu0 %v1569
  %3266 = vmatprep.subr.mxu0 0.0
  %3267 = vmatpush1.msra.mxu0 %v1568
  %3268 = vmatprep.subr.mxu0 0.0
  %3269 = vmatpush1.msra.mxu0 %v1567
  %3270 = vmatprep.subr.mxu0 0.0
  %3271 = vmatpush1.msra.mxu0 %v1566
  %3272 = vmatprep.subr.mxu0 0.0
  %3273 = vmatpush1.msra.mxu0 %v1565
  %3274 = vmatprep.subr.mxu0 0.0
  %3275 = vmatpush1.msra.mxu0 %v1564
  %3276 = vmatprep.subr.mxu0 0.0
  %3277 = vmatpush1.msra.mxu0 %v1563
  %3278 = vmatprep.subr.mxu0 0.0
  %3279 = vmatpush1.msra.mxu0 %v1562
  %3280 = vmatprep.subr.mxu0 0.0
  %3281 = vmatpush1.msra.mxu0 %v1561
  %3282 = vmatprep.subr.mxu0 0.0
  %3283 = vmatpush1.msra.mxu0 %v1560
  %3284 = vmatprep.subr.mxu0 0.0
  %3285 = vmatpush1.msra.mxu0 %v1559
  %3286 = vmatprep.subr.mxu0 0.0
  %3287 = vmatpush2.msra.mxu0 0.0
  %3288 = vmatprep.subr.mxu0 0.0
  %3289 = vmatpush2.msra.mxu0 0.0
  %3290 = vmatprep.subr.mxu0 0.0
  %3291 = vmatpush2.msra.mxu0 0.0
  %3292 = vmatprep.subr.mxu0 0.0
  %3293 = vmatpush2.msra.mxu0 0.0
  %3294 = vmatprep.subr.mxu0 0.0
  %3295 = vmatpush2.msra.mxu0 0.0
  %3296 = vmatprep.subr.mxu0 0.0
  %3297 = vmatpush2.msra.mxu0 0.0
  %3298 = vmatprep.subr.mxu0 0.0
  %3299 = vmatpush2.msra.mxu0 0.0
  %3300 = vmatprep.subr.mxu0 0.0
  %3301 = vmatpush2.msra.mxu0 0.0
  %3302 = vmatprep.subr.mxu0 0.0
  %3303 = vmatpush2.msra.mxu0 0.0
  %3304 = vmatprep.subr.mxu0 0.0
  %3305 = vmatpush2.msra.mxu0 0.0
  %3306 = vmatprep.subr.mxu0 0.0
  %3307 = vmatpush2.msra.mxu0 0.0
  %3308 = vmatprep.subr.mxu0 0.0
  %3309 = vmatpush2.msra.mxu0 0.0
  %3310 = vmatprep.subr.mxu0 0.0
  %3311 = vmatpush2.msra.mxu0 0.0
  %3312 = vmatprep.subr.mxu0 0.0
  %3313 = vmatpush2.msra.mxu0 0.0
  %3314 = vmatprep.subr.mxu0 0.0
  %3315 = vmatpush2.msra.mxu0 0.0
  %3316 = vmatprep.subr.mxu0 0.0
  %3317 = vmatpush2.msra.mxu0 0.0
  %3318 = vmatprep.mubr.f32.mxu0 0.0
  %3319 = vmatmul.mubr.f32.gmra.mxu0 %v3252
  %v3320 = vpop.f32.mrf.mxu0
  %v3321 = vadd.f32 0.0, %v3320
  %v3322 = vpop.f32.mrf.mxu0
  %3323 = vmatprep.mubr.f32.mxu0 0.0
  %3324 = vmatmul.mubr.f32.gmra.mxu0 %v3253
  %v3325 = vpop.f32.mrf.mxu0
  %v3326 = vadd.f32 0.0, %v3325
  %v3327 = vpop.f32.mrf.mxu0
  %3328 = vdwg.mxu0
  %v3329 = vpack.c.bf16 %v3326, %v3321
  %v3334 = vunpack.c.l.b16 %v3199
  %v3335 = vunpack.c.l.b16 %v3200
  %v3336 = vunpack.c.l.b16 %v3201
  %v3337 = vunpack.c.l.b16 %v3202
  %v3338 = vpack.c.b16 %v3335, %v3334
  %v3339 = vpack.c.b16 %v3337, %v3336
  %v3341 = vsel %vm1673, %v3338, 0
  %v3344 = vsel %vm1673, %v3339, 0
  %3346 = vmatprep.subr.bf16.mxu0 0
  %3347 = vmatpush1.bf16.msra.mxu0 0
  %3348 = vmatprep.subr.bf16.mxu0 0
  %3349 = vmatpush1.bf16.msra.mxu0 0
  %3350 = vmatprep.subr.bf16.mxu0 0
  %3351 = vmatpush1.bf16.msra.mxu0 0
  %3352 = vmatprep.subr.bf16.mxu0 0
  %3353 = vmatpush1.bf16.msra.mxu0 0
  %3354 = vmatprep.subr.bf16.mxu0 0
  %3355 = vmatpush1.bf16.msra.mxu0 0
  %3356 = vmatprep.subr.bf16.mxu0 0
  %3357 = vmatpush1.bf16.msra.mxu0 0
  %3358 = vmatprep.subr.bf16.mxu0 0
  %3359 = vmatpush1.bf16.msra.mxu0 0
  %3360 = vmatprep.subr.bf16.mxu0 0
  %3361 = vmatpush1.bf16.msra.mxu0 %v3329
  %3362 = vmatprep.subr.bf16.mxu0 0
  %3363 = vmatpush2.bf16.msra.mxu0 0
  %3364 = vmatprep.subr.bf16.mxu0 0
  %3365 = vmatpush2.bf16.msra.mxu0 0
  %3366 = vmatprep.subr.bf16.mxu0 0
  %3367 = vmatpush2.bf16.msra.mxu0 0
  %3368 = vmatprep.subr.bf16.mxu0 0
  %3369 = vmatpush2.bf16.msra.mxu0 0
  %3370 = vmatprep.subr.bf16.mxu0 0
  %3371 = vmatpush2.bf16.msra.mxu0 0
  %3372 = vmatprep.subr.bf16.mxu0 0
  %3373 = vmatpush2.bf16.msra.mxu0 0
  %3374 = vmatprep.subr.bf16.mxu0 0
  %3375 = vmatpush2.bf16.msra.mxu0 0
  %3376 = vmatprep.subr.bf16.mxu0 0
  %3377 = vmatpush2.bf16.msra.mxu0 0
  %3378 = vmatprep.mubr.bf16.mxu0 0
  %3379 = vmatmul.mubr.bf16.gmra.mxu0 %v3341
  %v3380 = vpop.f32.mrf.mxu0
  %v3381 = vadd.f32 0.0, %v3380
  %v3382 = vpop.f32.mrf.mxu0
  %v3383 = vpop.f32.mrf.mxu0
  %v3384 = vadd.f32 0.0, %v3383
  %v3385 = vpop.f32.mrf.mxu0
  %3386 = vmatprep.mubr.bf16.mxu0 0
  %3387 = vmatmul.mubr.bf16.gmra.mxu0 %v3344
  %v3388 = vpop.f32.mrf.mxu0
  %v3389 = vadd.f32 0.0, %v3388
  %v3390 = vpop.f32.mrf.mxu0
  %v3391 = vpop.f32.mrf.mxu0
  %v3392 = vadd.f32 0.0, %v3391
  %v3393 = vpop.f32.mrf.mxu0
  %3394 = vdwg.mxu0
  %v3395 = vld [vmem:[%s83] sm:$0xf]
  %v3396 = vld [vmem:[%s83 + $0x4] sm:$0xf]
  %v3397 = vld [vmem:[%s83 + $0x8] sm:$0xf]
  %v3398 = vld [vmem:[%s83 + $0xc] sm:$0xf]
  %v3399 = vld [vmem:[%s85] sm:$0xff]
  %v3400 = vld [vmem:[%s85 + $0x8] sm:$0xff]
  %v3401 = vld [vmem:[%s85 + $0x10] sm:$0xff]
  %v3402 = vld [vmem:[%s85 + $0x18] sm:$0xff]
  %v3403 = vpack.c.bf16 %v3384, %v3381
  %v3404 = vpack.c.bf16 %v3392, %v3389
  %3406 = vset.pattern.permute.xlu0 0
  %3407 = vperm.xlu0 %3406, %v3399
  %v3408 = vpop.permute.xlu0 %3407
  %3411 = vset.pattern.permute.xlu0 0
  %3412 = vperm.xlu0 %3411, %v3400
  %v3413 = vpop.permute.xlu0 %3412
  %3416 = vset.pattern.permute.xlu0 0
  %3417 = vperm.xlu0 %3416, %v3401
  %v3418 = vpop.permute.xlu0 %3417
  %3421 = vset.pattern.permute.xlu0 0
  %3422 = vperm.xlu0 %3421, %v3402
  %v3423 = vpop.permute.xlu0 %3422
  %v3429 = vunpack.c.l.b16 %v3395
  %v3430 = vunpack.c.l.b16 %v3396
  %v3431 = vunpack.c.l.b16 %v3397
  %v3432 = vunpack.c.l.b16 %v3398
  %v3433 = vpack.c.b16 %v3430, %v3429
  %v3434 = vpack.c.b16 %v3432, %v3431
  %v3436 = vsel %vm1723, %v3433, 0
  %v3439 = vsel %vm1723, %v3434, 0
  %3441 = vmatprep.subr.bf16.mxu0 0
  %3442 = vmatpush1.bf16.msra.mxu0 0
  %3443 = vmatprep.subr.bf16.mxu0 0
  %3444 = vmatpush1.bf16.msra.mxu0 0
  %3445 = vmatprep.subr.bf16.mxu0 0
  %3446 = vmatpush1.bf16.msra.mxu0 0
  %3447 = vmatprep.subr.bf16.mxu0 0
  %3448 = vmatpush1.bf16.msra.mxu0 0
  %3449 = vmatprep.subr.bf16.mxu0 0
  %3450 = vmatpush1.bf16.msra.mxu0 0
  %3451 = vmatprep.subr.bf16.mxu0 0
  %3452 = vmatpush1.bf16.msra.mxu0 0
  %3453 = vmatprep.subr.bf16.mxu0 0
  %3454 = vmatpush1.bf16.msra.mxu0 %v3404
  %3455 = vmatprep.subr.bf16.mxu0 0
  %3456 = vmatpush1.bf16.msra.mxu0 %v3403
  %3457 = vmatprep.subr.bf16.mxu0 0
  %3458 = vmatpush2.bf16.msra.mxu0 0
  %3459 = vmatprep.subr.bf16.mxu0 0
  %3460 = vmatpush2.bf16.msra.mxu0 0
  %3461 = vmatprep.subr.bf16.mxu0 0
  %3462 = vmatpush2.bf16.msra.mxu0 0
  %3463 = vmatprep.subr.bf16.mxu0 0
  %3464 = vmatpush2.bf16.msra.mxu0 0
  %3465 = vmatprep.subr.bf16.mxu0 0
  %3466 = vmatpush2.bf16.msra.mxu0 0
  %3467 = vmatprep.subr.bf16.mxu0 0
  %3468 = vmatpush2.bf16.msra.mxu0 0
  %3469 = vmatprep.subr.bf16.mxu0 0
  %3470 = vmatpush2.bf16.msra.mxu0 0
  %3471 = vmatprep.subr.bf16.mxu0 0
  %3472 = vmatpush2.bf16.msra.mxu0 0
  %3473 = vmatprep.mubr.bf16.mxu0 0
  %3474 = vmatmul.mubr.bf16.gmra.mxu0 %v3436
  %v3475 = vpop.f32.mrf.mxu0
  %v3476 = vadd.f32 %v3408, %v3475
  %v3477 = vpop.f32.mrf.mxu0
  %v3478 = vpop.f32.mrf.mxu0
  %v3479 = vadd.f32 %v3413, %v3478
  %v3480 = vpop.f32.mrf.mxu0
  %3481 = vmatprep.mubr.bf16.mxu0 0
  %3482 = vmatmul.mubr.bf16.gmra.mxu0 %v3439
  %v3483 = vpop.f32.mrf.mxu0
  %v3484 = vadd.f32 %v3418, %v3483
  %v3485 = vpop.f32.mrf.mxu0
  %v3486 = vpop.f32.mrf.mxu0
  %v3487 = vadd.f32 %v3423, %v3486
  %v3488 = vpop.f32.mrf.mxu0
  %3489 = vdwg.mxu0
  %v3490 = vsub.f32 0.0, %v3476
  %v3491 = vsub.f32 0.0, %v3479
  %v3492 = vsub.f32 0.0, %v3484
  %v3493 = vsub.f32 0.0, %v3487
  %v3494 = vmul.f32 %v3490, 1.442695
  %v3495 = vpow.pop %v3494
  %v3496 = vmul.f32 %v3491, 1.442695
  %v3497 = vpow.pop %v3496
  %v3498 = vmul.f32 %v3492, 1.442695
  %v3499 = vpow.pop %v3498
  %v3500 = vmul.f32 %v3493, 1.442695
  %v3501 = vpow.pop %v3500
  %v3502 = vadd.f32 %v3495, 1.0
  %v3503 = vadd.f32 %v3497, 1.0
  %v3504 = vadd.f32 %v3499, 1.0
  %v3505 = vadd.f32 %v3501, 1.0
  %v3506 = vrcp.pop %v3502
  %v3507 = vrcp.pop %v3503
  %v3508 = vrcp.pop %v3504
  %v3509 = vrcp.pop %v3505
  %v3510 = vmul.f32 %v3476, %v3506
  %v3511 = vmul.f32 %v3479, %v3507
  %v3512 = vmul.f32 %v3484, %v3508
  %v3513 = vmul.f32 %v3487, %v3509
  %v3514 = vld [vmem:[%s87] sm:$0xf]
  %v3515 = vld [vmem:[%s87 + $0x4] sm:$0xf]
  %v3516 = vld [vmem:[%s87 + $0x8] sm:$0xf]
  %v3517 = vld [vmem:[%s87 + $0xc] sm:$0xf]
  %v3518 = vld [vmem:[%s89] sm:$0xff]
  %v3519 = vld [vmem:[%s89 + $0x8] sm:$0xff]
  %v3520 = vld [vmem:[%s89 + $0x10] sm:$0xff]
  %v3521 = vld [vmem:[%s89 + $0x18] sm:$0xff]
  %v3522 = vpack.c.bf16 %v3511, %v3510
  %v3523 = vpack.c.bf16 %v3513, %v3512
  %3525 = vset.pattern.permute.xlu0 0
  %3526 = vperm.xlu0 %3525, %v3518
  %v3527 = vpop.permute.xlu0 %3526
  %3530 = vset.pattern.permute.xlu0 0
  %3531 = vperm.xlu0 %3530, %v3519
  %v3532 = vpop.permute.xlu0 %3531
  %3535 = vset.pattern.permute.xlu0 0
  %3536 = vperm.xlu0 %3535, %v3520
  %v3537 = vpop.permute.xlu0 %3536
  %3540 = vset.pattern.permute.xlu0 0
  %3541 = vperm.xlu0 %3540, %v3521
  %v3542 = vpop.permute.xlu0 %3541
  %v3548 = vunpack.c.l.b16 %v3514
  %v3549 = vunpack.c.l.b16 %v3515
  %v3550 = vunpack.c.l.b16 %v3516
  %v3551 = vunpack.c.l.b16 %v3517
  %v3552 = vpack.c.b16 %v3549, %v3548
  %v3553 = vpack.c.b16 %v3551, %v3550
  %v3555 = vsel %vm1723, %v3552, 0
  %v3558 = vsel %vm1723, %v3553, 0
  %3560 = vmatprep.subr.bf16.mxu0 0
  %3561 = vmatpush1.bf16.msra.mxu0 0
  %3562 = vmatprep.subr.bf16.mxu0 0
  %3563 = vmatpush1.bf16.msra.mxu0 0
  %3564 = vmatprep.subr.bf16.mxu0 0
  %3565 = vmatpush1.bf16.msra.mxu0 0
  %3566 = vmatprep.subr.bf16.mxu0 0
  %3567 = vmatpush1.bf16.msra.mxu0 0
  %3568 = vmatprep.subr.bf16.mxu0 0
  %3569 = vmatpush1.bf16.msra.mxu0 0
  %3570 = vmatprep.subr.bf16.mxu0 0
  %3571 = vmatpush1.bf16.msra.mxu0 0
  %3572 = vmatprep.subr.bf16.mxu0 0
  %3573 = vmatpush1.bf16.msra.mxu0 %v3523
  %3574 = vmatprep.subr.bf16.mxu0 0
  %3575 = vmatpush1.bf16.msra.mxu0 %v3522
  %3576 = vmatprep.subr.bf16.mxu0 0
  %3577 = vmatpush2.bf16.msra.mxu0 0
  %3578 = vmatprep.subr.bf16.mxu0 0
  %3579 = vmatpush2.bf16.msra.mxu0 0
  %3580 = vmatprep.subr.bf16.mxu0 0
  %3581 = vmatpush2.bf16.msra.mxu0 0
  %3582 = vmatprep.subr.bf16.mxu0 0
  %3583 = vmatpush2.bf16.msra.mxu0 0
  %3584 = vmatprep.subr.bf16.mxu0 0
  %3585 = vmatpush2.bf16.msra.mxu0 0
  %3586 = vmatprep.subr.bf16.mxu0 0
  %3587 = vmatpush2.bf16.msra.mxu0 0
  %3588 = vmatprep.subr.bf16.mxu0 0
  %3589 = vmatpush2.bf16.msra.mxu0 0
  %3590 = vmatprep.subr.bf16.mxu0 0
  %3591 = vmatpush2.bf16.msra.mxu0 0
  %3592 = vmatprep.mubr.bf16.mxu0 0
  %3593 = vmatmul.mubr.bf16.gmra.mxu0 %v3555
  %v3594 = vpop.f32.mrf.mxu0
  %v3595 = vadd.f32 %v3527, %v3594
  %v3596 = vpop.f32.mrf.mxu0
  %v3597 = vpop.f32.mrf.mxu0
  %v3598 = vadd.f32 %v3532, %v3597
  %v3599 = vpop.f32.mrf.mxu0
  %3600 = vmatprep.mubr.bf16.mxu0 0
  %3601 = vmatmul.mubr.bf16.gmra.mxu0 %v3558
  %v3602 = vpop.f32.mrf.mxu0
  %v3603 = vadd.f32 %v3537, %v3602
  %v3604 = vpop.f32.mrf.mxu0
  %v3605 = vpop.f32.mrf.mxu0
  %v3606 = vadd.f32 %v3542, %v3605
  %v3607 = vpop.f32.mrf.mxu0
  %3608 = vdwg.mxu0
  %v3609 = vsub.f32 0.0, %v3595
  %v3610 = vsub.f32 0.0, %v3598
  %v3611 = vsub.f32 0.0, %v3603
  %v3612 = vsub.f32 0.0, %v3606
  %v3613 = vmul.f32 %v3609, 1.442695
  %v3614 = vpow.pop %v3613
  %v3615 = vmul.f32 %v3610, 1.442695
  %v3616 = vpow.pop %v3615
  %v3617 = vmul.f32 %v3611, 1.442695
  %v3618 = vpow.pop %v3617
  %v3619 = vmul.f32 %v3612, 1.442695
  %v3620 = vpow.pop %v3619
  %v3621 = vadd.f32 %v3614, 1.0
  %v3622 = vadd.f32 %v3616, 1.0
  %v3623 = vadd.f32 %v3618, 1.0
  %v3624 = vadd.f32 %v3620, 1.0
  %v3625 = vrcp.pop %v3621
  %v3626 = vrcp.pop %v3622
  %v3627 = vrcp.pop %v3623
  %v3628 = vrcp.pop %v3624
  %v3629 = vmul.f32 %v3595, %v3625
  %v3630 = vmul.f32 %v3598, %v3626
  %v3631 = vmul.f32 %v3603, %v3627
  %v3632 = vmul.f32 %v3606, %v3628
  %v3633 = vld [vmem:[%s91] sm:$0xf]
  %v3634 = vld [vmem:[%s91 + $0x4] sm:$0xf]
  %v3635 = vpack.c.bf16 %v3630, %v3629
  %v3636 = vpack.c.bf16 %v3632, %v3631
  %v3639 = vunpack.c.l.b16 %v3633
  %v3640 = vunpack.c.l.b16 %v3634
  %v3641 = vpack.c.b16 %v3640, %v3639
  %v3643 = vsel %vm1723, %v3641, 0
  %3645 = vmatprep.subr.bf16.mxu0 0
  %3646 = vmatpush1.bf16.msra.mxu0 0
  %3647 = vmatprep.subr.bf16.mxu0 0
  %3648 = vmatpush1.bf16.msra.mxu0 0
  %3649 = vmatprep.subr.bf16.mxu0 0
  %3650 = vmatpush1.bf16.msra.mxu0 0
  %3651 = vmatprep.subr.bf16.mxu0 0
  %3652 = vmatpush1.bf16.msra.mxu0 0
  %3653 = vmatprep.subr.bf16.mxu0 0
  %3654 = vmatpush1.bf16.msra.mxu0 0
  %3655 = vmatprep.subr.bf16.mxu0 0
  %3656 = vmatpush1.bf16.msra.mxu0 0
  %3657 = vmatprep.subr.bf16.mxu0 0
  %3658 = vmatpush1.bf16.msra.mxu0 %v3636
  %3659 = vmatprep.subr.bf16.mxu0 0
  %3660 = vmatpush1.bf16.msra.mxu0 %v3635
  %3661 = vmatprep.subr.bf16.mxu0 0
  %3662 = vmatpush2.bf16.msra.mxu0 0
  %3663 = vmatprep.subr.bf16.mxu0 0
  %3664 = vmatpush2.bf16.msra.mxu0 0
  %3665 = vmatprep.subr.bf16.mxu0 0
  %3666 = vmatpush2.bf16.msra.mxu0 0
  %3667 = vmatprep.subr.bf16.mxu0 0
  %3668 = vmatpush2.bf16.msra.mxu0 0
  %3669 = vmatprep.subr.bf16.mxu0 0
  %3670 = vmatpush2.bf16.msra.mxu0 0
  %3671 = vmatprep.subr.bf16.mxu0 0
  %3672 = vmatpush2.bf16.msra.mxu0 0
  %3673 = vmatprep.subr.bf16.mxu0 0
  %3674 = vmatpush2.bf16.msra.mxu0 0
  %3675 = vmatprep.subr.bf16.mxu0 0
  %3676 = vmatpush2.bf16.msra.mxu0 0
  %3677 = vmatprep.mubr.bf16.mxu0 0
  %3678 = vmatmul.mubr.bf16.gmra.mxu0 %v3643
  %v3679 = vpop.f32.mrf.mxu0
  %v3680 = vadd.f32 0.0, %v3679
  %v3681 = vpop.f32.mrf.mxu0
  %v3682 = vpop.f32.mrf.mxu0
  %v3683 = vadd.f32 0.0, %v3682
  %v3684 = vpop.f32.mrf.mxu0
  %3685 = vdwg.mxu0
  %v3688 = vunpack.c.l.b16 %v2228
  %v3689 = vunpack.c.l.b16 %v2229
  %v3690 = vpack.c.b16 %v3689, %v3688
  %v3692 = vsel %vm1723, %v3690, 0
  %3694 = vmatprep.subr.bf16.mxu0 0
  %3695 = vmatpush1.bf16.msra.mxu0 0
  %3696 = vmatprep.subr.bf16.mxu0 0
  %3697 = vmatpush1.bf16.msra.mxu0 0
  %3698 = vmatprep.subr.bf16.mxu0 0
  %3699 = vmatpush1.bf16.msra.mxu0 0
  %3700 = vmatprep.subr.bf16.mxu0 0
  %3701 = vmatpush1.bf16.msra.mxu0 0
  %3702 = vmatprep.subr.bf16.mxu0 0
  %3703 = vmatpush1.bf16.msra.mxu0 0
  %3704 = vmatprep.subr.bf16.mxu0 0
  %3705 = vmatpush1.bf16.msra.mxu0 0
  %3706 = vmatprep.subr.bf16.mxu0 0
  %3707 = vmatpush1.bf16.msra.mxu0 %v2231
  %3708 = vmatprep.subr.bf16.mxu0 0
  %3709 = vmatpush1.bf16.msra.mxu0 %v2230
  %3710 = vmatprep.subr.bf16.mxu0 0
  %3711 = vmatpush2.bf16.msra.mxu0 0
  %3712 = vmatprep.subr.bf16.mxu0 0
  %3713 = vmatpush2.bf16.msra.mxu0 0
  %3714 = vmatprep.subr.bf16.mxu0 0
  %3715 = vmatpush2.bf16.msra.mxu0 0
  %3716 = vmatprep.subr.bf16.mxu0 0
  %3717 = vmatpush2.bf16.msra.mxu0 0
  %3718 = vmatprep.subr.bf16.mxu0 0
  %3719 = vmatpush2.bf16.msra.mxu0 0
  %3720 = vmatprep.subr.bf16.mxu0 0
  %3721 = vmatpush2.bf16.msra.mxu0 0
  %3722 = vmatprep.subr.bf16.mxu0 0
  %3723 = vmatpush2.bf16.msra.mxu0 0
  %3724 = vmatprep.subr.bf16.mxu0 0
  %3725 = vmatpush2.bf16.msra.mxu0 0
  %3726 = vmatprep.mubr.bf16.mxu0 0
  %3727 = vmatmul.mubr.bf16.gmra.mxu0 %v3692
  %v3728 = vpop.f32.mrf.mxu0
  %v3729 = vadd.f32 %v3680, %v3728
  %v3730 = vpop.f32.mrf.mxu0
  %v3731 = vpop.f32.mrf.mxu0
  %v3732 = vadd.f32 %v3683, %v3731
  %v3733 = vpop.f32.mrf.mxu0
  %3734 = vdwg.mxu0
  %v3735 = vld [vmem:[%s93] sm:$0xf]
  %v3736 = vld [vmem:[%s93 + $0x4] sm:$0xf]
  %v3737 = vld [vmem:[%s93 + $0x8] sm:$0xf]
  %v3738 = vld [vmem:[%s93 + $0xc] sm:$0xf]
  %v3739 = vld [vmem:[%s95] sm:$0xff]
  %v3740 = vld [vmem:[%s95 + $0x8] sm:$0xff]
  %v3741 = vld [vmem:[%s95 + $0x10] sm:$0xff]
  %v3742 = vld [vmem:[%s95 + $0x18] sm:$0xff]
  %v3743 = vld [vmem:[%s97] sm:$0xf]
  %v3744 = vld [vmem:[%s97 + $0x4] sm:$0xf]
  %v3745 = vld [vmem:[%s99] sm:$0xf]
  %v3746 = vld [vmem:[%s99 + $0x4] sm:$0xf]
  %v3747 = vld [vmem:[%s99 + $0x8] sm:$0xf]
  %v3748 = vld [vmem:[%s99 + $0xc] sm:$0xf]
  %v3749 = vld [vmem:[%s101] sm:$0xf]
  %v3750 = vld [vmem:[%s101 + $0x4] sm:$0xf]
  %v3751 = vld [vmem:[%s101 + $0x8] sm:$0xf]
  %v3752 = vld [vmem:[%s101 + $0xc] sm:$0xf]
  %v3753 = vld [vmem:[%s103] sm:$0xf]
  %v3754 = vld [vmem:[%s103 + $0x4] sm:$0xf]
  %v3755 = vpack.c.bf16 %v3196, %v3195
  %3757 = vset.pattern.permute.xlu0 0
  %3758 = vperm.xlu0 %3757, %v3739
  %v3759 = vpop.permute.xlu0 %3758
  %3762 = vset.pattern.permute.xlu0 0
  %3763 = vperm.xlu0 %3762, %v3740
  %v3764 = vpop.permute.xlu0 %3763
  %3767 = vset.pattern.permute.xlu0 0
  %3768 = vperm.xlu0 %3767, %v3741
  %v3769 = vpop.permute.xlu0 %3768
  %3772 = vset.pattern.permute.xlu0 0
  %3773 = vperm.xlu0 %3772, %v3742
  %v3774 = vpop.permute.xlu0 %3773
  %v3780 = vunpack.c.l.b16 %v3735
  %v3781 = vunpack.c.l.b16 %v3736
  %v3782 = vunpack.c.l.b16 %v3737
  %v3783 = vunpack.c.l.b16 %v3738
  %v3784 = vpack.c.b16 %v3781, %v3780
  %v3785 = vpack.c.b16 %v3783, %v3782
  %v3787 = vsel %vm1673, %v3784, 0
  %v3790 = vsel %vm1673, %v3785, 0
  %3792 = vmatprep.subr.bf16.mxu0 0
  %3793 = vmatpush1.bf16.msra.mxu0 0
  %3794 = vmatprep.subr.bf16.mxu0 0
  %3795 = vmatpush1.bf16.msra.mxu0 0
  %3796 = vmatprep.subr.bf16.mxu0 0
  %3797 = vmatpush1.bf16.msra.mxu0 0
  %3798 = vmatprep.subr.bf16.mxu0 0
  %3799 = vmatpush1.bf16.msra.mxu0 0
  %3800 = vmatprep.subr.bf16.mxu0 0
  %3801 = vmatpush1.bf16.msra.mxu0 0
  %3802 = vmatprep.subr.bf16.mxu0 0
  %3803 = vmatpush1.bf16.msra.mxu0 0
  %3804 = vmatprep.subr.bf16.mxu0 0
  %3805 = vmatpush1.bf16.msra.mxu0 0
  %3806 = vmatprep.subr.bf16.mxu0 0
  %3807 = vmatpush1.bf16.msra.mxu0 %v3755
  %3808 = vmatprep.subr.bf16.mxu0 0
  %3809 = vmatpush2.bf16.msra.mxu0 0
  %3810 = vmatprep.subr.bf16.mxu0 0
  %3811 = vmatpush2.bf16.msra.mxu0 0
  %3812 = vmatprep.subr.bf16.mxu0 0
  %3813 = vmatpush2.bf16.msra.mxu0 0
  %3814 = vmatprep.subr.bf16.mxu0 0
  %3815 = vmatpush2.bf16.msra.mxu0 0
  %3816 = vmatprep.subr.bf16.mxu0 0
  %3817 = vmatpush2.bf16.msra.mxu0 0
  %3818 = vmatprep.subr.bf16.mxu0 0
  %3819 = vmatpush2.bf16.msra.mxu0 0
  %3820 = vmatprep.subr.bf16.mxu0 0
  %3821 = vmatpush2.bf16.msra.mxu0 0
  %3822 = vmatprep.subr.bf16.mxu0 0
  %3823 = vmatpush2.bf16.msra.mxu0 0
  %3824 = vmatprep.mubr.bf16.mxu0 0
  %3825 = vmatmul.mubr.bf16.gmra.mxu0 %v3787
  %v3826 = vpop.f32.mrf.mxu0
  %v3827 = vadd.f32 %v3759, %v3826
  %v3828 = vpop.f32.mrf.mxu0
  %v3829 = vpop.f32.mrf.mxu0
  %v3830 = vadd.f32 %v3764, %v3829
  %v3831 = vpop.f32.mrf.mxu0
  %3832 = vmatprep.mubr.bf16.mxu0 0
  %3833 = vmatmul.mubr.bf16.gmra.mxu0 %v3790
  %v3834 = vpop.f32.mrf.mxu0
  %v3835 = vadd.f32 %v3769, %v3834
  %v3836 = vpop.f32.mrf.mxu0
  %v3837 = vpop.f32.mrf.mxu0
  %v3838 = vadd.f32 %v3774, %v3837
  %v3839 = vpop.f32.mrf.mxu0
  %3840 = vdwg.mxu0
  %v3841 = vsub.f32 0.0, %v3827
  %v3842 = vsub.f32 0.0, %v3830
  %v3843 = vmul.f32 %v3841, 1.442695
  %v3844 = vpow.pop %v3843
  %v3845 = vmul.f32 %v3842, 1.442695
  %v3846 = vpow.pop %v3845
  %v3847 = vadd.f32 %v3844, 1.0
  %v3848 = vadd.f32 %v3846, 1.0
  %v3849 = vrcp.pop %v3847
  %v3850 = vrcp.pop %v3848
  %v3851 = vmul.f32 %v3827, %v3849
  %v3852 = vmul.f32 %v3830, %v3850
  %v3853 = vsub.f32 0.0, %v3835
  %v3854 = vsub.f32 0.0, %v3838
  %v3855 = vmul.f32 %v3853, 1.442695
  %v3856 = vpow.pop %v3855
  %v3857 = vmul.f32 %v3854, 1.442695
  %v3858 = vpow.pop %v3857
  %v3859 = vadd.f32 %v3856, 1.0
  %v3860 = vadd.f32 %v3858, 1.0
  %v3861 = vrcp.pop %v3859
  %v3862 = vrcp.pop %v3860
  %v3863 = vmul.f32 %v3835, %v3861
  %v3864 = vmul.f32 %v3838, %v3862
  %v3867 = vunpack.c.l.b16 %v3743
  %v3868 = vunpack.c.l.b16 %v3744
  %v3869 = vpack.c.b16 %v3868, %v3867
  %v3871 = vsel %vm1600, %v3869, 0
  %3873 = vmatprep.subr.bf16.mxu0 0
  %3874 = vmatpush1.bf16.msra.mxu0 0
  %3875 = vmatprep.subr.bf16.mxu0 0
  %3876 = vmatpush1.bf16.msra.mxu0 0
  %3877 = vmatprep.subr.bf16.mxu0 0
  %3878 = vmatpush1.bf16.msra.mxu0 0
  %3879 = vmatprep.subr.bf16.mxu0 0
  %3880 = vmatpush1.bf16.msra.mxu0 0
  %3881 = vmatprep.subr.bf16.mxu0 0
  %3882 = vmatpush1.bf16.msra.mxu0 0
  %3883 = vmatprep.subr.bf16.mxu0 0
  %3884 = vmatpush1.bf16.msra.mxu0 0
  %3885 = vmatprep.subr.bf16.mxu0 0
  %3886 = vmatpush1.bf16.msra.mxu0 0
  %3887 = vmatprep.subr.bf16.mxu0 0
  %3888 = vmatpush1.bf16.msra.mxu0 %v1606
  %3889 = vmatprep.subr.bf16.mxu0 0
  %3890 = vmatpush2.bf16.msra.mxu0 0
  %3891 = vmatprep.subr.bf16.mxu0 0
  %3892 = vmatpush2.bf16.msra.mxu0 0
  %3893 = vmatprep.subr.bf16.mxu0 0
  %3894 = vmatpush2.bf16.msra.mxu0 0
  %3895 = vmatprep.subr.bf16.mxu0 0
  %3896 = vmatpush2.bf16.msra.mxu0 0
  %3897 = vmatprep.subr.bf16.mxu0 0
  %3898 = vmatpush2.bf16.msra.mxu0 0
  %3899 = vmatprep.subr.bf16.mxu0 0
  %3900 = vmatpush2.bf16.msra.mxu0 0
  %3901 = vmatprep.subr.bf16.mxu0 0
  %3902 = vmatpush2.bf16.msra.mxu0 0
  %3903 = vmatprep.subr.bf16.mxu0 0
  %3904 = vmatpush2.bf16.msra.mxu0 0
  %3905 = vmatprep.mubr.bf16.mxu0 0
  %3906 = vmatmul.mubr.bf16.gmra.mxu0 %v3871
  %v3907 = vpop.f32.mrf.mxu0
  %v3908 = vadd.f32 0.0, %v3907
  %v3909 = vpop.f32.mrf.mxu0
  %v3910 = vpop.f32.mrf.mxu0
  %v3911 = vadd.f32 0.0, %v3910
  %v3912 = vpop.f32.mrf.mxu0
  %3913 = vdwg.mxu0
  %v3914 = vmul.f32 %v3863, %v3908
  %v3915 = vmul.f32 %v3864, %v3911
  %v3916 = vpack.c.bf16 %v3915, %v3914
  %v3921 = vunpack.c.l.b16 %v3749
  %v3922 = vunpack.c.l.b16 %v3750
  %v3923 = vunpack.c.l.b16 %v3751
  %v3924 = vunpack.c.l.b16 %v3752
  %v3925 = vpack.c.b16 %v3922, %v3921
  %v3926 = vpack.c.b16 %v3924, %v3923
  %v3928 = vsel %vm1673, %v3925, 0
  %v3931 = vsel %vm1673, %v3926, 0
  %3933 = vmatprep.subr.bf16.mxu0 0
  %3934 = vmatpush1.bf16.msra.mxu0 0
  %3935 = vmatprep.subr.bf16.mxu0 0
  %3936 = vmatpush1.bf16.msra.mxu0 0
  %3937 = vmatprep.subr.bf16.mxu0 0
  %3938 = vmatpush1.bf16.msra.mxu0 0
  %3939 = vmatprep.subr.bf16.mxu0 0
  %3940 = vmatpush1.bf16.msra.mxu0 0
  %3941 = vmatprep.subr.bf16.mxu0 0
  %3942 = vmatpush1.bf16.msra.mxu0 0
  %3943 = vmatprep.subr.bf16.mxu0 0
  %3944 = vmatpush1.bf16.msra.mxu0 0
  %3945 = vmatprep.subr.bf16.mxu0 0
  %3946 = vmatpush1.bf16.msra.mxu0 0
  %3947 = vmatprep.subr.bf16.mxu0 0
  %3948 = vmatpush1.bf16.msra.mxu0 %v3916
  %3949 = vmatprep.subr.bf16.mxu0 0
  %3950 = vmatpush2.bf16.msra.mxu0 0
  %3951 = vmatprep.subr.bf16.mxu0 0
  %3952 = vmatpush2.bf16.msra.mxu0 0
  %3953 = vmatprep.subr.bf16.mxu0 0
  %3954 = vmatpush2.bf16.msra.mxu0 0
  %3955 = vmatprep.subr.bf16.mxu0 0
  %3956 = vmatpush2.bf16.msra.mxu0 0
  %3957 = vmatprep.subr.bf16.mxu0 0
  %3958 = vmatpush2.bf16.msra.mxu0 0
  %3959 = vmatprep.subr.bf16.mxu0 0
  %3960 = vmatpush2.bf16.msra.mxu0 0
  %3961 = vmatprep.subr.bf16.mxu0 0
  %3962 = vmatpush2.bf16.msra.mxu0 0
  %3963 = vmatprep.subr.bf16.mxu0 0
  %3964 = vmatpush2.bf16.msra.mxu0 0
  %3965 = vmatprep.mubr.bf16.mxu0 0
  %3966 = vmatmul.mubr.bf16.gmra.mxu0 %v3928
  %v3967 = vpop.f32.mrf.mxu0
  %v3968 = vadd.f32 0.0, %v3967
  %v3969 = vpop.f32.mrf.mxu0
  %v3970 = vpop.f32.mrf.mxu0
  %v3971 = vadd.f32 0.0, %v3970
  %v3972 = vpop.f32.mrf.mxu0
  %3973 = vmatprep.mubr.bf16.mxu0 0
  %3974 = vmatmul.mubr.bf16.gmra.mxu0 %v3931
  %v3975 = vpop.f32.mrf.mxu0
  %v3976 = vadd.f32 0.0, %v3975
  %v3977 = vpop.f32.mrf.mxu0
  %v3978 = vpop.f32.mrf.mxu0
  %v3979 = vadd.f32 0.0, %v3978
  %v3980 = vpop.f32.mrf.mxu0
  %3981 = vdwg.mxu0
  %v3982 = vsub.f32 0.0, %v3968
  %v3983 = vsub.f32 0.0, %v3971
  %v3984 = vsub.f32 0.0, %v3976
  %v3985 = vsub.f32 0.0, %v3979
  %v3986 = vmul.f32 %v3982, 1.442695
  %v3987 = vpow.pop %v3986
  %v3988 = vmul.f32 %v3983, 1.442695
  %v3989 = vpow.pop %v3988
  %v3990 = vmul.f32 %v3984, 1.442695
  %v3991 = vpow.pop %v3990
  %v3992 = vmul.f32 %v3985, 1.442695
  %v3993 = vpow.pop %v3992
  %v3994 = vadd.f32 %v3987, 1.0
  %v3995 = vadd.f32 %v3989, 1.0
  %v3996 = vadd.f32 %v3991, 1.0
  %v3997 = vadd.f32 %v3993, 1.0
  %v3998 = vrcp.pop %v3994
  %v3999 = vrcp.pop %v3995
  %v4000 = vrcp.pop %v3996
  %v4001 = vrcp.pop %v3997
  %v4002 = vmul.f32 %v3968, %v3998
  %v4003 = vmul.f32 %v3971, %v3999
  %v4004 = vmul.f32 %v3976, %v4000
  %v4005 = vmul.f32 %v3979, %v4001
  %v4010 = vunpack.c.l.b16 %v3745
  %v4011 = vunpack.c.l.b16 %v3746
  %v4012 = vunpack.c.l.b16 %v3747
  %v4013 = vunpack.c.l.b16 %v3748
  %v4014 = vpack.c.b16 %v4011, %v4010
  %v4015 = vpack.c.b16 %v4013, %v4012
  %v4017 = vsel %vm2513, %v4014, 0
  %v4020 = vsel %vm2513, %v4015, 0
  %4022 = vmatprep.subr.bf16.mxu0 0
  %4023 = vmatpush1.bf16.msra.mxu0 0
  %4024 = vmatprep.subr.bf16.mxu0 0
  %4025 = vmatpush1.bf16.msra.mxu0 0
  %4026 = vmatprep.subr.bf16.mxu0 0
  %4027 = vmatpush1.bf16.msra.mxu0 0
  %4028 = vmatprep.subr.bf16.mxu0 0
  %4029 = vmatpush1.bf16.msra.mxu0 0
  %4030 = vmatprep.subr.bf16.mxu0 0
  %4031 = vmatpush1.bf16.msra.mxu0 0
  %4032 = vmatprep.subr.bf16.mxu0 0
  %4033 = vmatpush1.bf16.msra.mxu0 0
  %4034 = vmatprep.subr.bf16.mxu0 0
  %4035 = vmatpush1.bf16.msra.mxu0 %v2521
  %4036 = vmatprep.subr.bf16.mxu0 0
  %4037 = vmatpush1.bf16.msra.mxu0 %v1541
  %4038 = vmatprep.subr.bf16.mxu0 0
  %4039 = vmatpush2.bf16.msra.mxu0 0
  %4040 = vmatprep.subr.bf16.mxu0 0
  %4041 = vmatpush2.bf16.msra.mxu0 0
  %4042 = vmatprep.subr.bf16.mxu0 0
  %4043 = vmatpush2.bf16.msra.mxu0 0
  %4044 = vmatprep.subr.bf16.mxu0 0
  %4045 = vmatpush2.bf16.msra.mxu0 0
  %4046 = vmatprep.subr.bf16.mxu0 0
  %4047 = vmatpush2.bf16.msra.mxu0 0
  %4048 = vmatprep.subr.bf16.mxu0 0
  %4049 = vmatpush2.bf16.msra.mxu0 0
  %4050 = vmatprep.subr.bf16.mxu0 0
  %4051 = vmatpush2.bf16.msra.mxu0 0
  %4052 = vmatprep.subr.bf16.mxu0 0
  %4053 = vmatpush2.bf16.msra.mxu0 0
  %4054 = vmatprep.mubr.bf16.mxu0 0
  %4055 = vmatmul.mubr.bf16.gmra.mxu0 %v4017
  %v4056 = vpop.f32.mrf.mxu0
  %v4057 = vadd.f32 0.0, %v4056
  %v4058 = vpop.f32.mrf.mxu0
  %v4059 = vpop.f32.mrf.mxu0
  %v4060 = vadd.f32 0.0, %v4059
  %v4061 = vpop.f32.mrf.mxu0
  %4062 = vmatprep.mubr.bf16.mxu0 0
  %4063 = vmatmul.mubr.bf16.gmra.mxu0 %v4020
  %v4064 = vpop.f32.mrf.mxu0
  %v4065 = vadd.f32 0.0, %v4064
  %v4066 = vpop.f32.mrf.mxu0
  %v4067 = vpop.f32.mrf.mxu0
  %v4068 = vadd.f32 0.0, %v4067
  %v4069 = vpop.f32.mrf.mxu0
  %4070 = vdwg.mxu0
  %4071 = vmatprep.subr.mxu0 0.0
  %4072 = vmatpush1.msra.mxu0 %v1282
  %4073 = vmatprep.subr.mxu0 0.0
  %4074 = vmatpush1.msra.mxu0 %v1281
  %4075 = vmatprep.subr.mxu0 0.0
  %4076 = vmatpush1.msra.mxu0 %v1280
  %4077 = vmatprep.subr.mxu0 0.0
  %4078 = vmatpush1.msra.mxu0 %v1279
  %4079 = vmatprep.subr.mxu0 0.0
  %4080 = vmatpush1.msra.mxu0 %v1278
  %4081 = vmatprep.subr.mxu0 0.0
  %4082 = vmatpush1.msra.mxu0 %v1277
  %4083 = vmatprep.subr.mxu0 0.0
  %4084 = vmatpush1.msra.mxu0 %v1276
  %4085 = vmatprep.subr.mxu0 0.0
  %4086 = vmatpush1.msra.mxu0 %v1275
  %4087 = vmatprep.subr.mxu0 0.0
  %4088 = vmatpush1.msra.mxu0 %v1274
  %4089 = vmatprep.subr.mxu0 0.0
  %4090 = vmatpush1.msra.mxu0 %v1273
  %4091 = vmatprep.subr.mxu0 0.0
  %4092 = vmatpush1.msra.mxu0 %v1272
  %4093 = vmatprep.subr.mxu0 0.0
  %4094 = vmatpush1.msra.mxu0 %v1271
  %4095 = vmatprep.subr.mxu0 0.0
  %4096 = vmatpush1.msra.mxu0 %v1270
  %4097 = vmatprep.subr.mxu0 0.0
  %4098 = vmatpush1.msra.mxu0 %v1269
  %4099 = vmatprep.subr.mxu0 0.0
  %4100 = vmatpush1.msra.mxu0 %v1268
  %4101 = vmatprep.subr.mxu0 0.0
  %4102 = vmatpush1.msra.mxu0 %v1267
  %4103 = vmatprep.subr.mxu0 0.0
  %4104 = vmatpush2.msra.mxu0 0.0
  %4105 = vmatprep.subr.mxu0 0.0
  %4106 = vmatpush2.msra.mxu0 0.0
  %4107 = vmatprep.subr.mxu0 0.0
  %4108 = vmatpush2.msra.mxu0 0.0
  %4109 = vmatprep.subr.mxu0 0.0
  %4110 = vmatpush2.msra.mxu0 0.0
  %4111 = vmatprep.subr.mxu0 0.0
  %4112 = vmatpush2.msra.mxu0 0.0
  %4113 = vmatprep.subr.mxu0 0.0
  %4114 = vmatpush2.msra.mxu0 0.0
  %4115 = vmatprep.subr.mxu0 0.0
  %4116 = vmatpush2.msra.mxu0 0.0
  %4117 = vmatprep.subr.mxu0 0.0
  %4118 = vmatpush2.msra.mxu0 0.0
  %4119 = vmatprep.subr.mxu0 0.0
  %4120 = vmatpush2.msra.mxu0 0.0
  %4121 = vmatprep.subr.mxu0 0.0
  %4122 = vmatpush2.msra.mxu0 0.0
  %4123 = vmatprep.subr.mxu0 0.0
  %4124 = vmatpush2.msra.mxu0 0.0
  %4125 = vmatprep.subr.mxu0 0.0
  %4126 = vmatpush2.msra.mxu0 0.0
  %4127 = vmatprep.subr.mxu0 0.0
  %4128 = vmatpush2.msra.mxu0 0.0
  %4129 = vmatprep.subr.mxu0 0.0
  %4130 = vmatpush2.msra.mxu0 0.0
  %4131 = vmatprep.subr.mxu0 0.0
  %4132 = vmatpush2.msra.mxu0 0.0
  %4133 = vmatprep.subr.mxu0 0.0
  %4134 = vmatpush2.msra.mxu0 0.0
  %4135 = vmatprep.mubr.f32.mxu0 0.0
  %4136 = vmatmul.mubr.f32.gmra.mxu0 %v4002
  %v4137 = vpop.f32.mrf.mxu0
  %v4138 = vadd.f32 0.0, %v4137
  %v4139 = vpop.f32.mrf.mxu0
  %4140 = vmatprep.mubr.f32.mxu0 0.0
  %4141 = vmatmul.mubr.f32.gmra.mxu0 %v4003
  %v4142 = vpop.f32.mrf.mxu0
  %v4143 = vadd.f32 0.0, %v4142
  %v4144 = vpop.f32.mrf.mxu0
  %4145 = vmatprep.mubr.f32.mxu0 0.0
  %4146 = vmatmul.mubr.f32.gmra.mxu0 %v4004
  %v4147 = vpop.f32.mrf.mxu0
  %v4148 = vadd.f32 0.0, %v4147
  %v4149 = vpop.f32.mrf.mxu0
  %4150 = vmatprep.mubr.f32.mxu0 0.0
  %4151 = vmatmul.mubr.f32.gmra.mxu0 %v4005
  %v4152 = vpop.f32.mrf.mxu0
  %v4153 = vadd.f32 0.0, %v4152
  %v4154 = vpop.f32.mrf.mxu0
  %4155 = vdwg.mxu0
  %v4156 = vmul.f32 %v4138, %v4057
  %v4157 = vmul.f32 %v4143, %v4060
  %v4158 = vmul.f32 %v4148, %v4065
  %v4159 = vmul.f32 %v4153, %v4068
  %4160 = vmatprep.subr.mxu0 0.0
  %4161 = vmatpush1.msra.mxu0 %v1558
  %4162 = vmatprep.subr.mxu0 0.0
  %4163 = vmatpush1.msra.mxu0 %v1557
  %4164 = vmatprep.subr.mxu0 0.0
  %4165 = vmatpush1.msra.mxu0 %v1556
  %4166 = vmatprep.subr.mxu0 0.0
  %4167 = vmatpush1.msra.mxu0 %v1555
  %4168 = vmatprep.subr.mxu0 0.0
  %4169 = vmatpush1.msra.mxu0 %v1554
  %4170 = vmatprep.subr.mxu0 0.0
  %4171 = vmatpush1.msra.mxu0 %v1553
  %4172 = vmatprep.subr.mxu0 0.0
  %4173 = vmatpush1.msra.mxu0 %v1552
  %4174 = vmatprep.subr.mxu0 0.0
  %4175 = vmatpush1.msra.mxu0 %v1551
  %4176 = vmatprep.subr.mxu0 0.0
  %4177 = vmatpush1.msra.mxu0 %v1550
  %4178 = vmatprep.subr.mxu0 0.0
  %4179 = vmatpush1.msra.mxu0 %v1549
  %4180 = vmatprep.subr.mxu0 0.0
  %4181 = vmatpush1.msra.mxu0 %v1548
  %4182 = vmatprep.subr.mxu0 0.0
  %4183 = vmatpush1.msra.mxu0 %v1547
  %4184 = vmatprep.subr.mxu0 0.0
  %4185 = vmatpush1.msra.mxu0 %v1546
  %4186 = vmatprep.subr.mxu0 0.0
  %4187 = vmatpush1.msra.mxu0 %v1545
  %4188 = vmatprep.subr.mxu0 0.0
  %4189 = vmatpush1.msra.mxu0 %v1544
  %4190 = vmatprep.subr.mxu0 0.0
  %4191 = vmatpush1.msra.mxu0 %v1543
  %4192 = vmatprep.subr.mxu0 0.0
  %4193 = vmatpush2.msra.mxu0 0.0
  %4194 = vmatprep.subr.mxu0 0.0
  %4195 = vmatpush2.msra.mxu0 0.0
  %4196 = vmatprep.subr.mxu0 0.0
  %4197 = vmatpush2.msra.mxu0 0.0
  %4198 = vmatprep.subr.mxu0 0.0
  %4199 = vmatpush2.msra.mxu0 0.0
  %4200 = vmatprep.subr.mxu0 0.0
  %4201 = vmatpush2.msra.mxu0 0.0
  %4202 = vmatprep.subr.mxu0 0.0
  %4203 = vmatpush2.msra.mxu0 0.0
  %4204 = vmatprep.subr.mxu0 0.0
  %4205 = vmatpush2.msra.mxu0 0.0
  %4206 = vmatprep.subr.mxu0 0.0
  %4207 = vmatpush2.msra.mxu0 0.0
  %4208 = vmatprep.subr.mxu0 0.0
  %4209 = vmatpush2.msra.mxu0 0.0
  %4210 = vmatprep.subr.mxu0 0.0
  %4211 = vmatpush2.msra.mxu0 0.0
  %4212 = vmatprep.subr.mxu0 0.0
  %4213 = vmatpush2.msra.mxu0 0.0
  %4214 = vmatprep.subr.mxu0 0.0
  %4215 = vmatpush2.msra.mxu0 0.0
  %4216 = vmatprep.subr.mxu0 0.0
  %4217 = vmatpush2.msra.mxu0 0.0
  %4218 = vmatprep.subr.mxu0 0.0
  %4219 = vmatpush2.msra.mxu0 0.0
  %4220 = vmatprep.subr.mxu0 0.0
  %4221 = vmatpush2.msra.mxu0 0.0
  %4222 = vmatprep.subr.mxu0 0.0
  %4223 = vmatpush2.msra.mxu0 0.0
  %4224 = vmatprep.mubr.f32.mxu0 0.0
  %4225 = vmatmul.mubr.f32.gmra.mxu0 %v4156
  %v4226 = vpop.f32.mrf.mxu0
  %v4227 = vadd.f32 0.0, %v4226
  %v4228 = vpop.f32.mrf.mxu0
  %4229 = vmatprep.mubr.f32.mxu0 0.0
  %4230 = vmatmul.mubr.f32.gmra.mxu0 %v4157
  %v4231 = vpop.f32.mrf.mxu0
  %v4232 = vadd.f32 0.0, %v4231
  %v4233 = vpop.f32.mrf.mxu0
  %4234 = vmatprep.mubr.f32.mxu0 0.0
  %4235 = vmatmul.mubr.f32.gmra.mxu0 %v4158
  %v4236 = vpop.f32.mrf.mxu0
  %v4237 = vadd.f32 0.0, %v4236
  %v4238 = vpop.f32.mrf.mxu0
  %4239 = vmatprep.mubr.f32.mxu0 0.0
  %4240 = vmatmul.mubr.f32.gmra.mxu0 %v4159
  %v4241 = vpop.f32.mrf.mxu0
  %v4242 = vadd.f32 0.0, %v4241
  %v4243 = vpop.f32.mrf.mxu0
  %4244 = vdwg.mxu0
  %v4245 = vpack.c.bf16 %v4232, %v4227
  %v4246 = vpack.c.bf16 %v4242, %v4237
  %v4249 = vunpack.c.l.b16 %v3753
  %v4250 = vunpack.c.l.b16 %v3754
  %v4251 = vpack.c.b16 %v4250, %v4249
  %v4253 = vsel %vm1723, %v4251, 0
  %4255 = vmatprep.subr.bf16.mxu0 0
  %4256 = vmatpush1.bf16.msra.mxu0 0
  %4257 = vmatprep.subr.bf16.mxu0 0
  %4258 = vmatpush1.bf16.msra.mxu0 0
  %4259 = vmatprep.subr.bf16.mxu0 0
  %4260 = vmatpush1.bf16.msra.mxu0 0
  %4261 = vmatprep.subr.bf16.mxu0 0
  %4262 = vmatpush1.bf16.msra.mxu0 0
  %4263 = vmatprep.subr.bf16.mxu0 0
  %4264 = vmatpush1.bf16.msra.mxu0 0
  %4265 = vmatprep.subr.bf16.mxu0 0
  %4266 = vmatpush1.bf16.msra.mxu0 0
  %4267 = vmatprep.subr.bf16.mxu0 0
  %4268 = vmatpush1.bf16.msra.mxu0 %v4246
  %4269 = vmatprep.subr.bf16.mxu0 0
  %4270 = vmatpush1.bf16.msra.mxu0 %v4245
  %4271 = vmatprep.subr.bf16.mxu0 0
  %4272 = vmatpush2.bf16.msra.mxu0 0
  %4273 = vmatprep.subr.bf16.mxu0 0
  %4274 = vmatpush2.bf16.msra.mxu0 0
  %4275 = vmatprep.subr.bf16.mxu0 0
  %4276 = vmatpush2.bf16.msra.mxu0 0
  %4277 = vmatprep.subr.bf16.mxu0 0
  %4278 = vmatpush2.bf16.msra.mxu0 0
  %4279 = vmatprep.subr.bf16.mxu0 0
  %4280 = vmatpush2.bf16.msra.mxu0 0
  %4281 = vmatprep.subr.bf16.mxu0 0
  %4282 = vmatpush2.bf16.msra.mxu0 0
  %4283 = vmatprep.subr.bf16.mxu0 0
  %4284 = vmatpush2.bf16.msra.mxu0 0
  %4285 = vmatprep.subr.bf16.mxu0 0
  %4286 = vmatpush2.bf16.msra.mxu0 0
  %4287 = vmatprep.mubr.bf16.mxu0 0
  %4288 = vmatmul.mubr.bf16.gmra.mxu0 %v4253
  %v4289 = vpop.f32.mrf.mxu0
  %v4290 = vadd.f32 0.0, %v4289
  %v4291 = vpop.f32.mrf.mxu0
  %v4292 = vpop.f32.mrf.mxu0
  %v4293 = vadd.f32 0.0, %v4292
  %v4294 = vpop.f32.mrf.mxu0
  %4295 = vdwg.mxu0
  %v4296 = vsub.f32 0.0, %v4290
  %v4297 = vsub.f32 0.0, %v4293
  %v4298 = vmul.f32 %v4296, 1.442695
  %v4299 = vpow.pop %v4298
  %v4300 = vmul.f32 %v4297, 1.442695
  %v4301 = vpow.pop %v4300
  %v4302 = vadd.f32 %v4299, 1.0
  %v4303 = vadd.f32 %v4301, 1.0
  %v4304 = vrcp.pop %v4302
  %v4305 = vrcp.pop %v4303
  %v4306 = vmul.f32 %v4290, %v4304
  %v4307 = vmul.f32 %v4293, %v4305
  %v4308 = vadd.f32 %v3851, %v4306
  %v4309 = vadd.f32 %v3852, %v4307
  %v4310 = vld [vmem:[%s105] sm:$0xf]
  %v4311 = vld [vmem:[%s105 + $0x4] sm:$0xf]
  %v4312 = vld [vmem:[%s107] sm:$0xff]
  %v4313 = vld [vmem:[%s107 + $0x8] sm:$0xff]
  %v4314 = vld [vmem:[%s109] sm:$0xf]
  %v4315 = vld [vmem:[%s109 + $0x4] sm:$0xf]
  %v4316 = vld [vmem:[%s111] sm:$0xff]
  %v4317 = vld [vmem:[%s111 + $0x8] sm:$0xff]
  %v4318 = vpack.c.bf16 %v4309, %v4308
  %4320 = vset.pattern.permute.xlu0 0
  %4321 = vperm.xlu0 %4320, %v4312
  %v4322 = vpop.permute.xlu0 %4321
  %4325 = vset.pattern.permute.xlu0 0
  %4326 = vperm.xlu0 %4325, %v4313
  %v4327 = vpop.permute.xlu0 %4326
  %v4331 = vunpack.c.l.b16 %v4310
  %v4332 = vunpack.c.l.b16 %v4311
  %v4333 = vpack.c.b16 %v4332, %v4331
  %v4335 = vsel %vm1673, %v4333, 0
  %4337 = vmatprep.subr.bf16.mxu0 0
  %4338 = vmatpush1.bf16.msra.mxu0 0
  %4339 = vmatprep.subr.bf16.mxu0 0
  %4340 = vmatpush1.bf16.msra.mxu0 0
  %4341 = vmatprep.subr.bf16.mxu0 0
  %4342 = vmatpush1.bf16.msra.mxu0 0
  %4343 = vmatprep.subr.bf16.mxu0 0
  %4344 = vmatpush1.bf16.msra.mxu0 0
  %4345 = vmatprep.subr.bf16.mxu0 0
  %4346 = vmatpush1.bf16.msra.mxu0 0
  %4347 = vmatprep.subr.bf16.mxu0 0
  %4348 = vmatpush1.bf16.msra.mxu0 0
  %4349 = vmatprep.subr.bf16.mxu0 0
  %4350 = vmatpush1.bf16.msra.mxu0 0
  %4351 = vmatprep.subr.bf16.mxu0 0
  %4352 = vmatpush1.bf16.msra.mxu0 %v4318
  %4353 = vmatprep.subr.bf16.mxu0 0
  %4354 = vmatpush2.bf16.msra.mxu0 0
  %4355 = vmatprep.subr.bf16.mxu0 0
  %4356 = vmatpush2.bf16.msra.mxu0 0
  %4357 = vmatprep.subr.bf16.mxu0 0
  %4358 = vmatpush2.bf16.msra.mxu0 0
  %4359 = vmatprep.subr.bf16.mxu0 0
  %4360 = vmatpush2.bf16.msra.mxu0 0
  %4361 = vmatprep.subr.bf16.mxu0 0
  %4362 = vmatpush2.bf16.msra.mxu0 0
  %4363 = vmatprep.subr.bf16.mxu0 0
  %4364 = vmatpush2.bf16.msra.mxu0 0
  %4365 = vmatprep.subr.bf16.mxu0 0
  %4366 = vmatpush2.bf16.msra.mxu0 0
  %4367 = vmatprep.subr.bf16.mxu0 0
  %4368 = vmatpush2.bf16.msra.mxu0 0
  %4369 = vmatprep.mubr.bf16.mxu0 0
  %4370 = vmatmul.mubr.bf16.gmra.mxu0 %v4335
  %v4371 = vpop.f32.mrf.mxu0
  %v4372 = vadd.f32 %v4322, %v4371
  %v4373 = vpop.f32.mrf.mxu0
  %v4374 = vpop.f32.mrf.mxu0
  %v4375 = vadd.f32 %v4327, %v4374
  %v4376 = vpop.f32.mrf.mxu0
  %4377 = vdwg.mxu0
  %v4378 = vsub.f32 0.0, %v4372
  %v4379 = vsub.f32 0.0, %v4375
  %v4380 = vmul.f32 %v4378, 1.442695
  %v4381 = vpow.pop %v4380
  %v4382 = vmul.f32 %v4379, 1.442695
  %v4383 = vpow.pop %v4382
  %v4384 = vadd.f32 %v4381, 1.0
  %v4385 = vadd.f32 %v4383, 1.0
  %v4386 = vrcp.pop %v4384
  %v4387 = vrcp.pop %v4385
  %v4388 = vmul.f32 %v4372, %v4386
  %v4389 = vmul.f32 %v4375, %v4387
  %v4390 = vpack.c.bf16 %v4389, %v4388
  %4392 = vset.pattern.permute.xlu0 0
  %4393 = vperm.xlu0 %4392, %v4316
  %v4394 = vpop.permute.xlu0 %4393
  %4397 = vset.pattern.permute.xlu0 0
  %4398 = vperm.xlu0 %4397, %v4317
  %v4399 = vpop.permute.xlu0 %4398
  %v4403 = vunpack.c.l.b16 %v4314
  %v4404 = vunpack.c.l.b16 %v4315
  %v4405 = vpack.c.b16 %v4404, %v4403
  %v4407 = vsel %vm1673, %v4405, 0
  %4409 = vmatprep.subr.bf16.mxu0 0
  %4410 = vmatpush1.bf16.msra.mxu0 0
  %4411 = vmatprep.subr.bf16.mxu0 0
  %4412 = vmatpush1.bf16.msra.mxu0 0
  %4413 = vmatprep.subr.bf16.mxu0 0
  %4414 = vmatpush1.bf16.msra.mxu0 0
  %4415 = vmatprep.subr.bf16.mxu0 0
  %4416 = vmatpush1.bf16.msra.mxu0 0
  %4417 = vmatprep.subr.bf16.mxu0 0
  %4418 = vmatpush1.bf16.msra.mxu0 0
  %4419 = vmatprep.subr.bf16.mxu0 0
  %4420 = vmatpush1.bf16.msra.mxu0 0
  %4421 = vmatprep.subr.bf16.mxu0 0
  %4422 = vmatpush1.bf16.msra.mxu0 0
  %4423 = vmatprep.subr.bf16.mxu0 0
  %4424 = vmatpush1.bf16.msra.mxu0 %v4390
  %4425 = vmatprep.subr.bf16.mxu0 0
  %4426 = vmatpush2.bf16.msra.mxu0 0
  %4427 = vmatprep.subr.bf16.mxu0 0
  %4428 = vmatpush2.bf16.msra.mxu0 0
  %4429 = vmatprep.subr.bf16.mxu0 0
  %4430 = vmatpush2.bf16.msra.mxu0 0
  %4431 = vmatprep.subr.bf16.mxu0 0
  %4432 = vmatpush2.bf16.msra.mxu0 0
  %4433 = vmatprep.subr.bf16.mxu0 0
  %4434 = vmatpush2.bf16.msra.mxu0 0
  %4435 = vmatprep.subr.bf16.mxu0 0
  %4436 = vmatpush2.bf16.msra.mxu0 0
  %4437 = vmatprep.subr.bf16.mxu0 0
  %4438 = vmatpush2.bf16.msra.mxu0 0
  %4439 = vmatprep.subr.bf16.mxu0 0
  %4440 = vmatpush2.bf16.msra.mxu0 0
  %4441 = vmatprep.mubr.bf16.mxu0 0
  %4442 = vmatmul.mubr.bf16.gmra.mxu0 %v4407
  %v4443 = vpop.f32.mrf.mxu0
  %v4444 = vadd.f32 %v4394, %v4443
  %v4445 = vpop.f32.mrf.mxu0
  %v4446 = vpop.f32.mrf.mxu0
  %v4447 = vadd.f32 %v4399, %v4446
  %v4448 = vpop.f32.mrf.mxu0
  %4449 = vdwg.mxu0
  %v4450 = vsub.f32 0.0, %v4444
  %v4451 = vsub.f32 0.0, %v4447
  %v4452 = vmul.f32 %v4450, 1.442695
  %v4453 = vpow.pop %v4452
  %v4454 = vmul.f32 %v4451, 1.442695
  %v4455 = vpow.pop %v4454
  %v4456 = vadd.f32 %v4453, 1.0
  %v4457 = vadd.f32 %v4455, 1.0
  %v4458 = vrcp.pop %v4456
  %v4459 = vrcp.pop %v4457
  %v4460 = vmul.f32 %v4444, %v4458
  %v4461 = vmul.f32 %v4447, %v4459
  %v4462 = vadd.f32 %v4308, %v4460
  %v4463 = vadd.f32 %v4309, %v4461
  %v4464 = vld [vmem:[%s113] sm:$0xf]
  %v4465 = vld [vmem:[%s113 + $0x4] sm:$0xf]
  %v4466 = vld [vmem:[%s115] sm:$0xff]
  %v4467 = vld [vmem:[%s115 + $0x8] sm:$0xff]
  %v4468 = vpack.c.bf16 %v4463, %v4462
  %4470 = vset.pattern.permute.xlu0 0
  %4471 = vperm.xlu0 %4470, %v4466
  %v4472 = vpop.permute.xlu0 %4471
  %4475 = vset.pattern.permute.xlu0 0
  %4476 = vperm.xlu0 %4475, %v4467
  %v4477 = vpop.permute.xlu0 %4476
  %v4481 = vunpack.c.l.b16 %v4464
  %v4482 = vunpack.c.l.b16 %v4465
  %v4483 = vpack.c.b16 %v4482, %v4481
  %v4485 = vsel %vm1673, %v4483, 0
  %4487 = vmatprep.subr.bf16.mxu0 0
  %4488 = vmatpush1.bf16.msra.mxu0 0
  %4489 = vmatprep.subr.bf16.mxu0 0
  %4490 = vmatpush1.bf16.msra.mxu0 0
  %4491 = vmatprep.subr.bf16.mxu0 0
  %4492 = vmatpush1.bf16.msra.mxu0 0
  %4493 = vmatprep.subr.bf16.mxu0 0
  %4494 = vmatpush1.bf16.msra.mxu0 0
  %4495 = vmatprep.subr.bf16.mxu0 0
  %4496 = vmatpush1.bf16.msra.mxu0 0
  %4497 = vmatprep.subr.bf16.mxu0 0
  %4498 = vmatpush1.bf16.msra.mxu0 0
  %4499 = vmatprep.subr.bf16.mxu0 0
  %4500 = vmatpush1.bf16.msra.mxu0 0
  %4501 = vmatprep.subr.bf16.mxu0 0
  %4502 = vmatpush1.bf16.msra.mxu0 %v4468
  %4503 = vmatprep.subr.bf16.mxu0 0
  %4504 = vmatpush2.bf16.msra.mxu0 0
  %4505 = vmatprep.subr.bf16.mxu0 0
  %4506 = vmatpush2.bf16.msra.mxu0 0
  %4507 = vmatprep.subr.bf16.mxu0 0
  %4508 = vmatpush2.bf16.msra.mxu0 0
  %4509 = vmatprep.subr.bf16.mxu0 0
  %4510 = vmatpush2.bf16.msra.mxu0 0
  %4511 = vmatprep.subr.bf16.mxu0 0
  %4512 = vmatpush2.bf16.msra.mxu0 0
  %4513 = vmatprep.subr.bf16.mxu0 0
  %4514 = vmatpush2.bf16.msra.mxu0 0
  %4515 = vmatprep.subr.bf16.mxu0 0
  %4516 = vmatpush2.bf16.msra.mxu0 0
  %4517 = vmatprep.subr.bf16.mxu0 0
  %4518 = vmatpush2.bf16.msra.mxu0 0
  %4519 = vmatprep.mubr.bf16.mxu0 0
  %4520 = vmatmul.mubr.bf16.gmra.mxu0 %v4485
  %v4521 = vpop.f32.mrf.mxu0
  %v4522 = vadd.f32 %v4472, %v4521
  %v4523 = vpop.f32.mrf.mxu0
  %v4524 = vpop.f32.mrf.mxu0
  %v4525 = vadd.f32 %v4477, %v4524
  %v4526 = vpop.f32.mrf.mxu0
  %4527 = vdwg.mxu0
  %v4528 = vsub.f32 0.0, %v4522
  %v4529 = vsub.f32 0.0, %v4525
  %v4530 = vmul.f32 %v4528, 1.442695
  %v4531 = vpow.pop %v4530
  %v4532 = vmul.f32 %v4529, 1.442695
  %v4533 = vpow.pop %v4532
  %v4534 = vadd.f32 %v4531, 1.0
  %v4535 = vadd.f32 %v4533, 1.0
  %v4536 = vrcp.pop %v4534
  %v4537 = vrcp.pop %v4535
  %v4538 = vmul.f32 %v4522, %v4536
  %v4539 = vmul.f32 %v4525, %v4537
  %v4540 = vadd.f32 %v4538, %v3195
  %v4541 = vadd.f32 %v4539, %v3196
  %v4542 = vld [vmem:[%s117] sm:$0xf]
  %v4543 = vld [vmem:[%s117 + $0x4] sm:$0xf]
  %v4544 = vld [vmem:[%s119] sm:$0xff]
  %v4545 = vld [vmem:[%s119 + $0x8] sm:$0xff]
  %v4546 = vld [vmem:[%s121] sm:$0xf]
  %v4547 = vld [vmem:[%s121 + $0x4] sm:$0xf]
  %v4548 = vld [vmem:[%s123] sm:$0xff]
  %v4549 = vld [vmem:[%s123 + $0x8] sm:$0xff]
  %v4550 = vpack.c.bf16 %v4541, %v4540
  %4552 = vset.pattern.permute.xlu0 0
  %4553 = vperm.xlu0 %4552, %v4544
  %v4554 = vpop.permute.xlu0 %4553
  %4557 = vset.pattern.permute.xlu0 0
  %4558 = vperm.xlu0 %4557, %v4545
  %v4559 = vpop.permute.xlu0 %4558
  %v4563 = vunpack.c.l.b16 %v4542
  %v4564 = vunpack.c.l.b16 %v4543
  %v4565 = vpack.c.b16 %v4564, %v4563
  %v4567 = vsel %vm1673, %v4565, 0
  %4569 = vmatprep.subr.bf16.mxu0 0
  %4570 = vmatpush1.bf16.msra.mxu0 0
  %4571 = vmatprep.subr.bf16.mxu0 0
  %4572 = vmatpush1.bf16.msra.mxu0 0
  %4573 = vmatprep.subr.bf16.mxu0 0
  %4574 = vmatpush1.bf16.msra.mxu0 0
  %4575 = vmatprep.subr.bf16.mxu0 0
  %4576 = vmatpush1.bf16.msra.mxu0 0
  %4577 = vmatprep.subr.bf16.mxu0 0
  %4578 = vmatpush1.bf16.msra.mxu0 0
  %4579 = vmatprep.subr.bf16.mxu0 0
  %4580 = vmatpush1.bf16.msra.mxu0 0
  %4581 = vmatprep.subr.bf16.mxu0 0
  %4582 = vmatpush1.bf16.msra.mxu0 0
  %4583 = vmatprep.subr.bf16.mxu0 0
  %4584 = vmatpush1.bf16.msra.mxu0 %v4550
  %4585 = vmatprep.subr.bf16.mxu0 0
  %4586 = vmatpush2.bf16.msra.mxu0 0
  %4587 = vmatprep.subr.bf16.mxu0 0
  %4588 = vmatpush2.bf16.msra.mxu0 0
  %4589 = vmatprep.subr.bf16.mxu0 0
  %4590 = vmatpush2.bf16.msra.mxu0 0
  %4591 = vmatprep.subr.bf16.mxu0 0
  %4592 = vmatpush2.bf16.msra.mxu0 0
  %4593 = vmatprep.subr.bf16.mxu0 0
  %4594 = vmatpush2.bf16.msra.mxu0 0
  %4595 = vmatprep.subr.bf16.mxu0 0
  %4596 = vmatpush2.bf16.msra.mxu0 0
  %4597 = vmatprep.subr.bf16.mxu0 0
  %4598 = vmatpush2.bf16.msra.mxu0 0
  %4599 = vmatprep.subr.bf16.mxu0 0
  %4600 = vmatpush2.bf16.msra.mxu0 0
  %4601 = vmatprep.mubr.bf16.mxu0 0
  %4602 = vmatmul.mubr.bf16.gmra.mxu0 %v4567
  %v4603 = vpop.f32.mrf.mxu0
  %v4604 = vadd.f32 %v4554, %v4603
  %v4605 = vpop.f32.mrf.mxu0
  %v4606 = vpop.f32.mrf.mxu0
  %v4607 = vadd.f32 %v4559, %v4606
  %v4608 = vpop.f32.mrf.mxu0
  %4609 = vdwg.mxu0
  %v4610 = vsub.f32 0.0, %v4604
  %v4611 = vsub.f32 0.0, %v4607
  %v4612 = vmul.f32 %v4610, 1.442695
  %v4613 = vpow.pop %v4612
  %v4614 = vmul.f32 %v4611, 1.442695
  %v4615 = vpow.pop %v4614
  %v4616 = vadd.f32 %v4613, 1.0
  %v4617 = vadd.f32 %v4615, 1.0
  %v4618 = vrcp.pop %v4616
  %v4619 = vrcp.pop %v4617
  %v4620 = vmul.f32 %v4604, %v4618
  %v4621 = vmul.f32 %v4607, %v4619
  %v4622 = vpack.c.bf16 %v4621, %v4620
  %4624 = vset.pattern.permute.xlu0 0
  %4625 = vperm.xlu0 %4624, %v4548
  %v4626 = vpop.permute.xlu0 %4625
  %4629 = vset.pattern.permute.xlu0 0
  %4630 = vperm.xlu0 %4629, %v4549
  %v4631 = vpop.permute.xlu0 %4630
  %v4635 = vunpack.c.l.b16 %v4546
  %v4636 = vunpack.c.l.b16 %v4547
  %v4637 = vpack.c.b16 %v4636, %v4635
  %v4639 = vsel %vm1673, %v4637, 0
  %4641 = vmatprep.subr.bf16.mxu0 0
  %4642 = vmatpush1.bf16.msra.mxu0 0
  %4643 = vmatprep.subr.bf16.mxu0 0
  %4644 = vmatpush1.bf16.msra.mxu0 0
  %4645 = vmatprep.subr.bf16.mxu0 0
  %4646 = vmatpush1.bf16.msra.mxu0 0
  %4647 = vmatprep.subr.bf16.mxu0 0
  %4648 = vmatpush1.bf16.msra.mxu0 0
  %4649 = vmatprep.subr.bf16.mxu0 0
  %4650 = vmatpush1.bf16.msra.mxu0 0
  %4651 = vmatprep.subr.bf16.mxu0 0
  %4652 = vmatpush1.bf16.msra.mxu0 0
  %4653 = vmatprep.subr.bf16.mxu0 0
  %4654 = vmatpush1.bf16.msra.mxu0 0
  %4655 = vmatprep.subr.bf16.mxu0 0
  %4656 = vmatpush1.bf16.msra.mxu0 %v4622
  %4657 = vmatprep.subr.bf16.mxu0 0
  %4658 = vmatpush2.bf16.msra.mxu0 0
  %4659 = vmatprep.subr.bf16.mxu0 0
  %4660 = vmatpush2.bf16.msra.mxu0 0
  %4661 = vmatprep.subr.bf16.mxu0 0
  %4662 = vmatpush2.bf16.msra.mxu0 0
  %4663 = vmatprep.subr.bf16.mxu0 0
  %4664 = vmatpush2.bf16.msra.mxu0 0
  %4665 = vmatprep.subr.bf16.mxu0 0
  %4666 = vmatpush2.bf16.msra.mxu0 0
  %4667 = vmatprep.subr.bf16.mxu0 0
  %4668 = vmatpush2.bf16.msra.mxu0 0
  %4669 = vmatprep.subr.bf16.mxu0 0
  %4670 = vmatpush2.bf16.msra.mxu0 0
  %4671 = vmatprep.subr.bf16.mxu0 0
  %4672 = vmatpush2.bf16.msra.mxu0 0
  %4673 = vmatprep.mubr.bf16.mxu0 0
  %4674 = vmatmul.mubr.bf16.gmra.mxu0 %v4639
  %v4675 = vpop.f32.mrf.mxu0
  %v4676 = vadd.f32 %v4626, %v4675
  %v4677 = vpop.f32.mrf.mxu0
  %v4678 = vpop.f32.mrf.mxu0
  %v4679 = vadd.f32 %v4631, %v4678
  %v4680 = vpop.f32.mrf.mxu0
  %4681 = vdwg.mxu0
  %v4682 = vsub.f32 0.0, %v4676
  %v4683 = vsub.f32 0.0, %v4679
  %v4684 = vmul.f32 %v4682, 1.442695
  %v4685 = vpow.pop %v4684
  %v4686 = vmul.f32 %v4683, 1.442695
  %v4687 = vpow.pop %v4686
  %v4688 = vadd.f32 %v4685, 1.0
  %v4689 = vadd.f32 %v4687, 1.0
  %v4690 = vrcp.pop %v4688
  %v4691 = vrcp.pop %v4689
  %v4692 = vmul.f32 %v4676, %v4690
  %v4693 = vmul.f32 %v4679, %v4691
  %v4694 = vadd.f32 %v4540, %v4692
  %v4695 = vadd.f32 %v4541, %v4693
  %v4696 = vld [vmem:[%s125] sm:$0xf]
  %v4697 = vld [vmem:[%s125 + $0x4] sm:$0xf]
  %v4698 = vld [vmem:[%s127] sm:$0xf]
  %v4699 = vld [vmem:[%s127 + $0x4] sm:$0xf]
  %v4700 = vld [vmem:[%s127 + $0x8] sm:$0xf]
  %v4701 = vld [vmem:[%s127 + $0xc] sm:$0xf]
  %v4704 = vunpack.c.l.b16 %v4696
  %v4705 = vunpack.c.l.b16 %v4697
  %v4706 = vpack.c.b16 %v4705, %v4704
  %v4708 = vsel %vm1600, %v4706, 0
  %4710 = vmatprep.subr.bf16.mxu0 0
  %4711 = vmatpush1.bf16.msra.mxu0 0
  %4712 = vmatprep.subr.bf16.mxu0 0
  %4713 = vmatpush1.bf16.msra.mxu0 0
  %4714 = vmatprep.subr.bf16.mxu0 0
  %4715 = vmatpush1.bf16.msra.mxu0 0
  %4716 = vmatprep.subr.bf16.mxu0 0
  %4717 = vmatpush1.bf16.msra.mxu0 0
  %4718 = vmatprep.subr.bf16.mxu0 0
  %4719 = vmatpush1.bf16.msra.mxu0 0
  %4720 = vmatprep.subr.bf16.mxu0 0
  %4721 = vmatpush1.bf16.msra.mxu0 0
  %4722 = vmatprep.subr.bf16.mxu0 0
  %4723 = vmatpush1.bf16.msra.mxu0 0
  %4724 = vmatprep.subr.bf16.mxu0 0
  %4725 = vmatpush1.bf16.msra.mxu0 %v1606
  %4726 = vmatprep.subr.bf16.mxu0 0
  %4727 = vmatpush2.bf16.msra.mxu0 0
  %4728 = vmatprep.subr.bf16.mxu0 0
  %4729 = vmatpush2.bf16.msra.mxu0 0
  %4730 = vmatprep.subr.bf16.mxu0 0
  %4731 = vmatpush2.bf16.msra.mxu0 0
  %4732 = vmatprep.subr.bf16.mxu0 0
  %4733 = vmatpush2.bf16.msra.mxu0 0
  %4734 = vmatprep.subr.bf16.mxu0 0
  %4735 = vmatpush2.bf16.msra.mxu0 0
  %4736 = vmatprep.subr.bf16.mxu0 0
  %4737 = vmatpush2.bf16.msra.mxu0 0
  %4738 = vmatprep.subr.bf16.mxu0 0
  %4739 = vmatpush2.bf16.msra.mxu0 0
  %4740 = vmatprep.subr.bf16.mxu0 0
  %4741 = vmatpush2.bf16.msra.mxu0 0
  %4742 = vmatprep.mubr.bf16.mxu0 0
  %4743 = vmatmul.mubr.bf16.gmra.mxu0 %v4708
  %v4744 = vpop.f32.mrf.mxu0
  %v4745 = vadd.f32 0.0, %v4744
  %v4746 = vpop.f32.mrf.mxu0
  %v4747 = vpop.f32.mrf.mxu0
  %v4748 = vadd.f32 0.0, %v4747
  %v4749 = vpop.f32.mrf.mxu0
  %4750 = vdwg.mxu0
  %v4751 = vmul.f32 %v4745, %v4694
  %v4752 = vmul.f32 %v4748, %v4695
  %4753 = vmatprep.subr.mxu0 0.0
  %4754 = vmatpush1.msra.mxu0 %v1574
  %4755 = vmatprep.subr.mxu0 0.0
  %4756 = vmatpush1.msra.mxu0 %v1573
  %4757 = vmatprep.subr.mxu0 0.0
  %4758 = vmatpush1.msra.mxu0 %v1572
  %4759 = vmatprep.subr.mxu0 0.0
  %4760 = vmatpush1.msra.mxu0 %v1571
  %4761 = vmatprep.subr.mxu0 0.0
  %4762 = vmatpush1.msra.mxu0 %v1570
  %4763 = vmatprep.subr.mxu0 0.0
  %4764 = vmatpush1.msra.mxu0 %v1569
  %4765 = vmatprep.subr.mxu0 0.0
  %4766 = vmatpush1.msra.mxu0 %v1568
  %4767 = vmatprep.subr.mxu0 0.0
  %4768 = vmatpush1.msra.mxu0 %v1567
  %4769 = vmatprep.subr.mxu0 0.0
  %4770 = vmatpush1.msra.mxu0 %v1566
  %4771 = vmatprep.subr.mxu0 0.0
  %4772 = vmatpush1.msra.mxu0 %v1565
  %4773 = vmatprep.subr.mxu0 0.0
  %4774 = vmatpush1.msra.mxu0 %v1564
  %4775 = vmatprep.subr.mxu0 0.0
  %4776 = vmatpush1.msra.mxu0 %v1563
  %4777 = vmatprep.subr.mxu0 0.0
  %4778 = vmatpush1.msra.mxu0 %v1562
  %4779 = vmatprep.subr.mxu0 0.0
  %4780 = vmatpush1.msra.mxu0 %v1561
  %4781 = vmatprep.subr.mxu0 0.0
  %4782 = vmatpush1.msra.mxu0 %v1560
  %4783 = vmatprep.subr.mxu0 0.0
  %4784 = vmatpush1.msra.mxu0 %v1559
  %4785 = vmatprep.subr.mxu0 0.0
  %4786 = vmatpush2.msra.mxu0 0.0
  %4787 = vmatprep.subr.mxu0 0.0
  %4788 = vmatpush2.msra.mxu0 0.0
  %4789 = vmatprep.subr.mxu0 0.0
  %4790 = vmatpush2.msra.mxu0 0.0
  %4791 = vmatprep.subr.mxu0 0.0
  %4792 = vmatpush2.msra.mxu0 0.0
  %4793 = vmatprep.subr.mxu0 0.0
  %4794 = vmatpush2.msra.mxu0 0.0
  %4795 = vmatprep.subr.mxu0 0.0
  %4796 = vmatpush2.msra.mxu0 0.0
  %4797 = vmatprep.subr.mxu0 0.0
  %4798 = vmatpush2.msra.mxu0 0.0
  %4799 = vmatprep.subr.mxu0 0.0
  %4800 = vmatpush2.msra.mxu0 0.0
  %4801 = vmatprep.subr.mxu0 0.0
  %4802 = vmatpush2.msra.mxu0 0.0
  %4803 = vmatprep.subr.mxu0 0.0
  %4804 = vmatpush2.msra.mxu0 0.0
  %4805 = vmatprep.subr.mxu0 0.0
  %4806 = vmatpush2.msra.mxu0 0.0
  %4807 = vmatprep.subr.mxu0 0.0
  %4808 = vmatpush2.msra.mxu0 0.0
  %4809 = vmatprep.subr.mxu0 0.0
  %4810 = vmatpush2.msra.mxu0 0.0
  %4811 = vmatprep.subr.mxu0 0.0
  %4812 = vmatpush2.msra.mxu0 0.0
  %4813 = vmatprep.subr.mxu0 0.0
  %4814 = vmatpush2.msra.mxu0 0.0
  %4815 = vmatprep.subr.mxu0 0.0
  %4816 = vmatpush2.msra.mxu0 0.0
  %4817 = vmatprep.mubr.f32.mxu0 0.0
  %4818 = vmatmul.mubr.f32.gmra.mxu0 %v4751
  %v4819 = vpop.f32.mrf.mxu0
  %v4820 = vadd.f32 0.0, %v4819
  %v4821 = vpop.f32.mrf.mxu0
  %4822 = vmatprep.mubr.f32.mxu0 0.0
  %4823 = vmatmul.mubr.f32.gmra.mxu0 %v4752
  %v4824 = vpop.f32.mrf.mxu0
  %v4825 = vadd.f32 0.0, %v4824
  %v4826 = vpop.f32.mrf.mxu0
  %4827 = vdwg.mxu0
  %v4828 = vpack.c.bf16 %v4825, %v4820
  %v4833 = vunpack.c.l.b16 %v4698
  %v4834 = vunpack.c.l.b16 %v4699
  %v4835 = vunpack.c.l.b16 %v4700
  %v4836 = vunpack.c.l.b16 %v4701
  %v4837 = vpack.c.b16 %v4834, %v4833
  %v4838 = vpack.c.b16 %v4836, %v4835
  %v4840 = vsel %vm1673, %v4837, 0
  %v4843 = vsel %vm1673, %v4838, 0
  %4845 = vmatprep.subr.bf16.mxu0 0
  %4846 = vmatpush1.bf16.msra.mxu0 0
  %4847 = vmatprep.subr.bf16.mxu0 0
  %4848 = vmatpush1.bf16.msra.mxu0 0
  %4849 = vmatprep.subr.bf16.mxu0 0
  %4850 = vmatpush1.bf16.msra.mxu0 0
  %4851 = vmatprep.subr.bf16.mxu0 0
  %4852 = vmatpush1.bf16.msra.mxu0 0
  %4853 = vmatprep.subr.bf16.mxu0 0
  %4854 = vmatpush1.bf16.msra.mxu0 0
  %4855 = vmatprep.subr.bf16.mxu0 0
  %4856 = vmatpush1.bf16.msra.mxu0 0
  %4857 = vmatprep.subr.bf16.mxu0 0
  %4858 = vmatpush1.bf16.msra.mxu0 0
  %4859 = vmatprep.subr.bf16.mxu0 0
  %4860 = vmatpush1.bf16.msra.mxu0 %v4828
  %4861 = vmatprep.subr.bf16.mxu0 0
  %4862 = vmatpush2.bf16.msra.mxu0 0
  %4863 = vmatprep.subr.bf16.mxu0 0
  %4864 = vmatpush2.bf16.msra.mxu0 0
  %4865 = vmatprep.subr.bf16.mxu0 0
  %4866 = vmatpush2.bf16.msra.mxu0 0
  %4867 = vmatprep.subr.bf16.mxu0 0
  %4868 = vmatpush2.bf16.msra.mxu0 0
  %4869 = vmatprep.subr.bf16.mxu0 0
  %4870 = vmatpush2.bf16.msra.mxu0 0
  %4871 = vmatprep.subr.bf16.mxu0 0
  %4872 = vmatpush2.bf16.msra.mxu0 0
  %4873 = vmatprep.subr.bf16.mxu0 0
  %4874 = vmatpush2.bf16.msra.mxu0 0
  %4875 = vmatprep.subr.bf16.mxu0 0
  %4876 = vmatpush2.bf16.msra.mxu0 0
  %4877 = vmatprep.mubr.bf16.mxu0 0
  %4878 = vmatmul.mubr.bf16.gmra.mxu0 %v4840
  %v4879 = vpop.f32.mrf.mxu0
  %v4880 = vadd.f32 0.0, %v4879
  %v4881 = vpop.f32.mrf.mxu0
  %v4882 = vpop.f32.mrf.mxu0
  %v4883 = vadd.f32 0.0, %v4882
  %v4884 = vpop.f32.mrf.mxu0
  %4885 = vmatprep.mubr.bf16.mxu0 0
  %4886 = vmatmul.mubr.bf16.gmra.mxu0 %v4843
  %v4887 = vpop.f32.mrf.mxu0
  %v4888 = vadd.f32 0.0, %v4887
  %v4889 = vpop.f32.mrf.mxu0
  %v4890 = vpop.f32.mrf.mxu0
  %v4891 = vadd.f32 0.0, %v4890
  %v4892 = vpop.f32.mrf.mxu0
  %4893 = vdwg.mxu0
  %v4894 = vld [vmem:[%s129] sm:$0xf]
  %v4895 = vld [vmem:[%s129 + $0x4] sm:$0xf]
  %v4896 = vld [vmem:[%s129 + $0x8] sm:$0xf]
  %v4897 = vld [vmem:[%s129 + $0xc] sm:$0xf]
  %v4898 = vld [vmem:[%s131] sm:$0xff]
  %v4899 = vld [vmem:[%s131 + $0x8] sm:$0xff]
  %v4900 = vld [vmem:[%s131 + $0x10] sm:$0xff]
  %v4901 = vld [vmem:[%s131 + $0x18] sm:$0xff]
  %v4902 = vpack.c.bf16 %v4883, %v4880
  %v4903 = vpack.c.bf16 %v4891, %v4888
  %4905 = vset.pattern.permute.xlu0 0
  %4906 = vperm.xlu0 %4905, %v4898
  %v4907 = vpop.permute.xlu0 %4906
  %4910 = vset.pattern.permute.xlu0 0
  %4911 = vperm.xlu0 %4910, %v4899
  %v4912 = vpop.permute.xlu0 %4911
  %4915 = vset.pattern.permute.xlu0 0
  %4916 = vperm.xlu0 %4915, %v4900
  %v4917 = vpop.permute.xlu0 %4916
  %4920 = vset.pattern.permute.xlu0 0
  %4921 = vperm.xlu0 %4920, %v4901
  %v4922 = vpop.permute.xlu0 %4921
  %v4928 = vunpack.c.l.b16 %v4894
  %v4929 = vunpack.c.l.b16 %v4895
  %v4930 = vunpack.c.l.b16 %v4896
  %v4931 = vunpack.c.l.b16 %v4897
  %v4932 = vpack.c.b16 %v4929, %v4928
  %v4933 = vpack.c.b16 %v4931, %v4930
  %v4935 = vsel %vm1723, %v4932, 0
  %v4938 = vsel %vm1723, %v4933, 0
  %4940 = vmatprep.subr.bf16.mxu0 0
  %4941 = vmatpush1.bf16.msra.mxu0 0
  %4942 = vmatprep.subr.bf16.mxu0 0
  %4943 = vmatpush1.bf16.msra.mxu0 0
  %4944 = vmatprep.subr.bf16.mxu0 0
  %4945 = vmatpush1.bf16.msra.mxu0 0
  %4946 = vmatprep.subr.bf16.mxu0 0
  %4947 = vmatpush1.bf16.msra.mxu0 0
  %4948 = vmatprep.subr.bf16.mxu0 0
  %4949 = vmatpush1.bf16.msra.mxu0 0
  %4950 = vmatprep.subr.bf16.mxu0 0
  %4951 = vmatpush1.bf16.msra.mxu0 0
  %4952 = vmatprep.subr.bf16.mxu0 0
  %4953 = vmatpush1.bf16.msra.mxu0 %v4903
  %4954 = vmatprep.subr.bf16.mxu0 0
  %4955 = vmatpush1.bf16.msra.mxu0 %v4902
  %4956 = vmatprep.subr.bf16.mxu0 0
  %4957 = vmatpush2.bf16.msra.mxu0 0
  %4958 = vmatprep.subr.bf16.mxu0 0
  %4959 = vmatpush2.bf16.msra.mxu0 0
  %4960 = vmatprep.subr.bf16.mxu0 0
  %4961 = vmatpush2.bf16.msra.mxu0 0
  %4962 = vmatprep.subr.bf16.mxu0 0
  %4963 = vmatpush2.bf16.msra.mxu0 0
  %4964 = vmatprep.subr.bf16.mxu0 0
  %4965 = vmatpush2.bf16.msra.mxu0 0
  %4966 = vmatprep.subr.bf16.mxu0 0
  %4967 = vmatpush2.bf16.msra.mxu0 0
  %4968 = vmatprep.subr.bf16.mxu0 0
  %4969 = vmatpush2.bf16.msra.mxu0 0
  %4970 = vmatprep.subr.bf16.mxu0 0
  %4971 = vmatpush2.bf16.msra.mxu0 0
  %4972 = vmatprep.mubr.bf16.mxu0 0
  %4973 = vmatmul.mubr.bf16.gmra.mxu0 %v4935
  %v4974 = vpop.f32.mrf.mxu0
  %v4975 = vadd.f32 %v4907, %v4974
  %v4976 = vpop.f32.mrf.mxu0
  %v4977 = vpop.f32.mrf.mxu0
  %v4978 = vadd.f32 %v4912, %v4977
  %v4979 = vpop.f32.mrf.mxu0
  %4980 = vmatprep.mubr.bf16.mxu0 0
  %4981 = vmatmul.mubr.bf16.gmra.mxu0 %v4938
  %v4982 = vpop.f32.mrf.mxu0
  %v4983 = vadd.f32 %v4917, %v4982
  %v4984 = vpop.f32.mrf.mxu0
  %v4985 = vpop.f32.mrf.mxu0
  %v4986 = vadd.f32 %v4922, %v4985
  %v4987 = vpop.f32.mrf.mxu0
  %4988 = vdwg.mxu0
  %v4989 = vsub.f32 0.0, %v4975
  %v4990 = vsub.f32 0.0, %v4978
  %v4991 = vsub.f32 0.0, %v4983
  %v4992 = vsub.f32 0.0, %v4986
  %v4993 = vmul.f32 %v4989, 1.442695
  %v4994 = vpow.pop %v4993
  %v4995 = vmul.f32 %v4990, 1.442695
  %v4996 = vpow.pop %v4995
  %v4997 = vmul.f32 %v4991, 1.442695
  %v4998 = vpow.pop %v4997
  %v4999 = vmul.f32 %v4992, 1.442695
  %v5000 = vpow.pop %v4999
  %v5001 = vadd.f32 %v4994, 1.0
  %v5002 = vadd.f32 %v4996, 1.0
  %v5003 = vadd.f32 %v4998, 1.0
  %v5004 = vadd.f32 %v5000, 1.0
  %v5005 = vrcp.pop %v5001
  %v5006 = vrcp.pop %v5002
  %v5007 = vrcp.pop %v5003
  %v5008 = vrcp.pop %v5004
  %v5009 = vmul.f32 %v4975, %v5005
  %v5010 = vmul.f32 %v4978, %v5006
  %v5011 = vmul.f32 %v4983, %v5007
  %v5012 = vmul.f32 %v4986, %v5008
  %v5013 = vld [vmem:[%s133] sm:$0xf]
  %v5014 = vld [vmem:[%s133 + $0x4] sm:$0xf]
  %v5015 = vld [vmem:[%s133 + $0x8] sm:$0xf]
  %v5016 = vld [vmem:[%s133 + $0xc] sm:$0xf]
  %v5017 = vld [vmem:[%s135] sm:$0xff]
  %v5018 = vld [vmem:[%s135 + $0x8] sm:$0xff]
  %v5019 = vld [vmem:[%s135 + $0x10] sm:$0xff]
  %v5020 = vld [vmem:[%s135 + $0x18] sm:$0xff]
  %v5021 = vpack.c.bf16 %v5010, %v5009
  %v5022 = vpack.c.bf16 %v5012, %v5011
  %5024 = vset.pattern.permute.xlu0 0
  %5025 = vperm.xlu0 %5024, %v5017
  %v5026 = vpop.permute.xlu0 %5025
  %5029 = vset.pattern.permute.xlu0 0
  %5030 = vperm.xlu0 %5029, %v5018
  %v5031 = vpop.permute.xlu0 %5030
  %5034 = vset.pattern.permute.xlu0 0
  %5035 = vperm.xlu0 %5034, %v5019
  %v5036 = vpop.permute.xlu0 %5035
  %5039 = vset.pattern.permute.xlu0 0
  %5040 = vperm.xlu0 %5039, %v5020
  %v5041 = vpop.permute.xlu0 %5040
  %v5047 = vunpack.c.l.b16 %v5013
  %v5048 = vunpack.c.l.b16 %v5014
  %v5049 = vunpack.c.l.b16 %v5015
  %v5050 = vunpack.c.l.b16 %v5016
  %v5051 = vpack.c.b16 %v5048, %v5047
  %v5052 = vpack.c.b16 %v5050, %v5049
  %v5054 = vsel %vm1723, %v5051, 0
  %v5057 = vsel %vm1723, %v5052, 0
  %5059 = vmatprep.subr.bf16.mxu0 0
  %5060 = vmatpush1.bf16.msra.mxu0 0
  %5061 = vmatprep.subr.bf16.mxu0 0
  %5062 = vmatpush1.bf16.msra.mxu0 0
  %5063 = vmatprep.subr.bf16.mxu0 0
  %5064 = vmatpush1.bf16.msra.mxu0 0
  %5065 = vmatprep.subr.bf16.mxu0 0
  %5066 = vmatpush1.bf16.msra.mxu0 0
  %5067 = vmatprep.subr.bf16.mxu0 0
  %5068 = vmatpush1.bf16.msra.mxu0 0
  %5069 = vmatprep.subr.bf16.mxu0 0
  %5070 = vmatpush1.bf16.msra.mxu0 0
  %5071 = vmatprep.subr.bf16.mxu0 0
  %5072 = vmatpush1.bf16.msra.mxu0 %v5022
  %5073 = vmatprep.subr.bf16.mxu0 0
  %5074 = vmatpush1.bf16.msra.mxu0 %v5021
  %5075 = vmatprep.subr.bf16.mxu0 0
  %5076 = vmatpush2.bf16.msra.mxu0 0
  %5077 = vmatprep.subr.bf16.mxu0 0
  %5078 = vmatpush2.bf16.msra.mxu0 0
  %5079 = vmatprep.subr.bf16.mxu0 0
  %5080 = vmatpush2.bf16.msra.mxu0 0
  %5081 = vmatprep.subr.bf16.mxu0 0
  %5082 = vmatpush2.bf16.msra.mxu0 0
  %5083 = vmatprep.subr.bf16.mxu0 0
  %5084 = vmatpush2.bf16.msra.mxu0 0
  %5085 = vmatprep.subr.bf16.mxu0 0
  %5086 = vmatpush2.bf16.msra.mxu0 0
  %5087 = vmatprep.subr.bf16.mxu0 0
  %5088 = vmatpush2.bf16.msra.mxu0 0
  %5089 = vmatprep.subr.bf16.mxu0 0
  %5090 = vmatpush2.bf16.msra.mxu0 0
  %5091 = vmatprep.mubr.bf16.mxu0 0
  %5092 = vmatmul.mubr.bf16.gmra.mxu0 %v5054
  %v5093 = vpop.f32.mrf.mxu0
  %v5094 = vadd.f32 %v5026, %v5093
  %v5095 = vpop.f32.mrf.mxu0
  %v5096 = vpop.f32.mrf.mxu0
  %v5097 = vadd.f32 %v5031, %v5096
  %v5098 = vpop.f32.mrf.mxu0
  %5099 = vmatprep.mubr.bf16.mxu0 0
  %5100 = vmatmul.mubr.bf16.gmra.mxu0 %v5057
  %v5101 = vpop.f32.mrf.mxu0
  %v5102 = vadd.f32 %v5036, %v5101
  %v5103 = vpop.f32.mrf.mxu0
  %v5104 = vpop.f32.mrf.mxu0
  %v5105 = vadd.f32 %v5041, %v5104
  %v5106 = vpop.f32.mrf.mxu0
  %5107 = vdwg.mxu0
  %v5108 = vsub.f32 0.0, %v5094
  %v5109 = vsub.f32 0.0, %v5097
  %v5110 = vsub.f32 0.0, %v5102
  %v5111 = vsub.f32 0.0, %v5105
  %v5112 = vmul.f32 %v5108, 1.442695
  %v5113 = vpow.pop %v5112
  %v5114 = vmul.f32 %v5109, 1.442695
  %v5115 = vpow.pop %v5114
  %v5116 = vmul.f32 %v5110, 1.442695
  %v5117 = vpow.pop %v5116
  %v5118 = vmul.f32 %v5111, 1.442695
  %v5119 = vpow.pop %v5118
  %v5120 = vadd.f32 %v5113, 1.0
  %v5121 = vadd.f32 %v5115, 1.0
  %v5122 = vadd.f32 %v5117, 1.0
  %v5123 = vadd.f32 %v5119, 1.0
  %v5124 = vrcp.pop %v5120
  %v5125 = vrcp.pop %v5121
  %v5126 = vrcp.pop %v5122
  %v5127 = vrcp.pop %v5123
  %v5128 = vmul.f32 %v5094, %v5124
  %v5129 = vmul.f32 %v5097, %v5125
  %v5130 = vmul.f32 %v5102, %v5126
  %v5131 = vmul.f32 %v5105, %v5127
  %v5132 = vld [vmem:[%s137] sm:$0xf]
  %v5133 = vld [vmem:[%s137 + $0x4] sm:$0xf]
  %v5134 = vpack.c.bf16 %v5129, %v5128
  %v5135 = vpack.c.bf16 %v5131, %v5130
  %v5138 = vunpack.c.l.b16 %v5132
  %v5139 = vunpack.c.l.b16 %v5133
  %v5140 = vpack.c.b16 %v5139, %v5138
  %v5142 = vsel %vm1723, %v5140, 0
  %5144 = vmatprep.subr.bf16.mxu0 0
  %5145 = vmatpush1.bf16.msra.mxu0 0
  %5146 = vmatprep.subr.bf16.mxu0 0
  %5147 = vmatpush1.bf16.msra.mxu0 0
  %5148 = vmatprep.subr.bf16.mxu0 0
  %5149 = vmatpush1.bf16.msra.mxu0 0
  %5150 = vmatprep.subr.bf16.mxu0 0
  %5151 = vmatpush1.bf16.msra.mxu0 0
  %5152 = vmatprep.subr.bf16.mxu0 0
  %5153 = vmatpush1.bf16.msra.mxu0 0
  %5154 = vmatprep.subr.bf16.mxu0 0
  %5155 = vmatpush1.bf16.msra.mxu0 0
  %5156 = vmatprep.subr.bf16.mxu0 0
  %5157 = vmatpush1.bf16.msra.mxu0 %v5135
  %5158 = vmatprep.subr.bf16.mxu0 0
  %5159 = vmatpush1.bf16.msra.mxu0 %v5134
  %5160 = vmatprep.subr.bf16.mxu0 0
  %5161 = vmatpush2.bf16.msra.mxu0 0
  %5162 = vmatprep.subr.bf16.mxu0 0
  %5163 = vmatpush2.bf16.msra.mxu0 0
  %5164 = vmatprep.subr.bf16.mxu0 0
  %5165 = vmatpush2.bf16.msra.mxu0 0
  %5166 = vmatprep.subr.bf16.mxu0 0
  %5167 = vmatpush2.bf16.msra.mxu0 0
  %5168 = vmatprep.subr.bf16.mxu0 0
  %5169 = vmatpush2.bf16.msra.mxu0 0
  %5170 = vmatprep.subr.bf16.mxu0 0
  %5171 = vmatpush2.bf16.msra.mxu0 0
  %5172 = vmatprep.subr.bf16.mxu0 0
  %5173 = vmatpush2.bf16.msra.mxu0 0
  %5174 = vmatprep.subr.bf16.mxu0 0
  %5175 = vmatpush2.bf16.msra.mxu0 0
  %5176 = vmatprep.mubr.bf16.mxu0 0
  %5177 = vmatmul.mubr.bf16.gmra.mxu0 %v5142
  %v5178 = vpop.f32.mrf.mxu0
  %v5179 = vadd.f32 0.0, %v5178
  %v5180 = vpop.f32.mrf.mxu0
  %v5181 = vpop.f32.mrf.mxu0
  %v5182 = vadd.f32 0.0, %v5181
  %v5183 = vpop.f32.mrf.mxu0
  %5184 = vdwg.mxu0
  %v5185 = vadd.f32 %v3729, %v5179
  %v5186 = vadd.f32 %v3732, %v5182
  %v5187 = vld [vmem:[%s139] sm:$0x3]
  %v5188 = vld [vmem:[%s141] sm:$0x7]
  %v5189 = vld [vmem:[%s11] sm:$0xff]
  %v5190 = vld [vmem:[%s11 + $0x8] sm:$0xff]
  %v5191 = vld [vmem:[%s11 + $0x10] sm:$0xff]
  %v5192 = vld [vmem:[%s11 + $0x18] sm:$0xff]
  %v5193 = vld [vmem:[%s11 + $0x20] sm:$0xff]
  %v5194 = vld [vmem:[%s11 + $0x28] sm:$0xff]
  %v5195 = vld [vmem:[%s11 + $0x30] sm:$0xff]
  %v5196 = vld [vmem:[%s11 + $0x38] sm:$0xff]
  %v5197 = vld [vmem:[%s11 + $0x40] sm:$0xff]
  %v5198 = vld [vmem:[%s11 + $0x48] sm:$0xff]
  %v5199 = vld [vmem:[%s11 + $0x50] sm:$0xff]
  %v5200 = vld [vmem:[%s11 + $0x58] sm:$0xff]
  %v5201 = vld [vmem:[%s11 + $0x60] sm:$0xff]
  %v5202 = vld [vmem:[%s11 + $0x68] sm:$0xff]
  %v5203 = vld [vmem:[%s11 + $0x70] sm:$0xff]
  %v5204 = vld [vmem:[%s11 + $0x78] sm:$0xff]
  %5205 = vmatprep.subr.mxu0 0.0
  %5206 = vmatpush1.msra.mxu0 %v5204
  %5207 = vmatprep.subr.mxu0 0.0
  %5208 = vmatpush1.msra.mxu0 %v5203
  %5209 = vmatprep.subr.mxu0 0.0
  %5210 = vmatpush1.msra.mxu0 %v5202
  %5211 = vmatprep.subr.mxu0 0.0
  %5212 = vmatpush1.msra.mxu0 %v5201
  %5213 = vmatprep.subr.mxu0 0.0
  %5214 = vmatpush1.msra.mxu0 %v5200
  %5215 = vmatprep.subr.mxu0 0.0
  %5216 = vmatpush1.msra.mxu0 %v5199
  %5217 = vmatprep.subr.mxu0 0.0
  %5218 = vmatpush1.msra.mxu0 %v5198
  %5219 = vmatprep.subr.mxu0 0.0
  %5220 = vmatpush1.msra.mxu0 %v5197
  %5221 = vmatprep.subr.mxu0 0.0
  %5222 = vmatpush1.msra.mxu0 %v5196
  %5223 = vmatprep.subr.mxu0 0.0
  %5224 = vmatpush1.msra.mxu0 %v5195
  %5225 = vmatprep.subr.mxu0 0.0
  %5226 = vmatpush1.msra.mxu0 %v5194
  %5227 = vmatprep.subr.mxu0 0.0
  %5228 = vmatpush1.msra.mxu0 %v5193
  %5229 = vmatprep.subr.mxu0 0.0
  %5230 = vmatpush1.msra.mxu0 %v5192
  %5231 = vmatprep.subr.mxu0 0.0
  %5232 = vmatpush1.msra.mxu0 %v5191
  %5233 = vmatprep.subr.mxu0 0.0
  %5234 = vmatpush1.msra.mxu0 %v5190
  %5235 = vmatprep.subr.mxu0 0.0
  %5236 = vmatpush1.msra.mxu0 %v5189
  %5237 = vmatprep.subr.mxu0 0.0
  %5238 = vmatpush2.msra.mxu0 0.0
  %5239 = vmatprep.subr.mxu0 0.0
  %5240 = vmatpush2.msra.mxu0 0.0
  %5241 = vmatprep.subr.mxu0 0.0
  %5242 = vmatpush2.msra.mxu0 0.0
  %5243 = vmatprep.subr.mxu0 0.0
  %5244 = vmatpush2.msra.mxu0 0.0
  %5245 = vmatprep.subr.mxu0 0.0
  %5246 = vmatpush2.msra.mxu0 0.0
  %5247 = vmatprep.subr.mxu0 0.0
  %5248 = vmatpush2.msra.mxu0 0.0
  %5249 = vmatprep.subr.mxu0 0.0
  %5250 = vmatpush2.msra.mxu0 0.0
  %5251 = vmatprep.subr.mxu0 0.0
  %5252 = vmatpush2.msra.mxu0 0.0
  %5253 = vmatprep.subr.mxu0 0.0
  %5254 = vmatpush2.msra.mxu0 0.0
  %5255 = vmatprep.subr.mxu0 0.0
  %5256 = vmatpush2.msra.mxu0 0.0
  %5257 = vmatprep.subr.mxu0 0.0
  %5258 = vmatpush2.msra.mxu0 0.0
  %5259 = vmatprep.subr.mxu0 0.0
  %5260 = vmatpush2.msra.mxu0 0.0
  %5261 = vmatprep.subr.mxu0 0.0
  %5262 = vmatpush2.msra.mxu0 0.0
  %5263 = vmatprep.subr.mxu0 0.0
  %5264 = vmatpush2.msra.mxu0 0.0
  %5265 = vmatprep.subr.mxu0 0.0
  %5266 = vmatpush2.msra.mxu0 0.0
  %5267 = vmatprep.subr.mxu0 0.0
  %5268 = vmatpush2.msra.mxu0 0.0
  %5269 = vmatprep.mubr.f32.mxu0 0.0
  %5270 = vmatmul.mubr.f32.gmra.mxu0 %v5185
  %v5271 = vpop.f32.mrf.mxu0
  %v5272 = vadd.f32 0.0, %v5271
  %v5273 = vpop.f32.mrf.mxu0
  %5274 = vmatprep.mubr.f32.mxu0 0.0
  %5275 = vmatmul.mubr.f32.gmra.mxu0 %v5186
  %v5276 = vpop.f32.mrf.mxu0
  %v5277 = vadd.f32 0.0, %v5276
  %v5278 = vpop.f32.mrf.mxu0
  %5279 = vdwg.mxu0
  %v5280 = vpack.c.bf16 %v5277, %v5272
  %5282 = vset.pattern.permute.xlu0 0
  %5283 = vperm.xlu0 %5282, %v5188
  %v5284 = vpop.permute.xlu0 %5283
  %v5287 = vsel %vm1673, %v5187, 0
  %5289 = vmatprep.subr.bf16.mxu0 0
  %5290 = vmatpush1.bf16.msra.mxu0 0
  %5291 = vmatprep.subr.bf16.mxu0 0
  %5292 = vmatpush1.bf16.msra.mxu0 0
  %5293 = vmatprep.subr.bf16.mxu0 0
  %5294 = vmatpush1.bf16.msra.mxu0 0
  %5295 = vmatprep.subr.bf16.mxu0 0
  %5296 = vmatpush1.bf16.msra.mxu0 0
  %5297 = vmatprep.subr.bf16.mxu0 0
  %5298 = vmatpush1.bf16.msra.mxu0 0
  %5299 = vmatprep.subr.bf16.mxu0 0
  %5300 = vmatpush1.bf16.msra.mxu0 0
  %5301 = vmatprep.subr.bf16.mxu0 0
  %5302 = vmatpush1.bf16.msra.mxu0 0
  %5303 = vmatprep.subr.bf16.mxu0 0
  %5304 = vmatpush1.bf16.msra.mxu0 %v5280
  %5305 = vmatprep.subr.bf16.mxu0 0
  %5306 = vmatpush2.bf16.msra.mxu0 0
  %5307 = vmatprep.subr.bf16.mxu0 0
  %5308 = vmatpush2.bf16.msra.mxu0 0
  %5309 = vmatprep.subr.bf16.mxu0 0
  %5310 = vmatpush2.bf16.msra.mxu0 0
  %5311 = vmatprep.subr.bf16.mxu0 0
  %5312 = vmatpush2.bf16.msra.mxu0 0
  %5313 = vmatprep.subr.bf16.mxu0 0
  %5314 = vmatpush2.bf16.msra.mxu0 0
  %5315 = vmatprep.subr.bf16.mxu0 0
  %5316 = vmatpush2.bf16.msra.mxu0 0
  %5317 = vmatprep.subr.bf16.mxu0 0
  %5318 = vmatpush2.bf16.msra.mxu0 0
  %5319 = vmatprep.subr.bf16.mxu0 0
  %5320 = vmatpush2.bf16.msra.mxu0 0
  %5321 = vmatprep.mubr.bf16.mxu0 0
  %5322 = vmatmul.mubr.bf16.gmra.mxu0 %v5287
  %v5323 = vpop.f32.mrf.mxu0
  %v5324 = vadd.f32 %v5284, %v5323
  %v5325 = vpop.f32.mrf.mxu0
  %v5326 = vpop.f32.mrf.mxu0
  %v5327 = vpop.f32.mrf.mxu0
  %5328 = vdwg.mxu0
  %vm5329 = vcmask 10240
  %5330 = vst.msk [vmem:[%s143] sm:$0x7] %vm5329, %v5324
  // Predicated region
  $region286: #{tpu_custom_call.1} parent=0 // pred_check
    _
  $region287: #{tpu_custom_call.1} parent=0 // pred_check_branch
    %5332 = sbr.rel (0) target = $region289
  $region288: #{tpu_custom_call.1} parent=0 // pred_region
    _
  $region289: #{tpu_custom_call.1} parent=0 // pred_fallthru
    _
  // Predicated region
  $region290: #{tpu_custom_call.1} parent=0 // pred_check
    _
  $region291: #{tpu_custom_call.1} parent=0 // pred_check_branch
    %5334 = sbr.rel (0) target = $region293
  $region292: #{tpu_custom_call.1} parent=0 // pred_region
    _
  $region293: #{tpu_custom_call.1} parent=0 // pred_fallthru
    _

</llo_original>
